<compile_context>
chip_gen: v7x
topology: tpu7x:2x2x1
jax: 0.10.0
libtpu: 0.0.40
codegen_flags: <defaults>
</compile_context>

<pallas_src>
import functools

import jax
import jax.numpy as jnp
from jax.experimental import pallas as pl
from jax.experimental.pallas import tpu as pltpu


def _conv3x3_bn_kernel(x_ref, w_ref, b_ref, out_ref, acc_ref, *, H, W):
    # x_ref:   (1, H+2, W+2, TCin)  bf16, spatially pre-padded input slab
    # w_ref:   (9, TCin, TCout)     bf16, BN scale already folded in
    # b_ref:   (1, TCout)           f32, folded BN bias
    # out_ref: (1, H, W, TCout)
    # acc_ref: (H*W, TCout)         f32 scratch, persists across Cin steps
    c = pl.program_id(2)

    @pl.when(c == 0)
    def _init():
        acc_ref[...] = jnp.broadcast_to(b_ref[...], acc_ref.shape)

    acc = acc_ref[...]
    for kh in range(3):
        for kw in range(3):
            patch = x_ref[0, kh:kh + H, kw:kw + W, :].reshape(H * W, -1)
            acc = acc + jnp.dot(patch, w_ref[kh * 3 + kw],
                                preferred_element_type=jnp.float32)
    acc_ref[...] = acc

    @pl.when(c == pl.num_programs(2) - 1)
    def _finalize():
        out_ref[0] = acc_ref[...].reshape(H, W, -1).astype(out_ref.dtype)


def _pick_tile(dim, candidates=(512, 256, 128)):
    """Largest multiple-of-128 candidate dividing `dim`, else the full dim."""
    for cand in candidates:
        if dim % cand == 0:
            return cand
    return dim


def conv3x3_bn(x_nchw, w_oihw, gamma, beta, mean, var, *, eps=1e-5,
               compute_dtype=jnp.bfloat16):
    """BasicConv2d forward: Conv2d(3x3, pad=1, no bias) + BatchNorm2d (eval)."""
    N, Cin, H, W = x_nchw.shape
    Cout = w_oihw.shape[0]

    # Fold BN into a per-output-channel scale (into weights) + bias.
    scale = gamma / jnp.sqrt(var + eps)                       # (Cout,)
    bias = (beta - mean * scale).astype(jnp.float32)          # (Cout,)
    w_folded = w_oihw * scale[:, None, None, None]            # (Cout,Cin,3,3)

    # (Cout, Cin, 3, 3) -> (3, 3, Cin, Cout) -> (9, Cin, Cout), bf16 for MXU.
    w = jnp.transpose(w_folded, (2, 3, 1, 0)).reshape(9, Cin, Cout)
    w = w.astype(compute_dtype)

    # NCHW -> NHWC, cast to bf16, pad spatially by 1 once in the wrapper.
    x = jnp.transpose(x_nchw, (0, 2, 3, 1)).astype(compute_dtype)
    x = jnp.pad(x, ((0, 0), (1, 1), (1, 1), (0, 0)))
    Hp, Wp = H + 2, W + 2

    tcin = _pick_tile(Cin)                 # contraction tile (multiple of 128)
    tcout = 256 if Cout % 256 == 0 else Cout
    c_steps = Cin // tcin
    j_steps = Cout // tcout

    kernel = functools.partial(_conv3x3_bn_kernel, H=H, W=W)

    out_nhwc = pl.pallas_call(
        kernel,
        out_shape=jax.ShapeDtypeStruct((N, H, W, Cout), x_nchw.dtype),
        grid_spec=pltpu.PrefetchScalarGridSpec(
            num_scalar_prefetch=0,
            grid=(N, j_steps, c_steps),
            in_specs=[
                pl.BlockSpec((1, Hp, Wp, tcin), lambda n, j, c: (n, 0, 0, c)),
                pl.BlockSpec((9, tcin, tcout), lambda n, j, c: (0, c, j)),
                pl.BlockSpec((1, tcout), lambda n, j, c: (0, j)),
            ],
            out_specs=pl.BlockSpec((1, H, W, tcout),
                                   lambda n, j, c: (n, 0, 0, j)),
            scratch_shapes=[pltpu.VMEM((H * W, tcout), jnp.float32)],
        ),
        compiler_params=pltpu.CompilerParams(
            dimension_semantics=("parallel", "parallel", "arbitrary"),
            vmem_limit_bytes=32 * 1024 * 1024,
        ),
    )(x, w, bias.reshape(1, Cout))

    return jnp.transpose(out_nhwc, (0, 3, 1, 2))  # back to NCHW


def fusion_mix_forward(x_fea, params, *, compute_dtype=jnp.bfloat16):
    """Fusion_mix.forward: apply one BasicConv2d per input feature map."""
    return [
        conv3x3_bn(x, p["w"], p["gamma"], p["beta"], p["mean"], p["var"],
                   compute_dtype=compute_dtype)
        for x, p in zip(x_fea, params)
    ]


# ----------------------------- references ---------------------------------

def _bn_fold(p, eps=1e-5):
    scale = p["gamma"] / jnp.sqrt(p["var"] + eps)
    bias = p["beta"] - p["mean"] * scale
    return scale, bias


def reference_folded(x, p, *, compute_dtype, eps=1e-5):
    """Same math as the kernel on the same bf16-rounded operands (f32 conv)."""
    scale, bias = _bn_fold(p, eps)
    wq = (p["w"] * scale[:, None, None, None]).astype(compute_dtype) \
        .astype(jnp.float32)
    xq = x.astype(compute_dtype).astype(jnp.float32)
    y = jax.lax.conv_general_dilated(
        xq, wq, window_strides=(1, 1), padding=[(1, 1), (1, 1)],
        dimension_numbers=("NCHW", "OIHW", "NCHW"),
        precision=jax.lax.Precision.HIGHEST)
    return y + bias[None, :, None, None]


def reference_full(x, p, eps=1e-5):
    """Pure f32 Conv2d + eval-mode BatchNorm2d (module semantics)."""
    y = jax.lax.conv_general_dilated(
        x, p["w"], window_strides=(1, 1), padding=[(1, 1), (1, 1)],
        dimension_numbers=("NCHW", "OIHW", "NCHW"),
        precision=jax.lax.Precision.HIGHEST)
    scale, bias = _bn_fold(p, eps)
    return y * scale[None, :, None, None] + bias[None, :, None, None]


# ------------------------------- self-test ---------------------------------

if __name__ == "__main__":
    # Channel counts fixed by Fusion_mix; small spatial sizes for the test.
    layer_cfg = [  # (Cin, Cout, H, W)
        (64 + 256, 64, 16, 16),
        (128 + 512, 128, 16, 16),
        (256 + 1024, 256, 8, 8),
        (512 + 2048, 512, 8, 8),
        (512 + 2048, 512, 8, 8),
    ]
    N = 2
    compute_dtype = jnp.bfloat16

    key = jax.random.PRNGKey(0)
    xs, params = [], []
    for cin, cout, h, w in layer_cfg:
        key, kx, kw_, kg, kb, km, kv = jax.random.split(key, 7)
        xs.append(jax.random.normal(kx, (N, cin, h, w), dtype=jnp.float32))
        params.append(dict(
            w=0.01 * jax.random.normal(kw_, (cout, cin, 3, 3), jnp.float32),
            gamma=1.0 + 0.1 * jax.random.normal(kg, (cout,), jnp.float32),
            beta=0.1 * jax.random.normal(kb, (cout,), jnp.float32),
            mean=0.1 * jax.random.normal(km, (cout,), jnp.float32),
            var=jax.random.uniform(kv, (cout,), jnp.float32, 0.5, 1.5),
        ))

    outs = fusion_mix_forward(xs, params, compute_dtype=compute_dtype)
    outs = jax.block_until_ready(outs)

    for x, p, out, (cin, cout, h, w) in zip(xs, params, outs, layer_cfg):
        assert out.shape == (N, cout, h, w)
        # Tight check against an f32 reference on the same bf16-rounded operands.
        ref_q = reference_folded(x, p, compute_dtype=compute_dtype)
        assert jnp.allclose(out, ref_q, atol=2e-3, rtol=2e-3), \
            "kernel mismatch vs folded reference"
        # Loose check against the pure-f32 conv+BN (guards the BN folding).
        ref_f = reference_full(x, p)
        assert jnp.allclose(out, ref_f, atol=8e-2, rtol=5e-2), \
            "kernel mismatch vs full-precision reference"

    print("KERNEL_OK")
</pallas_src>

<mosaic_0001>
module attributes {stable_mosaic.version = 11 : i64} {
  func.func @_conv3x3_bn_kernel(%arg0: i32, %arg1: i32, %arg2: i32, %arg3: memref<1x18x18x320xbf16, #tpu.memory_space<vmem>>, %arg4: memref<9x320x64xbf16, #tpu.memory_space<vmem>>, %arg5: memref<1x64xf32, #tpu.memory_space<vmem>>, %arg6: memref<1x16x16x64xf32, #tpu.memory_space<vmem>>, %arg7: memref<256x64xf32, #tpu.memory_space<vmem>>) attributes {dimension_semantics = [#tpu.dimension_semantics<parallel>, #tpu.dimension_semantics<parallel>, #tpu.dimension_semantics<arbitrary>], iteration_bounds = array<i64: 2, 1, 1>, scalar_prefetch = 0 : i64, scratch_operands = 1 : i64, tpu.core_type = #tpu.core_type<tc>, window_params = [{transform_indices = @transform_0, window_bounds = array<i64: 1, 18, 18, 320>}, {transform_indices = @transform_1, window_bounds = array<i64: 9, 320, 64>}, {transform_indices = @transform_2, window_bounds = array<i64: 1, 64>}, {transform_indices = @transform_3, window_bounds = array<i64: 1, 16, 16, 64>}]} {
    %c0_i32 = arith.constant 0 : i32
    %0 = arith.cmpi eq, %arg2, %c0_i32 : i32
    %1 = arith.extui %0 : i1 to i32
    %c0_i32_0 = arith.constant 0 : i32
    %2 = arith.cmpi ne, %1, %c0_i32_0 : i32
    scf.if %2 {
      %c0_69 = arith.constant 0 : index
      %c0_70 = arith.constant 0 : index
      %71 = vector.load %arg5[%c0_69, %c0_70] : memref<1x64xf32, #tpu.memory_space<vmem>>, vector<1x64xf32>
      %72 = vector.shape_cast %71 : vector<1x64xf32> to vector<1x64xf32>
      %73 = vector.broadcast %72 : vector<1x64xf32> to vector<256x64xf32>
      %c0_71 = arith.constant 0 : index
      %c0_72 = arith.constant 0 : index
      %74 = vector.load %arg7[%c0_71, %c0_72] : memref<256x64xf32, #tpu.memory_space<vmem>>, vector<256x64xf32>
      tpu.vector_store %arg7[%c0_71, %c0_72], %73 {strides = array<i32>} : memref<256x64xf32, #tpu.memory_space<vmem>>, vector<256x64xf32>,
    } else {
    }
    %c0 = arith.constant 0 : index
    %c0_1 = arith.constant 0 : index
    %3 = vector.load %arg7[%c0, %c0_1] : memref<256x64xf32, #tpu.memory_space<vmem>>, vector<256x64xf32>
    %c0_2 = arith.constant 0 : index
    %c0_3 = arith.constant 0 : index
    %c0_4 = arith.constant 0 : index
    %c0_5 = arith.constant 0 : index
    %4 = vector.load %arg3[%c0_2, %c0_3, %c0_4, %c0_5] : memref<1x18x18x320xbf16, #tpu.memory_space<vmem>>, vector<1x16x16x320xbf16>
    %5 = vector.shape_cast %4 : vector<1x16x16x320xbf16> to vector<16x16x320xbf16>
    %6 = vector.shape_cast %5 : vector<16x16x320xbf16> to vector<256x320xbf16>
    %c0_6 = arith.constant 0 : index
    %c0_7 = arith.constant 0 : index
    %c0_8 = arith.constant 0 : index
    %7 = vector.load %arg4[%c0_6, %c0_7, %c0_8] : memref<9x320x64xbf16, #tpu.memory_space<vmem>>, vector<1x320x64xbf16>
    %8 = vector.shape_cast %7 : vector<1x320x64xbf16> to vector<320x64xbf16>
    %cst = arith.constant dense<0.000000e+00> : vector<256x64xf32>
    %9 = tpu.matmul %6, %8, %cst {dimension_numbers = #tpu.dot_dimension_numbers<[1], [0], [0], [1], [0, 0, 1, 1], [], []>} : vector<256x320xbf16>, vector<320x64xbf16>, vector<256x64xf32> -> vector<256x64xf32>
    %10 = arith.addf %3, %9 : vector<256x64xf32>
    %c0_9 = arith.constant 0 : index
    %c0_10 = arith.constant 0 : index
    %c1 = arith.constant 1 : index
    %c0_11 = arith.constant 0 : index
    %11 = vector.load %arg3[%c0_9, %c0_10, %c1, %c0_11] : memref<1x18x18x320xbf16, #tpu.memory_space<vmem>>, vector<1x16x16x320xbf16>
    %12 = vector.shape_cast %11 : vector<1x16x16x320xbf16> to vector<16x16x320xbf16>
    %13 = vector.shape_cast %12 : vector<16x16x320xbf16> to vector<256x320xbf16>
    %c1_12 = arith.constant 1 : index
    %c0_13 = arith.constant 0 : index
    %c0_14 = arith.constant 0 : index
    %14 = vector.load %arg4[%c1_12, %c0_13, %c0_14] : memref<9x320x64xbf16, #tpu.memory_space<vmem>>, vector<1x320x64xbf16>
    %15 = vector.shape_cast %14 : vector<1x320x64xbf16> to vector<320x64xbf16>
    %cst_15 = arith.constant dense<0.000000e+00> : vector<256x64xf32>
    %16 = tpu.matmul %13, %15, %cst_15 {dimension_numbers = #tpu.dot_dimension_numbers<[1], [0], [0], [1], [0, 0, 1, 1], [], []>} : vector<256x320xbf16>, vector<320x64xbf16>, vector<256x64xf32> -> vector<256x64xf32>
    %17 = arith.addf %10, %16 : vector<256x64xf32>
    %c0_16 = arith.constant 0 : index
    %c0_17 = arith.constant 0 : index
    %c2 = arith.constant 2 : index
    %c0_18 = arith.constant 0 : index
    %18 = vector.load %arg3[%c0_16, %c0_17, %c2, %c0_18] : memref<1x18x18x320xbf16, #tpu.memory_space<vmem>>, vector<1x16x16x320xbf16>
    %19 = vector.shape_cast %18 : vector<1x16x16x320xbf16> to vector<16x16x320xbf16>
    %20 = vector.shape_cast %19 : vector<16x16x320xbf16> to vector<256x320xbf16>
    %c2_19 = arith.constant 2 : index
    %c0_20 = arith.constant 0 : index
    %c0_21 = arith.constant 0 : index
    %21 = vector.load %arg4[%c2_19, %c0_20, %c0_21] : memref<9x320x64xbf16, #tpu.memory_space<vmem>>, vector<1x320x64xbf16>
    %22 = vector.shape_cast %21 : vector<1x320x64xbf16> to vector<320x64xbf16>
    %cst_22 = arith.constant dense<0.000000e+00> : vector<256x64xf32>
    %23 = tpu.matmul %20, %22, %cst_22 {dimension_numbers = #tpu.dot_dimension_numbers<[1], [0], [0], [1], [0, 0, 1, 1], [], []>} : vector<256x320xbf16>, vector<320x64xbf16>, vector<256x64xf32> -> vector<256x64xf32>
    %24 = arith.addf %17, %23 : vector<256x64xf32>
    %c0_23 = arith.constant 0 : index
    %c1_24 = arith.constant 1 : index
    %c0_25 = arith.constant 0 : index
    %c0_26 = arith.constant 0 : index
    %25 = vector.load %arg3[%c0_23, %c1_24, %c0_25, %c0_26] : memref<1x18x18x320xbf16, #tpu.memory_space<vmem>>, vector<1x16x16x320xbf16>
    %26 = vector.shape_cast %25 : vector<1x16x16x320xbf16> to vector<16x16x320xbf16>
    %27 = vector.shape_cast %26 : vector<16x16x320xbf16> to vector<256x320xbf16>
    %c3 = arith.constant 3 : index
    %c0_27 = arith.constant 0 : index
    %c0_28 = arith.constant 0 : index
    %28 = vector.load %arg4[%c3, %c0_27, %c0_28] : memref<9x320x64xbf16, #tpu.memory_space<vmem>>, vector<1x320x64xbf16>
    %29 = vector.shape_cast %28 : vector<1x320x64xbf16> to vector<320x64xbf16>
    %cst_29 = arith.constant dense<0.000000e+00> : vector<256x64xf32>
    %30 = tpu.matmul %27, %29, %cst_29 {dimension_numbers = #tpu.dot_dimension_numbers<[1], [0], [0], [1], [0, 0, 1, 1], [], []>} : vector<256x320xbf16>, vector<320x64xbf16>, vector<256x64xf32> -> vector<256x64xf32>
    %31 = arith.addf %24, %30 : vector<256x64xf32>
    %c0_30 = arith.constant 0 : index
    %c1_31 = arith.constant 1 : index
    %c1_32 = arith.constant 1 : index
    %c0_33 = arith.constant 0 : index
    %32 = vector.load %arg3[%c0_30, %c1_31, %c1_32, %c0_33] : memref<1x18x18x320xbf16, #tpu.memory_space<vmem>>, vector<1x16x16x320xbf16>
    %33 = vector.shape_cast %32 : vector<1x16x16x320xbf16> to vector<16x16x320xbf16>
    %34 = vector.shape_cast %33 : vector<16x16x320xbf16> to vector<256x320xbf16>
    %c4 = arith.constant 4 : index
    %c0_34 = arith.constant 0 : index
    %c0_35 = arith.constant 0 : index
    %35 = vector.load %arg4[%c4, %c0_34, %c0_35] : memref<9x320x64xbf16, #tpu.memory_space<vmem>>, vector<1x320x64xbf16>
    %36 = vector.shape_cast %35 : vector<1x320x64xbf16> to vector<320x64xbf16>
    %cst_36 = arith.constant dense<0.000000e+00> : vector<256x64xf32>
    %37 = tpu.matmul %34, %36, %cst_36 {dimension_numbers = #tpu.dot_dimension_numbers<[1], [0], [0], [1], [0, 0, 1, 1], [], []>} : vector<256x320xbf16>, vector<320x64xbf16>, vector<256x64xf32> -> vector<256x64xf32>
    %38 = arith.addf %31, %37 : vector<256x64xf32>
    %c0_37 = arith.constant 0 : index
    %c1_38 = arith.constant 1 : index
    %c2_39 = arith.constant 2 : index
    %c0_40 = arith.constant 0 : index
    %39 = vector.load %arg3[%c0_37, %c1_38, %c2_39, %c0_40] : memref<1x18x18x320xbf16, #tpu.memory_space<vmem>>, vector<1x16x16x320xbf16>
    %40 = vector.shape_cast %39 : vector<1x16x16x320xbf16> to vector<16x16x320xbf16>
    %41 = vector.shape_cast %40 : vector<16x16x320xbf16> to vector<256x320xbf16>
    %c5 = arith.constant 5 : index
    %c0_41 = arith.constant 0 : index
    %c0_42 = arith.constant 0 : index
    %42 = vector.load %arg4[%c5, %c0_41, %c0_42] : memref<9x320x64xbf16, #tpu.memory_space<vmem>>, vector<1x320x64xbf16>
    %43 = vector.shape_cast %42 : vector<1x320x64xbf16> to vector<320x64xbf16>
    %cst_43 = arith.constant dense<0.000000e+00> : vector<256x64xf32>
    %44 = tpu.matmul %41, %43, %cst_43 {dimension_numbers = #tpu.dot_dimension_numbers<[1], [0], [0], [1], [0, 0, 1, 1], [], []>} : vector<256x320xbf16>, vector<320x64xbf16>, vector<256x64xf32> -> vector<256x64xf32>
    %45 = arith.addf %38, %44 : vector<256x64xf32>
    %c0_44 = arith.constant 0 : index
    %c2_45 = arith.constant 2 : index
    %c0_46 = arith.constant 0 : index
    %c0_47 = arith.constant 0 : index
    %46 = vector.load %arg3[%c0_44, %c2_45, %c0_46, %c0_47] : memref<1x18x18x320xbf16, #tpu.memory_space<vmem>>, vector<1x16x16x320xbf16>
    %47 = vector.shape_cast %46 : vector<1x16x16x320xbf16> to vector<16x16x320xbf16>
    %48 = vector.shape_cast %47 : vector<16x16x320xbf16> to vector<256x320xbf16>
    %c6 = arith.constant 6 : index
    %c0_48 = arith.constant 0 : index
    %c0_49 = arith.constant 0 : index
    %49 = vector.load %arg4[%c6, %c0_48, %c0_49] : memref<9x320x64xbf16, #tpu.memory_space<vmem>>, vector<1x320x64xbf16>
    %50 = vector.shape_cast %49 : vector<1x320x64xbf16> to vector<320x64xbf16>
    %cst_50 = arith.constant dense<0.000000e+00> : vector<256x64xf32>
    %51 = tpu.matmul %48, %50, %cst_50 {dimension_numbers = #tpu.dot_dimension_numbers<[1], [0], [0], [1], [0, 0, 1, 1], [], []>} : vector<256x320xbf16>, vector<320x64xbf16>, vector<256x64xf32> -> vector<256x64xf32>
    %52 = arith.addf %45, %51 : vector<256x64xf32>
    %c0_51 = arith.constant 0 : index
    %c2_52 = arith.constant 2 : index
    %c1_53 = arith.constant 1 : index
    %c0_54 = arith.constant 0 : index
    %53 = vector.load %arg3[%c0_51, %c2_52, %c1_53, %c0_54] : memref<1x18x18x320xbf16, #tpu.memory_space<vmem>>, vector<1x16x16x320xbf16>
    %54 = vector.shape_cast %53 : vector<1x16x16x320xbf16> to vector<16x16x320xbf16>
    %55 = vector.shape_cast %54 : vector<16x16x320xbf16> to vector<256x320xbf16>
    %c7 = arith.constant 7 : index
    %c0_55 = arith.constant 0 : index
    %c0_56 = arith.constant 0 : index
    %56 = vector.load %arg4[%c7, %c0_55, %c0_56] : memref<9x320x64xbf16, #tpu.memory_space<vmem>>, vector<1x320x64xbf16>
    %57 = vector.shape_cast %56 : vector<1x320x64xbf16> to vector<320x64xbf16>
    %cst_57 = arith.constant dense<0.000000e+00> : vector<256x64xf32>
    %58 = tpu.matmul %55, %57, %cst_57 {dimension_numbers = #tpu.dot_dimension_numbers<[1], [0], [0], [1], [0, 0, 1, 1], [], []>} : vector<256x320xbf16>, vector<320x64xbf16>, vector<256x64xf32> -> vector<256x64xf32>
    %59 = arith.addf %52, %58 : vector<256x64xf32>
    %c0_58 = arith.constant 0 : index
    %c2_59 = arith.constant 2 : index
    %c2_60 = arith.constant 2 : index
    %c0_61 = arith.constant 0 : index
    %60 = vector.load %arg3[%c0_58, %c2_59, %c2_60, %c0_61] : memref<1x18x18x320xbf16, #tpu.memory_space<vmem>>, vector<1x16x16x320xbf16>
    %61 = vector.shape_cast %60 : vector<1x16x16x320xbf16> to vector<16x16x320xbf16>
    %62 = vector.shape_cast %61 : vector<16x16x320xbf16> to vector<256x320xbf16>
    %c8 = arith.constant 8 : index
    %c0_62 = arith.constant 0 : index
    %c0_63 = arith.constant 0 : index
    %63 = vector.load %arg4[%c8, %c0_62, %c0_63] : memref<9x320x64xbf16, #tpu.memory_space<vmem>>, vector<1x320x64xbf16>
    %64 = vector.shape_cast %63 : vector<1x320x64xbf16> to vector<320x64xbf16>
    %cst_64 = arith.constant dense<0.000000e+00> : vector<256x64xf32>
    %65 = tpu.matmul %62, %64, %cst_64 {dimension_numbers = #tpu.dot_dimension_numbers<[1], [0], [0], [1], [0, 0, 1, 1], [], []>} : vector<256x320xbf16>, vector<320x64xbf16>, vector<256x64xf32> -> vector<256x64xf32>
    %66 = arith.addf %59, %65 : vector<256x64xf32>
    %c0_65 = arith.constant 0 : index
    %c0_66 = arith.constant 0 : index
    %67 = vector.load %arg7[%c0_65, %c0_66] : memref<256x64xf32, #tpu.memory_space<vmem>>, vector<256x64xf32>
    tpu.vector_store %arg7[%c0_65, %c0_66], %66 {strides = array<i32>} : memref<256x64xf32, #tpu.memory_space<vmem>>, vector<256x64xf32>,
    %c0_i32_67 = arith.constant 0 : i32
    %68 = arith.cmpi eq, %arg2, %c0_i32_67 : i32
    %69 = arith.extui %68 : i1 to i32
    %c0_i32_68 = arith.constant 0 : i32
    %70 = arith.cmpi ne, %69, %c0_i32_68 : i32
    scf.if %70 {
      %c0_69 = arith.constant 0 : index
      %c0_70 = arith.constant 0 : index
      %71 = vector.load %arg7[%c0_69, %c0_70] : memref<256x64xf32, #tpu.memory_space<vmem>>, vector<256x64xf32>
      %72 = vector.shape_cast %71 : vector<256x64xf32> to vector<16x16x64xf32>
      %c0_71 = arith.constant 0 : index
      %c0_72 = arith.constant 0 : index
      %c0_73 = arith.constant 0 : index
      %c0_74 = arith.constant 0 : index
      %73 = vector.load %arg6[%c0_71, %c0_72, %c0_73, %c0_74] : memref<1x16x16x64xf32, #tpu.memory_space<vmem>>, vector<1x16x16x64xf32>
      %74 = vector.shape_cast %73 : vector<1x16x16x64xf32> to vector<16x16x64xf32>
      %75 = vector.shape_cast %72 : vector<16x16x64xf32> to vector<1x16x16x64xf32>
      tpu.vector_store %arg6[%c0_71, %c0_72, %c0_73, %c0_74], %75 {strides = array<i32>} : memref<1x16x16x64xf32, #tpu.memory_space<vmem>>, vector<1x16x16x64xf32>,
    } else {
    }
    return
  }
  func.func @transform_0(%arg0: i32, %arg1: i32, %arg2: i32) -> (i32, i32, i32, i32) {
    %c0_i32 = arith.constant 0 : i32
    %c0_i32_0 = arith.constant 0 : i32
    %c0_i32_1 = arith.constant 0 : i32
    return %arg0, %c0_i32, %c0_i32_0, %arg2 : i32, i32, i32, i32
  }
  func.func @transform_1(%arg0: i32, %arg1: i32, %arg2: i32) -> (i32, i32, i32) {
    %c0_i32 = arith.constant 0 : i32
    %c0_i32_0 = arith.constant 0 : i32
    return %c0_i32, %arg2, %arg1 : i32, i32, i32
  }
  func.func @transform_2(%arg0: i32, %arg1: i32, %arg2: i32) -> (i32, i32) {
    %c0_i32 = arith.constant 0 : i32
    %c0_i32_0 = arith.constant 0 : i32
    return %c0_i32, %arg1 : i32, i32
  }
  func.func @transform_3(%arg0: i32, %arg1: i32, %arg2: i32) -> (i32, i32, i32, i32) {
    %c0_i32 = arith.constant 0 : i32
    %c0_i32_0 = arith.constant 0 : i32
    %c0_i32_1 = arith.constant 0 : i32
    return %arg0, %c0_i32, %c0_i32_0, %arg1 : i32, i32, i32, i32
  }
}

</mosaic_0001>

<llo_original>
// kernel: tpu_custom_call.1
$region0: #{tpu_custom_call.1}
  #allocation0 [shape = 'u32[]', space=smem, size = 0x4, offset = 0x4, fixed_abs, tag = 'smem constant byte address 0x4 - core index']
  #allocation1 [shape = 'u32[144,128]{1,0:T(1,128)}', space=vmem, size = 0x12000, scoped, tag = 'internal scratch']
  #allocation2 [shape = 'f32[256,64]{1,0:T(8,128)}', space=vmem, size = 0x20000, scoped, tag = 'scratch operand']
  %s0 = inlined_call_operand.vmem [shape: bf16[2,18,18,320], index: 0, kind: input, shape index: {}]
  %s1 = inlined_call_operand.vmem [shape: bf16[9,320,64], index: 1, kind: input, shape index: {}]
  %s2 = inlined_call_operand.vmem [shape: f32[1,64], index: 2, kind: input, shape index: {}]
  %s3 = inlined_call_operand.hbm [shape: f32[2,16,16,64], index: 3, kind: output, shape index: {}]
  %s4 = sld [smem:[#allocation0]]
  $region53: #{tpu_custom_call.1} parent=0
    _
  %s6 = ssub.s32 1, %s4
  %s7 = scalar_select 0, %s6, %s4
  $region1: #{tpu_custom_call.1} parent=0
    #allocation3 [shape = 'u8[262144]{0}', space=vmem, size = 0x40000, scoped, tag = 'output window, operand 0']
    #allocation4 [shape = 's32[2]{0}', space=sflag, size = 0x8, scoped, tag = 'scoped memory for tpu_custom_call.1']
    %8 = vsyncpa [#allocation4], 0
    %s9 = scalar_lea.sflag [#allocation4], 1
    %10 = vsyncpa %s9, 0
    loop: start=0, step=1, limit=4
    $region2: #{tpu_custom_call.1} parent=1 // loop_pre_header
      _
    $region3: #{tpu_custom_call.1} parent=1 // loop_header
      %s12 = sphi 0, %s16
      %p13 = scmp.ge.s32.totalorder %s12, 4
      %s19 = sphi 0, %s38
      %s20 = sphi 0, %s34
      %s21 = sphi 0, %s30
      %s22 = sphi 0, %s19
      %s23 = sphi 0, %s20
      %s24 = sphi 0, %s21
      %s25 = sphi 0, %s22
      %s26 = sphi 0, %s23
      %s27 = sphi 0, %s24
      %s43 = sphi 0, %s45
      %s46 = sphi 0, %s43
      %s47 = sphi 0, %s46
      %s63 = sphi 0, %s47
      %s71 = sphi 0, %s73
      %s74 = sphi 0, %s71
      %s75 = sphi 0, %s74
      %s91 = sphi 0, %s75
      %s97 = sphi 0, %s99
      %s100 = sphi 0, %s97
      %s101 = sphi 0, %s100
      %s117 = sphi 0, %s101
      %s125 = sphi 0, %s127
      %s128 = sphi 0, %s125
      %s129 = sphi 0, %s128
      %s145 = sphi 0, %s129
    $region4: #{tpu_custom_call.1} parent=1 // loop_header_branch
      %15 = sbr.rel (%p13) target = $region8
    $region5: #{tpu_custom_call.1} parent=1 // loop_body
      %s17 = ssub.s32 %s12, 1
      %s18 = ssub.s32 %s12, 2
      %s28 = sadd.s32 1, %s21
      %p29 = scmp.ge.s32.totalorder %s28, 1
      %s30 = scalar_select %p29, 0, %s28
      %s31 = sadd.s32 1, %s20
      %s32 = scalar_select %p29, %s31, %s20
      %p33 = scmp.ge.s32.totalorder %s32, 1
      %s34 = scalar_select %p33, 0, %s32
      %s35 = sadd.s32 1, %s19
      %s36 = scalar_select %p33, %s35, %s19
      %p37 = scmp.ge.s32.totalorder %s36, 2
      %s38 = scalar_select %p37, 0, %s36
      %s39 = ssub.s32 %s19, %s38
      %s40 = ssub.s32 %s21, %s30
      %s41 = sor.u32 %s39, %s40
      %p42 = scmp.eq.s32.totalorder %s41, 0
      %s44 = sadd.s32 %s43, 1
      %s45 = scalar_select %p42, %s43, %s44
      %p48 = pneg %p42
      %p49 = scmp.eq.s32.totalorder %s12, 1
      %p50 = por %p48, %p49
      %p51 = scmp.ne.s32.totalorder %s43, %s46
      %p52 = scmp.eq.s32.totalorder %s12, 0
      %p53 = por %p51, %p52
      %p54 = scmp.ne.s32.totalorder %s43, %s46
      %p55 = scmp.eq.s32.totalorder %s17, 1
      %p56 = por %p54, %p55
      %p57 = scmp.ne.s32.totalorder %s46, %s47
      %p58 = scmp.eq.s32.totalorder %s17, 0
      %p59 = por %p57, %p58
      %p60 = scmp.ne.s32.totalorder %s46, %s47
      %p61 = scmp.eq.s32.totalorder %s18, 1
      %p62 = por %p60, %p61
      %p64 = scmp.ne.s32.totalorder %s47, %s63
      %p65 = scmp.eq.s32.totalorder %s18, 0
      %p66 = por %p64, %p65
      %s67 = ssub.s32 %s21, %s30
      %s68 = ssub.s32 %s20, %s34
      %s69 = sor.u32 %s67, %s68
      %p70 = scmp.eq.s32.totalorder %s69, 0
      %s72 = sadd.s32 %s71, 1
      %s73 = scalar_select %p70, %s71, %s72
      %p76 = pneg %p70
      %p77 = scmp.eq.s32.totalorder %s12, 1
      %p78 = por %p76, %p77
      %p79 = scmp.ne.s32.totalorder %s71, %s74
      %p80 = scmp.eq.s32.totalorder %s12, 0
      %p81 = por %p79, %p80
      %p82 = scmp.ne.s32.totalorder %s71, %s74
      %p83 = scmp.eq.s32.totalorder %s17, 1
      %p84 = por %p82, %p83
      %p85 = scmp.ne.s32.totalorder %s74, %s75
      %p86 = scmp.eq.s32.totalorder %s17, 0
      %p87 = por %p85, %p86
      %p88 = scmp.ne.s32.totalorder %s74, %s75
      %p89 = scmp.eq.s32.totalorder %s18, 1
      %p90 = por %p88, %p89
      %p92 = scmp.ne.s32.totalorder %s75, %s91
      %p93 = scmp.eq.s32.totalorder %s18, 0
      %p94 = por %p92, %p93
      %s95 = ssub.s32 %s20, %s34
      %p96 = scmp.eq.s32.totalorder %s95, 0
      %s98 = sadd.s32 %s97, 1
      %s99 = scalar_select %p96, %s97, %s98
      %p102 = pneg %p96
      %p103 = scmp.eq.s32.totalorder %s12, 1
      %p104 = por %p102, %p103
      %p105 = scmp.ne.s32.totalorder %s97, %s100
      %p106 = scmp.eq.s32.totalorder %s12, 0
      %p107 = por %p105, %p106
      %p108 = scmp.ne.s32.totalorder %s97, %s100
      %p109 = scmp.eq.s32.totalorder %s17, 1
      %p110 = por %p108, %p109
      %p111 = scmp.ne.s32.totalorder %s100, %s101
      %p112 = scmp.eq.s32.totalorder %s17, 0
      %p113 = por %p111, %p112
      %p114 = scmp.ne.s32.totalorder %s100, %s101
      %p115 = scmp.eq.s32.totalorder %s18, 1
      %p116 = por %p114, %p115
      %p118 = scmp.ne.s32.totalorder %s101, %s117
      %p119 = scmp.eq.s32.totalorder %s18, 0
      %p120 = por %p118, %p119
      %s121 = ssub.s32 %s19, %s38
      %s122 = ssub.s32 %s20, %s34
      %s123 = sor.u32 %s121, %s122
      %p124 = scmp.eq.s32.totalorder %s123, 0
      %s126 = sadd.s32 %s125, 1
      %s127 = scalar_select %p124, %s125, %s126
      %p130 = pneg %p124
      %p131 = scmp.eq.s32.totalorder %s12, 1
      %p132 = por %p130, %p131
      %p133 = scmp.ne.s32.totalorder %s125, %s128
      %p134 = scmp.eq.s32.totalorder %s12, 0
      %p135 = por %p133, %p134
      %p136 = scmp.ne.s32.totalorder %s125, %s128
      %p137 = scmp.eq.s32.totalorder %s17, 1
      %p138 = por %p136, %p137
      %p139 = scmp.ne.s32.totalorder %s128, %s129
      %p140 = scmp.eq.s32.totalorder %s17, 0
      %p141 = por %p139, %p140
      %p142 = scmp.ne.s32.totalorder %s128, %s129
      %p143 = scmp.eq.s32.totalorder %s18, 1
      %p144 = por %p142, %p143
      %p146 = scmp.ne.s32.totalorder %s129, %s145
      %p147 = scmp.eq.s32.totalorder %s18, 0
      %p148 = por %p146, %p147
      %p149 = scmp.le.s32.totalorder 1, %s12
      %p150 = scmp.lt.s32.totalorder %s12, 3
      %p151 = pnand %p149, %p150
      %p152 = pneg %p151
      // Predicated region
      $region9: #{tpu_custom_call.1} parent=5 // pred_check
        _
      $region10: #{tpu_custom_call.1} parent=5 // pred_check_branch
        %154 = sbr.rel (%p151) target = $region12
      $region11: #{tpu_custom_call.1} parent=5 // pred_region
        %s155 = ssub.s32 %s12, 1
        // Predicated region
        $region13: #{tpu_custom_call.1} parent=11 // pred_check
          %p156 = pneg %p87
        $region14: #{tpu_custom_call.1} parent=11 // pred_check_branch
          %158 = sbr.rel (%p156) target = $region16
        $region15: #{tpu_custom_call.1} parent=11 // pred_region
          %s159 = smul.u32 40, %s24
          %p160 = scmp.lt.s32.totalorder %s159, 39
          %s161 = scalar_select %p160, %s159, 39
          %p162 = scmp.lt.s32.totalorder %s23, 0
          %s163 = scalar_select %p162, %s23, 0
          %s164 = sadd.s32 %s163, %s161
          %s165 = smul.addr %s164, 4
          %s166 = scalar_lea.vmem %s1, %s165
          %s167 = smul.u32 40, %s24
        $region16: #{tpu_custom_call.1} parent=11 // pred_fallthru
          _
        // Predicated region
        $region17: #{tpu_custom_call.1} parent=11 // pred_check
          %p168 = pneg %p113
        $region18: #{tpu_custom_call.1} parent=11 // pred_check_branch
          %170 = sbr.rel (%p168) target = $region20
        $region19: #{tpu_custom_call.1} parent=11 // pred_region
          %p171 = scmp.lt.s32.totalorder %s23, 0
          %s172 = scalar_select %p171, %s23, 0
          %s173 = scalar_lea.vmem %s2, %s172
        $region20: #{tpu_custom_call.1} parent=11 // pred_fallthru
          _
      $region12: #{tpu_custom_call.1} parent=5 // pred_fallthru
        _
      %p174 = scmp.lt.s32.totalorder %s12, 2
      // Predicated region
      $region21: #{tpu_custom_call.1} parent=5 // pred_check
        %p175 = pneg %p174
      $region22: #{tpu_custom_call.1} parent=5 // pred_check_branch
        %177 = sbr.rel (%p175) target = $region24
      $region23: #{tpu_custom_call.1} parent=5 // pred_region
        // Predicated region
        $region25: #{tpu_custom_call.1} parent=23 // pred_check
          %p178 = pneg %p53
        $region26: #{tpu_custom_call.1} parent=23 // pred_check_branch
          %180 = sbr.rel (%p178) target = $region28
        $region27: #{tpu_custom_call.1} parent=23 // pred_region
          %s181 = smul.u32 3, %s21
          %p182 = scmp.lt.s32.totalorder %s19, 1
          %s183 = scalar_select %p182, %s19, 1
          %p184 = scmp.lt.s32.totalorder %s181, 2
          %s185 = scalar_select %p184, %s181, 2
          %s186 = smul.addr %s183, 162
          %s187 = sadd.s32 %s185, %s186
          %s188 = smul.addr %s187, 4
          %s189 = scalar_lea.vmem %s0, %s188
          %s190 = smul.u32 3, %s21
        $region28: #{tpu_custom_call.1} parent=23 // pred_fallthru
          _
      $region24: #{tpu_custom_call.1} parent=5 // pred_fallthru
        _
      %p191 = scmp.le.s32.totalorder 1, %s12
      %p192 = scmp.lt.s32.totalorder %s12, 3
      %p193 = pnand %p191, %p192
      %p194 = pneg %p193
      // Predicated region
      $region29: #{tpu_custom_call.1} parent=5 // pred_check
        _
      $region30: #{tpu_custom_call.1} parent=5 // pred_check_branch
        %196 = sbr.rel (%p193) target = $region32
      $region31: #{tpu_custom_call.1} parent=5 // pred_region
        %s197 = ssub.s32 %s12, 1
        %s198 = smul.u32 3, %s24
        %p199 = scmp.lt.s32.totalorder %s22, 1
        %s200 = scalar_select %p199, %s22, 1
        %p201 = scmp.lt.s32.totalorder %s198, 2
        %s202 = scalar_select %p201, %s198, 2
        %s203 = smul.addr %s200, 162
        %s204 = sadd.s32 %s202, %s203
        %s205 = smul.addr %s204, 4
        %s206 = scalar_lea.vmem %s0, %s205
        %p207 = pneg %p59
        %p208 = pneg %p56
        %s209 = smul.u32 40, %s24
        %p210 = scmp.lt.s32.totalorder %s209, 39
        %s211 = scalar_select %p210, %s209, 39
        %p212 = scmp.lt.s32.totalorder %s23, 0
        %s213 = scalar_select %p212, %s23, 0
        %s214 = sadd.s32 %s213, %s211
        %s215 = smul.addr %s214, 4
        %s216 = scalar_lea.vmem %s1, %s215
        %p217 = pneg %p87
        %p218 = pneg %p84
        %p219 = scmp.lt.s32.totalorder %s23, 0
        %s220 = scalar_select %p219, %s23, 0
        %s221 = scalar_lea.vmem %s2, %s220
        %p222 = pneg %p113
        %p223 = pneg %p110
        %p224 = pneg %p141
        %p225 = pneg %p138
        %s226 = sand.u32 %s128, 1
        %s227 = scalar_lea.sflag [#allocation4], %s226
        %s228 = sand.u32 %s128, 1
        %s229 = smul.addr %s228, 256
        %s230 = scalar_lea.vmem [#allocation3], %s229
        %s231 = smul.u32 3, %s24
        %p232 = scmp.lt.s32.totalorder %s22, 1
        %s233 = scalar_select %p232, %s22, 1
        %p234 = scmp.lt.s32.totalorder %s231, 2
        %s235 = scalar_select %p234, %s231, 2
        %s236 = smul.addr %s233, 162
        %s237 = sadd.s32 %s235, %s236
        %s238 = smul.addr %s237, 4
        %s239 = scalar_lea.vmem %s0, %s238
        %s240 = smul.u32 3, %s24
        %s241 = smul.u32 40, %s24
        %p242 = scmp.lt.s32.totalorder %s241, 39
        %s243 = scalar_select %p242, %s241, 39
        %p244 = scmp.lt.s32.totalorder %s23, 0
        %s245 = scalar_select %p244, %s23, 0
        %s246 = sadd.s32 %s245, %s243
        %s247 = smul.addr %s246, 4
        %s248 = scalar_lea.vmem %s1, %s247
        %s249 = smul.u32 40, %s24
        %p250 = scmp.lt.s32.totalorder %s23, 0
        %s251 = scalar_select %p250, %s23, 0
        %s252 = scalar_lea.vmem %s2, %s251
        %p254 = scmp.eq.s32.totalorder %s24, 0
        // Predicated region
        $region33: #{tpu_custom_call.1} parent=31 // pred_check
          %p255 = pneg %p254
        $region34: #{tpu_custom_call.1} parent=31 // pred_check_branch
          %257 = sbr.rel (%p255) target = $region36
        $region35: #{tpu_custom_call.1} parent=31 // pred_region
          %v258 = vld [vmem:[%s252] sm:$0x1]
          %v260 = vlaneseq
          %v261 = vshrl.u32 %v260, 7
          %v262 = vsub.s32 0, %v261
          %v263 = vrot.slane %v258, %v262
          %vm265 = vcmask 523264
          %266 = vst.msk [vmem:[#allocation2] sm:$0xff] %vm265, %v263
          %267 = vst.msk [vmem:[#allocation2 + $0x8] sm:$0xff] %vm265, %v263
          %268 = vst.msk [vmem:[#allocation2 + $0x10] sm:$0xff] %vm265, %v263
          %269 = vst.msk [vmem:[#allocation2 + $0x18] sm:$0xff] %vm265, %v263
          %270 = vst.msk [vmem:[#allocation2 + $0x20] sm:$0xff] %vm265, %v263
          %271 = vst.msk [vmem:[#allocation2 + $0x28] sm:$0xff] %vm265, %v263
          %272 = vst.msk [vmem:[#allocation2 + $0x30] sm:$0xff] %vm265, %v263
          %273 = vst.msk [vmem:[#allocation2 + $0x38] sm:$0xff] %vm265, %v263
          %274 = vst.msk [vmem:[#allocation2 + $0x40] sm:$0xff] %vm265, %v263
          %275 = vst.msk [vmem:[#allocation2 + $0x48] sm:$0xff] %vm265, %v263
          %276 = vst.msk [vmem:[#allocation2 + $0x50] sm:$0xff] %vm265, %v263
          %277 = vst.msk [vmem:[#allocation2 + $0x58] sm:$0xff] %vm265, %v263
          %278 = vst.msk [vmem:[#allocation2 + $0x60] sm:$0xff] %vm265, %v263
          %279 = vst.msk [vmem:[#allocation2 + $0x68] sm:$0xff] %vm265, %v263
          %280 = vst.msk [vmem:[#allocation2 + $0x70] sm:$0xff] %vm265, %v263
          %281 = vst.msk [vmem:[#allocation2 + $0x78] sm:$0xff] %vm265, %v263
          %282 = vst.msk [vmem:[#allocation2 + $0x80] sm:$0xff] %vm265, %v263
          %283 = vst.msk [vmem:[#allocation2 + $0x88] sm:$0xff] %vm265, %v263
          %284 = vst.msk [vmem:[#allocation2 + $0x90] sm:$0xff] %vm265, %v263
          %285 = vst.msk [vmem:[#allocation2 + $0x98] sm:$0xff] %vm265, %v263
          %286 = vst.msk [vmem:[#allocation2 + $0xa0] sm:$0xff] %vm265, %v263
          %287 = vst.msk [vmem:[#allocation2 + $0xa8] sm:$0xff] %vm265, %v263
          %288 = vst.msk [vmem:[#allocation2 + $0xb0] sm:$0xff] %vm265, %v263
          %289 = vst.msk [vmem:[#allocation2 + $0xb8] sm:$0xff] %vm265, %v263
          %290 = vst.msk [vmem:[#allocation2 + $0xc0] sm:$0xff] %vm265, %v263
          %291 = vst.msk [vmem:[#allocation2 + $0xc8] sm:$0xff] %vm265, %v263
          %292 = vst.msk [vmem:[#allocation2 + $0xd0] sm:$0xff] %vm265, %v263
          %293 = vst.msk [vmem:[#allocation2 + $0xd8] sm:$0xff] %vm265, %v263
          %294 = vst.msk [vmem:[#allocation2 + $0xe0] sm:$0xff] %vm265, %v263
          %295 = vst.msk [vmem:[#allocation2 + $0xe8] sm:$0xff] %vm265, %v263
          %296 = vst.msk [vmem:[#allocation2 + $0xf0] sm:$0xff] %vm265, %v263
          %297 = vst.msk [vmem:[#allocation2 + $0xf8] sm:$0xff] %vm265, %v263
        $region36: #{tpu_custom_call.1} parent=31 // pred_fallthru
          _
        %v298 = vld [vmem:[#allocation2] sm:$0xff]
        %v299 = vld [vmem:[#allocation2 + $0x8] sm:$0xff]
        %v300 = vld [vmem:[#allocation2 + $0x10] sm:$0xff]
        %v301 = vld [vmem:[#allocation2 + $0x18] sm:$0xff]
        %v302 = vld [vmem:[#allocation2 + $0x20] sm:$0xff]
        %v303 = vld [vmem:[#allocation2 + $0x28] sm:$0xff]
        %v304 = vld [vmem:[#allocation2 + $0x30] sm:$0xff]
        %v305 = vld [vmem:[#allocation2 + $0x38] sm:$0xff]
        %v306 = vld [vmem:[#allocation2 + $0x40] sm:$0xff]
        %v307 = vld [vmem:[#allocation2 + $0x48] sm:$0xff]
        %v308 = vld [vmem:[#allocation2 + $0x50] sm:$0xff]
        %v309 = vld [vmem:[#allocation2 + $0x58] sm:$0xff]
        %v310 = vld [vmem:[#allocation2 + $0x60] sm:$0xff]
        %v311 = vld [vmem:[#allocation2 + $0x68] sm:$0xff]
        %v312 = vld [vmem:[#allocation2 + $0x70] sm:$0xff]
        %v313 = vld [vmem:[#allocation2 + $0x78] sm:$0xff]
        %v314 = vld [vmem:[#allocation2 + $0x80] sm:$0xff]
        %v315 = vld [vmem:[#allocation2 + $0x88] sm:$0xff]
        %v316 = vld [vmem:[#allocation2 + $0x90] sm:$0xff]
        %v317 = vld [vmem:[#allocation2 + $0x98] sm:$0xff]
        %v318 = vld [vmem:[#allocation2 + $0xa0] sm:$0xff]
        %v319 = vld [vmem:[#allocation2 + $0xa8] sm:$0xff]
        %v320 = vld [vmem:[#allocation2 + $0xb0] sm:$0xff]
        %v321 = vld [vmem:[#allocation2 + $0xb8] sm:$0xff]
        %v322 = vld [vmem:[#allocation2 + $0xc0] sm:$0xff]
        %v323 = vld [vmem:[#allocation2 + $0xc8] sm:$0xff]
        %v324 = vld [vmem:[#allocation2 + $0xd0] sm:$0xff]
        %v325 = vld [vmem:[#allocation2 + $0xd8] sm:$0xff]
        %v326 = vld [vmem:[#allocation2 + $0xe0] sm:$0xff]
        %v327 = vld [vmem:[#allocation2 + $0xe8] sm:$0xff]
        %v328 = vld [vmem:[#allocation2 + $0xf0] sm:$0xff]
        %v329 = vld [vmem:[#allocation2 + $0xf8] sm:$0xff]
        %v330 = vld [vmem:[%s239] sm:$0xff]
        %v331 = vld [vmem:[%s239 + $0x8] sm:$0xf]
        %v332 = vld [vmem:[%s239 + $0xc] sm:$0xff]
        %v333 = vld [vmem:[%s239 + $0x14] sm:$0xf]
        %v334 = vld [vmem:[%s239 + $0x24] sm:$0xff]
        %v335 = vld [vmem:[%s239 + $0x2c] sm:$0xf]
        %v336 = vld [vmem:[%s239 + $0x30] sm:$0xff]
        %v337 = vld [vmem:[%s239 + $0x38] sm:$0xf]
        %v338 = vld [vmem:[%s239 + $0x48] sm:$0xff]
        %v339 = vld [vmem:[%s239 + $0x50] sm:$0xf]
        %v340 = vld [vmem:[%s239 + $0x54] sm:$0xff]
        %v341 = vld [vmem:[%s239 + $0x5c] sm:$0xf]
        %v342 = vld [vmem:[%s239 + $0x6c] sm:$0xff]
        %v343 = vld [vmem:[%s239 + $0x74] sm:$0xf]
        %v344 = vld [vmem:[%s239 + $0x78] sm:$0xff]
        %v345 = vld [vmem:[%s239 + $0x80] sm:$0xf]
        %v346 = vld [vmem:[%s239 + $0x90] sm:$0xff]
        %v347 = vld [vmem:[%s239 + $0x98] sm:$0xf]
        %v348 = vld [vmem:[%s239 + $0x9c] sm:$0xff]
        %v349 = vld [vmem:[%s239 + $0xa4] sm:$0xf]
        %v350 = vld [vmem:[%s239 + $0xb4] sm:$0xff]
        %v351 = vld [vmem:[%s239 + $0xbc] sm:$0xf]
        %v352 = vld [vmem:[%s239 + $0xc0] sm:$0xff]
        %v353 = vld [vmem:[%s239 + $0xc8] sm:$0xf]
        %v354 = vld [vmem:[%s239 + $0xd8] sm:$0xff]
        %v355 = vld [vmem:[%s239 + $0xe0] sm:$0xf]
        %v356 = vld [vmem:[%s239 + $0xe4] sm:$0xff]
        %v357 = vld [vmem:[%s239 + $0xec] sm:$0xf]
        %v358 = vld [vmem:[%s239 + $0xfc] sm:$0xff]
        %v359 = vld [vmem:[%s239 + $0x104] sm:$0xf]
        %v360 = vld [vmem:[%s239 + $0x108] sm:$0xff]
        %v361 = vld [vmem:[%s239 + $0x110] sm:$0xf]
        %v362 = vld [vmem:[%s239 + $0x120] sm:$0xff]
        %v363 = vld [vmem:[%s239 + $0x128] sm:$0xf]
        %v364 = vld [vmem:[%s239 + $0x12c] sm:$0xff]
        %v365 = vld [vmem:[%s239 + $0x134] sm:$0xf]
        %v366 = vld [vmem:[%s239 + $0x144] sm:$0xff]
        %v367 = vld [vmem:[%s239 + $0x14c] sm:$0xf]
        %v368 = vld [vmem:[%s239 + $0x150] sm:$0xff]
        %v369 = vld [vmem:[%s239 + $0x158] sm:$0xf]
        %v370 = vld [vmem:[%s239 + $0x168] sm:$0xff]
        %v371 = vld [vmem:[%s239 + $0x170] sm:$0xf]
        %v372 = vld [vmem:[%s239 + $0x174] sm:$0xff]
        %v373 = vld [vmem:[%s239 + $0x17c] sm:$0xf]
        %v374 = vld [vmem:[%s239 + $0x18c] sm:$0xff]
        %v375 = vld [vmem:[%s239 + $0x194] sm:$0xf]
        %v376 = vld [vmem:[%s239 + $0x198] sm:$0xff]
        %v377 = vld [vmem:[%s239 + $0x1a0] sm:$0xf]
        %v378 = vld [vmem:[%s239 + $0x1b0] sm:$0xff]
        %v379 = vld [vmem:[%s239 + $0x1b8] sm:$0xf]
        %v380 = vld [vmem:[%s239 + $0x1bc] sm:$0xff]
        %v381 = vld [vmem:[%s239 + $0x1c4] sm:$0xf]
        %v382 = vld [vmem:[%s239 + $0x1d4] sm:$0xff]
        %v383 = vld [vmem:[%s239 + $0x1dc] sm:$0xf]
        %v384 = vld [vmem:[%s239 + $0x1e0] sm:$0xff]
        %v385 = vld [vmem:[%s239 + $0x1e8] sm:$0xf]
        %v386 = vld [vmem:[%s239 + $0x1f8] sm:$0xff]
        %v387 = vld [vmem:[%s239 + $0x200] sm:$0xf]
        %v388 = vld [vmem:[%s239 + $0x204] sm:$0xff]
        %v389 = vld [vmem:[%s239 + $0x20c] sm:$0xf]
        %v390 = vld [vmem:[%s239 + $0x21c] sm:$0xff]
        %v391 = vld [vmem:[%s239 + $0x224] sm:$0xf]
        %v392 = vld [vmem:[%s239 + $0x228] sm:$0xff]
        %v393 = vld [vmem:[%s239 + $0x230] sm:$0xf]
        %v394 = vld [vmem:[%s248] sm:$0xf]
        %v395 = vld [vmem:[%s248 + $0x4] sm:$0xf]
        %v396 = vld [vmem:[%s248 + $0x8] sm:$0xf]
        %v397 = vld [vmem:[%s248 + $0xc] sm:$0xf]
        %v398 = vld [vmem:[%s248 + $0x10] sm:$0xf]
        %v399 = vld [vmem:[%s248 + $0x14] sm:$0xf]
        %v400 = vld [vmem:[%s248 + $0x18] sm:$0xf]
        %v401 = vld [vmem:[%s248 + $0x1c] sm:$0xf]
        %v402 = vld [vmem:[%s248 + $0x20] sm:$0xf]
        %v403 = vld [vmem:[%s248 + $0x24] sm:$0xf]
        %v404 = vld [vmem:[%s248 + $0x28] sm:$0xf]
        %v405 = vld [vmem:[%s248 + $0x2c] sm:$0xf]
        %v406 = vld [vmem:[%s248 + $0x30] sm:$0xf]
        %v407 = vld [vmem:[%s248 + $0x34] sm:$0xf]
        %v408 = vld [vmem:[%s248 + $0x38] sm:$0xf]
        %v409 = vld [vmem:[%s248 + $0x3c] sm:$0xf]
        %v410 = vld [vmem:[%s248 + $0x40] sm:$0xf]
        %v411 = vld [vmem:[%s248 + $0x44] sm:$0xf]
        %v412 = vld [vmem:[%s248 + $0x48] sm:$0xf]
        %v413 = vld [vmem:[%s248 + $0x4c] sm:$0xf]
        %v414 = vld [vmem:[%s248 + $0x50] sm:$0xf]
        %v415 = vld [vmem:[%s248 + $0x54] sm:$0xf]
        %v416 = vld [vmem:[%s248 + $0x58] sm:$0xf]
        %v417 = vld [vmem:[%s248 + $0x5c] sm:$0xf]
        %v418 = vld [vmem:[%s248 + $0x60] sm:$0xf]
        %v419 = vld [vmem:[%s248 + $0x64] sm:$0xf]
        %v420 = vld [vmem:[%s248 + $0x68] sm:$0xf]
        %v421 = vld [vmem:[%s248 + $0x6c] sm:$0xf]
        %v422 = vld [vmem:[%s248 + $0x70] sm:$0xf]
        %v423 = vld [vmem:[%s248 + $0x74] sm:$0xf]
        %v424 = vld [vmem:[%s248 + $0x78] sm:$0xf]
        %v425 = vld [vmem:[%s248 + $0x7c] sm:$0xf]
        %v426 = vld [vmem:[%s248 + $0x80] sm:$0xf]
        %v427 = vld [vmem:[%s248 + $0x84] sm:$0xf]
        %v428 = vld [vmem:[%s248 + $0x88] sm:$0xf]
        %v429 = vld [vmem:[%s248 + $0x8c] sm:$0xf]
        %v430 = vld [vmem:[%s248 + $0x90] sm:$0xf]
        %v431 = vld [vmem:[%s248 + $0x94] sm:$0xf]
        %v432 = vld [vmem:[%s248 + $0x98] sm:$0xf]
        %v433 = vld [vmem:[%s248 + $0x9c] sm:$0xf]
        %v498 = vunpack.c.l.b16 %v330
        %v499 = vunpack.c.h.b16 %v330
        %v500 = vunpack.c.l.b16 %v331
        %v501 = vunpack.c.l.b16 %v332
        %v502 = vunpack.c.h.b16 %v332
        %v503 = vunpack.c.l.b16 %v333
        %v504 = vunpack.c.l.b16 %v334
        %v505 = vunpack.c.h.b16 %v334
        %v506 = vunpack.c.l.b16 %v335
        %v507 = vunpack.c.l.b16 %v336
        %v508 = vunpack.c.h.b16 %v336
        %v509 = vunpack.c.l.b16 %v337
        %v510 = vunpack.c.l.b16 %v338
        %v511 = vunpack.c.h.b16 %v338
        %v512 = vunpack.c.l.b16 %v339
        %v513 = vunpack.c.l.b16 %v340
        %v514 = vunpack.c.h.b16 %v340
        %v515 = vunpack.c.l.b16 %v341
        %v516 = vunpack.c.l.b16 %v342
        %v517 = vunpack.c.h.b16 %v342
        %v518 = vunpack.c.l.b16 %v343
        %v519 = vunpack.c.l.b16 %v344
        %v520 = vunpack.c.h.b16 %v344
        %v521 = vunpack.c.l.b16 %v345
        %v522 = vunpack.c.l.b16 %v346
        %v523 = vunpack.c.h.b16 %v346
        %v524 = vunpack.c.l.b16 %v347
        %v525 = vunpack.c.l.b16 %v348
        %v526 = vunpack.c.h.b16 %v348
        %v527 = vunpack.c.l.b16 %v349
        %v528 = vunpack.c.l.b16 %v350
        %v529 = vunpack.c.h.b16 %v350
        %v530 = vunpack.c.l.b16 %v351
        %v531 = vunpack.c.l.b16 %v352
        %v532 = vunpack.c.h.b16 %v352
        %v533 = vunpack.c.l.b16 %v353
        %v534 = vunpack.c.l.b16 %v354
        %v535 = vunpack.c.h.b16 %v354
        %v536 = vunpack.c.l.b16 %v355
        %v537 = vunpack.c.l.b16 %v356
        %v538 = vunpack.c.h.b16 %v356
        %v539 = vunpack.c.l.b16 %v357
        %v540 = vunpack.c.l.b16 %v358
        %v541 = vunpack.c.h.b16 %v358
        %v542 = vunpack.c.l.b16 %v359
        %v543 = vunpack.c.l.b16 %v360
        %v544 = vunpack.c.h.b16 %v360
        %v545 = vunpack.c.l.b16 %v361
        %v546 = vunpack.c.l.b16 %v362
        %v547 = vunpack.c.h.b16 %v362
        %v548 = vunpack.c.l.b16 %v363
        %v549 = vunpack.c.l.b16 %v364
        %v550 = vunpack.c.h.b16 %v364
        %v551 = vunpack.c.l.b16 %v365
        %v552 = vunpack.c.l.b16 %v366
        %v553 = vunpack.c.h.b16 %v366
        %v554 = vunpack.c.l.b16 %v367
        %v555 = vunpack.c.l.b16 %v368
        %v556 = vunpack.c.h.b16 %v368
        %v557 = vunpack.c.l.b16 %v369
        %v558 = vunpack.c.l.b16 %v370
        %v559 = vunpack.c.h.b16 %v370
        %v560 = vunpack.c.l.b16 %v371
        %v561 = vunpack.c.l.b16 %v372
        %v562 = vunpack.c.h.b16 %v372
        %v563 = vunpack.c.l.b16 %v373
        %v564 = vunpack.c.l.b16 %v374
        %v565 = vunpack.c.h.b16 %v374
        %v566 = vunpack.c.l.b16 %v375
        %v567 = vunpack.c.l.b16 %v376
        %v568 = vunpack.c.h.b16 %v376
        %v569 = vunpack.c.l.b16 %v377
        %v570 = vunpack.c.l.b16 %v378
        %v571 = vunpack.c.h.b16 %v378
        %v572 = vunpack.c.l.b16 %v379
        %v573 = vunpack.c.l.b16 %v380
        %v574 = vunpack.c.h.b16 %v380
        %v575 = vunpack.c.l.b16 %v381
        %v576 = vunpack.c.l.b16 %v382
        %v577 = vunpack.c.h.b16 %v382
        %v578 = vunpack.c.l.b16 %v383
        %v579 = vunpack.c.l.b16 %v384
        %v580 = vunpack.c.h.b16 %v384
        %v581 = vunpack.c.l.b16 %v385
        %v582 = vunpack.c.l.b16 %v386
        %v583 = vunpack.c.h.b16 %v386
        %v584 = vunpack.c.l.b16 %v387
        %v585 = vunpack.c.l.b16 %v388
        %v586 = vunpack.c.h.b16 %v388
        %v587 = vunpack.c.l.b16 %v389
        %v588 = vunpack.c.l.b16 %v390
        %v589 = vunpack.c.h.b16 %v390
        %v590 = vunpack.c.l.b16 %v391
        %v591 = vunpack.c.l.b16 %v392
        %v592 = vunpack.c.h.b16 %v392
        %v593 = vunpack.c.l.b16 %v393
        %v594 = vpack.c.b16 %v501, %v498
        %v595 = vpack.c.b16 %v502, %v499
        %v596 = vpack.c.b16 %v503, %v500
        %v597 = vpack.c.b16 %v507, %v504
        %v598 = vpack.c.b16 %v508, %v505
        %v599 = vpack.c.b16 %v509, %v506
        %v600 = vpack.c.b16 %v513, %v510
        %v601 = vpack.c.b16 %v514, %v511
        %v602 = vpack.c.b16 %v515, %v512
        %v603 = vpack.c.b16 %v519, %v516
        %v604 = vpack.c.b16 %v520, %v517
        %v605 = vpack.c.b16 %v521, %v518
        %v606 = vpack.c.b16 %v525, %v522
        %v607 = vpack.c.b16 %v526, %v523
        %v608 = vpack.c.b16 %v527, %v524
        %v609 = vpack.c.b16 %v531, %v528
        %v610 = vpack.c.b16 %v532, %v529
        %v611 = vpack.c.b16 %v533, %v530
        %v612 = vpack.c.b16 %v537, %v534
        %v613 = vpack.c.b16 %v538, %v535
        %v614 = vpack.c.b16 %v539, %v536
        %v615 = vpack.c.b16 %v543, %v540
        %v616 = vpack.c.b16 %v544, %v541
        %v617 = vpack.c.b16 %v545, %v542
        %v618 = vpack.c.b16 %v549, %v546
        %v619 = vpack.c.b16 %v550, %v547
        %v620 = vpack.c.b16 %v551, %v548
        %v621 = vpack.c.b16 %v555, %v552
        %v622 = vpack.c.b16 %v556, %v553
        %v623 = vpack.c.b16 %v557, %v554
        %v624 = vpack.c.b16 %v561, %v558
        %v625 = vpack.c.b16 %v562, %v559
        %v626 = vpack.c.b16 %v563, %v560
        %v627 = vpack.c.b16 %v567, %v564
        %v628 = vpack.c.b16 %v568, %v565
        %v629 = vpack.c.b16 %v569, %v566
        %v630 = vpack.c.b16 %v573, %v570
        %v631 = vpack.c.b16 %v574, %v571
        %v632 = vpack.c.b16 %v575, %v572
        %v633 = vpack.c.b16 %v579, %v576
        %v634 = vpack.c.b16 %v580, %v577
        %v635 = vpack.c.b16 %v581, %v578
        %v636 = vpack.c.b16 %v585, %v582
        %v637 = vpack.c.b16 %v586, %v583
        %v638 = vpack.c.b16 %v587, %v584
        %v639 = vpack.c.b16 %v591, %v588
        %v640 = vpack.c.b16 %v592, %v589
        %v641 = vpack.c.b16 %v593, %v590
        %v714 = vunpack.c.l.b16 %v394
        %v715 = vunpack.c.l.b16 %v395
        %v716 = vunpack.c.l.b16 %v396
        %v717 = vunpack.c.l.b16 %v397
        %v718 = vunpack.c.l.b16 %v398
        %v719 = vunpack.c.l.b16 %v399
        %v720 = vunpack.c.l.b16 %v400
        %v721 = vunpack.c.l.b16 %v401
        %v722 = vunpack.c.l.b16 %v402
        %v723 = vunpack.c.l.b16 %v403
        %v724 = vunpack.c.l.b16 %v404
        %v725 = vunpack.c.l.b16 %v405
        %v726 = vunpack.c.l.b16 %v406
        %v727 = vunpack.c.l.b16 %v407
        %v728 = vunpack.c.l.b16 %v408
        %v729 = vunpack.c.l.b16 %v409
        %v730 = vunpack.c.l.b16 %v410
        %v731 = vunpack.c.l.b16 %v411
        %v732 = vunpack.c.l.b16 %v412
        %v733 = vunpack.c.l.b16 %v413
        %v734 = vunpack.c.l.b16 %v414
        %v735 = vunpack.c.l.b16 %v415
        %v736 = vunpack.c.l.b16 %v416
        %v737 = vunpack.c.l.b16 %v417
        %v738 = vunpack.c.l.b16 %v418
        %v739 = vunpack.c.l.b16 %v419
        %v740 = vunpack.c.l.b16 %v420
        %v741 = vunpack.c.l.b16 %v421
        %v742 = vunpack.c.l.b16 %v422
        %v743 = vunpack.c.l.b16 %v423
        %v744 = vunpack.c.l.b16 %v424
        %v745 = vunpack.c.l.b16 %v425
        %v746 = vunpack.c.l.b16 %v426
        %v747 = vunpack.c.l.b16 %v427
        %v748 = vunpack.c.l.b16 %v428
        %v749 = vunpack.c.l.b16 %v429
        %v750 = vunpack.c.l.b16 %v430
        %v751 = vunpack.c.l.b16 %v431
        %v752 = vunpack.c.l.b16 %v432
        %v753 = vunpack.c.l.b16 %v433
        %v754 = vpack.c.b16 %v715, %v714
        %v755 = vpack.c.b16 %v717, %v716
        %v756 = vpack.c.b16 %v719, %v718
        %v757 = vpack.c.b16 %v721, %v720
        %v758 = vpack.c.b16 %v723, %v722
        %v759 = vpack.c.b16 %v725, %v724
        %v760 = vpack.c.b16 %v727, %v726
        %v761 = vpack.c.b16 %v729, %v728
        %v762 = vpack.c.b16 %v731, %v730
        %v763 = vpack.c.b16 %v733, %v732
        %v764 = vpack.c.b16 %v735, %v734
        %v765 = vpack.c.b16 %v737, %v736
        %v766 = vpack.c.b16 %v739, %v738
        %v767 = vpack.c.b16 %v741, %v740
        %v768 = vpack.c.b16 %v743, %v742
        %v769 = vpack.c.b16 %v745, %v744
        %v770 = vpack.c.b16 %v747, %v746
        %v771 = vpack.c.b16 %v749, %v748
        %v772 = vpack.c.b16 %v751, %v750
        %v773 = vpack.c.b16 %v753, %v752
        %vm794 = vcmask 523264
        %v796 = vsel %vm794, %v596, 0
        %v799 = vsel %vm794, %v599, 0
        %v802 = vsel %vm794, %v602, 0
        %v805 = vsel %vm794, %v605, 0
        %v808 = vsel %vm794, %v608, 0
        %v811 = vsel %vm794, %v611, 0
        %v814 = vsel %vm794, %v614, 0
        %v817 = vsel %vm794, %v617, 0
        %v820 = vsel %vm794, %v620, 0
        %v823 = vsel %vm794, %v623, 0
        %v826 = vsel %vm794, %v626, 0
        %v829 = vsel %vm794, %v629, 0
        %v832 = vsel %vm794, %v632, 0
        %v835 = vsel %vm794, %v635, 0
        %v838 = vsel %vm794, %v638, 0
        %v841 = vsel %vm794, %v641, 0
        %843 = vmatprep.subr.bf16.mxu0 0
        %844 = vmatpush1.bf16.msra.mxu0 %v754
        %845 = vmatprep.subr.bf16.mxu0 0
        %846 = vmatpush1.bf16.msra.mxu0 %v755
        %847 = vmatprep.subr.bf16.mxu0 0
        %848 = vmatpush1.bf16.msra.mxu0 %v756
        %849 = vmatprep.subr.bf16.mxu0 0
        %850 = vmatpush1.bf16.msra.mxu0 %v757
        %851 = vmatprep.subr.bf16.mxu0 0
        %852 = vmatpush1.bf16.msra.mxu0 %v758
        %853 = vmatprep.subr.bf16.mxu0 0
        %854 = vmatpush1.bf16.msra.mxu0 %v759
        %855 = vmatprep.subr.bf16.mxu0 0
        %856 = vmatpush1.bf16.msra.mxu0 %v760
        %857 = vmatprep.subr.bf16.mxu0 0
        %858 = vmatpush1.bf16.msra.mxu0 %v761
        %859 = vmatprep.subr.bf16.mxu0 0
        %860 = vmatpush1.bf16.msra.mxu0 %v762
        %861 = vmatprep.subr.bf16.mxu0 0
        %862 = vmatpush1.bf16.msra.mxu0 %v763
        %863 = vmatprep.subr.bf16.mxu0 0
        %864 = vmatpush1.bf16.msra.mxu0 %v764
        %865 = vmatprep.subr.bf16.mxu0 0
        %866 = vmatpush1.bf16.msra.mxu0 %v765
        %867 = vmatprep.subr.bf16.mxu0 0
        %868 = vmatpush1.bf16.msra.mxu0 %v766
        %869 = vmatprep.subr.bf16.mxu0 0
        %870 = vmatpush1.bf16.msra.mxu0 %v767
        %871 = vmatprep.subr.bf16.mxu0 0
        %872 = vmatpush1.bf16.msra.mxu0 %v768
        %873 = vmatprep.subr.bf16.mxu0 0
        %874 = vmatpush1.bf16.msra.mxu0 %v769
        %875 = vmatprep.mubr.bf16.mxu0 %v595
        %876 = vmatmul.mubr.bf16.gmra.mrb[0].mxu0 %v594
        %v877 = vpop.f32.mrb[0].mxu0
        %v878 = vadd.f32 0.0, %v877
        %v879 = vpop.f32.mrb[0].mxu0
        %v880 = vpop.f32.mrb[0].mxu0
        %v881 = vadd.f32 0.0, %v880
        %v882 = vpop.f32.mrb[0].mxu0
        %883 = vmatprep.mubr.bf16.mxu0 %v598
        %884 = vmatmul.mubr.bf16.gmra.mrb[0].mxu0 %v597
        %v885 = vpop.f32.mrb[0].mxu0
        %v886 = vadd.f32 0.0, %v885
        %v887 = vpop.f32.mrb[0].mxu0
        %v888 = vpop.f32.mrb[0].mxu0
        %v889 = vadd.f32 0.0, %v888
        %v890 = vpop.f32.mrb[0].mxu0
        %891 = vmatprep.mubr.bf16.mxu0 %v601
        %892 = vmatmul.mubr.bf16.gmra.mrb[0].mxu0 %v600
        %v893 = vpop.f32.mrb[0].mxu0
        %v894 = vadd.f32 0.0, %v893
        %v895 = vpop.f32.mrb[0].mxu0
        %v896 = vpop.f32.mrb[0].mxu0
        %v897 = vadd.f32 0.0, %v896
        %v898 = vpop.f32.mrb[0].mxu0
        %899 = vmatprep.mubr.bf16.mxu0 %v604
        %900 = vmatmul.mubr.bf16.gmra.mrb[0].mxu0 %v603
        %v901 = vpop.f32.mrb[0].mxu0
        %v902 = vadd.f32 0.0, %v901
        %v903 = vpop.f32.mrb[0].mxu0
        %v904 = vpop.f32.mrb[0].mxu0
        %v905 = vadd.f32 0.0, %v904
        %v906 = vpop.f32.mrb[0].mxu0
        %907 = vmatprep.mubr.bf16.mxu0 %v607
        %908 = vmatmul.mubr.bf16.gmra.mrb[0].mxu0 %v606
        %v909 = vpop.f32.mrb[0].mxu0
        %v910 = vadd.f32 0.0, %v909
        %v911 = vpop.f32.mrb[0].mxu0
        %v912 = vpop.f32.mrb[0].mxu0
        %v913 = vadd.f32 0.0, %v912
        %v914 = vpop.f32.mrb[0].mxu0
        %915 = vmatprep.mubr.bf16.mxu0 %v610
        %916 = vmatmul.mubr.bf16.gmra.mrb[0].mxu0 %v609
        %v917 = vpop.f32.mrb[0].mxu0
        %v918 = vadd.f32 0.0, %v917
        %v919 = vpop.f32.mrb[0].mxu0
        %v920 = vpop.f32.mrb[0].mxu0
        %v921 = vadd.f32 0.0, %v920
        %v922 = vpop.f32.mrb[0].mxu0
        %923 = vmatprep.mubr.bf16.mxu0 %v613
        %924 = vmatmul.mubr.bf16.gmra.mrb[0].mxu0 %v612
        %v925 = vpop.f32.mrb[0].mxu0
        %v926 = vadd.f32 0.0, %v925
        %v927 = vpop.f32.mrb[0].mxu0
        %v928 = vpop.f32.mrb[0].mxu0
        %v929 = vadd.f32 0.0, %v928
        %v930 = vpop.f32.mrb[0].mxu0
        %931 = vmatprep.mubr.bf16.mxu0 %v616
        %932 = vmatmul.mubr.bf16.gmra.mrb[0].mxu0 %v615
        %v933 = vpop.f32.mrb[0].mxu0
        %v934 = vadd.f32 0.0, %v933
        %v935 = vpop.f32.mrb[0].mxu0
        %v936 = vpop.f32.mrb[0].mxu0
        %v937 = vadd.f32 0.0, %v936
        %v938 = vpop.f32.mrb[0].mxu0
        %939 = vmatprep.mubr.bf16.mxu0 %v619
        %940 = vmatmul.mubr.bf16.gmra.mrb[0].mxu0 %v618
        %v941 = vpop.f32.mrb[0].mxu0
        %v942 = vadd.f32 0.0, %v941
        %v943 = vpop.f32.mrb[0].mxu0
        %v944 = vpop.f32.mrb[0].mxu0
        %v945 = vadd.f32 0.0, %v944
        %v946 = vpop.f32.mrb[0].mxu0
        %947 = vmatprep.mubr.bf16.mxu0 %v622
        %948 = vmatmul.mubr.bf16.gmra.mrb[0].mxu0 %v621
        %v949 = vpop.f32.mrb[0].mxu0
        %v950 = vadd.f32 0.0, %v949
        %v951 = vpop.f32.mrb[0].mxu0
        %v952 = vpop.f32.mrb[0].mxu0
        %v953 = vadd.f32 0.0, %v952
        %v954 = vpop.f32.mrb[0].mxu0
        %955 = vmatprep.mubr.bf16.mxu0 %v625
        %956 = vmatmul.mubr.bf16.gmra.mrb[0].mxu0 %v624
        %v957 = vpop.f32.mrb[0].mxu0
        %v958 = vadd.f32 0.0, %v957
        %v959 = vpop.f32.mrb[0].mxu0
        %v960 = vpop.f32.mrb[0].mxu0
        %v961 = vadd.f32 0.0, %v960
        %v962 = vpop.f32.mrb[0].mxu0
        %963 = vmatprep.mubr.bf16.mxu0 %v628
        %964 = vmatmul.mubr.bf16.gmra.mrb[0].mxu0 %v627
        %v965 = vpop.f32.mrb[0].mxu0
        %v966 = vadd.f32 0.0, %v965
        %v967 = vpop.f32.mrb[0].mxu0
        %v968 = vpop.f32.mrb[0].mxu0
        %v969 = vadd.f32 0.0, %v968
        %v970 = vpop.f32.mrb[0].mxu0
        %971 = vmatprep.mubr.bf16.mxu0 %v631
        %972 = vmatmul.mubr.bf16.gmra.mrb[0].mxu0 %v630
        %v973 = vpop.f32.mrb[0].mxu0
        %v974 = vadd.f32 0.0, %v973
        %v975 = vpop.f32.mrb[0].mxu0
        %v976 = vpop.f32.mrb[0].mxu0
        %v977 = vadd.f32 0.0, %v976
        %v978 = vpop.f32.mrb[0].mxu0
        %979 = vmatprep.mubr.bf16.mxu0 %v634
        %980 = vmatmul.mubr.bf16.gmra.mrb[0].mxu0 %v633
        %v981 = vpop.f32.mrb[0].mxu0
        %v982 = vadd.f32 0.0, %v981
        %v983 = vpop.f32.mrb[0].mxu0
        %v984 = vpop.f32.mrb[0].mxu0
        %v985 = vadd.f32 0.0, %v984
        %v986 = vpop.f32.mrb[0].mxu0
        %987 = vmatprep.mubr.bf16.mxu0 %v637
        %988 = vmatmul.mubr.bf16.gmra.mrb[0].mxu0 %v636
        %v989 = vpop.f32.mrb[0].mxu0
        %v990 = vadd.f32 0.0, %v989
        %v991 = vpop.f32.mrb[0].mxu0
        %v992 = vpop.f32.mrb[0].mxu0
        %v993 = vadd.f32 0.0, %v992
        %v994 = vpop.f32.mrb[0].mxu0
        %995 = vmatprep.mubr.bf16.mxu0 %v640
        %996 = vmatmul.mubr.bf16.gmra.mrb[0].mxu0 %v639
        %v997 = vpop.f32.mrb[0].mxu0
        %v998 = vadd.f32 0.0, %v997
        %v999 = vpop.f32.mrb[0].mxu0
        %v1000 = vpop.f32.mrb[0].mxu0
        %v1001 = vadd.f32 0.0, %v1000
        %v1002 = vpop.f32.mrb[0].mxu0
        %1003 = vdwg.mxu0
        %1004 = vmatprep.subr.bf16.mxu0 0
        %1005 = vmatpush1.bf16.msra.mxu0 %v770
        %1006 = vmatprep.subr.bf16.mxu0 0
        %1007 = vmatpush1.bf16.msra.mxu0 %v771
        %1008 = vmatprep.subr.bf16.mxu0 0
        %1009 = vmatpush1.bf16.msra.mxu0 %v772
        %1010 = vmatprep.subr.bf16.mxu0 0
        %1011 = vmatpush1.bf16.msra.mxu0 %v773
        %1012 = vmatprep.subr.bf16.mxu0 0
        %1013 = vmatpush1.bf16.msra.mxu0 0
        %1014 = vmatprep.subr.bf16.mxu0 0
        %1015 = vmatpush1.bf16.msra.mxu0 0
        %1016 = vmatprep.subr.bf16.mxu0 0
        %1017 = vmatpush1.bf16.msra.mxu0 0
        %1018 = vmatprep.subr.bf16.mxu0 0
        %1019 = vmatpush1.bf16.msra.mxu0 0
        %1020 = vmatprep.subr.bf16.mxu0 0
        %1021 = vmatpush1.bf16.msra.mxu0 0
        %1022 = vmatprep.subr.bf16.mxu0 0
        %1023 = vmatpush1.bf16.msra.mxu0 0
        %1024 = vmatprep.subr.bf16.mxu0 0
        %1025 = vmatpush1.bf16.msra.mxu0 0
        %1026 = vmatprep.subr.bf16.mxu0 0
        %1027 = vmatpush1.bf16.msra.mxu0 0
        %1028 = vmatprep.subr.bf16.mxu0 0
        %1029 = vmatpush1.bf16.msra.mxu0 0
        %1030 = vmatprep.subr.bf16.mxu0 0
        %1031 = vmatpush1.bf16.msra.mxu0 0
        %1032 = vmatprep.subr.bf16.mxu0 0
        %1033 = vmatpush1.bf16.msra.mxu0 0
        %1034 = vmatprep.subr.bf16.mxu0 0
        %1035 = vmatpush1.bf16.msra.mxu0 0
        %1036 = vmatprep.mubr.bf16.mxu0 0
        %1037 = vmatmul.mubr.bf16.gmra.mrb[0].mxu0 %v796
        %v1038 = vpop.f32.mrb[0].mxu0
        %v1039 = vadd.f32 %v878, %v1038
        %v1040 = vpop.f32.mrb[0].mxu0
        %v1041 = vpop.f32.mrb[0].mxu0
        %v1042 = vadd.f32 %v881, %v1041
        %v1043 = vpop.f32.mrb[0].mxu0
        %1044 = vmatprep.mubr.bf16.mxu0 0
        %1045 = vmatmul.mubr.bf16.gmra.mrb[0].mxu0 %v799
        %v1046 = vpop.f32.mrb[0].mxu0
        %v1047 = vadd.f32 %v886, %v1046
        %v1048 = vpop.f32.mrb[0].mxu0
        %v1049 = vpop.f32.mrb[0].mxu0
        %v1050 = vadd.f32 %v889, %v1049
        %v1051 = vpop.f32.mrb[0].mxu0
        %1052 = vmatprep.mubr.bf16.mxu0 0
        %1053 = vmatmul.mubr.bf16.gmra.mrb[0].mxu0 %v802
        %v1054 = vpop.f32.mrb[0].mxu0
        %v1055 = vadd.f32 %v894, %v1054
        %v1056 = vpop.f32.mrb[0].mxu0
        %v1057 = vpop.f32.mrb[0].mxu0
        %v1058 = vadd.f32 %v897, %v1057
        %v1059 = vpop.f32.mrb[0].mxu0
        %1060 = vmatprep.mubr.bf16.mxu0 0
        %1061 = vmatmul.mubr.bf16.gmra.mrb[0].mxu0 %v805
        %v1062 = vpop.f32.mrb[0].mxu0
        %v1063 = vadd.f32 %v902, %v1062
        %v1064 = vpop.f32.mrb[0].mxu0
        %v1065 = vpop.f32.mrb[0].mxu0
        %v1066 = vadd.f32 %v905, %v1065
        %v1067 = vpop.f32.mrb[0].mxu0
        %1068 = vmatprep.mubr.bf16.mxu0 0
        %1069 = vmatmul.mubr.bf16.gmra.mrb[0].mxu0 %v808
        %v1070 = vpop.f32.mrb[0].mxu0
        %v1071 = vadd.f32 %v910, %v1070
        %v1072 = vpop.f32.mrb[0].mxu0
        %v1073 = vpop.f32.mrb[0].mxu0
        %v1074 = vadd.f32 %v913, %v1073
        %v1075 = vpop.f32.mrb[0].mxu0
        %1076 = vmatprep.mubr.bf16.mxu0 0
        %1077 = vmatmul.mubr.bf16.gmra.mrb[0].mxu0 %v811
        %v1078 = vpop.f32.mrb[0].mxu0
        %v1079 = vadd.f32 %v918, %v1078
        %v1080 = vpop.f32.mrb[0].mxu0
        %v1081 = vpop.f32.mrb[0].mxu0
        %v1082 = vadd.f32 %v921, %v1081
        %v1083 = vpop.f32.mrb[0].mxu0
        %1084 = vmatprep.mubr.bf16.mxu0 0
        %1085 = vmatmul.mubr.bf16.gmra.mrb[0].mxu0 %v814
        %v1086 = vpop.f32.mrb[0].mxu0
        %v1087 = vadd.f32 %v926, %v1086
        %v1088 = vpop.f32.mrb[0].mxu0
        %v1089 = vpop.f32.mrb[0].mxu0
        %v1090 = vadd.f32 %v929, %v1089
        %v1091 = vpop.f32.mrb[0].mxu0
        %1092 = vmatprep.mubr.bf16.mxu0 0
        %1093 = vmatmul.mubr.bf16.gmra.mrb[0].mxu0 %v817
        %v1094 = vpop.f32.mrb[0].mxu0
        %v1095 = vadd.f32 %v934, %v1094
        %v1096 = vpop.f32.mrb[0].mxu0
        %v1097 = vpop.f32.mrb[0].mxu0
        %v1098 = vadd.f32 %v937, %v1097
        %v1099 = vpop.f32.mrb[0].mxu0
        %1100 = vmatprep.mubr.bf16.mxu0 0
        %1101 = vmatmul.mubr.bf16.gmra.mrb[0].mxu0 %v820
        %v1102 = vpop.f32.mrb[0].mxu0
        %v1103 = vadd.f32 %v942, %v1102
        %v1104 = vpop.f32.mrb[0].mxu0
        %v1105 = vpop.f32.mrb[0].mxu0
        %v1106 = vadd.f32 %v945, %v1105
        %v1107 = vpop.f32.mrb[0].mxu0
        %1108 = vmatprep.mubr.bf16.mxu0 0
        %1109 = vmatmul.mubr.bf16.gmra.mrb[0].mxu0 %v823
        %v1110 = vpop.f32.mrb[0].mxu0
        %v1111 = vadd.f32 %v950, %v1110
        %v1112 = vpop.f32.mrb[0].mxu0
        %v1113 = vpop.f32.mrb[0].mxu0
        %v1114 = vadd.f32 %v953, %v1113
        %v1115 = vpop.f32.mrb[0].mxu0
        %1116 = vmatprep.mubr.bf16.mxu0 0
        %1117 = vmatmul.mubr.bf16.gmra.mrb[0].mxu0 %v826
        %v1118 = vpop.f32.mrb[0].mxu0
        %v1119 = vadd.f32 %v958, %v1118
        %v1120 = vpop.f32.mrb[0].mxu0
        %v1121 = vpop.f32.mrb[0].mxu0
        %v1122 = vadd.f32 %v961, %v1121
        %v1123 = vpop.f32.mrb[0].mxu0
        %1124 = vmatprep.mubr.bf16.mxu0 0
        %1125 = vmatmul.mubr.bf16.gmra.mrb[0].mxu0 %v829
        %v1126 = vpop.f32.mrb[0].mxu0
        %v1127 = vadd.f32 %v966, %v1126
        %v1128 = vpop.f32.mrb[0].mxu0
        %v1129 = vpop.f32.mrb[0].mxu0
        %v1130 = vadd.f32 %v969, %v1129
        %v1131 = vpop.f32.mrb[0].mxu0
        %1132 = vmatprep.mubr.bf16.mxu0 0
        %1133 = vmatmul.mubr.bf16.gmra.mrb[0].mxu0 %v832
        %v1134 = vpop.f32.mrb[0].mxu0
        %v1135 = vadd.f32 %v974, %v1134
        %v1136 = vpop.f32.mrb[0].mxu0
        %v1137 = vpop.f32.mrb[0].mxu0
        %v1138 = vadd.f32 %v977, %v1137
        %v1139 = vpop.f32.mrb[0].mxu0
        %1140 = vmatprep.mubr.bf16.mxu0 0
        %1141 = vmatmul.mubr.bf16.gmra.mrb[0].mxu0 %v835
        %v1142 = vpop.f32.mrb[0].mxu0
        %v1143 = vadd.f32 %v982, %v1142
        %v1144 = vpop.f32.mrb[0].mxu0
        %v1145 = vpop.f32.mrb[0].mxu0
        %v1146 = vadd.f32 %v985, %v1145
        %v1147 = vpop.f32.mrb[0].mxu0
        %1148 = vmatprep.mubr.bf16.mxu0 0
        %1149 = vmatmul.mubr.bf16.gmra.mrb[0].mxu0 %v838
        %v1150 = vpop.f32.mrb[0].mxu0
        %v1151 = vadd.f32 %v990, %v1150
        %v1152 = vpop.f32.mrb[0].mxu0
        %v1153 = vpop.f32.mrb[0].mxu0
        %v1154 = vadd.f32 %v993, %v1153
        %v1155 = vpop.f32.mrb[0].mxu0
        %1156 = vmatprep.mubr.bf16.mxu0 0
        %1157 = vmatmul.mubr.bf16.gmra.mrb[0].mxu0 %v841
        %v1158 = vpop.f32.mrb[0].mxu0
        %v1159 = vadd.f32 %v998, %v1158
        %v1160 = vpop.f32.mrb[0].mxu0
        %v1161 = vpop.f32.mrb[0].mxu0
        %v1162 = vadd.f32 %v1001, %v1161
        %v1163 = vpop.f32.mrb[0].mxu0
        %1164 = vdwg.mxu0
        %v1165 = vadd.f32 %v298, %v1039
        %v1166 = vadd.f32 %v299, %v1042
        %v1167 = vadd.f32 %v300, %v1047
        %v1168 = vadd.f32 %v301, %v1050
        %v1169 = vadd.f32 %v302, %v1055
        %v1170 = vadd.f32 %v303, %v1058
        %v1171 = vadd.f32 %v304, %v1063
        %v1172 = vadd.f32 %v305, %v1066
        %v1173 = vadd.f32 %v306, %v1071
        %v1174 = vadd.f32 %v307, %v1074
        %v1175 = vadd.f32 %v308, %v1079
        %v1176 = vadd.f32 %v309, %v1082
        %v1177 = vadd.f32 %v310, %v1087
        %v1178 = vadd.f32 %v311, %v1090
        %v1179 = vadd.f32 %v312, %v1095
        %v1180 = vadd.f32 %v313, %v1098
        %v1181 = vadd.f32 %v314, %v1103
        %v1182 = vadd.f32 %v315, %v1106
        %v1183 = vadd.f32 %v316, %v1111
        %v1184 = vadd.f32 %v317, %v1114
        %v1185 = vadd.f32 %v318, %v1119
        %v1186 = vadd.f32 %v319, %v1122
        %v1187 = vadd.f32 %v320, %v1127
        %v1188 = vadd.f32 %v321, %v1130
        %v1189 = vadd.f32 %v322, %v1135
        %v1190 = vadd.f32 %v323, %v1138
        %v1191 = vadd.f32 %v324, %v1143
        %v1192 = vadd.f32 %v325, %v1146
        %v1193 = vadd.f32 %v326, %v1151
        %v1194 = vadd.f32 %v327, %v1154
        %v1195 = vadd.f32 %v328, %v1159
        %v1196 = vadd.f32 %v329, %v1162
        %v1197 = vld [vmem:[%s239] sm:$0xff]
        %v1198 = vld [vmem:[%s239 + $0x8] sm:$0xf]
        %v1199 = vld [vmem:[%s239 + $0xc] sm:$0xff]
        %v1200 = vld [vmem:[%s239 + $0x14] sm:$0xf]
        %v1201 = vld [vmem:[%s239 + $0x18] sm:$0x11]
        %v1202 = vld [vmem:[%s239 + $0x20] sm:$0x1]
        %v1203 = vld [vmem:[%s239 + $0x24] sm:$0xff]
        %v1204 = vld [vmem:[%s239 + $0x2c] sm:$0xf]
        %v1205 = vld [vmem:[%s239 + $0x30] sm:$0xff]
        %v1206 = vld [vmem:[%s239 + $0x38] sm:$0xf]
        %v1207 = vld [vmem:[%s239 + $0x3c] sm:$0x11]
        %v1208 = vld [vmem:[%s239 + $0x44] sm:$0x1]
        %v1209 = vld [vmem:[%s239 + $0x48] sm:$0xff]
        %v1210 = vld [vmem:[%s239 + $0x50] sm:$0xf]
        %v1211 = vld [vmem:[%s239 + $0x54] sm:$0xff]
        %v1212 = vld [vmem:[%s239 + $0x5c] sm:$0xf]
        %v1213 = vld [vmem:[%s239 + $0x60] sm:$0x11]
        %v1214 = vld [vmem:[%s239 + $0x68] sm:$0x1]
        %v1215 = vld [vmem:[%s239 + $0x6c] sm:$0xff]
        %v1216 = vld [vmem:[%s239 + $0x74] sm:$0xf]
        %v1217 = vld [vmem:[%s239 + $0x78] sm:$0xff]
        %v1218 = vld [vmem:[%s239 + $0x80] sm:$0xf]
        %v1219 = vld [vmem:[%s239 + $0x84] sm:$0x11]
        %v1220 = vld [vmem:[%s239 + $0x8c] sm:$0x1]
        %v1221 = vld [vmem:[%s239 + $0x90] sm:$0xff]
        %v1222 = vld [vmem:[%s239 + $0x98] sm:$0xf]
        %v1223 = vld [vmem:[%s239 + $0x9c] sm:$0xff]
        %v1224 = vld [vmem:[%s239 + $0xa4] sm:$0xf]
        %v1225 = vld [vmem:[%s239 + $0xa8] sm:$0x11]
        %v1226 = vld [vmem:[%s239 + $0xb0] sm:$0x1]
        %v1227 = vld [vmem:[%s239 + $0xb4] sm:$0xff]
        %v1228 = vld [vmem:[%s239 + $0xbc] sm:$0xf]
        %v1229 = vld [vmem:[%s239 + $0xc0] sm:$0xff]
        %v1230 = vld [vmem:[%s239 + $0xc8] sm:$0xf]
        %v1231 = vld [vmem:[%s239 + $0xcc] sm:$0x11]
        %v1232 = vld [vmem:[%s239 + $0xd4] sm:$0x1]
        %v1233 = vld [vmem:[%s239 + $0xd8] sm:$0xff]
        %v1234 = vld [vmem:[%s239 + $0xe0] sm:$0xf]
        %v1235 = vld [vmem:[%s239 + $0xe4] sm:$0xff]
        %v1236 = vld [vmem:[%s239 + $0xec] sm:$0xf]
        %v1237 = vld [vmem:[%s239 + $0xf0] sm:$0x11]
        %v1238 = vld [vmem:[%s239 + $0xf8] sm:$0x1]
        %v1239 = vld [vmem:[%s239 + $0xfc] sm:$0xff]
        %v1240 = vld [vmem:[%s239 + $0x104] sm:$0xf]
        %v1241 = vld [vmem:[%s239 + $0x108] sm:$0xff]
        %v1242 = vld [vmem:[%s239 + $0x110] sm:$0xf]
        %v1243 = vld [vmem:[%s239 + $0x114] sm:$0x11]
        %v1244 = vld [vmem:[%s239 + $0x11c] sm:$0x1]
        %v1245 = vld [vmem:[%s239 + $0x120] sm:$0xff]
        %v1246 = vld [vmem:[%s239 + $0x128] sm:$0xf]
        %v1247 = vld [vmem:[%s239 + $0x12c] sm:$0xff]
        %v1248 = vld [vmem:[%s239 + $0x134] sm:$0xf]
        %v1249 = vld [vmem:[%s239 + $0x138] sm:$0x11]
        %v1250 = vld [vmem:[%s239 + $0x140] sm:$0x1]
        %v1251 = vld [vmem:[%s239 + $0x144] sm:$0xff]
        %v1252 = vld [vmem:[%s239 + $0x14c] sm:$0xf]
        %v1253 = vld [vmem:[%s239 + $0x150] sm:$0xff]
        %v1254 = vld [vmem:[%s239 + $0x158] sm:$0xf]
        %v1255 = vld [vmem:[%s239 + $0x15c] sm:$0x11]
        %v1256 = vld [vmem:[%s239 + $0x164] sm:$0x1]
        %v1257 = vld [vmem:[%s239 + $0x168] sm:$0xff]
        %v1258 = vld [vmem:[%s239 + $0x170] sm:$0xf]
        %v1259 = vld [vmem:[%s239 + $0x174] sm:$0xff]
        %v1260 = vld [vmem:[%s239 + $0x17c] sm:$0xf]
        %v1261 = vld [vmem:[%s239 + $0x180] sm:$0x11]
        %v1262 = vld [vmem:[%s239 + $0x188] sm:$0x1]
        %v1263 = vld [vmem:[%s239 + $0x18c] sm:$0xff]
        %v1264 = vld [vmem:[%s239 + $0x194] sm:$0xf]
        %v1265 = vld [vmem:[%s239 + $0x198] sm:$0xff]
        %v1266 = vld [vmem:[%s239 + $0x1a0] sm:$0xf]
        %v1267 = vld [vmem:[%s239 + $0x1a4] sm:$0x11]
        %v1268 = vld [vmem:[%s239 + $0x1ac] sm:$0x1]
        %v1269 = vld [vmem:[%s239 + $0x1b0] sm:$0xff]
        %v1270 = vld [vmem:[%s239 + $0x1b8] sm:$0xf]
        %v1271 = vld [vmem:[%s239 + $0x1bc] sm:$0xff]
        %v1272 = vld [vmem:[%s239 + $0x1c4] sm:$0xf]
        %v1273 = vld [vmem:[%s239 + $0x1c8] sm:$0x11]
        %v1274 = vld [vmem:[%s239 + $0x1d0] sm:$0x1]
        %v1275 = vld [vmem:[%s239 + $0x1d4] sm:$0xff]
        %v1276 = vld [vmem:[%s239 + $0x1dc] sm:$0xf]
        %v1277 = vld [vmem:[%s239 + $0x1e0] sm:$0xff]
        %v1278 = vld [vmem:[%s239 + $0x1e8] sm:$0xf]
        %v1279 = vld [vmem:[%s239 + $0x1ec] sm:$0x11]
        %v1280 = vld [vmem:[%s239 + $0x1f4] sm:$0x1]
        %v1281 = vld [vmem:[%s239 + $0x1f8] sm:$0xff]
        %v1282 = vld [vmem:[%s239 + $0x200] sm:$0xf]
        %v1283 = vld [vmem:[%s239 + $0x204] sm:$0xff]
        %v1284 = vld [vmem:[%s239 + $0x20c] sm:$0xf]
        %v1285 = vld [vmem:[%s239 + $0x210] sm:$0x11]
        %v1286 = vld [vmem:[%s239 + $0x218] sm:$0x1]
        %v1287 = vld [vmem:[%s239 + $0x21c] sm:$0xff]
        %v1288 = vld [vmem:[%s239 + $0x224] sm:$0xf]
        %v1289 = vld [vmem:[%s239 + $0x228] sm:$0xff]
        %v1290 = vld [vmem:[%s239 + $0x230] sm:$0xf]
        %v1291 = vld [vmem:[%s239 + $0x234] sm:$0x11]
        %v1292 = vld [vmem:[%s239 + $0x23c] sm:$0x1]
        %vm1293 = vsmask.f32 3328
        %vm1294 = vsmask.f32 7440
        %vm1295 = vmor %vm1293, %vm1294
        %v1297 = vshrl.u32 %v1197, 16
        %v1299 = vrot.slane %v1297, 4
        %v1300 = vshll.u32 %v1197, 16
        %v1302 = vrot.slane %v1300, 5
        %v1303 = vor.u32 %v1299, %v1302
        %v1304 = vrot.slane %v1303, 4
        %v1306 = vshll.u32 %v1199, 16
        %v1308 = vrot.slane %v1306, 5
        %v1309 = vsel %vm1295, %v1304, %v1308
        %v1311 = vshrl.u32 %v1198, 16
        %v1313 = vrot.slane %v1311, 4
        %v1314 = vshll.u32 %v1198, 16
        %v1316 = vrot.slane %v1314, 5
        %v1317 = vor.u32 %v1313, %v1316
        %v1318 = vrot.slane %v1317, 4
        %v1320 = vshll.u32 %v1200, 16
        %v1322 = vrot.slane %v1320, 5
        %v1323 = vsel %vm1295, %v1318, %v1322
        %v1324 = vshrl.u32 %v1199, 16
        %v1326 = vrot.slane %v1324, 4
        %v1327 = vor.u32 %v1326, %v1308
        %v1328 = vrot.slane %v1327, 4
        %v1330 = vshll.u32 %v1201, 16
        %v1332 = vrot.slane %v1330, 5
        %v1333 = vsel %vm1295, %v1328, %v1332
        %v1334 = vshrl.u32 %v1200, 16
        %v1336 = vrot.slane %v1334, 4
        %v1337 = vor.u32 %v1336, %v1322
        %v1338 = vrot.slane %v1337, 4
        %v1340 = vshll.u32 %v1202, 16
        %v1342 = vrot.slane %v1340, 5
        %v1343 = vsel %vm1295, %v1338, %v1342
        %v1345 = vshrl.u32 %v1203, 16
        %v1347 = vrot.slane %v1345, 4
        %v1348 = vshll.u32 %v1203, 16
        %v1350 = vrot.slane %v1348, 5
        %v1351 = vor.u32 %v1347, %v1350
        %v1352 = vrot.slane %v1351, 4
        %v1354 = vshll.u32 %v1205, 16
        %v1356 = vrot.slane %v1354, 5
        %v1357 = vsel %vm1295, %v1352, %v1356
        %v1359 = vshrl.u32 %v1204, 16
        %v1361 = vrot.slane %v1359, 4
        %v1362 = vshll.u32 %v1204, 16
        %v1364 = vrot.slane %v1362, 5
        %v1365 = vor.u32 %v1361, %v1364
        %v1366 = vrot.slane %v1365, 4
        %v1368 = vshll.u32 %v1206, 16
        %v1370 = vrot.slane %v1368, 5
        %v1371 = vsel %vm1295, %v1366, %v1370
        %v1372 = vshrl.u32 %v1205, 16
        %v1374 = vrot.slane %v1372, 4
        %v1375 = vor.u32 %v1374, %v1356
        %v1376 = vrot.slane %v1375, 4
        %v1378 = vshll.u32 %v1207, 16
        %v1380 = vrot.slane %v1378, 5
        %v1381 = vsel %vm1295, %v1376, %v1380
        %v1382 = vshrl.u32 %v1206, 16
        %v1384 = vrot.slane %v1382, 4
        %v1385 = vor.u32 %v1384, %v1370
        %v1386 = vrot.slane %v1385, 4
        %v1388 = vshll.u32 %v1208, 16
        %v1390 = vrot.slane %v1388, 5
        %v1391 = vsel %vm1295, %v1386, %v1390
        %v1393 = vshrl.u32 %v1209, 16
        %v1395 = vrot.slane %v1393, 4
        %v1396 = vshll.u32 %v1209, 16
        %v1398 = vrot.slane %v1396, 5
        %v1399 = vor.u32 %v1395, %v1398
        %v1400 = vrot.slane %v1399, 4
        %v1402 = vshll.u32 %v1211, 16
        %v1404 = vrot.slane %v1402, 5
        %v1405 = vsel %vm1295, %v1400, %v1404
        %v1407 = vshrl.u32 %v1210, 16
        %v1409 = vrot.slane %v1407, 4
        %v1410 = vshll.u32 %v1210, 16
        %v1412 = vrot.slane %v1410, 5
        %v1413 = vor.u32 %v1409, %v1412
        %v1414 = vrot.slane %v1413, 4
        %v1416 = vshll.u32 %v1212, 16
        %v1418 = vrot.slane %v1416, 5
        %v1419 = vsel %vm1295, %v1414, %v1418
        %v1420 = vshrl.u32 %v1211, 16
        %v1422 = vrot.slane %v1420, 4
        %v1423 = vor.u32 %v1422, %v1404
        %v1424 = vrot.slane %v1423, 4
        %v1426 = vshll.u32 %v1213, 16
        %v1428 = vrot.slane %v1426, 5
        %v1429 = vsel %vm1295, %v1424, %v1428
        %v1430 = vshrl.u32 %v1212, 16
        %v1432 = vrot.slane %v1430, 4
        %v1433 = vor.u32 %v1432, %v1418
        %v1434 = vrot.slane %v1433, 4
        %v1436 = vshll.u32 %v1214, 16
        %v1438 = vrot.slane %v1436, 5
        %v1439 = vsel %vm1295, %v1434, %v1438
        %v1441 = vshrl.u32 %v1215, 16
        %v1443 = vrot.slane %v1441, 4
        %v1444 = vshll.u32 %v1215, 16
        %v1446 = vrot.slane %v1444, 5
        %v1447 = vor.u32 %v1443, %v1446
        %v1448 = vrot.slane %v1447, 4
        %v1450 = vshll.u32 %v1217, 16
        %v1452 = vrot.slane %v1450, 5
        %v1453 = vsel %vm1295, %v1448, %v1452
        %v1455 = vshrl.u32 %v1216, 16
        %v1457 = vrot.slane %v1455, 4
        %v1458 = vshll.u32 %v1216, 16
        %v1460 = vrot.slane %v1458, 5
        %v1461 = vor.u32 %v1457, %v1460
        %v1462 = vrot.slane %v1461, 4
        %v1464 = vshll.u32 %v1218, 16
        %v1466 = vrot.slane %v1464, 5
        %v1467 = vsel %vm1295, %v1462, %v1466
        %v1468 = vshrl.u32 %v1217, 16
        %v1470 = vrot.slane %v1468, 4
        %v1471 = vor.u32 %v1470, %v1452
        %v1472 = vrot.slane %v1471, 4
        %v1474 = vshll.u32 %v1219, 16
        %v1476 = vrot.slane %v1474, 5
        %v1477 = vsel %vm1295, %v1472, %v1476
        %v1478 = vshrl.u32 %v1218, 16
        %v1480 = vrot.slane %v1478, 4
        %v1481 = vor.u32 %v1480, %v1466
        %v1482 = vrot.slane %v1481, 4
        %v1484 = vshll.u32 %v1220, 16
        %v1486 = vrot.slane %v1484, 5
        %v1487 = vsel %vm1295, %v1482, %v1486
        %v1489 = vshrl.u32 %v1221, 16
        %v1491 = vrot.slane %v1489, 4
        %v1492 = vshll.u32 %v1221, 16
        %v1494 = vrot.slane %v1492, 5
        %v1495 = vor.u32 %v1491, %v1494
        %v1496 = vrot.slane %v1495, 4
        %v1498 = vshll.u32 %v1223, 16
        %v1500 = vrot.slane %v1498, 5
        %v1501 = vsel %vm1295, %v1496, %v1500
        %v1503 = vshrl.u32 %v1222, 16
        %v1505 = vrot.slane %v1503, 4
        %v1506 = vshll.u32 %v1222, 16
        %v1508 = vrot.slane %v1506, 5
        %v1509 = vor.u32 %v1505, %v1508
        %v1510 = vrot.slane %v1509, 4
        %v1512 = vshll.u32 %v1224, 16
        %v1514 = vrot.slane %v1512, 5
        %v1515 = vsel %vm1295, %v1510, %v1514
        %v1516 = vshrl.u32 %v1223, 16
        %v1518 = vrot.slane %v1516, 4
        %v1519 = vor.u32 %v1518, %v1500
        %v1520 = vrot.slane %v1519, 4
        %v1522 = vshll.u32 %v1225, 16
        %v1524 = vrot.slane %v1522, 5
        %v1525 = vsel %vm1295, %v1520, %v1524
        %v1526 = vshrl.u32 %v1224, 16
        %v1528 = vrot.slane %v1526, 4
        %v1529 = vor.u32 %v1528, %v1514
        %v1530 = vrot.slane %v1529, 4
        %v1532 = vshll.u32 %v1226, 16
        %v1534 = vrot.slane %v1532, 5
        %v1535 = vsel %vm1295, %v1530, %v1534
        %v1537 = vshrl.u32 %v1227, 16
        %v1539 = vrot.slane %v1537, 4
        %v1540 = vshll.u32 %v1227, 16
        %v1542 = vrot.slane %v1540, 5
        %v1543 = vor.u32 %v1539, %v1542
        %v1544 = vrot.slane %v1543, 4
        %v1546 = vshll.u32 %v1229, 16
        %v1548 = vrot.slane %v1546, 5
        %v1549 = vsel %vm1295, %v1544, %v1548
        %v1551 = vshrl.u32 %v1228, 16
        %v1553 = vrot.slane %v1551, 4
        %v1554 = vshll.u32 %v1228, 16
        %v1556 = vrot.slane %v1554, 5
        %v1557 = vor.u32 %v1553, %v1556
        %v1558 = vrot.slane %v1557, 4
        %v1560 = vshll.u32 %v1230, 16
        %v1562 = vrot.slane %v1560, 5
        %v1563 = vsel %vm1295, %v1558, %v1562
        %v1564 = vshrl.u32 %v1229, 16
        %v1566 = vrot.slane %v1564, 4
        %v1567 = vor.u32 %v1566, %v1548
        %v1568 = vrot.slane %v1567, 4
        %v1570 = vshll.u32 %v1231, 16
        %v1572 = vrot.slane %v1570, 5
        %v1573 = vsel %vm1295, %v1568, %v1572
        %v1574 = vshrl.u32 %v1230, 16
        %v1576 = vrot.slane %v1574, 4
        %v1577 = vor.u32 %v1576, %v1562
        %v1578 = vrot.slane %v1577, 4
        %v1580 = vshll.u32 %v1232, 16
        %v1582 = vrot.slane %v1580, 5
        %v1583 = vsel %vm1295, %v1578, %v1582
        %v1585 = vshrl.u32 %v1233, 16
        %v1587 = vrot.slane %v1585, 4
        %v1588 = vshll.u32 %v1233, 16
        %v1590 = vrot.slane %v1588, 5
        %v1591 = vor.u32 %v1587, %v1590
        %v1592 = vrot.slane %v1591, 4
        %v1594 = vshll.u32 %v1235, 16
        %v1596 = vrot.slane %v1594, 5
        %v1597 = vsel %vm1295, %v1592, %v1596
        %v1599 = vshrl.u32 %v1234, 16
        %v1601 = vrot.slane %v1599, 4
        %v1602 = vshll.u32 %v1234, 16
        %v1604 = vrot.slane %v1602, 5
        %v1605 = vor.u32 %v1601, %v1604
        %v1606 = vrot.slane %v1605, 4
        %v1608 = vshll.u32 %v1236, 16
        %v1610 = vrot.slane %v1608, 5
        %v1611 = vsel %vm1295, %v1606, %v1610
        %v1612 = vshrl.u32 %v1235, 16
        %v1614 = vrot.slane %v1612, 4
        %v1615 = vor.u32 %v1614, %v1596
        %v1616 = vrot.slane %v1615, 4
        %v1618 = vshll.u32 %v1237, 16
        %v1620 = vrot.slane %v1618, 5
        %v1621 = vsel %vm1295, %v1616, %v1620
        %v1622 = vshrl.u32 %v1236, 16
        %v1624 = vrot.slane %v1622, 4
        %v1625 = vor.u32 %v1624, %v1610
        %v1626 = vrot.slane %v1625, 4
        %v1628 = vshll.u32 %v1238, 16
        %v1630 = vrot.slane %v1628, 5
        %v1631 = vsel %vm1295, %v1626, %v1630
        %v1633 = vshrl.u32 %v1239, 16
        %v1635 = vrot.slane %v1633, 4
        %v1636 = vshll.u32 %v1239, 16
        %v1638 = vrot.slane %v1636, 5
        %v1639 = vor.u32 %v1635, %v1638
        %v1640 = vrot.slane %v1639, 4
        %v1642 = vshll.u32 %v1241, 16
        %v1644 = vrot.slane %v1642, 5
        %v1645 = vsel %vm1295, %v1640, %v1644
        %v1647 = vshrl.u32 %v1240, 16
        %v1649 = vrot.slane %v1647, 4
        %v1650 = vshll.u32 %v1240, 16
        %v1652 = vrot.slane %v1650, 5
        %v1653 = vor.u32 %v1649, %v1652
        %v1654 = vrot.slane %v1653, 4
        %v1656 = vshll.u32 %v1242, 16
        %v1658 = vrot.slane %v1656, 5
        %v1659 = vsel %vm1295, %v1654, %v1658
        %v1660 = vshrl.u32 %v1241, 16
        %v1662 = vrot.slane %v1660, 4
        %v1663 = vor.u32 %v1662, %v1644
        %v1664 = vrot.slane %v1663, 4
        %v1666 = vshll.u32 %v1243, 16
        %v1668 = vrot.slane %v1666, 5
        %v1669 = vsel %vm1295, %v1664, %v1668
        %v1670 = vshrl.u32 %v1242, 16
        %v1672 = vrot.slane %v1670, 4
        %v1673 = vor.u32 %v1672, %v1658
        %v1674 = vrot.slane %v1673, 4
        %v1676 = vshll.u32 %v1244, 16
        %v1678 = vrot.slane %v1676, 5
        %v1679 = vsel %vm1295, %v1674, %v1678
        %v1681 = vshrl.u32 %v1245, 16
        %v1683 = vrot.slane %v1681, 4
        %v1684 = vshll.u32 %v1245, 16
        %v1686 = vrot.slane %v1684, 5
        %v1687 = vor.u32 %v1683, %v1686
        %v1688 = vrot.slane %v1687, 4
        %v1690 = vshll.u32 %v1247, 16
        %v1692 = vrot.slane %v1690, 5
        %v1693 = vsel %vm1295, %v1688, %v1692
        %v1695 = vshrl.u32 %v1246, 16
        %v1697 = vrot.slane %v1695, 4
        %v1698 = vshll.u32 %v1246, 16
        %v1700 = vrot.slane %v1698, 5
        %v1701 = vor.u32 %v1697, %v1700
        %v1702 = vrot.slane %v1701, 4
        %v1704 = vshll.u32 %v1248, 16
        %v1706 = vrot.slane %v1704, 5
        %v1707 = vsel %vm1295, %v1702, %v1706
        %v1708 = vshrl.u32 %v1247, 16
        %v1710 = vrot.slane %v1708, 4
        %v1711 = vor.u32 %v1710, %v1692
        %v1712 = vrot.slane %v1711, 4
        %v1714 = vshll.u32 %v1249, 16
        %v1716 = vrot.slane %v1714, 5
        %v1717 = vsel %vm1295, %v1712, %v1716
        %v1718 = vshrl.u32 %v1248, 16
        %v1720 = vrot.slane %v1718, 4
        %v1721 = vor.u32 %v1720, %v1706
        %v1722 = vrot.slane %v1721, 4
        %v1724 = vshll.u32 %v1250, 16
        %v1726 = vrot.slane %v1724, 5
        %v1727 = vsel %vm1295, %v1722, %v1726
        %v1729 = vshrl.u32 %v1251, 16
        %v1731 = vrot.slane %v1729, 4
        %v1732 = vshll.u32 %v1251, 16
        %v1734 = vrot.slane %v1732, 5
        %v1735 = vor.u32 %v1731, %v1734
        %v1736 = vrot.slane %v1735, 4
        %v1738 = vshll.u32 %v1253, 16
        %v1740 = vrot.slane %v1738, 5
        %v1741 = vsel %vm1295, %v1736, %v1740
        %v1743 = vshrl.u32 %v1252, 16
        %v1745 = vrot.slane %v1743, 4
        %v1746 = vshll.u32 %v1252, 16
        %v1748 = vrot.slane %v1746, 5
        %v1749 = vor.u32 %v1745, %v1748
        %v1750 = vrot.slane %v1749, 4
        %v1752 = vshll.u32 %v1254, 16
        %v1754 = vrot.slane %v1752, 5
        %v1755 = vsel %vm1295, %v1750, %v1754
        %v1756 = vshrl.u32 %v1253, 16
        %v1758 = vrot.slane %v1756, 4
        %v1759 = vor.u32 %v1758, %v1740
        %v1760 = vrot.slane %v1759, 4
        %v1762 = vshll.u32 %v1255, 16
        %v1764 = vrot.slane %v1762, 5
        %v1765 = vsel %vm1295, %v1760, %v1764
        %v1766 = vshrl.u32 %v1254, 16
        %v1768 = vrot.slane %v1766, 4
        %v1769 = vor.u32 %v1768, %v1754
        %v1770 = vrot.slane %v1769, 4
        %v1772 = vshll.u32 %v1256, 16
        %v1774 = vrot.slane %v1772, 5
        %v1775 = vsel %vm1295, %v1770, %v1774
        %v1777 = vshrl.u32 %v1257, 16
        %v1779 = vrot.slane %v1777, 4
        %v1780 = vshll.u32 %v1257, 16
        %v1782 = vrot.slane %v1780, 5
        %v1783 = vor.u32 %v1779, %v1782
        %v1784 = vrot.slane %v1783, 4
        %v1786 = vshll.u32 %v1259, 16
        %v1788 = vrot.slane %v1786, 5
        %v1789 = vsel %vm1295, %v1784, %v1788
        %v1791 = vshrl.u32 %v1258, 16
        %v1793 = vrot.slane %v1791, 4
        %v1794 = vshll.u32 %v1258, 16
        %v1796 = vrot.slane %v1794, 5
        %v1797 = vor.u32 %v1793, %v1796
        %v1798 = vrot.slane %v1797, 4
        %v1800 = vshll.u32 %v1260, 16
        %v1802 = vrot.slane %v1800, 5
        %v1803 = vsel %vm1295, %v1798, %v1802
        %v1804 = vshrl.u32 %v1259, 16
        %v1806 = vrot.slane %v1804, 4
        %v1807 = vor.u32 %v1806, %v1788
        %v1808 = vrot.slane %v1807, 4
        %v1810 = vshll.u32 %v1261, 16
        %v1812 = vrot.slane %v1810, 5
        %v1813 = vsel %vm1295, %v1808, %v1812
        %v1814 = vshrl.u32 %v1260, 16
        %v1816 = vrot.slane %v1814, 4
        %v1817 = vor.u32 %v1816, %v1802
        %v1818 = vrot.slane %v1817, 4
        %v1820 = vshll.u32 %v1262, 16
        %v1822 = vrot.slane %v1820, 5
        %v1823 = vsel %vm1295, %v1818, %v1822
        %v1825 = vshrl.u32 %v1263, 16
        %v1827 = vrot.slane %v1825, 4
        %v1828 = vshll.u32 %v1263, 16
        %v1830 = vrot.slane %v1828, 5
        %v1831 = vor.u32 %v1827, %v1830
        %v1832 = vrot.slane %v1831, 4
        %v1834 = vshll.u32 %v1265, 16
        %v1836 = vrot.slane %v1834, 5
        %v1837 = vsel %vm1295, %v1832, %v1836
        %v1839 = vshrl.u32 %v1264, 16
        %v1841 = vrot.slane %v1839, 4
        %v1842 = vshll.u32 %v1264, 16
        %v1844 = vrot.slane %v1842, 5
        %v1845 = vor.u32 %v1841, %v1844
        %v1846 = vrot.slane %v1845, 4
        %v1848 = vshll.u32 %v1266, 16
        %v1850 = vrot.slane %v1848, 5
        %v1851 = vsel %vm1295, %v1846, %v1850
        %v1852 = vshrl.u32 %v1265, 16
        %v1854 = vrot.slane %v1852, 4
        %v1855 = vor.u32 %v1854, %v1836
        %v1856 = vrot.slane %v1855, 4
        %v1858 = vshll.u32 %v1267, 16
        %v1860 = vrot.slane %v1858, 5
        %v1861 = vsel %vm1295, %v1856, %v1860
        %v1862 = vshrl.u32 %v1266, 16
        %v1864 = vrot.slane %v1862, 4
        %v1865 = vor.u32 %v1864, %v1850
        %v1866 = vrot.slane %v1865, 4
        %v1868 = vshll.u32 %v1268, 16
        %v1870 = vrot.slane %v1868, 5
        %v1871 = vsel %vm1295, %v1866, %v1870
        %v1873 = vshrl.u32 %v1269, 16
        %v1875 = vrot.slane %v1873, 4
        %v1876 = vshll.u32 %v1269, 16
        %v1878 = vrot.slane %v1876, 5
        %v1879 = vor.u32 %v1875, %v1878
        %v1880 = vrot.slane %v1879, 4
        %v1882 = vshll.u32 %v1271, 16
        %v1884 = vrot.slane %v1882, 5
        %v1885 = vsel %vm1295, %v1880, %v1884
        %v1887 = vshrl.u32 %v1270, 16
        %v1889 = vrot.slane %v1887, 4
        %v1890 = vshll.u32 %v1270, 16
        %v1892 = vrot.slane %v1890, 5
        %v1893 = vor.u32 %v1889, %v1892
        %v1894 = vrot.slane %v1893, 4
        %v1896 = vshll.u32 %v1272, 16
        %v1898 = vrot.slane %v1896, 5
        %v1899 = vsel %vm1295, %v1894, %v1898
        %v1900 = vshrl.u32 %v1271, 16
        %v1902 = vrot.slane %v1900, 4
        %v1903 = vor.u32 %v1902, %v1884
        %v1904 = vrot.slane %v1903, 4
        %v1906 = vshll.u32 %v1273, 16
        %v1908 = vrot.slane %v1906, 5
        %v1909 = vsel %vm1295, %v1904, %v1908
        %v1910 = vshrl.u32 %v1272, 16
        %v1912 = vrot.slane %v1910, 4
        %v1913 = vor.u32 %v1912, %v1898
        %v1914 = vrot.slane %v1913, 4
        %v1916 = vshll.u32 %v1274, 16
        %v1918 = vrot.slane %v1916, 5
        %v1919 = vsel %vm1295, %v1914, %v1918
        %v1921 = vshrl.u32 %v1275, 16
        %v1923 = vrot.slane %v1921, 4
        %v1924 = vshll.u32 %v1275, 16
        %v1926 = vrot.slane %v1924, 5
        %v1927 = vor.u32 %v1923, %v1926
        %v1928 = vrot.slane %v1927, 4
        %v1930 = vshll.u32 %v1277, 16
        %v1932 = vrot.slane %v1930, 5
        %v1933 = vsel %vm1295, %v1928, %v1932
        %v1935 = vshrl.u32 %v1276, 16
        %v1937 = vrot.slane %v1935, 4
        %v1938 = vshll.u32 %v1276, 16
        %v1940 = vrot.slane %v1938, 5
        %v1941 = vor.u32 %v1937, %v1940
        %v1942 = vrot.slane %v1941, 4
        %v1944 = vshll.u32 %v1278, 16
        %v1946 = vrot.slane %v1944, 5
        %v1947 = vsel %vm1295, %v1942, %v1946
        %v1948 = vshrl.u32 %v1277, 16
        %v1950 = vrot.slane %v1948, 4
        %v1951 = vor.u32 %v1950, %v1932
        %v1952 = vrot.slane %v1951, 4
        %v1954 = vshll.u32 %v1279, 16
        %v1956 = vrot.slane %v1954, 5
        %v1957 = vsel %vm1295, %v1952, %v1956
        %v1958 = vshrl.u32 %v1278, 16
        %v1960 = vrot.slane %v1958, 4
        %v1961 = vor.u32 %v1960, %v1946
        %v1962 = vrot.slane %v1961, 4
        %v1964 = vshll.u32 %v1280, 16
        %v1966 = vrot.slane %v1964, 5
        %v1967 = vsel %vm1295, %v1962, %v1966
        %v1969 = vshrl.u32 %v1281, 16
        %v1971 = vrot.slane %v1969, 4
        %v1972 = vshll.u32 %v1281, 16
        %v1974 = vrot.slane %v1972, 5
        %v1975 = vor.u32 %v1971, %v1974
        %v1976 = vrot.slane %v1975, 4
        %v1978 = vshll.u32 %v1283, 16
        %v1980 = vrot.slane %v1978, 5
        %v1981 = vsel %vm1295, %v1976, %v1980
        %v1983 = vshrl.u32 %v1282, 16
        %v1985 = vrot.slane %v1983, 4
        %v1986 = vshll.u32 %v1282, 16
        %v1988 = vrot.slane %v1986, 5
        %v1989 = vor.u32 %v1985, %v1988
        %v1990 = vrot.slane %v1989, 4
        %v1992 = vshll.u32 %v1284, 16
        %v1994 = vrot.slane %v1992, 5
        %v1995 = vsel %vm1295, %v1990, %v1994
        %v1996 = vshrl.u32 %v1283, 16
        %v1998 = vrot.slane %v1996, 4
        %v1999 = vor.u32 %v1998, %v1980
        %v2000 = vrot.slane %v1999, 4
        %v2002 = vshll.u32 %v1285, 16
        %v2004 = vrot.slane %v2002, 5
        %v2005 = vsel %vm1295, %v2000, %v2004
        %v2006 = vshrl.u32 %v1284, 16
        %v2008 = vrot.slane %v2006, 4
        %v2009 = vor.u32 %v2008, %v1994
        %v2010 = vrot.slane %v2009, 4
        %v2012 = vshll.u32 %v1286, 16
        %v2014 = vrot.slane %v2012, 5
        %v2015 = vsel %vm1295, %v2010, %v2014
        %v2017 = vshrl.u32 %v1287, 16
        %v2019 = vrot.slane %v2017, 4
        %v2020 = vshll.u32 %v1287, 16
        %v2022 = vrot.slane %v2020, 5
        %v2023 = vor.u32 %v2019, %v2022
        %v2024 = vrot.slane %v2023, 4
        %v2026 = vshll.u32 %v1289, 16
        %v2028 = vrot.slane %v2026, 5
        %v2029 = vsel %vm1295, %v2024, %v2028
        %v2031 = vshrl.u32 %v1288, 16
        %v2033 = vrot.slane %v2031, 4
        %v2034 = vshll.u32 %v1288, 16
        %v2036 = vrot.slane %v2034, 5
        %v2037 = vor.u32 %v2033, %v2036
        %v2038 = vrot.slane %v2037, 4
        %v2040 = vshll.u32 %v1290, 16
        %v2042 = vrot.slane %v2040, 5
        %v2043 = vsel %vm1295, %v2038, %v2042
        %v2044 = vshrl.u32 %v1289, 16
        %v2046 = vrot.slane %v2044, 4
        %v2047 = vor.u32 %v2046, %v2028
        %v2048 = vrot.slane %v2047, 4
        %v2050 = vshll.u32 %v1291, 16
        %v2052 = vrot.slane %v2050, 5
        %v2053 = vsel %vm1295, %v2048, %v2052
        %v2054 = vshrl.u32 %v1290, 16
        %v2056 = vrot.slane %v2054, 4
        %v2057 = vor.u32 %v2056, %v2042
        %v2058 = vrot.slane %v2057, 4
        %v2060 = vshll.u32 %v1292, 16
        %v2062 = vrot.slane %v2060, 5
        %v2063 = vsel %vm1295, %v2058, %v2062
        %s2064 = scalar_lea.vmem %s248, 160
        %v2065 = vld [vmem:[%s2064] sm:$0xf]
        %v2066 = vld [vmem:[%s2064 + $0x4] sm:$0xf]
        %v2067 = vld [vmem:[%s2064 + $0x8] sm:$0xf]
        %v2068 = vld [vmem:[%s2064 + $0xc] sm:$0xf]
        %v2069 = vld [vmem:[%s2064 + $0x10] sm:$0xf]
        %v2070 = vld [vmem:[%s2064 + $0x14] sm:$0xf]
        %v2071 = vld [vmem:[%s2064 + $0x18] sm:$0xf]
        %v2072 = vld [vmem:[%s2064 + $0x1c] sm:$0xf]
        %v2073 = vld [vmem:[%s2064 + $0x20] sm:$0xf]
        %v2074 = vld [vmem:[%s2064 + $0x24] sm:$0xf]
        %v2075 = vld [vmem:[%s2064 + $0x28] sm:$0xf]
        %v2076 = vld [vmem:[%s2064 + $0x2c] sm:$0xf]
        %v2077 = vld [vmem:[%s2064 + $0x30] sm:$0xf]
        %v2078 = vld [vmem:[%s2064 + $0x34] sm:$0xf]
        %v2079 = vld [vmem:[%s2064 + $0x38] sm:$0xf]
        %v2080 = vld [vmem:[%s2064 + $0x3c] sm:$0xf]
        %v2081 = vld [vmem:[%s2064 + $0x40] sm:$0xf]
        %v2082 = vld [vmem:[%s2064 + $0x44] sm:$0xf]
        %v2083 = vld [vmem:[%s2064 + $0x48] sm:$0xf]
        %v2084 = vld [vmem:[%s2064 + $0x4c] sm:$0xf]
        %v2085 = vld [vmem:[%s2064 + $0x50] sm:$0xf]
        %v2086 = vld [vmem:[%s2064 + $0x54] sm:$0xf]
        %v2087 = vld [vmem:[%s2064 + $0x58] sm:$0xf]
        %v2088 = vld [vmem:[%s2064 + $0x5c] sm:$0xf]
        %v2089 = vld [vmem:[%s2064 + $0x60] sm:$0xf]
        %v2090 = vld [vmem:[%s2064 + $0x64] sm:$0xf]
        %v2091 = vld [vmem:[%s2064 + $0x68] sm:$0xf]
        %v2092 = vld [vmem:[%s2064 + $0x6c] sm:$0xf]
        %v2093 = vld [vmem:[%s2064 + $0x70] sm:$0xf]
        %v2094 = vld [vmem:[%s2064 + $0x74] sm:$0xf]
        %v2095 = vld [vmem:[%s2064 + $0x78] sm:$0xf]
        %v2096 = vld [vmem:[%s2064 + $0x7c] sm:$0xf]
        %v2097 = vld [vmem:[%s2064 + $0x80] sm:$0xf]
        %v2098 = vld [vmem:[%s2064 + $0x84] sm:$0xf]
        %v2099 = vld [vmem:[%s2064 + $0x88] sm:$0xf]
        %v2100 = vld [vmem:[%s2064 + $0x8c] sm:$0xf]
        %v2101 = vld [vmem:[%s2064 + $0x90] sm:$0xf]
        %v2102 = vld [vmem:[%s2064 + $0x94] sm:$0xf]
        %v2103 = vld [vmem:[%s2064 + $0x98] sm:$0xf]
        %v2104 = vld [vmem:[%s2064 + $0x9c] sm:$0xf]
        %v2105 = vunpack.c.l.b16 %v1309
        %v2106 = vunpack.c.h.b16 %v1309
        %v2107 = vunpack.c.l.b16 %v1323
        %v2108 = vunpack.c.l.b16 %v1333
        %v2109 = vunpack.c.h.b16 %v1333
        %v2110 = vunpack.c.l.b16 %v1343
        %v2111 = vunpack.c.l.b16 %v1357
        %v2112 = vunpack.c.h.b16 %v1357
        %v2113 = vunpack.c.l.b16 %v1371
        %v2114 = vunpack.c.l.b16 %v1381
        %v2115 = vunpack.c.h.b16 %v1381
        %v2116 = vunpack.c.l.b16 %v1391
        %v2117 = vunpack.c.l.b16 %v1405
        %v2118 = vunpack.c.h.b16 %v1405
        %v2119 = vunpack.c.l.b16 %v1419
        %v2120 = vunpack.c.l.b16 %v1429
        %v2121 = vunpack.c.h.b16 %v1429
        %v2122 = vunpack.c.l.b16 %v1439
        %v2123 = vunpack.c.l.b16 %v1453
        %v2124 = vunpack.c.h.b16 %v1453
        %v2125 = vunpack.c.l.b16 %v1467
        %v2126 = vunpack.c.l.b16 %v1477
        %v2127 = vunpack.c.h.b16 %v1477
        %v2128 = vunpack.c.l.b16 %v1487
        %v2129 = vunpack.c.l.b16 %v1501
        %v2130 = vunpack.c.h.b16 %v1501
        %v2131 = vunpack.c.l.b16 %v1515
        %v2132 = vunpack.c.l.b16 %v1525
        %v2133 = vunpack.c.h.b16 %v1525
        %v2134 = vunpack.c.l.b16 %v1535
        %v2135 = vunpack.c.l.b16 %v1549
        %v2136 = vunpack.c.h.b16 %v1549
        %v2137 = vunpack.c.l.b16 %v1563
        %v2138 = vunpack.c.l.b16 %v1573
        %v2139 = vunpack.c.h.b16 %v1573
        %v2140 = vunpack.c.l.b16 %v1583
        %v2141 = vunpack.c.l.b16 %v1597
        %v2142 = vunpack.c.h.b16 %v1597
        %v2143 = vunpack.c.l.b16 %v1611
        %v2144 = vunpack.c.l.b16 %v1621
        %v2145 = vunpack.c.h.b16 %v1621
        %v2146 = vunpack.c.l.b16 %v1631
        %v2147 = vunpack.c.l.b16 %v1645
        %v2148 = vunpack.c.h.b16 %v1645
        %v2149 = vunpack.c.l.b16 %v1659
        %v2150 = vunpack.c.l.b16 %v1669
        %v2151 = vunpack.c.h.b16 %v1669
        %v2152 = vunpack.c.l.b16 %v1679
        %v2153 = vunpack.c.l.b16 %v1693
        %v2154 = vunpack.c.h.b16 %v1693
        %v2155 = vunpack.c.l.b16 %v1707
        %v2156 = vunpack.c.l.b16 %v1717
        %v2157 = vunpack.c.h.b16 %v1717
        %v2158 = vunpack.c.l.b16 %v1727
        %v2159 = vunpack.c.l.b16 %v1741
        %v2160 = vunpack.c.h.b16 %v1741
        %v2161 = vunpack.c.l.b16 %v1755
        %v2162 = vunpack.c.l.b16 %v1765
        %v2163 = vunpack.c.h.b16 %v1765
        %v2164 = vunpack.c.l.b16 %v1775
        %v2165 = vunpack.c.l.b16 %v1789
        %v2166 = vunpack.c.h.b16 %v1789
        %v2167 = vunpack.c.l.b16 %v1803
        %v2168 = vunpack.c.l.b16 %v1813
        %v2169 = vunpack.c.h.b16 %v1813
        %v2170 = vunpack.c.l.b16 %v1823
        %v2171 = vunpack.c.l.b16 %v1837
        %v2172 = vunpack.c.h.b16 %v1837
        %v2173 = vunpack.c.l.b16 %v1851
        %v2174 = vunpack.c.l.b16 %v1861
        %v2175 = vunpack.c.h.b16 %v1861
        %v2176 = vunpack.c.l.b16 %v1871
        %v2177 = vunpack.c.l.b16 %v1885
        %v2178 = vunpack.c.h.b16 %v1885
        %v2179 = vunpack.c.l.b16 %v1899
        %v2180 = vunpack.c.l.b16 %v1909
        %v2181 = vunpack.c.h.b16 %v1909
        %v2182 = vunpack.c.l.b16 %v1919
        %v2183 = vunpack.c.l.b16 %v1933
        %v2184 = vunpack.c.h.b16 %v1933
        %v2185 = vunpack.c.l.b16 %v1947
        %v2186 = vunpack.c.l.b16 %v1957
        %v2187 = vunpack.c.h.b16 %v1957
        %v2188 = vunpack.c.l.b16 %v1967
        %v2189 = vunpack.c.l.b16 %v1981
        %v2190 = vunpack.c.h.b16 %v1981
        %v2191 = vunpack.c.l.b16 %v1995
        %v2192 = vunpack.c.l.b16 %v2005
        %v2193 = vunpack.c.h.b16 %v2005
        %v2194 = vunpack.c.l.b16 %v2015
        %v2195 = vunpack.c.l.b16 %v2029
        %v2196 = vunpack.c.h.b16 %v2029
        %v2197 = vunpack.c.l.b16 %v2043
        %v2198 = vunpack.c.l.b16 %v2053
        %v2199 = vunpack.c.h.b16 %v2053
        %v2200 = vunpack.c.l.b16 %v2063
        %v2201 = vpack.c.b16 %v2108, %v2105
        %v2202 = vpack.c.b16 %v2109, %v2106
        %v2203 = vpack.c.b16 %v2110, %v2107
        %v2204 = vpack.c.b16 %v2114, %v2111
        %v2205 = vpack.c.b16 %v2115, %v2112
        %v2206 = vpack.c.b16 %v2116, %v2113
        %v2207 = vpack.c.b16 %v2120, %v2117
        %v2208 = vpack.c.b16 %v2121, %v2118
        %v2209 = vpack.c.b16 %v2122, %v2119
        %v2210 = vpack.c.b16 %v2126, %v2123
        %v2211 = vpack.c.b16 %v2127, %v2124
        %v2212 = vpack.c.b16 %v2128, %v2125
        %v2213 = vpack.c.b16 %v2132, %v2129
        %v2214 = vpack.c.b16 %v2133, %v2130
        %v2215 = vpack.c.b16 %v2134, %v2131
        %v2216 = vpack.c.b16 %v2138, %v2135
        %v2217 = vpack.c.b16 %v2139, %v2136
        %v2218 = vpack.c.b16 %v2140, %v2137
        %v2219 = vpack.c.b16 %v2144, %v2141
        %v2220 = vpack.c.b16 %v2145, %v2142
        %v2221 = vpack.c.b16 %v2146, %v2143
        %v2222 = vpack.c.b16 %v2150, %v2147
        %v2223 = vpack.c.b16 %v2151, %v2148
        %v2224 = vpack.c.b16 %v2152, %v2149
        %v2225 = vpack.c.b16 %v2156, %v2153
        %v2226 = vpack.c.b16 %v2157, %v2154
        %v2227 = vpack.c.b16 %v2158, %v2155
        %v2228 = vpack.c.b16 %v2162, %v2159
        %v2229 = vpack.c.b16 %v2163, %v2160
        %v2230 = vpack.c.b16 %v2164, %v2161
        %v2231 = vpack.c.b16 %v2168, %v2165
        %v2232 = vpack.c.b16 %v2169, %v2166
        %v2233 = vpack.c.b16 %v2170, %v2167
        %v2234 = vpack.c.b16 %v2174, %v2171
        %v2235 = vpack.c.b16 %v2175, %v2172
        %v2236 = vpack.c.b16 %v2176, %v2173
        %v2237 = vpack.c.b16 %v2180, %v2177
        %v2238 = vpack.c.b16 %v2181, %v2178
        %v2239 = vpack.c.b16 %v2182, %v2179
        %v2240 = vpack.c.b16 %v2186, %v2183
        %v2241 = vpack.c.b16 %v2187, %v2184
        %v2242 = vpack.c.b16 %v2188, %v2185
        %v2243 = vpack.c.b16 %v2192, %v2189
        %v2244 = vpack.c.b16 %v2193, %v2190
        %v2245 = vpack.c.b16 %v2194, %v2191
        %v2246 = vpack.c.b16 %v2198, %v2195
        %v2247 = vpack.c.b16 %v2199, %v2196
        %v2248 = vpack.c.b16 %v2200, %v2197
        %v2321 = vunpack.c.l.b16 %v2065
        %v2322 = vunpack.c.l.b16 %v2066
        %v2323 = vunpack.c.l.b16 %v2067
        %v2324 = vunpack.c.l.b16 %v2068
        %v2325 = vunpack.c.l.b16 %v2069
        %v2326 = vunpack.c.l.b16 %v2070
        %v2327 = vunpack.c.l.b16 %v2071
        %v2328 = vunpack.c.l.b16 %v2072
        %v2329 = vunpack.c.l.b16 %v2073
        %v2330 = vunpack.c.l.b16 %v2074
        %v2331 = vunpack.c.l.b16 %v2075
        %v2332 = vunpack.c.l.b16 %v2076
        %v2333 = vunpack.c.l.b16 %v2077
        %v2334 = vunpack.c.l.b16 %v2078
        %v2335 = vunpack.c.l.b16 %v2079
        %v2336 = vunpack.c.l.b16 %v2080
        %v2337 = vunpack.c.l.b16 %v2081
        %v2338 = vunpack.c.l.b16 %v2082
        %v2339 = vunpack.c.l.b16 %v2083
        %v2340 = vunpack.c.l.b16 %v2084
        %v2341 = vunpack.c.l.b16 %v2085
        %v2342 = vunpack.c.l.b16 %v2086
        %v2343 = vunpack.c.l.b16 %v2087
        %v2344 = vunpack.c.l.b16 %v2088
        %v2345 = vunpack.c.l.b16 %v2089
        %v2346 = vunpack.c.l.b16 %v2090
        %v2347 = vunpack.c.l.b16 %v2091
        %v2348 = vunpack.c.l.b16 %v2092
        %v2349 = vunpack.c.l.b16 %v2093
        %v2350 = vunpack.c.l.b16 %v2094
        %v2351 = vunpack.c.l.b16 %v2095
        %v2352 = vunpack.c.l.b16 %v2096
        %v2353 = vunpack.c.l.b16 %v2097
        %v2354 = vunpack.c.l.b16 %v2098
        %v2355 = vunpack.c.l.b16 %v2099
        %v2356 = vunpack.c.l.b16 %v2100
        %v2357 = vunpack.c.l.b16 %v2101
        %v2358 = vunpack.c.l.b16 %v2102
        %v2359 = vunpack.c.l.b16 %v2103
        %v2360 = vunpack.c.l.b16 %v2104
        %v2361 = vpack.c.b16 %v2322, %v2321
        %v2362 = vpack.c.b16 %v2324, %v2323
        %v2363 = vpack.c.b16 %v2326, %v2325
        %v2364 = vpack.c.b16 %v2328, %v2327
        %v2365 = vpack.c.b16 %v2330, %v2329
        %v2366 = vpack.c.b16 %v2332, %v2331
        %v2367 = vpack.c.b16 %v2334, %v2333
        %v2368 = vpack.c.b16 %v2336, %v2335
        %v2369 = vpack.c.b16 %v2338, %v2337
        %v2370 = vpack.c.b16 %v2340, %v2339
        %v2371 = vpack.c.b16 %v2342, %v2341
        %v2372 = vpack.c.b16 %v2344, %v2343
        %v2373 = vpack.c.b16 %v2346, %v2345
        %v2374 = vpack.c.b16 %v2348, %v2347
        %v2375 = vpack.c.b16 %v2350, %v2349
        %v2376 = vpack.c.b16 %v2352, %v2351
        %v2377 = vpack.c.b16 %v2354, %v2353
        %v2378 = vpack.c.b16 %v2356, %v2355
        %v2379 = vpack.c.b16 %v2358, %v2357
        %v2380 = vpack.c.b16 %v2360, %v2359
        %v2402 = vsel %vm794, %v2203, 0
        %v2405 = vsel %vm794, %v2206, 0
        %v2408 = vsel %vm794, %v2209, 0
        %v2411 = vsel %vm794, %v2212, 0
        %v2414 = vsel %vm794, %v2215, 0
        %v2417 = vsel %vm794, %v2218, 0
        %v2420 = vsel %vm794, %v2221, 0
        %v2423 = vsel %vm794, %v2224, 0
        %v2426 = vsel %vm794, %v2227, 0
        %v2429 = vsel %vm794, %v2230, 0
        %v2432 = vsel %vm794, %v2233, 0
        %v2435 = vsel %vm794, %v2236, 0
        %v2438 = vsel %vm794, %v2239, 0
        %v2441 = vsel %vm794, %v2242, 0
        %v2444 = vsel %vm794, %v2245, 0
        %v2447 = vsel %vm794, %v2248, 0
        %2449 = vmatprep.subr.bf16.mxu0 0
        %2450 = vmatpush1.bf16.msra.mxu0 %v2361
        %2451 = vmatprep.subr.bf16.mxu0 0
        %2452 = vmatpush1.bf16.msra.mxu0 %v2362
        %2453 = vmatprep.subr.bf16.mxu0 0
        %2454 = vmatpush1.bf16.msra.mxu0 %v2363
        %2455 = vmatprep.subr.bf16.mxu0 0
        %2456 = vmatpush1.bf16.msra.mxu0 %v2364
        %2457 = vmatprep.subr.bf16.mxu0 0
        %2458 = vmatpush1.bf16.msra.mxu0 %v2365
        %2459 = vmatprep.subr.bf16.mxu0 0
        %2460 = vmatpush1.bf16.msra.mxu0 %v2366
        %2461 = vmatprep.subr.bf16.mxu0 0
        %2462 = vmatpush1.bf16.msra.mxu0 %v2367
        %2463 = vmatprep.subr.bf16.mxu0 0
        %2464 = vmatpush1.bf16.msra.mxu0 %v2368
        %2465 = vmatprep.subr.bf16.mxu0 0
        %2466 = vmatpush1.bf16.msra.mxu0 %v2369
        %2467 = vmatprep.subr.bf16.mxu0 0
        %2468 = vmatpush1.bf16.msra.mxu0 %v2370
        %2469 = vmatprep.subr.bf16.mxu0 0
        %2470 = vmatpush1.bf16.msra.mxu0 %v2371
        %2471 = vmatprep.subr.bf16.mxu0 0
        %2472 = vmatpush1.bf16.msra.mxu0 %v2372
        %2473 = vmatprep.subr.bf16.mxu0 0
        %2474 = vmatpush1.bf16.msra.mxu0 %v2373
        %2475 = vmatprep.subr.bf16.mxu0 0
        %2476 = vmatpush1.bf16.msra.mxu0 %v2374
        %2477 = vmatprep.subr.bf16.mxu0 0
        %2478 = vmatpush1.bf16.msra.mxu0 %v2375
        %2479 = vmatprep.subr.bf16.mxu0 0
        %2480 = vmatpush1.bf16.msra.mxu0 %v2376
        %2481 = vmatprep.mubr.bf16.mxu0 %v2202
        %2482 = vmatmul.mubr.bf16.gmra.mrb[0].mxu0 %v2201
        %v2483 = vpop.f32.mrb[0].mxu0
        %v2484 = vadd.f32 0.0, %v2483
        %v2485 = vpop.f32.mrb[0].mxu0
        %v2486 = vpop.f32.mrb[0].mxu0
        %v2487 = vadd.f32 0.0, %v2486
        %v2488 = vpop.f32.mrb[0].mxu0
        %2489 = vmatprep.mubr.bf16.mxu0 %v2205
        %2490 = vmatmul.mubr.bf16.gmra.mrb[0].mxu0 %v2204
        %v2491 = vpop.f32.mrb[0].mxu0
        %v2492 = vadd.f32 0.0, %v2491
        %v2493 = vpop.f32.mrb[0].mxu0
        %v2494 = vpop.f32.mrb[0].mxu0
        %v2495 = vadd.f32 0.0, %v2494
        %v2496 = vpop.f32.mrb[0].mxu0
        %2497 = vmatprep.mubr.bf16.mxu0 %v2208
        %2498 = vmatmul.mubr.bf16.gmra.mrb[0].mxu0 %v2207
        %v2499 = vpop.f32.mrb[0].mxu0
        %v2500 = vadd.f32 0.0, %v2499
        %v2501 = vpop.f32.mrb[0].mxu0
        %v2502 = vpop.f32.mrb[0].mxu0
        %v2503 = vadd.f32 0.0, %v2502
        %v2504 = vpop.f32.mrb[0].mxu0
        %2505 = vmatprep.mubr.bf16.mxu0 %v2211
        %2506 = vmatmul.mubr.bf16.gmra.mrb[0].mxu0 %v2210
        %v2507 = vpop.f32.mrb[0].mxu0
        %v2508 = vadd.f32 0.0, %v2507
        %v2509 = vpop.f32.mrb[0].mxu0
        %v2510 = vpop.f32.mrb[0].mxu0
        %v2511 = vadd.f32 0.0, %v2510
        %v2512 = vpop.f32.mrb[0].mxu0
        %2513 = vmatprep.mubr.bf16.mxu0 %v2214
        %2514 = vmatmul.mubr.bf16.gmra.mrb[0].mxu0 %v2213
        %v2515 = vpop.f32.mrb[0].mxu0
        %v2516 = vadd.f32 0.0, %v2515
        %v2517 = vpop.f32.mrb[0].mxu0
        %v2518 = vpop.f32.mrb[0].mxu0
        %v2519 = vadd.f32 0.0, %v2518
        %v2520 = vpop.f32.mrb[0].mxu0
        %2521 = vmatprep.mubr.bf16.mxu0 %v2217
        %2522 = vmatmul.mubr.bf16.gmra.mrb[0].mxu0 %v2216
        %v2523 = vpop.f32.mrb[0].mxu0
        %v2524 = vadd.f32 0.0, %v2523
        %v2525 = vpop.f32.mrb[0].mxu0
        %v2526 = vpop.f32.mrb[0].mxu0
        %v2527 = vadd.f32 0.0, %v2526
        %v2528 = vpop.f32.mrb[0].mxu0
        %2529 = vmatprep.mubr.bf16.mxu0 %v2220
        %2530 = vmatmul.mubr.bf16.gmra.mrb[0].mxu0 %v2219
        %v2531 = vpop.f32.mrb[0].mxu0
        %v2532 = vadd.f32 0.0, %v2531
        %v2533 = vpop.f32.mrb[0].mxu0
        %v2534 = vpop.f32.mrb[0].mxu0
        %v2535 = vadd.f32 0.0, %v2534
        %v2536 = vpop.f32.mrb[0].mxu0
        %2537 = vmatprep.mubr.bf16.mxu0 %v2223
        %2538 = vmatmul.mubr.bf16.gmra.mrb[0].mxu0 %v2222
        %v2539 = vpop.f32.mrb[0].mxu0
        %v2540 = vadd.f32 0.0, %v2539
        %v2541 = vpop.f32.mrb[0].mxu0
        %v2542 = vpop.f32.mrb[0].mxu0
        %v2543 = vadd.f32 0.0, %v2542
        %v2544 = vpop.f32.mrb[0].mxu0
        %2545 = vmatprep.mubr.bf16.mxu0 %v2226
        %2546 = vmatmul.mubr.bf16.gmra.mrb[0].mxu0 %v2225
        %v2547 = vpop.f32.mrb[0].mxu0
        %v2548 = vadd.f32 0.0, %v2547
        %v2549 = vpop.f32.mrb[0].mxu0
        %v2550 = vpop.f32.mrb[0].mxu0
        %v2551 = vadd.f32 0.0, %v2550
        %v2552 = vpop.f32.mrb[0].mxu0
        %2553 = vmatprep.mubr.bf16.mxu0 %v2229
        %2554 = vmatmul.mubr.bf16.gmra.mrb[0].mxu0 %v2228
        %v2555 = vpop.f32.mrb[0].mxu0
        %v2556 = vadd.f32 0.0, %v2555
        %v2557 = vpop.f32.mrb[0].mxu0
        %v2558 = vpop.f32.mrb[0].mxu0
        %v2559 = vadd.f32 0.0, %v2558
        %v2560 = vpop.f32.mrb[0].mxu0
        %2561 = vmatprep.mubr.bf16.mxu0 %v2232
        %2562 = vmatmul.mubr.bf16.gmra.mrb[0].mxu0 %v2231
        %v2563 = vpop.f32.mrb[0].mxu0
        %v2564 = vadd.f32 0.0, %v2563
        %v2565 = vpop.f32.mrb[0].mxu0
        %v2566 = vpop.f32.mrb[0].mxu0
        %v2567 = vadd.f32 0.0, %v2566
        %v2568 = vpop.f32.mrb[0].mxu0
        %2569 = vmatprep.mubr.bf16.mxu0 %v2235
        %2570 = vmatmul.mubr.bf16.gmra.mrb[0].mxu0 %v2234
        %v2571 = vpop.f32.mrb[0].mxu0
        %v2572 = vadd.f32 0.0, %v2571
        %v2573 = vpop.f32.mrb[0].mxu0
        %v2574 = vpop.f32.mrb[0].mxu0
        %v2575 = vadd.f32 0.0, %v2574
        %v2576 = vpop.f32.mrb[0].mxu0
        %2577 = vmatprep.mubr.bf16.mxu0 %v2238
        %2578 = vmatmul.mubr.bf16.gmra.mrb[0].mxu0 %v2237
        %v2579 = vpop.f32.mrb[0].mxu0
        %v2580 = vadd.f32 0.0, %v2579
        %v2581 = vpop.f32.mrb[0].mxu0
        %v2582 = vpop.f32.mrb[0].mxu0
        %v2583 = vadd.f32 0.0, %v2582
        %v2584 = vpop.f32.mrb[0].mxu0
        %2585 = vmatprep.mubr.bf16.mxu0 %v2241
        %2586 = vmatmul.mubr.bf16.gmra.mrb[0].mxu0 %v2240
        %v2587 = vpop.f32.mrb[0].mxu0
        %v2588 = vadd.f32 0.0, %v2587
        %v2589 = vpop.f32.mrb[0].mxu0
        %v2590 = vpop.f32.mrb[0].mxu0
        %v2591 = vadd.f32 0.0, %v2590
        %v2592 = vpop.f32.mrb[0].mxu0
        %2593 = vmatprep.mubr.bf16.mxu0 %v2244
        %2594 = vmatmul.mubr.bf16.gmra.mrb[0].mxu0 %v2243
        %v2595 = vpop.f32.mrb[0].mxu0
        %v2596 = vadd.f32 0.0, %v2595
        %v2597 = vpop.f32.mrb[0].mxu0
        %v2598 = vpop.f32.mrb[0].mxu0
        %v2599 = vadd.f32 0.0, %v2598
        %v2600 = vpop.f32.mrb[0].mxu0
        %2601 = vmatprep.mubr.bf16.mxu0 %v2247
        %2602 = vmatmul.mubr.bf16.gmra.mrb[0].mxu0 %v2246
        %v2603 = vpop.f32.mrb[0].mxu0
        %v2604 = vadd.f32 0.0, %v2603
        %v2605 = vpop.f32.mrb[0].mxu0
        %v2606 = vpop.f32.mrb[0].mxu0
        %v2607 = vadd.f32 0.0, %v2606
        %v2608 = vpop.f32.mrb[0].mxu0
        %2609 = vdwg.mxu0
        %2610 = vmatprep.subr.bf16.mxu0 0
        %2611 = vmatpush1.bf16.msra.mxu0 %v2377
        %2612 = vmatprep.subr.bf16.mxu0 0
        %2613 = vmatpush1.bf16.msra.mxu0 %v2378
        %2614 = vmatprep.subr.bf16.mxu0 0
        %2615 = vmatpush1.bf16.msra.mxu0 %v2379
        %2616 = vmatprep.subr.bf16.mxu0 0
        %2617 = vmatpush1.bf16.msra.mxu0 %v2380
        %2618 = vmatprep.subr.bf16.mxu0 0
        %2619 = vmatpush1.bf16.msra.mxu0 0
        %2620 = vmatprep.subr.bf16.mxu0 0
        %2621 = vmatpush1.bf16.msra.mxu0 0
        %2622 = vmatprep.subr.bf16.mxu0 0
        %2623 = vmatpush1.bf16.msra.mxu0 0
        %2624 = vmatprep.subr.bf16.mxu0 0
        %2625 = vmatpush1.bf16.msra.mxu0 0
        %2626 = vmatprep.subr.bf16.mxu0 0
        %2627 = vmatpush1.bf16.msra.mxu0 0
        %2628 = vmatprep.subr.bf16.mxu0 0
        %2629 = vmatpush1.bf16.msra.mxu0 0
        %2630 = vmatprep.subr.bf16.mxu0 0
        %2631 = vmatpush1.bf16.msra.mxu0 0
        %2632 = vmatprep.subr.bf16.mxu0 0
        %2633 = vmatpush1.bf16.msra.mxu0 0
        %2634 = vmatprep.subr.bf16.mxu0 0
        %2635 = vmatpush1.bf16.msra.mxu0 0
        %2636 = vmatprep.subr.bf16.mxu0 0
        %2637 = vmatpush1.bf16.msra.mxu0 0
        %2638 = vmatprep.subr.bf16.mxu0 0
        %2639 = vmatpush1.bf16.msra.mxu0 0
        %2640 = vmatprep.subr.bf16.mxu0 0
        %2641 = vmatpush1.bf16.msra.mxu0 0
        %2642 = vmatprep.mubr.bf16.mxu0 0
        %2643 = vmatmul.mubr.bf16.gmra.mrb[0].mxu0 %v2402
        %v2644 = vpop.f32.mrb[0].mxu0
        %v2645 = vadd.f32 %v2484, %v2644
        %v2646 = vpop.f32.mrb[0].mxu0
        %v2647 = vpop.f32.mrb[0].mxu0
        %v2648 = vadd.f32 %v2487, %v2647
        %v2649 = vpop.f32.mrb[0].mxu0
        %2650 = vmatprep.mubr.bf16.mxu0 0
        %2651 = vmatmul.mubr.bf16.gmra.mrb[0].mxu0 %v2405
        %v2652 = vpop.f32.mrb[0].mxu0
        %v2653 = vadd.f32 %v2492, %v2652
        %v2654 = vpop.f32.mrb[0].mxu0
        %v2655 = vpop.f32.mrb[0].mxu0
        %v2656 = vadd.f32 %v2495, %v2655
        %v2657 = vpop.f32.mrb[0].mxu0
        %2658 = vmatprep.mubr.bf16.mxu0 0
        %2659 = vmatmul.mubr.bf16.gmra.mrb[0].mxu0 %v2408
        %v2660 = vpop.f32.mrb[0].mxu0
        %v2661 = vadd.f32 %v2500, %v2660
        %v2662 = vpop.f32.mrb[0].mxu0
        %v2663 = vpop.f32.mrb[0].mxu0
        %v2664 = vadd.f32 %v2503, %v2663
        %v2665 = vpop.f32.mrb[0].mxu0
        %2666 = vmatprep.mubr.bf16.mxu0 0
        %2667 = vmatmul.mubr.bf16.gmra.mrb[0].mxu0 %v2411
        %v2668 = vpop.f32.mrb[0].mxu0
        %v2669 = vadd.f32 %v2508, %v2668
        %v2670 = vpop.f32.mrb[0].mxu0
        %v2671 = vpop.f32.mrb[0].mxu0
        %v2672 = vadd.f32 %v2511, %v2671
        %v2673 = vpop.f32.mrb[0].mxu0
        %2674 = vmatprep.mubr.bf16.mxu0 0
        %2675 = vmatmul.mubr.bf16.gmra.mrb[0].mxu0 %v2414
        %v2676 = vpop.f32.mrb[0].mxu0
        %v2677 = vadd.f32 %v2516, %v2676
        %v2678 = vpop.f32.mrb[0].mxu0
        %v2679 = vpop.f32.mrb[0].mxu0
        %v2680 = vadd.f32 %v2519, %v2679
        %v2681 = vpop.f32.mrb[0].mxu0
        %2682 = vmatprep.mubr.bf16.mxu0 0
        %2683 = vmatmul.mubr.bf16.gmra.mrb[0].mxu0 %v2417
        %v2684 = vpop.f32.mrb[0].mxu0
        %v2685 = vadd.f32 %v2524, %v2684
        %v2686 = vpop.f32.mrb[0].mxu0
        %v2687 = vpop.f32.mrb[0].mxu0
        %v2688 = vadd.f32 %v2527, %v2687
        %v2689 = vpop.f32.mrb[0].mxu0
        %2690 = vmatprep.mubr.bf16.mxu0 0
        %2691 = vmatmul.mubr.bf16.gmra.mrb[0].mxu0 %v2420
        %v2692 = vpop.f32.mrb[0].mxu0
        %v2693 = vadd.f32 %v2532, %v2692
        %v2694 = vpop.f32.mrb[0].mxu0
        %v2695 = vpop.f32.mrb[0].mxu0
        %v2696 = vadd.f32 %v2535, %v2695
        %v2697 = vpop.f32.mrb[0].mxu0
        %2698 = vmatprep.mubr.bf16.mxu0 0
        %2699 = vmatmul.mubr.bf16.gmra.mrb[0].mxu0 %v2423
        %v2700 = vpop.f32.mrb[0].mxu0
        %v2701 = vadd.f32 %v2540, %v2700
        %v2702 = vpop.f32.mrb[0].mxu0
        %v2703 = vpop.f32.mrb[0].mxu0
        %v2704 = vadd.f32 %v2543, %v2703
        %v2705 = vpop.f32.mrb[0].mxu0
        %2706 = vmatprep.mubr.bf16.mxu0 0
        %2707 = vmatmul.mubr.bf16.gmra.mrb[0].mxu0 %v2426
        %v2708 = vpop.f32.mrb[0].mxu0
        %v2709 = vadd.f32 %v2548, %v2708
        %v2710 = vpop.f32.mrb[0].mxu0
        %v2711 = vpop.f32.mrb[0].mxu0
        %v2712 = vadd.f32 %v2551, %v2711
        %v2713 = vpop.f32.mrb[0].mxu0
        %2714 = vmatprep.mubr.bf16.mxu0 0
        %2715 = vmatmul.mubr.bf16.gmra.mrb[0].mxu0 %v2429
        %v2716 = vpop.f32.mrb[0].mxu0
        %v2717 = vadd.f32 %v2556, %v2716
        %v2718 = vpop.f32.mrb[0].mxu0
        %v2719 = vpop.f32.mrb[0].mxu0
        %v2720 = vadd.f32 %v2559, %v2719
        %v2721 = vpop.f32.mrb[0].mxu0
        %2722 = vmatprep.mubr.bf16.mxu0 0
        %2723 = vmatmul.mubr.bf16.gmra.mrb[0].mxu0 %v2432
        %v2724 = vpop.f32.mrb[0].mxu0
        %v2725 = vadd.f32 %v2564, %v2724
        %v2726 = vpop.f32.mrb[0].mxu0
        %v2727 = vpop.f32.mrb[0].mxu0
        %v2728 = vadd.f32 %v2567, %v2727
        %v2729 = vpop.f32.mrb[0].mxu0
        %2730 = vmatprep.mubr.bf16.mxu0 0
        %2731 = vmatmul.mubr.bf16.gmra.mrb[0].mxu0 %v2435
        %v2732 = vpop.f32.mrb[0].mxu0
        %v2733 = vadd.f32 %v2572, %v2732
        %v2734 = vpop.f32.mrb[0].mxu0
        %v2735 = vpop.f32.mrb[0].mxu0
        %v2736 = vadd.f32 %v2575, %v2735
        %v2737 = vpop.f32.mrb[0].mxu0
        %2738 = vmatprep.mubr.bf16.mxu0 0
        %2739 = vmatmul.mubr.bf16.gmra.mrb[0].mxu0 %v2438
        %v2740 = vpop.f32.mrb[0].mxu0
        %v2741 = vadd.f32 %v2580, %v2740
        %v2742 = vpop.f32.mrb[0].mxu0
        %v2743 = vpop.f32.mrb[0].mxu0
        %v2744 = vadd.f32 %v2583, %v2743
        %v2745 = vpop.f32.mrb[0].mxu0
        %2746 = vmatprep.mubr.bf16.mxu0 0
        %2747 = vmatmul.mubr.bf16.gmra.mrb[0].mxu0 %v2441
        %v2748 = vpop.f32.mrb[0].mxu0
        %v2749 = vadd.f32 %v2588, %v2748
        %v2750 = vpop.f32.mrb[0].mxu0
        %v2751 = vpop.f32.mrb[0].mxu0
        %v2752 = vadd.f32 %v2591, %v2751
        %v2753 = vpop.f32.mrb[0].mxu0
        %2754 = vmatprep.mubr.bf16.mxu0 0
        %2755 = vmatmul.mubr.bf16.gmra.mrb[0].mxu0 %v2444
        %v2756 = vpop.f32.mrb[0].mxu0
        %v2757 = vadd.f32 %v2596, %v2756
        %v2758 = vpop.f32.mrb[0].mxu0
        %v2759 = vpop.f32.mrb[0].mxu0
        %v2760 = vadd.f32 %v2599, %v2759
        %v2761 = vpop.f32.mrb[0].mxu0
        %2762 = vmatprep.mubr.bf16.mxu0 0
        %2763 = vmatmul.mubr.bf16.gmra.mrb[0].mxu0 %v2447
        %v2764 = vpop.f32.mrb[0].mxu0
        %v2765 = vadd.f32 %v2604, %v2764
        %v2766 = vpop.f32.mrb[0].mxu0
        %v2767 = vpop.f32.mrb[0].mxu0
        %v2768 = vadd.f32 %v2607, %v2767
        %v2769 = vpop.f32.mrb[0].mxu0
        %2770 = vdwg.mxu0
        %v2771 = vadd.f32 %v1165, %v2645
        %v2772 = vadd.f32 %v1166, %v2648
        %v2773 = vadd.f32 %v1167, %v2653
        %v2774 = vadd.f32 %v1168, %v2656
        %v2775 = vadd.f32 %v1169, %v2661
        %v2776 = vadd.f32 %v1170, %v2664
        %v2777 = vadd.f32 %v1171, %v2669
        %v2778 = vadd.f32 %v1172, %v2672
        %v2779 = vadd.f32 %v1173, %v2677
        %v2780 = vadd.f32 %v1174, %v2680
        %v2781 = vadd.f32 %v1175, %v2685
        %v2782 = vadd.f32 %v1176, %v2688
        %v2783 = vadd.f32 %v1177, %v2693
        %v2784 = vadd.f32 %v1178, %v2696
        %v2785 = vadd.f32 %v1179, %v2701
        %v2786 = vadd.f32 %v1180, %v2704
        %v2787 = vadd.f32 %v1181, %v2709
        %v2788 = vadd.f32 %v1182, %v2712
        %v2789 = vadd.f32 %v1183, %v2717
        %v2790 = vadd.f32 %v1184, %v2720
        %v2791 = vadd.f32 %v1185, %v2725
        %v2792 = vadd.f32 %v1186, %v2728
        %v2793 = vadd.f32 %v1187, %v2733
        %v2794 = vadd.f32 %v1188, %v2736
        %v2795 = vadd.f32 %v1189, %v2741
        %v2796 = vadd.f32 %v1190, %v2744
        %v2797 = vadd.f32 %v1191, %v2749
        %v2798 = vadd.f32 %v1192, %v2752
        %v2799 = vadd.f32 %v1193, %v2757
        %v2800 = vadd.f32 %v1194, %v2760
        %v2801 = vadd.f32 %v1195, %v2765
        %v2802 = vadd.f32 %v1196, %v2768
        %v2803 = vld [vmem:[%s239] sm:$0xee]
        %v2804 = vld [vmem:[%s239 + $0x8] sm:$0xe]
        %v2805 = vld [vmem:[%s239 + $0x24] sm:$0xee]
        %v2806 = vld [vmem:[%s239 + $0x2c] sm:$0xe]
        %v2807 = vld [vmem:[%s239 + $0x48] sm:$0xee]
        %v2808 = vld [vmem:[%s239 + $0x50] sm:$0xe]
        %v2809 = vld [vmem:[%s239 + $0x6c] sm:$0xee]
        %v2810 = vld [vmem:[%s239 + $0x74] sm:$0xe]
        %v2811 = vld [vmem:[%s239 + $0x90] sm:$0xee]
        %v2812 = vld [vmem:[%s239 + $0x98] sm:$0xe]
        %v2813 = vld [vmem:[%s239 + $0xb4] sm:$0xee]
        %v2814 = vld [vmem:[%s239 + $0xbc] sm:$0xe]
        %v2815 = vld [vmem:[%s239 + $0xd8] sm:$0xee]
        %v2816 = vld [vmem:[%s239 + $0xe0] sm:$0xe]
        %v2817 = vld [vmem:[%s239 + $0xfc] sm:$0xee]
        %v2818 = vld [vmem:[%s239 + $0x104] sm:$0xe]
        %v2819 = vld [vmem:[%s239 + $0x120] sm:$0xee]
        %v2820 = vld [vmem:[%s239 + $0x128] sm:$0xe]
        %v2821 = vld [vmem:[%s239 + $0x144] sm:$0xee]
        %v2822 = vld [vmem:[%s239 + $0x14c] sm:$0xe]
        %v2823 = vld [vmem:[%s239 + $0x168] sm:$0xee]
        %v2824 = vld [vmem:[%s239 + $0x170] sm:$0xe]
        %v2825 = vld [vmem:[%s239 + $0x18c] sm:$0xee]
        %v2826 = vld [vmem:[%s239 + $0x194] sm:$0xe]
        %v2827 = vld [vmem:[%s239 + $0x1b0] sm:$0xee]
        %v2828 = vld [vmem:[%s239 + $0x1b8] sm:$0xe]
        %v2829 = vld [vmem:[%s239 + $0x1d4] sm:$0xee]
        %v2830 = vld [vmem:[%s239 + $0x1dc] sm:$0xe]
        %v2831 = vld [vmem:[%s239 + $0x1f8] sm:$0xee]
        %v2832 = vld [vmem:[%s239 + $0x200] sm:$0xe]
        %v2833 = vld [vmem:[%s239 + $0x21c] sm:$0xee]
        %v2834 = vld [vmem:[%s239 + $0x224] sm:$0xe]
        %vm2931 = vcmask 1042432
        %vm2932 = vcmask 1046532
        %vm2933 = vmor %vm2931, %vm2932
        %v2934 = vrot.slane %v2803, 5
        %v2935 = vrot.slane %v2934, 4
        %v2936 = vrot.slane %v1199, 5
        %v2937 = vsel %vm2933, %v2935, %v2936
        %v2938 = vrot.slane %v2804, 5
        %v2939 = vrot.slane %v2938, 4
        %v2940 = vrot.slane %v1200, 5
        %v2941 = vsel %vm2933, %v2939, %v2940
        %v2942 = vrot.slane %v2936, 4
        %v2943 = vrot.slane %v1201, 5
        %v2944 = vsel %vm2933, %v2942, %v2943
        %v2945 = vrot.slane %v2940, 4
        %v2946 = vrot.slane %v1202, 5
        %v2947 = vsel %vm2933, %v2945, %v2946
        %v2948 = vrot.slane %v2805, 5
        %v2949 = vrot.slane %v2948, 4
        %v2950 = vrot.slane %v1205, 5
        %v2951 = vsel %vm2933, %v2949, %v2950
        %v2952 = vrot.slane %v2806, 5
        %v2953 = vrot.slane %v2952, 4
        %v2954 = vrot.slane %v1206, 5
        %v2955 = vsel %vm2933, %v2953, %v2954
        %v2956 = vrot.slane %v2950, 4
        %v2957 = vrot.slane %v1207, 5
        %v2958 = vsel %vm2933, %v2956, %v2957
        %v2959 = vrot.slane %v2954, 4
        %v2960 = vrot.slane %v1208, 5
        %v2961 = vsel %vm2933, %v2959, %v2960
        %v2962 = vrot.slane %v2807, 5
        %v2963 = vrot.slane %v2962, 4
        %v2964 = vrot.slane %v1211, 5
        %v2965 = vsel %vm2933, %v2963, %v2964
        %v2966 = vrot.slane %v2808, 5
        %v2967 = vrot.slane %v2966, 4
        %v2968 = vrot.slane %v1212, 5
        %v2969 = vsel %vm2933, %v2967, %v2968
        %v2970 = vrot.slane %v2964, 4
        %v2971 = vrot.slane %v1213, 5
        %v2972 = vsel %vm2933, %v2970, %v2971
        %v2973 = vrot.slane %v2968, 4
        %v2974 = vrot.slane %v1214, 5
        %v2975 = vsel %vm2933, %v2973, %v2974
        %v2976 = vrot.slane %v2809, 5
        %v2977 = vrot.slane %v2976, 4
        %v2978 = vrot.slane %v1217, 5
        %v2979 = vsel %vm2933, %v2977, %v2978
        %v2980 = vrot.slane %v2810, 5
        %v2981 = vrot.slane %v2980, 4
        %v2982 = vrot.slane %v1218, 5
        %v2983 = vsel %vm2933, %v2981, %v2982
        %v2984 = vrot.slane %v2978, 4
        %v2985 = vrot.slane %v1219, 5
        %v2986 = vsel %vm2933, %v2984, %v2985
        %v2987 = vrot.slane %v2982, 4
        %v2988 = vrot.slane %v1220, 5
        %v2989 = vsel %vm2933, %v2987, %v2988
        %v2990 = vrot.slane %v2811, 5
        %v2991 = vrot.slane %v2990, 4
        %v2992 = vrot.slane %v1223, 5
        %v2993 = vsel %vm2933, %v2991, %v2992
        %v2994 = vrot.slane %v2812, 5
        %v2995 = vrot.slane %v2994, 4
        %v2996 = vrot.slane %v1224, 5
        %v2997 = vsel %vm2933, %v2995, %v2996
        %v2998 = vrot.slane %v2992, 4
        %v2999 = vrot.slane %v1225, 5
        %v3000 = vsel %vm2933, %v2998, %v2999
        %v3001 = vrot.slane %v2996, 4
        %v3002 = vrot.slane %v1226, 5
        %v3003 = vsel %vm2933, %v3001, %v3002
        %v3004 = vrot.slane %v2813, 5
        %v3005 = vrot.slane %v3004, 4
        %v3006 = vrot.slane %v1229, 5
        %v3007 = vsel %vm2933, %v3005, %v3006
        %v3008 = vrot.slane %v2814, 5
        %v3009 = vrot.slane %v3008, 4
        %v3010 = vrot.slane %v1230, 5
        %v3011 = vsel %vm2933, %v3009, %v3010
        %v3012 = vrot.slane %v3006, 4
        %v3013 = vrot.slane %v1231, 5
        %v3014 = vsel %vm2933, %v3012, %v3013
        %v3015 = vrot.slane %v3010, 4
        %v3016 = vrot.slane %v1232, 5
        %v3017 = vsel %vm2933, %v3015, %v3016
        %v3018 = vrot.slane %v2815, 5
        %v3019 = vrot.slane %v3018, 4
        %v3020 = vrot.slane %v1235, 5
        %v3021 = vsel %vm2933, %v3019, %v3020
        %v3022 = vrot.slane %v2816, 5
        %v3023 = vrot.slane %v3022, 4
        %v3024 = vrot.slane %v1236, 5
        %v3025 = vsel %vm2933, %v3023, %v3024
        %v3026 = vrot.slane %v3020, 4
        %v3027 = vrot.slane %v1237, 5
        %v3028 = vsel %vm2933, %v3026, %v3027
        %v3029 = vrot.slane %v3024, 4
        %v3030 = vrot.slane %v1238, 5
        %v3031 = vsel %vm2933, %v3029, %v3030
        %v3032 = vrot.slane %v2817, 5
        %v3033 = vrot.slane %v3032, 4
        %v3034 = vrot.slane %v1241, 5
        %v3035 = vsel %vm2933, %v3033, %v3034
        %v3036 = vrot.slane %v2818, 5
        %v3037 = vrot.slane %v3036, 4
        %v3038 = vrot.slane %v1242, 5
        %v3039 = vsel %vm2933, %v3037, %v3038
        %v3040 = vrot.slane %v3034, 4
        %v3041 = vrot.slane %v1243, 5
        %v3042 = vsel %vm2933, %v3040, %v3041
        %v3043 = vrot.slane %v3038, 4
        %v3044 = vrot.slane %v1244, 5
        %v3045 = vsel %vm2933, %v3043, %v3044
        %v3046 = vrot.slane %v2819, 5
        %v3047 = vrot.slane %v3046, 4
        %v3048 = vrot.slane %v1247, 5
        %v3049 = vsel %vm2933, %v3047, %v3048
        %v3050 = vrot.slane %v2820, 5
        %v3051 = vrot.slane %v3050, 4
        %v3052 = vrot.slane %v1248, 5
        %v3053 = vsel %vm2933, %v3051, %v3052
        %v3054 = vrot.slane %v3048, 4
        %v3055 = vrot.slane %v1249, 5
        %v3056 = vsel %vm2933, %v3054, %v3055
        %v3057 = vrot.slane %v3052, 4
        %v3058 = vrot.slane %v1250, 5
        %v3059 = vsel %vm2933, %v3057, %v3058
        %v3060 = vrot.slane %v2821, 5
        %v3061 = vrot.slane %v3060, 4
        %v3062 = vrot.slane %v1253, 5
        %v3063 = vsel %vm2933, %v3061, %v3062
        %v3064 = vrot.slane %v2822, 5
        %v3065 = vrot.slane %v3064, 4
        %v3066 = vrot.slane %v1254, 5
        %v3067 = vsel %vm2933, %v3065, %v3066
        %v3068 = vrot.slane %v3062, 4
        %v3069 = vrot.slane %v1255, 5
        %v3070 = vsel %vm2933, %v3068, %v3069
        %v3071 = vrot.slane %v3066, 4
        %v3072 = vrot.slane %v1256, 5
        %v3073 = vsel %vm2933, %v3071, %v3072
        %v3074 = vrot.slane %v2823, 5
        %v3075 = vrot.slane %v3074, 4
        %v3076 = vrot.slane %v1259, 5
        %v3077 = vsel %vm2933, %v3075, %v3076
        %v3078 = vrot.slane %v2824, 5
        %v3079 = vrot.slane %v3078, 4
        %v3080 = vrot.slane %v1260, 5
        %v3081 = vsel %vm2933, %v3079, %v3080
        %v3082 = vrot.slane %v3076, 4
        %v3083 = vrot.slane %v1261, 5
        %v3084 = vsel %vm2933, %v3082, %v3083
        %v3085 = vrot.slane %v3080, 4
        %v3086 = vrot.slane %v1262, 5
        %v3087 = vsel %vm2933, %v3085, %v3086
        %v3088 = vrot.slane %v2825, 5
        %v3089 = vrot.slane %v3088, 4
        %v3090 = vrot.slane %v1265, 5
        %v3091 = vsel %vm2933, %v3089, %v3090
        %v3092 = vrot.slane %v2826, 5
        %v3093 = vrot.slane %v3092, 4
        %v3094 = vrot.slane %v1266, 5
        %v3095 = vsel %vm2933, %v3093, %v3094
        %v3096 = vrot.slane %v3090, 4
        %v3097 = vrot.slane %v1267, 5
        %v3098 = vsel %vm2933, %v3096, %v3097
        %v3099 = vrot.slane %v3094, 4
        %v3100 = vrot.slane %v1268, 5
        %v3101 = vsel %vm2933, %v3099, %v3100
        %v3102 = vrot.slane %v2827, 5
        %v3103 = vrot.slane %v3102, 4
        %v3104 = vrot.slane %v1271, 5
        %v3105 = vsel %vm2933, %v3103, %v3104
        %v3106 = vrot.slane %v2828, 5
        %v3107 = vrot.slane %v3106, 4
        %v3108 = vrot.slane %v1272, 5
        %v3109 = vsel %vm2933, %v3107, %v3108
        %v3110 = vrot.slane %v3104, 4
        %v3111 = vrot.slane %v1273, 5
        %v3112 = vsel %vm2933, %v3110, %v3111
        %v3113 = vrot.slane %v3108, 4
        %v3114 = vrot.slane %v1274, 5
        %v3115 = vsel %vm2933, %v3113, %v3114
        %v3116 = vrot.slane %v2829, 5
        %v3117 = vrot.slane %v3116, 4
        %v3118 = vrot.slane %v1277, 5
        %v3119 = vsel %vm2933, %v3117, %v3118
        %v3120 = vrot.slane %v2830, 5
        %v3121 = vrot.slane %v3120, 4
        %v3122 = vrot.slane %v1278, 5
        %v3123 = vsel %vm2933, %v3121, %v3122
        %v3124 = vrot.slane %v3118, 4
        %v3125 = vrot.slane %v1279, 5
        %v3126 = vsel %vm2933, %v3124, %v3125
        %v3127 = vrot.slane %v3122, 4
        %v3128 = vrot.slane %v1280, 5
        %v3129 = vsel %vm2933, %v3127, %v3128
        %v3130 = vrot.slane %v2831, 5
        %v3131 = vrot.slane %v3130, 4
        %v3132 = vrot.slane %v1283, 5
        %v3133 = vsel %vm2933, %v3131, %v3132
        %v3134 = vrot.slane %v2832, 5
        %v3135 = vrot.slane %v3134, 4
        %v3136 = vrot.slane %v1284, 5
        %v3137 = vsel %vm2933, %v3135, %v3136
        %v3138 = vrot.slane %v3132, 4
        %v3139 = vrot.slane %v1285, 5
        %v3140 = vsel %vm2933, %v3138, %v3139
        %v3141 = vrot.slane %v3136, 4
        %v3142 = vrot.slane %v1286, 5
        %v3143 = vsel %vm2933, %v3141, %v3142
        %v3144 = vrot.slane %v2833, 5
        %v3145 = vrot.slane %v3144, 4
        %v3146 = vrot.slane %v1289, 5
        %v3147 = vsel %vm2933, %v3145, %v3146
        %v3148 = vrot.slane %v2834, 5
        %v3149 = vrot.slane %v3148, 4
        %v3150 = vrot.slane %v1290, 5
        %v3151 = vsel %vm2933, %v3149, %v3150
        %v3152 = vrot.slane %v3146, 4
        %v3153 = vrot.slane %v1291, 5
        %v3154 = vsel %vm2933, %v3152, %v3153
        %v3155 = vrot.slane %v3150, 4
        %v3156 = vrot.slane %v1292, 5
        %v3157 = vsel %vm2933, %v3155, %v3156
        %s3158 = scalar_lea.vmem %s248, 320
        %v3159 = vld [vmem:[%s3158] sm:$0xf]
        %v3160 = vld [vmem:[%s3158 + $0x4] sm:$0xf]
        %v3161 = vld [vmem:[%s3158 + $0x8] sm:$0xf]
        %v3162 = vld [vmem:[%s3158 + $0xc] sm:$0xf]
        %v3163 = vld [vmem:[%s3158 + $0x10] sm:$0xf]
        %v3164 = vld [vmem:[%s3158 + $0x14] sm:$0xf]
        %v3165 = vld [vmem:[%s3158 + $0x18] sm:$0xf]
        %v3166 = vld [vmem:[%s3158 + $0x1c] sm:$0xf]
        %v3167 = vld [vmem:[%s3158 + $0x20] sm:$0xf]
        %v3168 = vld [vmem:[%s3158 + $0x24] sm:$0xf]
        %v3169 = vld [vmem:[%s3158 + $0x28] sm:$0xf]
        %v3170 = vld [vmem:[%s3158 + $0x2c] sm:$0xf]
        %v3171 = vld [vmem:[%s3158 + $0x30] sm:$0xf]
        %v3172 = vld [vmem:[%s3158 + $0x34] sm:$0xf]
        %v3173 = vld [vmem:[%s3158 + $0x38] sm:$0xf]
        %v3174 = vld [vmem:[%s3158 + $0x3c] sm:$0xf]
        %v3175 = vld [vmem:[%s3158 + $0x40] sm:$0xf]
        %v3176 = vld [vmem:[%s3158 + $0x44] sm:$0xf]
        %v3177 = vld [vmem:[%s3158 + $0x48] sm:$0xf]
        %v3178 = vld [vmem:[%s3158 + $0x4c] sm:$0xf]
        %v3179 = vld [vmem:[%s3158 + $0x50] sm:$0xf]
        %v3180 = vld [vmem:[%s3158 + $0x54] sm:$0xf]
        %v3181 = vld [vmem:[%s3158 + $0x58] sm:$0xf]
        %v3182 = vld [vmem:[%s3158 + $0x5c] sm:$0xf]
        %v3183 = vld [vmem:[%s3158 + $0x60] sm:$0xf]
        %v3184 = vld [vmem:[%s3158 + $0x64] sm:$0xf]
        %v3185 = vld [vmem:[%s3158 + $0x68] sm:$0xf]
        %v3186 = vld [vmem:[%s3158 + $0x6c] sm:$0xf]
        %v3187 = vld [vmem:[%s3158 + $0x70] sm:$0xf]
        %v3188 = vld [vmem:[%s3158 + $0x74] sm:$0xf]
        %v3189 = vld [vmem:[%s3158 + $0x78] sm:$0xf]
        %v3190 = vld [vmem:[%s3158 + $0x7c] sm:$0xf]
        %v3191 = vld [vmem:[%s3158 + $0x80] sm:$0xf]
        %v3192 = vld [vmem:[%s3158 + $0x84] sm:$0xf]
        %v3193 = vld [vmem:[%s3158 + $0x88] sm:$0xf]
        %v3194 = vld [vmem:[%s3158 + $0x8c] sm:$0xf]
        %v3195 = vld [vmem:[%s3158 + $0x90] sm:$0xf]
        %v3196 = vld [vmem:[%s3158 + $0x94] sm:$0xf]
        %v3197 = vld [vmem:[%s3158 + $0x98] sm:$0xf]
        %v3198 = vld [vmem:[%s3158 + $0x9c] sm:$0xf]
        %v3199 = vunpack.c.l.b16 %v2937
        %v3200 = vunpack.c.h.b16 %v2937
        %v3201 = vunpack.c.l.b16 %v2941
        %v3202 = vunpack.c.l.b16 %v2944
        %v3203 = vunpack.c.h.b16 %v2944
        %v3204 = vunpack.c.l.b16 %v2947
        %v3205 = vunpack.c.l.b16 %v2951
        %v3206 = vunpack.c.h.b16 %v2951
        %v3207 = vunpack.c.l.b16 %v2955
        %v3208 = vunpack.c.l.b16 %v2958
        %v3209 = vunpack.c.h.b16 %v2958
        %v3210 = vunpack.c.l.b16 %v2961
        %v3211 = vunpack.c.l.b16 %v2965
        %v3212 = vunpack.c.h.b16 %v2965
        %v3213 = vunpack.c.l.b16 %v2969
        %v3214 = vunpack.c.l.b16 %v2972
        %v3215 = vunpack.c.h.b16 %v2972
        %v3216 = vunpack.c.l.b16 %v2975
        %v3217 = vunpack.c.l.b16 %v2979
        %v3218 = vunpack.c.h.b16 %v2979
        %v3219 = vunpack.c.l.b16 %v2983
        %v3220 = vunpack.c.l.b16 %v2986
        %v3221 = vunpack.c.h.b16 %v2986
        %v3222 = vunpack.c.l.b16 %v2989
        %v3223 = vunpack.c.l.b16 %v2993
        %v3224 = vunpack.c.h.b16 %v2993
        %v3225 = vunpack.c.l.b16 %v2997
        %v3226 = vunpack.c.l.b16 %v3000
        %v3227 = vunpack.c.h.b16 %v3000
        %v3228 = vunpack.c.l.b16 %v3003
        %v3229 = vunpack.c.l.b16 %v3007
        %v3230 = vunpack.c.h.b16 %v3007
        %v3231 = vunpack.c.l.b16 %v3011
        %v3232 = vunpack.c.l.b16 %v3014
        %v3233 = vunpack.c.h.b16 %v3014
        %v3234 = vunpack.c.l.b16 %v3017
        %v3235 = vunpack.c.l.b16 %v3021
        %v3236 = vunpack.c.h.b16 %v3021
        %v3237 = vunpack.c.l.b16 %v3025
        %v3238 = vunpack.c.l.b16 %v3028
        %v3239 = vunpack.c.h.b16 %v3028
        %v3240 = vunpack.c.l.b16 %v3031
        %v3241 = vunpack.c.l.b16 %v3035
        %v3242 = vunpack.c.h.b16 %v3035
        %v3243 = vunpack.c.l.b16 %v3039
        %v3244 = vunpack.c.l.b16 %v3042
        %v3245 = vunpack.c.h.b16 %v3042
        %v3246 = vunpack.c.l.b16 %v3045
        %v3247 = vunpack.c.l.b16 %v3049
        %v3248 = vunpack.c.h.b16 %v3049
        %v3249 = vunpack.c.l.b16 %v3053
        %v3250 = vunpack.c.l.b16 %v3056
        %v3251 = vunpack.c.h.b16 %v3056
        %v3252 = vunpack.c.l.b16 %v3059
        %v3253 = vunpack.c.l.b16 %v3063
        %v3254 = vunpack.c.h.b16 %v3063
        %v3255 = vunpack.c.l.b16 %v3067
        %v3256 = vunpack.c.l.b16 %v3070
        %v3257 = vunpack.c.h.b16 %v3070
        %v3258 = vunpack.c.l.b16 %v3073
        %v3259 = vunpack.c.l.b16 %v3077
        %v3260 = vunpack.c.h.b16 %v3077
        %v3261 = vunpack.c.l.b16 %v3081
        %v3262 = vunpack.c.l.b16 %v3084
        %v3263 = vunpack.c.h.b16 %v3084
        %v3264 = vunpack.c.l.b16 %v3087
        %v3265 = vunpack.c.l.b16 %v3091
        %v3266 = vunpack.c.h.b16 %v3091
        %v3267 = vunpack.c.l.b16 %v3095
        %v3268 = vunpack.c.l.b16 %v3098
        %v3269 = vunpack.c.h.b16 %v3098
        %v3270 = vunpack.c.l.b16 %v3101
        %v3271 = vunpack.c.l.b16 %v3105
        %v3272 = vunpack.c.h.b16 %v3105
        %v3273 = vunpack.c.l.b16 %v3109
        %v3274 = vunpack.c.l.b16 %v3112
        %v3275 = vunpack.c.h.b16 %v3112
        %v3276 = vunpack.c.l.b16 %v3115
        %v3277 = vunpack.c.l.b16 %v3119
        %v3278 = vunpack.c.h.b16 %v3119
        %v3279 = vunpack.c.l.b16 %v3123
        %v3280 = vunpack.c.l.b16 %v3126
        %v3281 = vunpack.c.h.b16 %v3126
        %v3282 = vunpack.c.l.b16 %v3129
        %v3283 = vunpack.c.l.b16 %v3133
        %v3284 = vunpack.c.h.b16 %v3133
        %v3285 = vunpack.c.l.b16 %v3137
        %v3286 = vunpack.c.l.b16 %v3140
        %v3287 = vunpack.c.h.b16 %v3140
        %v3288 = vunpack.c.l.b16 %v3143
        %v3289 = vunpack.c.l.b16 %v3147
        %v3290 = vunpack.c.h.b16 %v3147
        %v3291 = vunpack.c.l.b16 %v3151
        %v3292 = vunpack.c.l.b16 %v3154
        %v3293 = vunpack.c.h.b16 %v3154
        %v3294 = vunpack.c.l.b16 %v3157
        %v3295 = vpack.c.b16 %v3202, %v3199
        %v3296 = vpack.c.b16 %v3203, %v3200
        %v3297 = vpack.c.b16 %v3204, %v3201
        %v3298 = vpack.c.b16 %v3208, %v3205
        %v3299 = vpack.c.b16 %v3209, %v3206
        %v3300 = vpack.c.b16 %v3210, %v3207
        %v3301 = vpack.c.b16 %v3214, %v3211
        %v3302 = vpack.c.b16 %v3215, %v3212
        %v3303 = vpack.c.b16 %v3216, %v3213
        %v3304 = vpack.c.b16 %v3220, %v3217
        %v3305 = vpack.c.b16 %v3221, %v3218
        %v3306 = vpack.c.b16 %v3222, %v3219
        %v3307 = vpack.c.b16 %v3226, %v3223
        %v3308 = vpack.c.b16 %v3227, %v3224
        %v3309 = vpack.c.b16 %v3228, %v3225
        %v3310 = vpack.c.b16 %v3232, %v3229
        %v3311 = vpack.c.b16 %v3233, %v3230
        %v3312 = vpack.c.b16 %v3234, %v3231
        %v3313 = vpack.c.b16 %v3238, %v3235
        %v3314 = vpack.c.b16 %v3239, %v3236
        %v3315 = vpack.c.b16 %v3240, %v3237
        %v3316 = vpack.c.b16 %v3244, %v3241
        %v3317 = vpack.c.b16 %v3245, %v3242
        %v3318 = vpack.c.b16 %v3246, %v3243
        %v3319 = vpack.c.b16 %v3250, %v3247
        %v3320 = vpack.c.b16 %v3251, %v3248
        %v3321 = vpack.c.b16 %v3252, %v3249
        %v3322 = vpack.c.b16 %v3256, %v3253
        %v3323 = vpack.c.b16 %v3257, %v3254
        %v3324 = vpack.c.b16 %v3258, %v3255
        %v3325 = vpack.c.b16 %v3262, %v3259
        %v3326 = vpack.c.b16 %v3263, %v3260
        %v3327 = vpack.c.b16 %v3264, %v3261
        %v3328 = vpack.c.b16 %v3268, %v3265
        %v3329 = vpack.c.b16 %v3269, %v3266
        %v3330 = vpack.c.b16 %v3270, %v3267
        %v3331 = vpack.c.b16 %v3274, %v3271
        %v3332 = vpack.c.b16 %v3275, %v3272
        %v3333 = vpack.c.b16 %v3276, %v3273
        %v3334 = vpack.c.b16 %v3280, %v3277
        %v3335 = vpack.c.b16 %v3281, %v3278
        %v3336 = vpack.c.b16 %v3282, %v3279
        %v3337 = vpack.c.b16 %v3286, %v3283
        %v3338 = vpack.c.b16 %v3287, %v3284
        %v3339 = vpack.c.b16 %v3288, %v3285
        %v3340 = vpack.c.b16 %v3292, %v3289
        %v3341 = vpack.c.b16 %v3293, %v3290
        %v3342 = vpack.c.b16 %v3294, %v3291
        %v3415 = vunpack.c.l.b16 %v3159
        %v3416 = vunpack.c.l.b16 %v3160
        %v3417 = vunpack.c.l.b16 %v3161
        %v3418 = vunpack.c.l.b16 %v3162
        %v3419 = vunpack.c.l.b16 %v3163
        %v3420 = vunpack.c.l.b16 %v3164
        %v3421 = vunpack.c.l.b16 %v3165
        %v3422 = vunpack.c.l.b16 %v3166
        %v3423 = vunpack.c.l.b16 %v3167
        %v3424 = vunpack.c.l.b16 %v3168
        %v3425 = vunpack.c.l.b16 %v3169
        %v3426 = vunpack.c.l.b16 %v3170
        %v3427 = vunpack.c.l.b16 %v3171
        %v3428 = vunpack.c.l.b16 %v3172
        %v3429 = vunpack.c.l.b16 %v3173
        %v3430 = vunpack.c.l.b16 %v3174
        %v3431 = vunpack.c.l.b16 %v3175
        %v3432 = vunpack.c.l.b16 %v3176
        %v3433 = vunpack.c.l.b16 %v3177
        %v3434 = vunpack.c.l.b16 %v3178
        %v3435 = vunpack.c.l.b16 %v3179
        %v3436 = vunpack.c.l.b16 %v3180
        %v3437 = vunpack.c.l.b16 %v3181
        %v3438 = vunpack.c.l.b16 %v3182
        %v3439 = vunpack.c.l.b16 %v3183
        %v3440 = vunpack.c.l.b16 %v3184
        %v3441 = vunpack.c.l.b16 %v3185
        %v3442 = vunpack.c.l.b16 %v3186
        %v3443 = vunpack.c.l.b16 %v3187
        %v3444 = vunpack.c.l.b16 %v3188
        %v3445 = vunpack.c.l.b16 %v3189
        %v3446 = vunpack.c.l.b16 %v3190
        %v3447 = vunpack.c.l.b16 %v3191
        %v3448 = vunpack.c.l.b16 %v3192
        %v3449 = vunpack.c.l.b16 %v3193
        %v3450 = vunpack.c.l.b16 %v3194
        %v3451 = vunpack.c.l.b16 %v3195
        %v3452 = vunpack.c.l.b16 %v3196
        %v3453 = vunpack.c.l.b16 %v3197
        %v3454 = vunpack.c.l.b16 %v3198
        %v3455 = vpack.c.b16 %v3416, %v3415
        %v3456 = vpack.c.b16 %v3418, %v3417
        %v3457 = vpack.c.b16 %v3420, %v3419
        %v3458 = vpack.c.b16 %v3422, %v3421
        %v3459 = vpack.c.b16 %v3424, %v3423
        %v3460 = vpack.c.b16 %v3426, %v3425
        %v3461 = vpack.c.b16 %v3428, %v3427
        %v3462 = vpack.c.b16 %v3430, %v3429
        %v3463 = vpack.c.b16 %v3432, %v3431
        %v3464 = vpack.c.b16 %v3434, %v3433
        %v3465 = vpack.c.b16 %v3436, %v3435
        %v3466 = vpack.c.b16 %v3438, %v3437
        %v3467 = vpack.c.b16 %v3440, %v3439
        %v3468 = vpack.c.b16 %v3442, %v3441
        %v3469 = vpack.c.b16 %v3444, %v3443
        %v3470 = vpack.c.b16 %v3446, %v3445
        %v3471 = vpack.c.b16 %v3448, %v3447
        %v3472 = vpack.c.b16 %v3450, %v3449
        %v3473 = vpack.c.b16 %v3452, %v3451
        %v3474 = vpack.c.b16 %v3454, %v3453
        %v3496 = vsel %vm794, %v3297, 0
        %v3499 = vsel %vm794, %v3300, 0
        %v3502 = vsel %vm794, %v3303, 0
        %v3505 = vsel %vm794, %v3306, 0
        %v3508 = vsel %vm794, %v3309, 0
        %v3511 = vsel %vm794, %v3312, 0
        %v3514 = vsel %vm794, %v3315, 0
        %v3517 = vsel %vm794, %v3318, 0
        %v3520 = vsel %vm794, %v3321, 0
        %v3523 = vsel %vm794, %v3324, 0
        %v3526 = vsel %vm794, %v3327, 0
        %v3529 = vsel %vm794, %v3330, 0
        %v3532 = vsel %vm794, %v3333, 0
        %v3535 = vsel %vm794, %v3336, 0
        %v3538 = vsel %vm794, %v3339, 0
        %v3541 = vsel %vm794, %v3342, 0
        %3543 = vmatprep.subr.bf16.mxu0 0
        %3544 = vmatpush1.bf16.msra.mxu0 %v3455
        %3545 = vmatprep.subr.bf16.mxu0 0
        %3546 = vmatpush1.bf16.msra.mxu0 %v3456
        %3547 = vmatprep.subr.bf16.mxu0 0
        %3548 = vmatpush1.bf16.msra.mxu0 %v3457
        %3549 = vmatprep.subr.bf16.mxu0 0
        %3550 = vmatpush1.bf16.msra.mxu0 %v3458
        %3551 = vmatprep.subr.bf16.mxu0 0
        %3552 = vmatpush1.bf16.msra.mxu0 %v3459
        %3553 = vmatprep.subr.bf16.mxu0 0
        %3554 = vmatpush1.bf16.msra.mxu0 %v3460
        %3555 = vmatprep.subr.bf16.mxu0 0
        %3556 = vmatpush1.bf16.msra.mxu0 %v3461
        %3557 = vmatprep.subr.bf16.mxu0 0
        %3558 = vmatpush1.bf16.msra.mxu0 %v3462
        %3559 = vmatprep.subr.bf16.mxu0 0
        %3560 = vmatpush1.bf16.msra.mxu0 %v3463
        %3561 = vmatprep.subr.bf16.mxu0 0
        %3562 = vmatpush1.bf16.msra.mxu0 %v3464
        %3563 = vmatprep.subr.bf16.mxu0 0
        %3564 = vmatpush1.bf16.msra.mxu0 %v3465
        %3565 = vmatprep.subr.bf16.mxu0 0
        %3566 = vmatpush1.bf16.msra.mxu0 %v3466
        %3567 = vmatprep.subr.bf16.mxu0 0
        %3568 = vmatpush1.bf16.msra.mxu0 %v3467
        %3569 = vmatprep.subr.bf16.mxu0 0
        %3570 = vmatpush1.bf16.msra.mxu0 %v3468
        %3571 = vmatprep.subr.bf16.mxu0 0
        %3572 = vmatpush1.bf16.msra.mxu0 %v3469
        %3573 = vmatprep.subr.bf16.mxu0 0
        %3574 = vmatpush1.bf16.msra.mxu0 %v3470
        %3575 = vmatprep.mubr.bf16.mxu0 %v3296
        %3576 = vmatmul.mubr.bf16.gmra.mrb[0].mxu0 %v3295
        %v3577 = vpop.f32.mrb[0].mxu0
        %v3578 = vadd.f32 0.0, %v3577
        %v3579 = vpop.f32.mrb[0].mxu0
        %v3580 = vpop.f32.mrb[0].mxu0
        %v3581 = vadd.f32 0.0, %v3580
        %v3582 = vpop.f32.mrb[0].mxu0
        %3583 = vmatprep.mubr.bf16.mxu0 %v3299
        %3584 = vmatmul.mubr.bf16.gmra.mrb[0].mxu0 %v3298
        %v3585 = vpop.f32.mrb[0].mxu0
        %v3586 = vadd.f32 0.0, %v3585
        %v3587 = vpop.f32.mrb[0].mxu0
        %v3588 = vpop.f32.mrb[0].mxu0
        %v3589 = vadd.f32 0.0, %v3588
        %v3590 = vpop.f32.mrb[0].mxu0
        %3591 = vmatprep.mubr.bf16.mxu0 %v3302
        %3592 = vmatmul.mubr.bf16.gmra.mrb[0].mxu0 %v3301
        %v3593 = vpop.f32.mrb[0].mxu0
        %v3594 = vadd.f32 0.0, %v3593
        %v3595 = vpop.f32.mrb[0].mxu0
        %v3596 = vpop.f32.mrb[0].mxu0
        %v3597 = vadd.f32 0.0, %v3596
        %v3598 = vpop.f32.mrb[0].mxu0
        %3599 = vmatprep.mubr.bf16.mxu0 %v3305
        %3600 = vmatmul.mubr.bf16.gmra.mrb[0].mxu0 %v3304
        %v3601 = vpop.f32.mrb[0].mxu0
        %v3602 = vadd.f32 0.0, %v3601
        %v3603 = vpop.f32.mrb[0].mxu0
        %v3604 = vpop.f32.mrb[0].mxu0
        %v3605 = vadd.f32 0.0, %v3604
        %v3606 = vpop.f32.mrb[0].mxu0
        %3607 = vmatprep.mubr.bf16.mxu0 %v3308
        %3608 = vmatmul.mubr.bf16.gmra.mrb[0].mxu0 %v3307
        %v3609 = vpop.f32.mrb[0].mxu0
        %v3610 = vadd.f32 0.0, %v3609
        %v3611 = vpop.f32.mrb[0].mxu0
        %v3612 = vpop.f32.mrb[0].mxu0
        %v3613 = vadd.f32 0.0, %v3612
        %v3614 = vpop.f32.mrb[0].mxu0
        %3615 = vmatprep.mubr.bf16.mxu0 %v3311
        %3616 = vmatmul.mubr.bf16.gmra.mrb[0].mxu0 %v3310
        %v3617 = vpop.f32.mrb[0].mxu0
        %v3618 = vadd.f32 0.0, %v3617
        %v3619 = vpop.f32.mrb[0].mxu0
        %v3620 = vpop.f32.mrb[0].mxu0
        %v3621 = vadd.f32 0.0, %v3620
        %v3622 = vpop.f32.mrb[0].mxu0
        %3623 = vmatprep.mubr.bf16.mxu0 %v3314
        %3624 = vmatmul.mubr.bf16.gmra.mrb[0].mxu0 %v3313
        %v3625 = vpop.f32.mrb[0].mxu0
        %v3626 = vadd.f32 0.0, %v3625
        %v3627 = vpop.f32.mrb[0].mxu0
        %v3628 = vpop.f32.mrb[0].mxu0
        %v3629 = vadd.f32 0.0, %v3628
        %v3630 = vpop.f32.mrb[0].mxu0
        %3631 = vmatprep.mubr.bf16.mxu0 %v3317
        %3632 = vmatmul.mubr.bf16.gmra.mrb[0].mxu0 %v3316
        %v3633 = vpop.f32.mrb[0].mxu0
        %v3634 = vadd.f32 0.0, %v3633
        %v3635 = vpop.f32.mrb[0].mxu0
        %v3636 = vpop.f32.mrb[0].mxu0
        %v3637 = vadd.f32 0.0, %v3636
        %v3638 = vpop.f32.mrb[0].mxu0
        %3639 = vmatprep.mubr.bf16.mxu0 %v3320
        %3640 = vmatmul.mubr.bf16.gmra.mrb[0].mxu0 %v3319
        %v3641 = vpop.f32.mrb[0].mxu0
        %v3642 = vadd.f32 0.0, %v3641
        %v3643 = vpop.f32.mrb[0].mxu0
        %v3644 = vpop.f32.mrb[0].mxu0
        %v3645 = vadd.f32 0.0, %v3644
        %v3646 = vpop.f32.mrb[0].mxu0
        %3647 = vmatprep.mubr.bf16.mxu0 %v3323
        %3648 = vmatmul.mubr.bf16.gmra.mrb[0].mxu0 %v3322
        %v3649 = vpop.f32.mrb[0].mxu0
        %v3650 = vadd.f32 0.0, %v3649
        %v3651 = vpop.f32.mrb[0].mxu0
        %v3652 = vpop.f32.mrb[0].mxu0
        %v3653 = vadd.f32 0.0, %v3652
        %v3654 = vpop.f32.mrb[0].mxu0
        %3655 = vmatprep.mubr.bf16.mxu0 %v3326
        %3656 = vmatmul.mubr.bf16.gmra.mrb[0].mxu0 %v3325
        %v3657 = vpop.f32.mrb[0].mxu0
        %v3658 = vadd.f32 0.0, %v3657
        %v3659 = vpop.f32.mrb[0].mxu0
        %v3660 = vpop.f32.mrb[0].mxu0
        %v3661 = vadd.f32 0.0, %v3660
        %v3662 = vpop.f32.mrb[0].mxu0
        %3663 = vmatprep.mubr.bf16.mxu0 %v3329
        %3664 = vmatmul.mubr.bf16.gmra.mrb[0].mxu0 %v3328
        %v3665 = vpop.f32.mrb[0].mxu0
        %v3666 = vadd.f32 0.0, %v3665
        %v3667 = vpop.f32.mrb[0].mxu0
        %v3668 = vpop.f32.mrb[0].mxu0
        %v3669 = vadd.f32 0.0, %v3668
        %v3670 = vpop.f32.mrb[0].mxu0
        %3671 = vmatprep.mubr.bf16.mxu0 %v3332
        %3672 = vmatmul.mubr.bf16.gmra.mrb[0].mxu0 %v3331
        %v3673 = vpop.f32.mrb[0].mxu0
        %v3674 = vadd.f32 0.0, %v3673
        %v3675 = vpop.f32.mrb[0].mxu0
        %v3676 = vpop.f32.mrb[0].mxu0
        %v3677 = vadd.f32 0.0, %v3676
        %v3678 = vpop.f32.mrb[0].mxu0
        %3679 = vmatprep.mubr.bf16.mxu0 %v3335
        %3680 = vmatmul.mubr.bf16.gmra.mrb[0].mxu0 %v3334
        %v3681 = vpop.f32.mrb[0].mxu0
        %v3682 = vadd.f32 0.0, %v3681
        %v3683 = vpop.f32.mrb[0].mxu0
        %v3684 = vpop.f32.mrb[0].mxu0
        %v3685 = vadd.f32 0.0, %v3684
        %v3686 = vpop.f32.mrb[0].mxu0
        %3687 = vmatprep.mubr.bf16.mxu0 %v3338
        %3688 = vmatmul.mubr.bf16.gmra.mrb[0].mxu0 %v3337
        %v3689 = vpop.f32.mrb[0].mxu0
        %v3690 = vadd.f32 0.0, %v3689
        %v3691 = vpop.f32.mrb[0].mxu0
        %v3692 = vpop.f32.mrb[0].mxu0
        %v3693 = vadd.f32 0.0, %v3692
        %v3694 = vpop.f32.mrb[0].mxu0
        %3695 = vmatprep.mubr.bf16.mxu0 %v3341
        %3696 = vmatmul.mubr.bf16.gmra.mrb[0].mxu0 %v3340
        %v3697 = vpop.f32.mrb[0].mxu0
        %v3698 = vadd.f32 0.0, %v3697
        %v3699 = vpop.f32.mrb[0].mxu0
        %v3700 = vpop.f32.mrb[0].mxu0
        %v3701 = vadd.f32 0.0, %v3700
        %v3702 = vpop.f32.mrb[0].mxu0
        %3703 = vdwg.mxu0
        %3704 = vmatprep.subr.bf16.mxu0 0
        %3705 = vmatpush1.bf16.msra.mxu0 %v3471
        %3706 = vmatprep.subr.bf16.mxu0 0
        %3707 = vmatpush1.bf16.msra.mxu0 %v3472
        %3708 = vmatprep.subr.bf16.mxu0 0
        %3709 = vmatpush1.bf16.msra.mxu0 %v3473
        %3710 = vmatprep.subr.bf16.mxu0 0
        %3711 = vmatpush1.bf16.msra.mxu0 %v3474
        %3712 = vmatprep.subr.bf16.mxu0 0
        %3713 = vmatpush1.bf16.msra.mxu0 0
        %3714 = vmatprep.subr.bf16.mxu0 0
        %3715 = vmatpush1.bf16.msra.mxu0 0
        %3716 = vmatprep.subr.bf16.mxu0 0
        %3717 = vmatpush1.bf16.msra.mxu0 0
        %3718 = vmatprep.subr.bf16.mxu0 0
        %3719 = vmatpush1.bf16.msra.mxu0 0
        %3720 = vmatprep.subr.bf16.mxu0 0
        %3721 = vmatpush1.bf16.msra.mxu0 0
        %3722 = vmatprep.subr.bf16.mxu0 0
        %3723 = vmatpush1.bf16.msra.mxu0 0
        %3724 = vmatprep.subr.bf16.mxu0 0
        %3725 = vmatpush1.bf16.msra.mxu0 0
        %3726 = vmatprep.subr.bf16.mxu0 0
        %3727 = vmatpush1.bf16.msra.mxu0 0
        %3728 = vmatprep.subr.bf16.mxu0 0
        %3729 = vmatpush1.bf16.msra.mxu0 0
        %3730 = vmatprep.subr.bf16.mxu0 0
        %3731 = vmatpush1.bf16.msra.mxu0 0
        %3732 = vmatprep.subr.bf16.mxu0 0
        %3733 = vmatpush1.bf16.msra.mxu0 0
        %3734 = vmatprep.subr.bf16.mxu0 0
        %3735 = vmatpush1.bf16.msra.mxu0 0
        %3736 = vmatprep.mubr.bf16.mxu0 0
        %3737 = vmatmul.mubr.bf16.gmra.mrb[0].mxu0 %v3496
        %v3738 = vpop.f32.mrb[0].mxu0
        %v3739 = vadd.f32 %v3578, %v3738
        %v3740 = vpop.f32.mrb[0].mxu0
        %v3741 = vpop.f32.mrb[0].mxu0
        %v3742 = vadd.f32 %v3581, %v3741
        %v3743 = vpop.f32.mrb[0].mxu0
        %3744 = vmatprep.mubr.bf16.mxu0 0
        %3745 = vmatmul.mubr.bf16.gmra.mrb[0].mxu0 %v3499
        %v3746 = vpop.f32.mrb[0].mxu0
        %v3747 = vadd.f32 %v3586, %v3746
        %v3748 = vpop.f32.mrb[0].mxu0
        %v3749 = vpop.f32.mrb[0].mxu0
        %v3750 = vadd.f32 %v3589, %v3749
        %v3751 = vpop.f32.mrb[0].mxu0
        %3752 = vmatprep.mubr.bf16.mxu0 0
        %3753 = vmatmul.mubr.bf16.gmra.mrb[0].mxu0 %v3502
        %v3754 = vpop.f32.mrb[0].mxu0
        %v3755 = vadd.f32 %v3594, %v3754
        %v3756 = vpop.f32.mrb[0].mxu0
        %v3757 = vpop.f32.mrb[0].mxu0
        %v3758 = vadd.f32 %v3597, %v3757
        %v3759 = vpop.f32.mrb[0].mxu0
        %3760 = vmatprep.mubr.bf16.mxu0 0
        %3761 = vmatmul.mubr.bf16.gmra.mrb[0].mxu0 %v3505
        %v3762 = vpop.f32.mrb[0].mxu0
        %v3763 = vadd.f32 %v3602, %v3762
        %v3764 = vpop.f32.mrb[0].mxu0
        %v3765 = vpop.f32.mrb[0].mxu0
        %v3766 = vadd.f32 %v3605, %v3765
        %v3767 = vpop.f32.mrb[0].mxu0
        %3768 = vmatprep.mubr.bf16.mxu0 0
        %3769 = vmatmul.mubr.bf16.gmra.mrb[0].mxu0 %v3508
        %v3770 = vpop.f32.mrb[0].mxu0
        %v3771 = vadd.f32 %v3610, %v3770
        %v3772 = vpop.f32.mrb[0].mxu0
        %v3773 = vpop.f32.mrb[0].mxu0
        %v3774 = vadd.f32 %v3613, %v3773
        %v3775 = vpop.f32.mrb[0].mxu0
        %3776 = vmatprep.mubr.bf16.mxu0 0
        %3777 = vmatmul.mubr.bf16.gmra.mrb[0].mxu0 %v3511
        %v3778 = vpop.f32.mrb[0].mxu0
        %v3779 = vadd.f32 %v3618, %v3778
        %v3780 = vpop.f32.mrb[0].mxu0
        %v3781 = vpop.f32.mrb[0].mxu0
        %v3782 = vadd.f32 %v3621, %v3781
        %v3783 = vpop.f32.mrb[0].mxu0
        %3784 = vmatprep.mubr.bf16.mxu0 0
        %3785 = vmatmul.mubr.bf16.gmra.mrb[0].mxu0 %v3514
        %v3786 = vpop.f32.mrb[0].mxu0
        %v3787 = vadd.f32 %v3626, %v3786
        %v3788 = vpop.f32.mrb[0].mxu0
        %v3789 = vpop.f32.mrb[0].mxu0
        %v3790 = vadd.f32 %v3629, %v3789
        %v3791 = vpop.f32.mrb[0].mxu0
        %3792 = vmatprep.mubr.bf16.mxu0 0
        %3793 = vmatmul.mubr.bf16.gmra.mrb[0].mxu0 %v3517
        %v3794 = vpop.f32.mrb[0].mxu0
        %v3795 = vadd.f32 %v3634, %v3794
        %v3796 = vpop.f32.mrb[0].mxu0
        %v3797 = vpop.f32.mrb[0].mxu0
        %v3798 = vadd.f32 %v3637, %v3797
        %v3799 = vpop.f32.mrb[0].mxu0
        %3800 = vmatprep.mubr.bf16.mxu0 0
        %3801 = vmatmul.mubr.bf16.gmra.mrb[0].mxu0 %v3520
        %v3802 = vpop.f32.mrb[0].mxu0
        %v3803 = vadd.f32 %v3642, %v3802
        %v3804 = vpop.f32.mrb[0].mxu0
        %v3805 = vpop.f32.mrb[0].mxu0
        %v3806 = vadd.f32 %v3645, %v3805
        %v3807 = vpop.f32.mrb[0].mxu0
        %3808 = vmatprep.mubr.bf16.mxu0 0
        %3809 = vmatmul.mubr.bf16.gmra.mrb[0].mxu0 %v3523
        %v3810 = vpop.f32.mrb[0].mxu0
        %v3811 = vadd.f32 %v3650, %v3810
        %v3812 = vpop.f32.mrb[0].mxu0
        %v3813 = vpop.f32.mrb[0].mxu0
        %v3814 = vadd.f32 %v3653, %v3813
        %v3815 = vpop.f32.mrb[0].mxu0
        %3816 = vmatprep.mubr.bf16.mxu0 0
        %3817 = vmatmul.mubr.bf16.gmra.mrb[0].mxu0 %v3526
        %v3818 = vpop.f32.mrb[0].mxu0
        %v3819 = vadd.f32 %v3658, %v3818
        %v3820 = vpop.f32.mrb[0].mxu0
        %v3821 = vpop.f32.mrb[0].mxu0
        %v3822 = vadd.f32 %v3661, %v3821
        %v3823 = vpop.f32.mrb[0].mxu0
        %3824 = vmatprep.mubr.bf16.mxu0 0
        %3825 = vmatmul.mubr.bf16.gmra.mrb[0].mxu0 %v3529
        %v3826 = vpop.f32.mrb[0].mxu0
        %v3827 = vadd.f32 %v3666, %v3826
        %v3828 = vpop.f32.mrb[0].mxu0
        %v3829 = vpop.f32.mrb[0].mxu0
        %v3830 = vadd.f32 %v3669, %v3829
        %v3831 = vpop.f32.mrb[0].mxu0
        %3832 = vmatprep.mubr.bf16.mxu0 0
        %3833 = vmatmul.mubr.bf16.gmra.mrb[0].mxu0 %v3532
        %v3834 = vpop.f32.mrb[0].mxu0
        %v3835 = vadd.f32 %v3674, %v3834
        %v3836 = vpop.f32.mrb[0].mxu0
        %v3837 = vpop.f32.mrb[0].mxu0
        %v3838 = vadd.f32 %v3677, %v3837
        %v3839 = vpop.f32.mrb[0].mxu0
        %3840 = vmatprep.mubr.bf16.mxu0 0
        %3841 = vmatmul.mubr.bf16.gmra.mrb[0].mxu0 %v3535
        %v3842 = vpop.f32.mrb[0].mxu0
        %v3843 = vadd.f32 %v3682, %v3842
        %v3844 = vpop.f32.mrb[0].mxu0
        %v3845 = vpop.f32.mrb[0].mxu0
        %v3846 = vadd.f32 %v3685, %v3845
        %v3847 = vpop.f32.mrb[0].mxu0
        %3848 = vmatprep.mubr.bf16.mxu0 0
        %3849 = vmatmul.mubr.bf16.gmra.mrb[0].mxu0 %v3538
        %v3850 = vpop.f32.mrb[0].mxu0
        %v3851 = vadd.f32 %v3690, %v3850
        %v3852 = vpop.f32.mrb[0].mxu0
        %v3853 = vpop.f32.mrb[0].mxu0
        %v3854 = vadd.f32 %v3693, %v3853
        %v3855 = vpop.f32.mrb[0].mxu0
        %3856 = vmatprep.mubr.bf16.mxu0 0
        %3857 = vmatmul.mubr.bf16.gmra.mrb[0].mxu0 %v3541
        %v3858 = vpop.f32.mrb[0].mxu0
        %v3859 = vadd.f32 %v3698, %v3858
        %v3860 = vpop.f32.mrb[0].mxu0
        %v3861 = vpop.f32.mrb[0].mxu0
        %v3862 = vadd.f32 %v3701, %v3861
        %v3863 = vpop.f32.mrb[0].mxu0
        %3864 = vdwg.mxu0
        %v3865 = vadd.f32 %v2771, %v3739
        %v3866 = vadd.f32 %v2772, %v3742
        %v3867 = vadd.f32 %v2773, %v3747
        %v3868 = vadd.f32 %v2774, %v3750
        %v3869 = vadd.f32 %v2775, %v3755
        %v3870 = vadd.f32 %v2776, %v3758
        %v3871 = vadd.f32 %v2777, %v3763
        %v3872 = vadd.f32 %v2778, %v3766
        %v3873 = vadd.f32 %v2779, %v3771
        %v3874 = vadd.f32 %v2780, %v3774
        %v3875 = vadd.f32 %v2781, %v3779
        %v3876 = vadd.f32 %v2782, %v3782
        %v3877 = vadd.f32 %v2783, %v3787
        %v3878 = vadd.f32 %v2784, %v3790
        %v3879 = vadd.f32 %v2785, %v3795
        %v3880 = vadd.f32 %v2786, %v3798
        %v3881 = vadd.f32 %v2787, %v3803
        %v3882 = vadd.f32 %v2788, %v3806
        %v3883 = vadd.f32 %v2789, %v3811
        %v3884 = vadd.f32 %v2790, %v3814
        %v3885 = vadd.f32 %v2791, %v3819
        %v3886 = vadd.f32 %v2792, %v3822
        %v3887 = vadd.f32 %v2793, %v3827
        %v3888 = vadd.f32 %v2794, %v3830
        %v3889 = vadd.f32 %v2795, %v3835
        %v3890 = vadd.f32 %v2796, %v3838
        %v3891 = vadd.f32 %v2797, %v3843
        %v3892 = vadd.f32 %v2798, %v3846
        %v3893 = vadd.f32 %v2799, %v3851
        %v3894 = vadd.f32 %v2800, %v3854
        %v3895 = vadd.f32 %v2801, %v3859
        %v3896 = vadd.f32 %v2802, %v3862
        %s3897 = scalar_lea.vmem %s239, 36
        %v3898 = vld [vmem:[%s3897] sm:$0xff]
        %v3899 = vld [vmem:[%s3897 + $0x8] sm:$0xf]
        %v3900 = vld [vmem:[%s3897 + $0xc] sm:$0xff]
        %v3901 = vld [vmem:[%s3897 + $0x14] sm:$0xf]
        %v3902 = vld [vmem:[%s3897 + $0x24] sm:$0xff]
        %v3903 = vld [vmem:[%s3897 + $0x2c] sm:$0xf]
        %v3904 = vld [vmem:[%s3897 + $0x30] sm:$0xff]
        %v3905 = vld [vmem:[%s3897 + $0x38] sm:$0xf]
        %v3906 = vld [vmem:[%s3897 + $0x48] sm:$0xff]
        %v3907 = vld [vmem:[%s3897 + $0x50] sm:$0xf]
        %v3908 = vld [vmem:[%s3897 + $0x54] sm:$0xff]
        %v3909 = vld [vmem:[%s3897 + $0x5c] sm:$0xf]
        %v3910 = vld [vmem:[%s3897 + $0x6c] sm:$0xff]
        %v3911 = vld [vmem:[%s3897 + $0x74] sm:$0xf]
        %v3912 = vld [vmem:[%s3897 + $0x78] sm:$0xff]
        %v3913 = vld [vmem:[%s3897 + $0x80] sm:$0xf]
        %v3914 = vld [vmem:[%s3897 + $0x90] sm:$0xff]
        %v3915 = vld [vmem:[%s3897 + $0x98] sm:$0xf]
        %v3916 = vld [vmem:[%s3897 + $0x9c] sm:$0xff]
        %v3917 = vld [vmem:[%s3897 + $0xa4] sm:$0xf]
        %v3918 = vld [vmem:[%s3897 + $0xb4] sm:$0xff]
        %v3919 = vld [vmem:[%s3897 + $0xbc] sm:$0xf]
        %v3920 = vld [vmem:[%s3897 + $0xc0] sm:$0xff]
        %v3921 = vld [vmem:[%s3897 + $0xc8] sm:$0xf]
        %v3922 = vld [vmem:[%s3897 + $0xd8] sm:$0xff]
        %v3923 = vld [vmem:[%s3897 + $0xe0] sm:$0xf]
        %v3924 = vld [vmem:[%s3897 + $0xe4] sm:$0xff]
        %v3925 = vld [vmem:[%s3897 + $0xec] sm:$0xf]
        %v3926 = vld [vmem:[%s3897 + $0xfc] sm:$0xff]
        %v3927 = vld [vmem:[%s3897 + $0x104] sm:$0xf]
        %v3928 = vld [vmem:[%s3897 + $0x108] sm:$0xff]
        %v3929 = vld [vmem:[%s3897 + $0x110] sm:$0xf]
        %v3930 = vld [vmem:[%s3897 + $0x120] sm:$0xff]
        %v3931 = vld [vmem:[%s3897 + $0x128] sm:$0xf]
        %v3932 = vld [vmem:[%s3897 + $0x12c] sm:$0xff]
        %v3933 = vld [vmem:[%s3897 + $0x134] sm:$0xf]
        %v3934 = vld [vmem:[%s3897 + $0x144] sm:$0xff]
        %v3935 = vld [vmem:[%s3897 + $0x14c] sm:$0xf]
        %v3936 = vld [vmem:[%s3897 + $0x150] sm:$0xff]
        %v3937 = vld [vmem:[%s3897 + $0x158] sm:$0xf]
        %v3938 = vld [vmem:[%s3897 + $0x168] sm:$0xff]
        %v3939 = vld [vmem:[%s3897 + $0x170] sm:$0xf]
        %v3940 = vld [vmem:[%s3897 + $0x174] sm:$0xff]
        %v3941 = vld [vmem:[%s3897 + $0x17c] sm:$0xf]
        %v3942 = vld [vmem:[%s3897 + $0x18c] sm:$0xff]
        %v3943 = vld [vmem:[%s3897 + $0x194] sm:$0xf]
        %v3944 = vld [vmem:[%s3897 + $0x198] sm:$0xff]
        %v3945 = vld [vmem:[%s3897 + $0x1a0] sm:$0xf]
        %v3946 = vld [vmem:[%s3897 + $0x1b0] sm:$0xff]
        %v3947 = vld [vmem:[%s3897 + $0x1b8] sm:$0xf]
        %v3948 = vld [vmem:[%s3897 + $0x1bc] sm:$0xff]
        %v3949 = vld [vmem:[%s3897 + $0x1c4] sm:$0xf]
        %v3950 = vld [vmem:[%s3897 + $0x1d4] sm:$0xff]
        %v3951 = vld [vmem:[%s3897 + $0x1dc] sm:$0xf]
        %v3952 = vld [vmem:[%s3897 + $0x1e0] sm:$0xff]
        %v3953 = vld [vmem:[%s3897 + $0x1e8] sm:$0xf]
        %v3954 = vld [vmem:[%s3897 + $0x1f8] sm:$0xff]
        %v3955 = vld [vmem:[%s3897 + $0x200] sm:$0xf]
        %v3956 = vld [vmem:[%s3897 + $0x204] sm:$0xff]
        %v3957 = vld [vmem:[%s3897 + $0x20c] sm:$0xf]
        %v3958 = vld [vmem:[%s3897 + $0x21c] sm:$0xff]
        %v3959 = vld [vmem:[%s3897 + $0x224] sm:$0xf]
        %v3960 = vld [vmem:[%s3897 + $0x228] sm:$0xff]
        %v3961 = vld [vmem:[%s3897 + $0x230] sm:$0xf]
        %s3962 = scalar_lea.vmem %s248, 480
        %v3963 = vld [vmem:[%s3962] sm:$0xf]
        %v3964 = vld [vmem:[%s3962 + $0x4] sm:$0xf]
        %v3965 = vld [vmem:[%s3962 + $0x8] sm:$0xf]
        %v3966 = vld [vmem:[%s3962 + $0xc] sm:$0xf]
        %v3967 = vld [vmem:[%s3962 + $0x10] sm:$0xf]
        %v3968 = vld [vmem:[%s3962 + $0x14] sm:$0xf]
        %v3969 = vld [vmem:[%s3962 + $0x18] sm:$0xf]
        %v3970 = vld [vmem:[%s3962 + $0x1c] sm:$0xf]
        %v3971 = vld [vmem:[%s3962 + $0x20] sm:$0xf]
        %v3972 = vld [vmem:[%s3962 + $0x24] sm:$0xf]
        %v3973 = vld [vmem:[%s3962 + $0x28] sm:$0xf]
        %v3974 = vld [vmem:[%s3962 + $0x2c] sm:$0xf]
        %v3975 = vld [vmem:[%s3962 + $0x30] sm:$0xf]
        %v3976 = vld [vmem:[%s3962 + $0x34] sm:$0xf]
        %v3977 = vld [vmem:[%s3962 + $0x38] sm:$0xf]
        %v3978 = vld [vmem:[%s3962 + $0x3c] sm:$0xf]
        %v3979 = vld [vmem:[%s3962 + $0x40] sm:$0xf]
        %v3980 = vld [vmem:[%s3962 + $0x44] sm:$0xf]
        %v3981 = vld [vmem:[%s3962 + $0x48] sm:$0xf]
        %v3982 = vld [vmem:[%s3962 + $0x4c] sm:$0xf]
        %v3983 = vld [vmem:[%s3962 + $0x50] sm:$0xf]
        %v3984 = vld [vmem:[%s3962 + $0x54] sm:$0xf]
        %v3985 = vld [vmem:[%s3962 + $0x58] sm:$0xf]
        %v3986 = vld [vmem:[%s3962 + $0x5c] sm:$0xf]
        %v3987 = vld [vmem:[%s3962 + $0x60] sm:$0xf]
        %v3988 = vld [vmem:[%s3962 + $0x64] sm:$0xf]
        %v3989 = vld [vmem:[%s3962 + $0x68] sm:$0xf]
        %v3990 = vld [vmem:[%s3962 + $0x6c] sm:$0xf]
        %v3991 = vld [vmem:[%s3962 + $0x70] sm:$0xf]
        %v3992 = vld [vmem:[%s3962 + $0x74] sm:$0xf]
        %v3993 = vld [vmem:[%s3962 + $0x78] sm:$0xf]
        %v3994 = vld [vmem:[%s3962 + $0x7c] sm:$0xf]
        %v3995 = vld [vmem:[%s3962 + $0x80] sm:$0xf]
        %v3996 = vld [vmem:[%s3962 + $0x84] sm:$0xf]
        %v3997 = vld [vmem:[%s3962 + $0x88] sm:$0xf]
        %v3998 = vld [vmem:[%s3962 + $0x8c] sm:$0xf]
        %v3999 = vld [vmem:[%s3962 + $0x90] sm:$0xf]
        %v4000 = vld [vmem:[%s3962 + $0x94] sm:$0xf]
        %v4001 = vld [vmem:[%s3962 + $0x98] sm:$0xf]
        %v4002 = vld [vmem:[%s3962 + $0x9c] sm:$0xf]
        %v4067 = vunpack.c.l.b16 %v3898
        %v4068 = vunpack.c.h.b16 %v3898
        %v4069 = vunpack.c.l.b16 %v3899
        %v4070 = vunpack.c.l.b16 %v3900
        %v4071 = vunpack.c.h.b16 %v3900
        %v4072 = vunpack.c.l.b16 %v3901
        %v4073 = vunpack.c.l.b16 %v3902
        %v4074 = vunpack.c.h.b16 %v3902
        %v4075 = vunpack.c.l.b16 %v3903
        %v4076 = vunpack.c.l.b16 %v3904
        %v4077 = vunpack.c.h.b16 %v3904
        %v4078 = vunpack.c.l.b16 %v3905
        %v4079 = vunpack.c.l.b16 %v3906
        %v4080 = vunpack.c.h.b16 %v3906
        %v4081 = vunpack.c.l.b16 %v3907
        %v4082 = vunpack.c.l.b16 %v3908
        %v4083 = vunpack.c.h.b16 %v3908
        %v4084 = vunpack.c.l.b16 %v3909
        %v4085 = vunpack.c.l.b16 %v3910
        %v4086 = vunpack.c.h.b16 %v3910
        %v4087 = vunpack.c.l.b16 %v3911
        %v4088 = vunpack.c.l.b16 %v3912
        %v4089 = vunpack.c.h.b16 %v3912
        %v4090 = vunpack.c.l.b16 %v3913
        %v4091 = vunpack.c.l.b16 %v3914
        %v4092 = vunpack.c.h.b16 %v3914
        %v4093 = vunpack.c.l.b16 %v3915
        %v4094 = vunpack.c.l.b16 %v3916
        %v4095 = vunpack.c.h.b16 %v3916
        %v4096 = vunpack.c.l.b16 %v3917
        %v4097 = vunpack.c.l.b16 %v3918
        %v4098 = vunpack.c.h.b16 %v3918
        %v4099 = vunpack.c.l.b16 %v3919
        %v4100 = vunpack.c.l.b16 %v3920
        %v4101 = vunpack.c.h.b16 %v3920
        %v4102 = vunpack.c.l.b16 %v3921
        %v4103 = vunpack.c.l.b16 %v3922
        %v4104 = vunpack.c.h.b16 %v3922
        %v4105 = vunpack.c.l.b16 %v3923
        %v4106 = vunpack.c.l.b16 %v3924
        %v4107 = vunpack.c.h.b16 %v3924
        %v4108 = vunpack.c.l.b16 %v3925
        %v4109 = vunpack.c.l.b16 %v3926
        %v4110 = vunpack.c.h.b16 %v3926
        %v4111 = vunpack.c.l.b16 %v3927
        %v4112 = vunpack.c.l.b16 %v3928
        %v4113 = vunpack.c.h.b16 %v3928
        %v4114 = vunpack.c.l.b16 %v3929
        %v4115 = vunpack.c.l.b16 %v3930
        %v4116 = vunpack.c.h.b16 %v3930
        %v4117 = vunpack.c.l.b16 %v3931
        %v4118 = vunpack.c.l.b16 %v3932
        %v4119 = vunpack.c.h.b16 %v3932
        %v4120 = vunpack.c.l.b16 %v3933
        %v4121 = vunpack.c.l.b16 %v3934
        %v4122 = vunpack.c.h.b16 %v3934
        %v4123 = vunpack.c.l.b16 %v3935
        %v4124 = vunpack.c.l.b16 %v3936
        %v4125 = vunpack.c.h.b16 %v3936
        %v4126 = vunpack.c.l.b16 %v3937
        %v4127 = vunpack.c.l.b16 %v3938
        %v4128 = vunpack.c.h.b16 %v3938
        %v4129 = vunpack.c.l.b16 %v3939
        %v4130 = vunpack.c.l.b16 %v3940
        %v4131 = vunpack.c.h.b16 %v3940
        %v4132 = vunpack.c.l.b16 %v3941
        %v4133 = vunpack.c.l.b16 %v3942
        %v4134 = vunpack.c.h.b16 %v3942
        %v4135 = vunpack.c.l.b16 %v3943
        %v4136 = vunpack.c.l.b16 %v3944
        %v4137 = vunpack.c.h.b16 %v3944
        %v4138 = vunpack.c.l.b16 %v3945
        %v4139 = vunpack.c.l.b16 %v3946
        %v4140 = vunpack.c.h.b16 %v3946
        %v4141 = vunpack.c.l.b16 %v3947
        %v4142 = vunpack.c.l.b16 %v3948
        %v4143 = vunpack.c.h.b16 %v3948
        %v4144 = vunpack.c.l.b16 %v3949
        %v4145 = vunpack.c.l.b16 %v3950
        %v4146 = vunpack.c.h.b16 %v3950
        %v4147 = vunpack.c.l.b16 %v3951
        %v4148 = vunpack.c.l.b16 %v3952
        %v4149 = vunpack.c.h.b16 %v3952
        %v4150 = vunpack.c.l.b16 %v3953
        %v4151 = vunpack.c.l.b16 %v3954
        %v4152 = vunpack.c.h.b16 %v3954
        %v4153 = vunpack.c.l.b16 %v3955
        %v4154 = vunpack.c.l.b16 %v3956
        %v4155 = vunpack.c.h.b16 %v3956
        %v4156 = vunpack.c.l.b16 %v3957
        %v4157 = vunpack.c.l.b16 %v3958
        %v4158 = vunpack.c.h.b16 %v3958
        %v4159 = vunpack.c.l.b16 %v3959
        %v4160 = vunpack.c.l.b16 %v3960
        %v4161 = vunpack.c.h.b16 %v3960
        %v4162 = vunpack.c.l.b16 %v3961
        %v4163 = vpack.c.b16 %v4070, %v4067
        %v4164 = vpack.c.b16 %v4071, %v4068
        %v4165 = vpack.c.b16 %v4072, %v4069
        %v4166 = vpack.c.b16 %v4076, %v4073
        %v4167 = vpack.c.b16 %v4077, %v4074
        %v4168 = vpack.c.b16 %v4078, %v4075
        %v4169 = vpack.c.b16 %v4082, %v4079
        %v4170 = vpack.c.b16 %v4083, %v4080
        %v4171 = vpack.c.b16 %v4084, %v4081
        %v4172 = vpack.c.b16 %v4088, %v4085
        %v4173 = vpack.c.b16 %v4089, %v4086
        %v4174 = vpack.c.b16 %v4090, %v4087
        %v4175 = vpack.c.b16 %v4094, %v4091
        %v4176 = vpack.c.b16 %v4095, %v4092
        %v4177 = vpack.c.b16 %v4096, %v4093
        %v4178 = vpack.c.b16 %v4100, %v4097
        %v4179 = vpack.c.b16 %v4101, %v4098
        %v4180 = vpack.c.b16 %v4102, %v4099
        %v4181 = vpack.c.b16 %v4106, %v4103
        %v4182 = vpack.c.b16 %v4107, %v4104
        %v4183 = vpack.c.b16 %v4108, %v4105
        %v4184 = vpack.c.b16 %v4112, %v4109
        %v4185 = vpack.c.b16 %v4113, %v4110
        %v4186 = vpack.c.b16 %v4114, %v4111
        %v4187 = vpack.c.b16 %v4118, %v4115
        %v4188 = vpack.c.b16 %v4119, %v4116
        %v4189 = vpack.c.b16 %v4120, %v4117
        %v4190 = vpack.c.b16 %v4124, %v4121
        %v4191 = vpack.c.b16 %v4125, %v4122
        %v4192 = vpack.c.b16 %v4126, %v4123
        %v4193 = vpack.c.b16 %v4130, %v4127
        %v4194 = vpack.c.b16 %v4131, %v4128
        %v4195 = vpack.c.b16 %v4132, %v4129
        %v4196 = vpack.c.b16 %v4136, %v4133
        %v4197 = vpack.c.b16 %v4137, %v4134
        %v4198 = vpack.c.b16 %v4138, %v4135
        %v4199 = vpack.c.b16 %v4142, %v4139
        %v4200 = vpack.c.b16 %v4143, %v4140
        %v4201 = vpack.c.b16 %v4144, %v4141
        %v4202 = vpack.c.b16 %v4148, %v4145
        %v4203 = vpack.c.b16 %v4149, %v4146
        %v4204 = vpack.c.b16 %v4150, %v4147
        %v4205 = vpack.c.b16 %v4154, %v4151
        %v4206 = vpack.c.b16 %v4155, %v4152
        %v4207 = vpack.c.b16 %v4156, %v4153
        %v4208 = vpack.c.b16 %v4160, %v4157
        %v4209 = vpack.c.b16 %v4161, %v4158
        %v4210 = vpack.c.b16 %v4162, %v4159
        %v4283 = vunpack.c.l.b16 %v3963
        %v4284 = vunpack.c.l.b16 %v3964
        %v4285 = vunpack.c.l.b16 %v3965
        %v4286 = vunpack.c.l.b16 %v3966
        %v4287 = vunpack.c.l.b16 %v3967
        %v4288 = vunpack.c.l.b16 %v3968
        %v4289 = vunpack.c.l.b16 %v3969
        %v4290 = vunpack.c.l.b16 %v3970
        %v4291 = vunpack.c.l.b16 %v3971
        %v4292 = vunpack.c.l.b16 %v3972
        %v4293 = vunpack.c.l.b16 %v3973
        %v4294 = vunpack.c.l.b16 %v3974
        %v4295 = vunpack.c.l.b16 %v3975
        %v4296 = vunpack.c.l.b16 %v3976
        %v4297 = vunpack.c.l.b16 %v3977
        %v4298 = vunpack.c.l.b16 %v3978
        %v4299 = vunpack.c.l.b16 %v3979
        %v4300 = vunpack.c.l.b16 %v3980
        %v4301 = vunpack.c.l.b16 %v3981
        %v4302 = vunpack.c.l.b16 %v3982
        %v4303 = vunpack.c.l.b16 %v3983
        %v4304 = vunpack.c.l.b16 %v3984
        %v4305 = vunpack.c.l.b16 %v3985
        %v4306 = vunpack.c.l.b16 %v3986
        %v4307 = vunpack.c.l.b16 %v3987
        %v4308 = vunpack.c.l.b16 %v3988
        %v4309 = vunpack.c.l.b16 %v3989
        %v4310 = vunpack.c.l.b16 %v3990
        %v4311 = vunpack.c.l.b16 %v3991
        %v4312 = vunpack.c.l.b16 %v3992
        %v4313 = vunpack.c.l.b16 %v3993
        %v4314 = vunpack.c.l.b16 %v3994
        %v4315 = vunpack.c.l.b16 %v3995
        %v4316 = vunpack.c.l.b16 %v3996
        %v4317 = vunpack.c.l.b16 %v3997
        %v4318 = vunpack.c.l.b16 %v3998
        %v4319 = vunpack.c.l.b16 %v3999
        %v4320 = vunpack.c.l.b16 %v4000
        %v4321 = vunpack.c.l.b16 %v4001
        %v4322 = vunpack.c.l.b16 %v4002
        %v4323 = vpack.c.b16 %v4284, %v4283
        %v4324 = vpack.c.b16 %v4286, %v4285
        %v4325 = vpack.c.b16 %v4288, %v4287
        %v4326 = vpack.c.b16 %v4290, %v4289
        %v4327 = vpack.c.b16 %v4292, %v4291
        %v4328 = vpack.c.b16 %v4294, %v4293
        %v4329 = vpack.c.b16 %v4296, %v4295
        %v4330 = vpack.c.b16 %v4298, %v4297
        %v4331 = vpack.c.b16 %v4300, %v4299
        %v4332 = vpack.c.b16 %v4302, %v4301
        %v4333 = vpack.c.b16 %v4304, %v4303
        %v4334 = vpack.c.b16 %v4306, %v4305
        %v4335 = vpack.c.b16 %v4308, %v4307
        %v4336 = vpack.c.b16 %v4310, %v4309
        %v4337 = vpack.c.b16 %v4312, %v4311
        %v4338 = vpack.c.b16 %v4314, %v4313
        %v4339 = vpack.c.b16 %v4316, %v4315
        %v4340 = vpack.c.b16 %v4318, %v4317
        %v4341 = vpack.c.b16 %v4320, %v4319
        %v4342 = vpack.c.b16 %v4322, %v4321
        %v4364 = vsel %vm794, %v4165, 0
        %v4367 = vsel %vm794, %v4168, 0
        %v4370 = vsel %vm794, %v4171, 0
        %v4373 = vsel %vm794, %v4174, 0
        %v4376 = vsel %vm794, %v4177, 0
        %v4379 = vsel %vm794, %v4180, 0
        %v4382 = vsel %vm794, %v4183, 0
        %v4385 = vsel %vm794, %v4186, 0
        %v4388 = vsel %vm794, %v4189, 0
        %v4391 = vsel %vm794, %v4192, 0
        %v4394 = vsel %vm794, %v4195, 0
        %v4397 = vsel %vm794, %v4198, 0
        %v4400 = vsel %vm794, %v4201, 0
        %v4403 = vsel %vm794, %v4204, 0
        %v4406 = vsel %vm794, %v4207, 0
        %v4409 = vsel %vm794, %v4210, 0
        %4411 = vmatprep.subr.bf16.mxu0 0
        %4412 = vmatpush1.bf16.msra.mxu0 %v4323
        %4413 = vmatprep.subr.bf16.mxu0 0
        %4414 = vmatpush1.bf16.msra.mxu0 %v4324
        %4415 = vmatprep.subr.bf16.mxu0 0
        %4416 = vmatpush1.bf16.msra.mxu0 %v4325
        %4417 = vmatprep.subr.bf16.mxu0 0
        %4418 = vmatpush1.bf16.msra.mxu0 %v4326
        %4419 = vmatprep.subr.bf16.mxu0 0
        %4420 = vmatpush1.bf16.msra.mxu0 %v4327
        %4421 = vmatprep.subr.bf16.mxu0 0
        %4422 = vmatpush1.bf16.msra.mxu0 %v4328
        %4423 = vmatprep.subr.bf16.mxu0 0
        %4424 = vmatpush1.bf16.msra.mxu0 %v4329
        %4425 = vmatprep.subr.bf16.mxu0 0
        %4426 = vmatpush1.bf16.msra.mxu0 %v4330
        %4427 = vmatprep.subr.bf16.mxu0 0
        %4428 = vmatpush1.bf16.msra.mxu0 %v4331
        %4429 = vmatprep.subr.bf16.mxu0 0
        %4430 = vmatpush1.bf16.msra.mxu0 %v4332
        %4431 = vmatprep.subr.bf16.mxu0 0
        %4432 = vmatpush1.bf16.msra.mxu0 %v4333
        %4433 = vmatprep.subr.bf16.mxu0 0
        %4434 = vmatpush1.bf16.msra.mxu0 %v4334
        %4435 = vmatprep.subr.bf16.mxu0 0
        %4436 = vmatpush1.bf16.msra.mxu0 %v4335
        %4437 = vmatprep.subr.bf16.mxu0 0
        %4438 = vmatpush1.bf16.msra.mxu0 %v4336
        %4439 = vmatprep.subr.bf16.mxu0 0
        %4440 = vmatpush1.bf16.msra.mxu0 %v4337
        %4441 = vmatprep.subr.bf16.mxu0 0
        %4442 = vmatpush1.bf16.msra.mxu0 %v4338
        %4443 = vmatprep.mubr.bf16.mxu0 %v4164
        %4444 = vmatmul.mubr.bf16.gmra.mrb[0].mxu0 %v4163
        %v4445 = vpop.f32.mrb[0].mxu0
        %v4446 = vadd.f32 0.0, %v4445
        %v4447 = vpop.f32.mrb[0].mxu0
        %v4448 = vpop.f32.mrb[0].mxu0
        %v4449 = vadd.f32 0.0, %v4448
        %v4450 = vpop.f32.mrb[0].mxu0
        %4451 = vmatprep.mubr.bf16.mxu0 %v4167
        %4452 = vmatmul.mubr.bf16.gmra.mrb[0].mxu0 %v4166
        %v4453 = vpop.f32.mrb[0].mxu0
        %v4454 = vadd.f32 0.0, %v4453
        %v4455 = vpop.f32.mrb[0].mxu0
        %v4456 = vpop.f32.mrb[0].mxu0
        %v4457 = vadd.f32 0.0, %v4456
        %v4458 = vpop.f32.mrb[0].mxu0
        %4459 = vmatprep.mubr.bf16.mxu0 %v4170
        %4460 = vmatmul.mubr.bf16.gmra.mrb[0].mxu0 %v4169
        %v4461 = vpop.f32.mrb[0].mxu0
        %v4462 = vadd.f32 0.0, %v4461
        %v4463 = vpop.f32.mrb[0].mxu0
        %v4464 = vpop.f32.mrb[0].mxu0
        %v4465 = vadd.f32 0.0, %v4464
        %v4466 = vpop.f32.mrb[0].mxu0
        %4467 = vmatprep.mubr.bf16.mxu0 %v4173
        %4468 = vmatmul.mubr.bf16.gmra.mrb[0].mxu0 %v4172
        %v4469 = vpop.f32.mrb[0].mxu0
        %v4470 = vadd.f32 0.0, %v4469
        %v4471 = vpop.f32.mrb[0].mxu0
        %v4472 = vpop.f32.mrb[0].mxu0
        %v4473 = vadd.f32 0.0, %v4472
        %v4474 = vpop.f32.mrb[0].mxu0
        %4475 = vmatprep.mubr.bf16.mxu0 %v4176
        %4476 = vmatmul.mubr.bf16.gmra.mrb[0].mxu0 %v4175
        %v4477 = vpop.f32.mrb[0].mxu0
        %v4478 = vadd.f32 0.0, %v4477
        %v4479 = vpop.f32.mrb[0].mxu0
        %v4480 = vpop.f32.mrb[0].mxu0
        %v4481 = vadd.f32 0.0, %v4480
        %v4482 = vpop.f32.mrb[0].mxu0
        %4483 = vmatprep.mubr.bf16.mxu0 %v4179
        %4484 = vmatmul.mubr.bf16.gmra.mrb[0].mxu0 %v4178
        %v4485 = vpop.f32.mrb[0].mxu0
        %v4486 = vadd.f32 0.0, %v4485
        %v4487 = vpop.f32.mrb[0].mxu0
        %v4488 = vpop.f32.mrb[0].mxu0
        %v4489 = vadd.f32 0.0, %v4488
        %v4490 = vpop.f32.mrb[0].mxu0
        %4491 = vmatprep.mubr.bf16.mxu0 %v4182
        %4492 = vmatmul.mubr.bf16.gmra.mrb[0].mxu0 %v4181
        %v4493 = vpop.f32.mrb[0].mxu0
        %v4494 = vadd.f32 0.0, %v4493
        %v4495 = vpop.f32.mrb[0].mxu0
        %v4496 = vpop.f32.mrb[0].mxu0
        %v4497 = vadd.f32 0.0, %v4496
        %v4498 = vpop.f32.mrb[0].mxu0
        %4499 = vmatprep.mubr.bf16.mxu0 %v4185
        %4500 = vmatmul.mubr.bf16.gmra.mrb[0].mxu0 %v4184
        %v4501 = vpop.f32.mrb[0].mxu0
        %v4502 = vadd.f32 0.0, %v4501
        %v4503 = vpop.f32.mrb[0].mxu0
        %v4504 = vpop.f32.mrb[0].mxu0
        %v4505 = vadd.f32 0.0, %v4504
        %v4506 = vpop.f32.mrb[0].mxu0
        %4507 = vmatprep.mubr.bf16.mxu0 %v4188
        %4508 = vmatmul.mubr.bf16.gmra.mrb[0].mxu0 %v4187
        %v4509 = vpop.f32.mrb[0].mxu0
        %v4510 = vadd.f32 0.0, %v4509
        %v4511 = vpop.f32.mrb[0].mxu0
        %v4512 = vpop.f32.mrb[0].mxu0
        %v4513 = vadd.f32 0.0, %v4512
        %v4514 = vpop.f32.mrb[0].mxu0
        %4515 = vmatprep.mubr.bf16.mxu0 %v4191
        %4516 = vmatmul.mubr.bf16.gmra.mrb[0].mxu0 %v4190
        %v4517 = vpop.f32.mrb[0].mxu0
        %v4518 = vadd.f32 0.0, %v4517
        %v4519 = vpop.f32.mrb[0].mxu0
        %v4520 = vpop.f32.mrb[0].mxu0
        %v4521 = vadd.f32 0.0, %v4520
        %v4522 = vpop.f32.mrb[0].mxu0
        %4523 = vmatprep.mubr.bf16.mxu0 %v4194
        %4524 = vmatmul.mubr.bf16.gmra.mrb[0].mxu0 %v4193
        %v4525 = vpop.f32.mrb[0].mxu0
        %v4526 = vadd.f32 0.0, %v4525
        %v4527 = vpop.f32.mrb[0].mxu0
        %v4528 = vpop.f32.mrb[0].mxu0
        %v4529 = vadd.f32 0.0, %v4528
        %v4530 = vpop.f32.mrb[0].mxu0
        %4531 = vmatprep.mubr.bf16.mxu0 %v4197
        %4532 = vmatmul.mubr.bf16.gmra.mrb[0].mxu0 %v4196
        %v4533 = vpop.f32.mrb[0].mxu0
        %v4534 = vadd.f32 0.0, %v4533
        %v4535 = vpop.f32.mrb[0].mxu0
        %v4536 = vpop.f32.mrb[0].mxu0
        %v4537 = vadd.f32 0.0, %v4536
        %v4538 = vpop.f32.mrb[0].mxu0
        %4539 = vmatprep.mubr.bf16.mxu0 %v4200
        %4540 = vmatmul.mubr.bf16.gmra.mrb[0].mxu0 %v4199
        %v4541 = vpop.f32.mrb[0].mxu0
        %v4542 = vadd.f32 0.0, %v4541
        %v4543 = vpop.f32.mrb[0].mxu0
        %v4544 = vpop.f32.mrb[0].mxu0
        %v4545 = vadd.f32 0.0, %v4544
        %v4546 = vpop.f32.mrb[0].mxu0
        %4547 = vmatprep.mubr.bf16.mxu0 %v4203
        %4548 = vmatmul.mubr.bf16.gmra.mrb[0].mxu0 %v4202
        %v4549 = vpop.f32.mrb[0].mxu0
        %v4550 = vadd.f32 0.0, %v4549
        %v4551 = vpop.f32.mrb[0].mxu0
        %v4552 = vpop.f32.mrb[0].mxu0
        %v4553 = vadd.f32 0.0, %v4552
        %v4554 = vpop.f32.mrb[0].mxu0
        %4555 = vmatprep.mubr.bf16.mxu0 %v4206
        %4556 = vmatmul.mubr.bf16.gmra.mrb[0].mxu0 %v4205
        %v4557 = vpop.f32.mrb[0].mxu0
        %v4558 = vadd.f32 0.0, %v4557
        %v4559 = vpop.f32.mrb[0].mxu0
        %v4560 = vpop.f32.mrb[0].mxu0
        %v4561 = vadd.f32 0.0, %v4560
        %v4562 = vpop.f32.mrb[0].mxu0
        %4563 = vmatprep.mubr.bf16.mxu0 %v4209
        %4564 = vmatmul.mubr.bf16.gmra.mrb[0].mxu0 %v4208
        %v4565 = vpop.f32.mrb[0].mxu0
        %v4566 = vadd.f32 0.0, %v4565
        %v4567 = vpop.f32.mrb[0].mxu0
        %v4568 = vpop.f32.mrb[0].mxu0
        %v4569 = vadd.f32 0.0, %v4568
        %v4570 = vpop.f32.mrb[0].mxu0
        %4571 = vdwg.mxu0
        %4572 = vmatprep.subr.bf16.mxu0 0
        %4573 = vmatpush1.bf16.msra.mxu0 %v4339
        %4574 = vmatprep.subr.bf16.mxu0 0
        %4575 = vmatpush1.bf16.msra.mxu0 %v4340
        %4576 = vmatprep.subr.bf16.mxu0 0
        %4577 = vmatpush1.bf16.msra.mxu0 %v4341
        %4578 = vmatprep.subr.bf16.mxu0 0
        %4579 = vmatpush1.bf16.msra.mxu0 %v4342
        %4580 = vmatprep.subr.bf16.mxu0 0
        %4581 = vmatpush1.bf16.msra.mxu0 0
        %4582 = vmatprep.subr.bf16.mxu0 0
        %4583 = vmatpush1.bf16.msra.mxu0 0
        %4584 = vmatprep.subr.bf16.mxu0 0
        %4585 = vmatpush1.bf16.msra.mxu0 0
        %4586 = vmatprep.subr.bf16.mxu0 0
        %4587 = vmatpush1.bf16.msra.mxu0 0
        %4588 = vmatprep.subr.bf16.mxu0 0
        %4589 = vmatpush1.bf16.msra.mxu0 0
        %4590 = vmatprep.subr.bf16.mxu0 0
        %4591 = vmatpush1.bf16.msra.mxu0 0
        %4592 = vmatprep.subr.bf16.mxu0 0
        %4593 = vmatpush1.bf16.msra.mxu0 0
        %4594 = vmatprep.subr.bf16.mxu0 0
        %4595 = vmatpush1.bf16.msra.mxu0 0
        %4596 = vmatprep.subr.bf16.mxu0 0
        %4597 = vmatpush1.bf16.msra.mxu0 0
        %4598 = vmatprep.subr.bf16.mxu0 0
        %4599 = vmatpush1.bf16.msra.mxu0 0
        %4600 = vmatprep.subr.bf16.mxu0 0
        %4601 = vmatpush1.bf16.msra.mxu0 0
        %4602 = vmatprep.subr.bf16.mxu0 0
        %4603 = vmatpush1.bf16.msra.mxu0 0
        %4604 = vmatprep.mubr.bf16.mxu0 0
        %4605 = vmatmul.mubr.bf16.gmra.mrb[0].mxu0 %v4364
        %v4606 = vpop.f32.mrb[0].mxu0
        %v4607 = vadd.f32 %v4446, %v4606
        %v4608 = vpop.f32.mrb[0].mxu0
        %v4609 = vpop.f32.mrb[0].mxu0
        %v4610 = vadd.f32 %v4449, %v4609
        %v4611 = vpop.f32.mrb[0].mxu0
        %4612 = vmatprep.mubr.bf16.mxu0 0
        %4613 = vmatmul.mubr.bf16.gmra.mrb[0].mxu0 %v4367
        %v4614 = vpop.f32.mrb[0].mxu0
        %v4615 = vadd.f32 %v4454, %v4614
        %v4616 = vpop.f32.mrb[0].mxu0
        %v4617 = vpop.f32.mrb[0].mxu0
        %v4618 = vadd.f32 %v4457, %v4617
        %v4619 = vpop.f32.mrb[0].mxu0
        %4620 = vmatprep.mubr.bf16.mxu0 0
        %4621 = vmatmul.mubr.bf16.gmra.mrb[0].mxu0 %v4370
        %v4622 = vpop.f32.mrb[0].mxu0
        %v4623 = vadd.f32 %v4462, %v4622
        %v4624 = vpop.f32.mrb[0].mxu0
        %v4625 = vpop.f32.mrb[0].mxu0
        %v4626 = vadd.f32 %v4465, %v4625
        %v4627 = vpop.f32.mrb[0].mxu0
        %4628 = vmatprep.mubr.bf16.mxu0 0
        %4629 = vmatmul.mubr.bf16.gmra.mrb[0].mxu0 %v4373
        %v4630 = vpop.f32.mrb[0].mxu0
        %v4631 = vadd.f32 %v4470, %v4630
        %v4632 = vpop.f32.mrb[0].mxu0
        %v4633 = vpop.f32.mrb[0].mxu0
        %v4634 = vadd.f32 %v4473, %v4633
        %v4635 = vpop.f32.mrb[0].mxu0
        %4636 = vmatprep.mubr.bf16.mxu0 0
        %4637 = vmatmul.mubr.bf16.gmra.mrb[0].mxu0 %v4376
        %v4638 = vpop.f32.mrb[0].mxu0
        %v4639 = vadd.f32 %v4478, %v4638
        %v4640 = vpop.f32.mrb[0].mxu0
        %v4641 = vpop.f32.mrb[0].mxu0
        %v4642 = vadd.f32 %v4481, %v4641
        %v4643 = vpop.f32.mrb[0].mxu0
        %4644 = vmatprep.mubr.bf16.mxu0 0
        %4645 = vmatmul.mubr.bf16.gmra.mrb[0].mxu0 %v4379
        %v4646 = vpop.f32.mrb[0].mxu0
        %v4647 = vadd.f32 %v4486, %v4646
        %v4648 = vpop.f32.mrb[0].mxu0
        %v4649 = vpop.f32.mrb[0].mxu0
        %v4650 = vadd.f32 %v4489, %v4649
        %v4651 = vpop.f32.mrb[0].mxu0
        %4652 = vmatprep.mubr.bf16.mxu0 0
        %4653 = vmatmul.mubr.bf16.gmra.mrb[0].mxu0 %v4382
        %v4654 = vpop.f32.mrb[0].mxu0
        %v4655 = vadd.f32 %v4494, %v4654
        %v4656 = vpop.f32.mrb[0].mxu0
        %v4657 = vpop.f32.mrb[0].mxu0
        %v4658 = vadd.f32 %v4497, %v4657
        %v4659 = vpop.f32.mrb[0].mxu0
        %4660 = vmatprep.mubr.bf16.mxu0 0
        %4661 = vmatmul.mubr.bf16.gmra.mrb[0].mxu0 %v4385
        %v4662 = vpop.f32.mrb[0].mxu0
        %v4663 = vadd.f32 %v4502, %v4662
        %v4664 = vpop.f32.mrb[0].mxu0
        %v4665 = vpop.f32.mrb[0].mxu0
        %v4666 = vadd.f32 %v4505, %v4665
        %v4667 = vpop.f32.mrb[0].mxu0
        %4668 = vmatprep.mubr.bf16.mxu0 0
        %4669 = vmatmul.mubr.bf16.gmra.mrb[0].mxu0 %v4388
        %v4670 = vpop.f32.mrb[0].mxu0
        %v4671 = vadd.f32 %v4510, %v4670
        %v4672 = vpop.f32.mrb[0].mxu0
        %v4673 = vpop.f32.mrb[0].mxu0
        %v4674 = vadd.f32 %v4513, %v4673
        %v4675 = vpop.f32.mrb[0].mxu0
        %4676 = vmatprep.mubr.bf16.mxu0 0
        %4677 = vmatmul.mubr.bf16.gmra.mrb[0].mxu0 %v4391
        %v4678 = vpop.f32.mrb[0].mxu0
        %v4679 = vadd.f32 %v4518, %v4678
        %v4680 = vpop.f32.mrb[0].mxu0
        %v4681 = vpop.f32.mrb[0].mxu0
        %v4682 = vadd.f32 %v4521, %v4681
        %v4683 = vpop.f32.mrb[0].mxu0
        %4684 = vmatprep.mubr.bf16.mxu0 0
        %4685 = vmatmul.mubr.bf16.gmra.mrb[0].mxu0 %v4394
        %v4686 = vpop.f32.mrb[0].mxu0
        %v4687 = vadd.f32 %v4526, %v4686
        %v4688 = vpop.f32.mrb[0].mxu0
        %v4689 = vpop.f32.mrb[0].mxu0
        %v4690 = vadd.f32 %v4529, %v4689
        %v4691 = vpop.f32.mrb[0].mxu0
        %4692 = vmatprep.mubr.bf16.mxu0 0
        %4693 = vmatmul.mubr.bf16.gmra.mrb[0].mxu0 %v4397
        %v4694 = vpop.f32.mrb[0].mxu0
        %v4695 = vadd.f32 %v4534, %v4694
        %v4696 = vpop.f32.mrb[0].mxu0
        %v4697 = vpop.f32.mrb[0].mxu0
        %v4698 = vadd.f32 %v4537, %v4697
        %v4699 = vpop.f32.mrb[0].mxu0
        %4700 = vmatprep.mubr.bf16.mxu0 0
        %4701 = vmatmul.mubr.bf16.gmra.mrb[0].mxu0 %v4400
        %v4702 = vpop.f32.mrb[0].mxu0
        %v4703 = vadd.f32 %v4542, %v4702
        %v4704 = vpop.f32.mrb[0].mxu0
        %v4705 = vpop.f32.mrb[0].mxu0
        %v4706 = vadd.f32 %v4545, %v4705
        %v4707 = vpop.f32.mrb[0].mxu0
        %4708 = vmatprep.mubr.bf16.mxu0 0
        %4709 = vmatmul.mubr.bf16.gmra.mrb[0].mxu0 %v4403
        %v4710 = vpop.f32.mrb[0].mxu0
        %v4711 = vadd.f32 %v4550, %v4710
        %v4712 = vpop.f32.mrb[0].mxu0
        %v4713 = vpop.f32.mrb[0].mxu0
        %v4714 = vadd.f32 %v4553, %v4713
        %v4715 = vpop.f32.mrb[0].mxu0
        %4716 = vmatprep.mubr.bf16.mxu0 0
        %4717 = vmatmul.mubr.bf16.gmra.mrb[0].mxu0 %v4406
        %v4718 = vpop.f32.mrb[0].mxu0
        %v4719 = vadd.f32 %v4558, %v4718
        %v4720 = vpop.f32.mrb[0].mxu0
        %v4721 = vpop.f32.mrb[0].mxu0
        %v4722 = vadd.f32 %v4561, %v4721
        %v4723 = vpop.f32.mrb[0].mxu0
        %4724 = vmatprep.mubr.bf16.mxu0 0
        %4725 = vmatmul.mubr.bf16.gmra.mrb[0].mxu0 %v4409
        %v4726 = vpop.f32.mrb[0].mxu0
        %v4727 = vadd.f32 %v4566, %v4726
        %v4728 = vpop.f32.mrb[0].mxu0
        %v4729 = vpop.f32.mrb[0].mxu0
        %v4730 = vadd.f32 %v4569, %v4729
        %v4731 = vpop.f32.mrb[0].mxu0
        %4732 = vdwg.mxu0
        %v4733 = vadd.f32 %v3865, %v4607
        %v4734 = vadd.f32 %v3866, %v4610
        %v4735 = vadd.f32 %v3867, %v4615
        %v4736 = vadd.f32 %v3868, %v4618
        %v4737 = vadd.f32 %v3869, %v4623
        %v4738 = vadd.f32 %v3870, %v4626
        %v4739 = vadd.f32 %v3871, %v4631
        %v4740 = vadd.f32 %v3872, %v4634
        %v4741 = vadd.f32 %v3873, %v4639
        %v4742 = vadd.f32 %v3874, %v4642
        %v4743 = vadd.f32 %v3875, %v4647
        %v4744 = vadd.f32 %v3876, %v4650
        %v4745 = vadd.f32 %v3877, %v4655
        %v4746 = vadd.f32 %v3878, %v4658
        %v4747 = vadd.f32 %v3879, %v4663
        %v4748 = vadd.f32 %v3880, %v4666
        %v4749 = vadd.f32 %v3881, %v4671
        %v4750 = vadd.f32 %v3882, %v4674
        %v4751 = vadd.f32 %v3883, %v4679
        %v4752 = vadd.f32 %v3884, %v4682
        %v4753 = vadd.f32 %v3885, %v4687
        %v4754 = vadd.f32 %v3886, %v4690
        %v4755 = vadd.f32 %v3887, %v4695
        %v4756 = vadd.f32 %v3888, %v4698
        %v4757 = vadd.f32 %v3889, %v4703
        %v4758 = vadd.f32 %v3890, %v4706
        %v4759 = vadd.f32 %v3891, %v4711
        %v4760 = vadd.f32 %v3892, %v4714
        %v4761 = vadd.f32 %v3893, %v4719
        %v4762 = vadd.f32 %v3894, %v4722
        %v4763 = vadd.f32 %v3895, %v4727
        %v4764 = vadd.f32 %v3896, %v4730
        %v4765 = vld [vmem:[%s3897] sm:$0xff]
        %v4766 = vld [vmem:[%s3897 + $0x8] sm:$0xf]
        %v4767 = vld [vmem:[%s3897 + $0xc] sm:$0xff]
        %v4768 = vld [vmem:[%s3897 + $0x14] sm:$0xf]
        %v4769 = vld [vmem:[%s3897 + $0x18] sm:$0x11]
        %v4770 = vld [vmem:[%s3897 + $0x20] sm:$0x1]
        %v4771 = vld [vmem:[%s3897 + $0x24] sm:$0xff]
        %v4772 = vld [vmem:[%s3897 + $0x2c] sm:$0xf]
        %v4773 = vld [vmem:[%s3897 + $0x30] sm:$0xff]
        %v4774 = vld [vmem:[%s3897 + $0x38] sm:$0xf]
        %v4775 = vld [vmem:[%s3897 + $0x3c] sm:$0x11]
        %v4776 = vld [vmem:[%s3897 + $0x44] sm:$0x1]
        %v4777 = vld [vmem:[%s3897 + $0x48] sm:$0xff]
        %v4778 = vld [vmem:[%s3897 + $0x50] sm:$0xf]
        %v4779 = vld [vmem:[%s3897 + $0x54] sm:$0xff]
        %v4780 = vld [vmem:[%s3897 + $0x5c] sm:$0xf]
        %v4781 = vld [vmem:[%s3897 + $0x60] sm:$0x11]
        %v4782 = vld [vmem:[%s3897 + $0x68] sm:$0x1]
        %v4783 = vld [vmem:[%s3897 + $0x6c] sm:$0xff]
        %v4784 = vld [vmem:[%s3897 + $0x74] sm:$0xf]
        %v4785 = vld [vmem:[%s3897 + $0x78] sm:$0xff]
        %v4786 = vld [vmem:[%s3897 + $0x80] sm:$0xf]
        %v4787 = vld [vmem:[%s3897 + $0x84] sm:$0x11]
        %v4788 = vld [vmem:[%s3897 + $0x8c] sm:$0x1]
        %v4789 = vld [vmem:[%s3897 + $0x90] sm:$0xff]
        %v4790 = vld [vmem:[%s3897 + $0x98] sm:$0xf]
        %v4791 = vld [vmem:[%s3897 + $0x9c] sm:$0xff]
        %v4792 = vld [vmem:[%s3897 + $0xa4] sm:$0xf]
        %v4793 = vld [vmem:[%s3897 + $0xa8] sm:$0x11]
        %v4794 = vld [vmem:[%s3897 + $0xb0] sm:$0x1]
        %v4795 = vld [vmem:[%s3897 + $0xb4] sm:$0xff]
        %v4796 = vld [vmem:[%s3897 + $0xbc] sm:$0xf]
        %v4797 = vld [vmem:[%s3897 + $0xc0] sm:$0xff]
        %v4798 = vld [vmem:[%s3897 + $0xc8] sm:$0xf]
        %v4799 = vld [vmem:[%s3897 + $0xcc] sm:$0x11]
        %v4800 = vld [vmem:[%s3897 + $0xd4] sm:$0x1]
        %v4801 = vld [vmem:[%s3897 + $0xd8] sm:$0xff]
        %v4802 = vld [vmem:[%s3897 + $0xe0] sm:$0xf]
        %v4803 = vld [vmem:[%s3897 + $0xe4] sm:$0xff]
        %v4804 = vld [vmem:[%s3897 + $0xec] sm:$0xf]
        %v4805 = vld [vmem:[%s3897 + $0xf0] sm:$0x11]
        %v4806 = vld [vmem:[%s3897 + $0xf8] sm:$0x1]
        %v4807 = vld [vmem:[%s3897 + $0xfc] sm:$0xff]
        %v4808 = vld [vmem:[%s3897 + $0x104] sm:$0xf]
        %v4809 = vld [vmem:[%s3897 + $0x108] sm:$0xff]
        %v4810 = vld [vmem:[%s3897 + $0x110] sm:$0xf]
        %v4811 = vld [vmem:[%s3897 + $0x114] sm:$0x11]
        %v4812 = vld [vmem:[%s3897 + $0x11c] sm:$0x1]
        %v4813 = vld [vmem:[%s3897 + $0x120] sm:$0xff]
        %v4814 = vld [vmem:[%s3897 + $0x128] sm:$0xf]
        %v4815 = vld [vmem:[%s3897 + $0x12c] sm:$0xff]
        %v4816 = vld [vmem:[%s3897 + $0x134] sm:$0xf]
        %v4817 = vld [vmem:[%s3897 + $0x138] sm:$0x11]
        %v4818 = vld [vmem:[%s3897 + $0x140] sm:$0x1]
        %v4819 = vld [vmem:[%s3897 + $0x144] sm:$0xff]
        %v4820 = vld [vmem:[%s3897 + $0x14c] sm:$0xf]
        %v4821 = vld [vmem:[%s3897 + $0x150] sm:$0xff]
        %v4822 = vld [vmem:[%s3897 + $0x158] sm:$0xf]
        %v4823 = vld [vmem:[%s3897 + $0x15c] sm:$0x11]
        %v4824 = vld [vmem:[%s3897 + $0x164] sm:$0x1]
        %v4825 = vld [vmem:[%s3897 + $0x168] sm:$0xff]
        %v4826 = vld [vmem:[%s3897 + $0x170] sm:$0xf]
        %v4827 = vld [vmem:[%s3897 + $0x174] sm:$0xff]
        %v4828 = vld [vmem:[%s3897 + $0x17c] sm:$0xf]
        %v4829 = vld [vmem:[%s3897 + $0x180] sm:$0x11]
        %v4830 = vld [vmem:[%s3897 + $0x188] sm:$0x1]
        %v4831 = vld [vmem:[%s3897 + $0x18c] sm:$0xff]
        %v4832 = vld [vmem:[%s3897 + $0x194] sm:$0xf]
        %v4833 = vld [vmem:[%s3897 + $0x198] sm:$0xff]
        %v4834 = vld [vmem:[%s3897 + $0x1a0] sm:$0xf]
        %v4835 = vld [vmem:[%s3897 + $0x1a4] sm:$0x11]
        %v4836 = vld [vmem:[%s3897 + $0x1ac] sm:$0x1]
        %v4837 = vld [vmem:[%s3897 + $0x1b0] sm:$0xff]
        %v4838 = vld [vmem:[%s3897 + $0x1b8] sm:$0xf]
        %v4839 = vld [vmem:[%s3897 + $0x1bc] sm:$0xff]
        %v4840 = vld [vmem:[%s3897 + $0x1c4] sm:$0xf]
        %v4841 = vld [vmem:[%s3897 + $0x1c8] sm:$0x11]
        %v4842 = vld [vmem:[%s3897 + $0x1d0] sm:$0x1]
        %v4843 = vld [vmem:[%s3897 + $0x1d4] sm:$0xff]
        %v4844 = vld [vmem:[%s3897 + $0x1dc] sm:$0xf]
        %v4845 = vld [vmem:[%s3897 + $0x1e0] sm:$0xff]
        %v4846 = vld [vmem:[%s3897 + $0x1e8] sm:$0xf]
        %v4847 = vld [vmem:[%s3897 + $0x1ec] sm:$0x11]
        %v4848 = vld [vmem:[%s3897 + $0x1f4] sm:$0x1]
        %v4849 = vld [vmem:[%s3897 + $0x1f8] sm:$0xff]
        %v4850 = vld [vmem:[%s3897 + $0x200] sm:$0xf]
        %v4851 = vld [vmem:[%s3897 + $0x204] sm:$0xff]
        %v4852 = vld [vmem:[%s3897 + $0x20c] sm:$0xf]
        %v4853 = vld [vmem:[%s3897 + $0x210] sm:$0x11]
        %v4854 = vld [vmem:[%s3897 + $0x218] sm:$0x1]
        %v4855 = vld [vmem:[%s3897 + $0x21c] sm:$0xff]
        %v4856 = vld [vmem:[%s3897 + $0x224] sm:$0xf]
        %v4857 = vld [vmem:[%s3897 + $0x228] sm:$0xff]
        %v4858 = vld [vmem:[%s3897 + $0x230] sm:$0xf]
        %v4859 = vld [vmem:[%s3897 + $0x234] sm:$0x11]
        %v4860 = vld [vmem:[%s3897 + $0x23c] sm:$0x1]
        %v4862 = vshrl.u32 %v4765, 16
        %v4864 = vrot.slane %v4862, 4
        %v4865 = vshll.u32 %v4765, 16
        %v4867 = vrot.slane %v4865, 5
        %v4868 = vor.u32 %v4864, %v4867
        %v4869 = vrot.slane %v4868, 4
        %v4871 = vshll.u32 %v4767, 16
        %v4873 = vrot.slane %v4871, 5
        %v4874 = vsel %vm1295, %v4869, %v4873
        %v4876 = vshrl.u32 %v4766, 16
        %v4878 = vrot.slane %v4876, 4
        %v4879 = vshll.u32 %v4766, 16
        %v4881 = vrot.slane %v4879, 5
        %v4882 = vor.u32 %v4878, %v4881
        %v4883 = vrot.slane %v4882, 4
        %v4885 = vshll.u32 %v4768, 16
        %v4887 = vrot.slane %v4885, 5
        %v4888 = vsel %vm1295, %v4883, %v4887
        %v4889 = vshrl.u32 %v4767, 16
        %v4891 = vrot.slane %v4889, 4
        %v4892 = vor.u32 %v4891, %v4873
        %v4893 = vrot.slane %v4892, 4
        %v4895 = vshll.u32 %v4769, 16
        %v4897 = vrot.slane %v4895, 5
        %v4898 = vsel %vm1295, %v4893, %v4897
        %v4899 = vshrl.u32 %v4768, 16
        %v4901 = vrot.slane %v4899, 4
        %v4902 = vor.u32 %v4901, %v4887
        %v4903 = vrot.slane %v4902, 4
        %v4905 = vshll.u32 %v4770, 16
        %v4907 = vrot.slane %v4905, 5
        %v4908 = vsel %vm1295, %v4903, %v4907
        %v4910 = vshrl.u32 %v4771, 16
        %v4912 = vrot.slane %v4910, 4
        %v4913 = vshll.u32 %v4771, 16
        %v4915 = vrot.slane %v4913, 5
        %v4916 = vor.u32 %v4912, %v4915
        %v4917 = vrot.slane %v4916, 4
        %v4919 = vshll.u32 %v4773, 16
        %v4921 = vrot.slane %v4919, 5
        %v4922 = vsel %vm1295, %v4917, %v4921
        %v4924 = vshrl.u32 %v4772, 16
        %v4926 = vrot.slane %v4924, 4
        %v4927 = vshll.u32 %v4772, 16
        %v4929 = vrot.slane %v4927, 5
        %v4930 = vor.u32 %v4926, %v4929
        %v4931 = vrot.slane %v4930, 4
        %v4933 = vshll.u32 %v4774, 16
        %v4935 = vrot.slane %v4933, 5
        %v4936 = vsel %vm1295, %v4931, %v4935
        %v4937 = vshrl.u32 %v4773, 16
        %v4939 = vrot.slane %v4937, 4
        %v4940 = vor.u32 %v4939, %v4921
        %v4941 = vrot.slane %v4940, 4
        %v4943 = vshll.u32 %v4775, 16
        %v4945 = vrot.slane %v4943, 5
        %v4946 = vsel %vm1295, %v4941, %v4945
        %v4947 = vshrl.u32 %v4774, 16
        %v4949 = vrot.slane %v4947, 4
        %v4950 = vor.u32 %v4949, %v4935
        %v4951 = vrot.slane %v4950, 4
        %v4953 = vshll.u32 %v4776, 16
        %v4955 = vrot.slane %v4953, 5
        %v4956 = vsel %vm1295, %v4951, %v4955
        %v4958 = vshrl.u32 %v4777, 16
        %v4960 = vrot.slane %v4958, 4
        %v4961 = vshll.u32 %v4777, 16
        %v4963 = vrot.slane %v4961, 5
        %v4964 = vor.u32 %v4960, %v4963
        %v4965 = vrot.slane %v4964, 4
        %v4967 = vshll.u32 %v4779, 16
        %v4969 = vrot.slane %v4967, 5
        %v4970 = vsel %vm1295, %v4965, %v4969
        %v4972 = vshrl.u32 %v4778, 16
        %v4974 = vrot.slane %v4972, 4
        %v4975 = vshll.u32 %v4778, 16
        %v4977 = vrot.slane %v4975, 5
        %v4978 = vor.u32 %v4974, %v4977
        %v4979 = vrot.slane %v4978, 4
        %v4981 = vshll.u32 %v4780, 16
        %v4983 = vrot.slane %v4981, 5
        %v4984 = vsel %vm1295, %v4979, %v4983
        %v4985 = vshrl.u32 %v4779, 16
        %v4987 = vrot.slane %v4985, 4
        %v4988 = vor.u32 %v4987, %v4969
        %v4989 = vrot.slane %v4988, 4
        %v4991 = vshll.u32 %v4781, 16
        %v4993 = vrot.slane %v4991, 5
        %v4994 = vsel %vm1295, %v4989, %v4993
        %v4995 = vshrl.u32 %v4780, 16
        %v4997 = vrot.slane %v4995, 4
        %v4998 = vor.u32 %v4997, %v4983
        %v4999 = vrot.slane %v4998, 4
        %v5001 = vshll.u32 %v4782, 16
        %v5003 = vrot.slane %v5001, 5
        %v5004 = vsel %vm1295, %v4999, %v5003
        %v5006 = vshrl.u32 %v4783, 16
        %v5008 = vrot.slane %v5006, 4
        %v5009 = vshll.u32 %v4783, 16
        %v5011 = vrot.slane %v5009, 5
        %v5012 = vor.u32 %v5008, %v5011
        %v5013 = vrot.slane %v5012, 4
        %v5015 = vshll.u32 %v4785, 16
        %v5017 = vrot.slane %v5015, 5
        %v5018 = vsel %vm1295, %v5013, %v5017
        %v5020 = vshrl.u32 %v4784, 16
        %v5022 = vrot.slane %v5020, 4
        %v5023 = vshll.u32 %v4784, 16
        %v5025 = vrot.slane %v5023, 5
        %v5026 = vor.u32 %v5022, %v5025
        %v5027 = vrot.slane %v5026, 4
        %v5029 = vshll.u32 %v4786, 16
        %v5031 = vrot.slane %v5029, 5
        %v5032 = vsel %vm1295, %v5027, %v5031
        %v5033 = vshrl.u32 %v4785, 16
        %v5035 = vrot.slane %v5033, 4
        %v5036 = vor.u32 %v5035, %v5017
        %v5037 = vrot.slane %v5036, 4
        %v5039 = vshll.u32 %v4787, 16
        %v5041 = vrot.slane %v5039, 5
        %v5042 = vsel %vm1295, %v5037, %v5041
        %v5043 = vshrl.u32 %v4786, 16
        %v5045 = vrot.slane %v5043, 4
        %v5046 = vor.u32 %v5045, %v5031
        %v5047 = vrot.slane %v5046, 4
        %v5049 = vshll.u32 %v4788, 16
        %v5051 = vrot.slane %v5049, 5
        %v5052 = vsel %vm1295, %v5047, %v5051
        %v5054 = vshrl.u32 %v4789, 16
        %v5056 = vrot.slane %v5054, 4
        %v5057 = vshll.u32 %v4789, 16
        %v5059 = vrot.slane %v5057, 5
        %v5060 = vor.u32 %v5056, %v5059
        %v5061 = vrot.slane %v5060, 4
        %v5063 = vshll.u32 %v4791, 16
        %v5065 = vrot.slane %v5063, 5
        %v5066 = vsel %vm1295, %v5061, %v5065
        %v5068 = vshrl.u32 %v4790, 16
        %v5070 = vrot.slane %v5068, 4
        %v5071 = vshll.u32 %v4790, 16
        %v5073 = vrot.slane %v5071, 5
        %v5074 = vor.u32 %v5070, %v5073
        %v5075 = vrot.slane %v5074, 4
        %v5077 = vshll.u32 %v4792, 16
        %v5079 = vrot.slane %v5077, 5
        %v5080 = vsel %vm1295, %v5075, %v5079
        %v5081 = vshrl.u32 %v4791, 16
        %v5083 = vrot.slane %v5081, 4
        %v5084 = vor.u32 %v5083, %v5065
        %v5085 = vrot.slane %v5084, 4
        %v5087 = vshll.u32 %v4793, 16
        %v5089 = vrot.slane %v5087, 5
        %v5090 = vsel %vm1295, %v5085, %v5089
        %v5091 = vshrl.u32 %v4792, 16
        %v5093 = vrot.slane %v5091, 4
        %v5094 = vor.u32 %v5093, %v5079
        %v5095 = vrot.slane %v5094, 4
        %v5097 = vshll.u32 %v4794, 16
        %v5099 = vrot.slane %v5097, 5
        %v5100 = vsel %vm1295, %v5095, %v5099
        %v5102 = vshrl.u32 %v4795, 16
        %v5104 = vrot.slane %v5102, 4
        %v5105 = vshll.u32 %v4795, 16
        %v5107 = vrot.slane %v5105, 5
        %v5108 = vor.u32 %v5104, %v5107
        %v5109 = vrot.slane %v5108, 4
        %v5111 = vshll.u32 %v4797, 16
        %v5113 = vrot.slane %v5111, 5
        %v5114 = vsel %vm1295, %v5109, %v5113
        %v5116 = vshrl.u32 %v4796, 16
        %v5118 = vrot.slane %v5116, 4
        %v5119 = vshll.u32 %v4796, 16
        %v5121 = vrot.slane %v5119, 5
        %v5122 = vor.u32 %v5118, %v5121
        %v5123 = vrot.slane %v5122, 4
        %v5125 = vshll.u32 %v4798, 16
        %v5127 = vrot.slane %v5125, 5
        %v5128 = vsel %vm1295, %v5123, %v5127
        %v5129 = vshrl.u32 %v4797, 16
        %v5131 = vrot.slane %v5129, 4
        %v5132 = vor.u32 %v5131, %v5113
        %v5133 = vrot.slane %v5132, 4
        %v5135 = vshll.u32 %v4799, 16
        %v5137 = vrot.slane %v5135, 5
        %v5138 = vsel %vm1295, %v5133, %v5137
        %v5139 = vshrl.u32 %v4798, 16
        %v5141 = vrot.slane %v5139, 4
        %v5142 = vor.u32 %v5141, %v5127
        %v5143 = vrot.slane %v5142, 4
        %v5145 = vshll.u32 %v4800, 16
        %v5147 = vrot.slane %v5145, 5
        %v5148 = vsel %vm1295, %v5143, %v5147
        %v5150 = vshrl.u32 %v4801, 16
        %v5152 = vrot.slane %v5150, 4
        %v5153 = vshll.u32 %v4801, 16
        %v5155 = vrot.slane %v5153, 5
        %v5156 = vor.u32 %v5152, %v5155
        %v5157 = vrot.slane %v5156, 4
        %v5159 = vshll.u32 %v4803, 16
        %v5161 = vrot.slane %v5159, 5
        %v5162 = vsel %vm1295, %v5157, %v5161
        %v5164 = vshrl.u32 %v4802, 16
        %v5166 = vrot.slane %v5164, 4
        %v5167 = vshll.u32 %v4802, 16
        %v5169 = vrot.slane %v5167, 5
        %v5170 = vor.u32 %v5166, %v5169
        %v5171 = vrot.slane %v5170, 4
        %v5173 = vshll.u32 %v4804, 16
        %v5175 = vrot.slane %v5173, 5
        %v5176 = vsel %vm1295, %v5171, %v5175
        %v5177 = vshrl.u32 %v4803, 16
        %v5179 = vrot.slane %v5177, 4
        %v5180 = vor.u32 %v5179, %v5161
        %v5181 = vrot.slane %v5180, 4
        %v5183 = vshll.u32 %v4805, 16
        %v5185 = vrot.slane %v5183, 5
        %v5186 = vsel %vm1295, %v5181, %v5185
        %v5187 = vshrl.u32 %v4804, 16
        %v5189 = vrot.slane %v5187, 4
        %v5190 = vor.u32 %v5189, %v5175
        %v5191 = vrot.slane %v5190, 4
        %v5193 = vshll.u32 %v4806, 16
        %v5195 = vrot.slane %v5193, 5
        %v5196 = vsel %vm1295, %v5191, %v5195
        %v5198 = vshrl.u32 %v4807, 16
        %v5200 = vrot.slane %v5198, 4
        %v5201 = vshll.u32 %v4807, 16
        %v5203 = vrot.slane %v5201, 5
        %v5204 = vor.u32 %v5200, %v5203
        %v5205 = vrot.slane %v5204, 4
        %v5207 = vshll.u32 %v4809, 16
        %v5209 = vrot.slane %v5207, 5
        %v5210 = vsel %vm1295, %v5205, %v5209
        %v5212 = vshrl.u32 %v4808, 16
        %v5214 = vrot.slane %v5212, 4
        %v5215 = vshll.u32 %v4808, 16
        %v5217 = vrot.slane %v5215, 5
        %v5218 = vor.u32 %v5214, %v5217
        %v5219 = vrot.slane %v5218, 4
        %v5221 = vshll.u32 %v4810, 16
        %v5223 = vrot.slane %v5221, 5
        %v5224 = vsel %vm1295, %v5219, %v5223
        %v5225 = vshrl.u32 %v4809, 16
        %v5227 = vrot.slane %v5225, 4
        %v5228 = vor.u32 %v5227, %v5209
        %v5229 = vrot.slane %v5228, 4
        %v5231 = vshll.u32 %v4811, 16
        %v5233 = vrot.slane %v5231, 5
        %v5234 = vsel %vm1295, %v5229, %v5233
        %v5235 = vshrl.u32 %v4810, 16
        %v5237 = vrot.slane %v5235, 4
        %v5238 = vor.u32 %v5237, %v5223
        %v5239 = vrot.slane %v5238, 4
        %v5241 = vshll.u32 %v4812, 16
        %v5243 = vrot.slane %v5241, 5
        %v5244 = vsel %vm1295, %v5239, %v5243
        %v5246 = vshrl.u32 %v4813, 16
        %v5248 = vrot.slane %v5246, 4
        %v5249 = vshll.u32 %v4813, 16
        %v5251 = vrot.slane %v5249, 5
        %v5252 = vor.u32 %v5248, %v5251
        %v5253 = vrot.slane %v5252, 4
        %v5255 = vshll.u32 %v4815, 16
        %v5257 = vrot.slane %v5255, 5
        %v5258 = vsel %vm1295, %v5253, %v5257
        %v5260 = vshrl.u32 %v4814, 16
        %v5262 = vrot.slane %v5260, 4
        %v5263 = vshll.u32 %v4814, 16
        %v5265 = vrot.slane %v5263, 5
        %v5266 = vor.u32 %v5262, %v5265
        %v5267 = vrot.slane %v5266, 4
        %v5269 = vshll.u32 %v4816, 16
        %v5271 = vrot.slane %v5269, 5
        %v5272 = vsel %vm1295, %v5267, %v5271
        %v5273 = vshrl.u32 %v4815, 16
        %v5275 = vrot.slane %v5273, 4
        %v5276 = vor.u32 %v5275, %v5257
        %v5277 = vrot.slane %v5276, 4
        %v5279 = vshll.u32 %v4817, 16
        %v5281 = vrot.slane %v5279, 5
        %v5282 = vsel %vm1295, %v5277, %v5281
        %v5283 = vshrl.u32 %v4816, 16
        %v5285 = vrot.slane %v5283, 4
        %v5286 = vor.u32 %v5285, %v5271
        %v5287 = vrot.slane %v5286, 4
        %v5289 = vshll.u32 %v4818, 16
        %v5291 = vrot.slane %v5289, 5
        %v5292 = vsel %vm1295, %v5287, %v5291
        %v5294 = vshrl.u32 %v4819, 16
        %v5296 = vrot.slane %v5294, 4
        %v5297 = vshll.u32 %v4819, 16
        %v5299 = vrot.slane %v5297, 5
        %v5300 = vor.u32 %v5296, %v5299
        %v5301 = vrot.slane %v5300, 4
        %v5303 = vshll.u32 %v4821, 16
        %v5305 = vrot.slane %v5303, 5
        %v5306 = vsel %vm1295, %v5301, %v5305
        %v5308 = vshrl.u32 %v4820, 16
        %v5310 = vrot.slane %v5308, 4
        %v5311 = vshll.u32 %v4820, 16
        %v5313 = vrot.slane %v5311, 5
        %v5314 = vor.u32 %v5310, %v5313
        %v5315 = vrot.slane %v5314, 4
        %v5317 = vshll.u32 %v4822, 16
        %v5319 = vrot.slane %v5317, 5
        %v5320 = vsel %vm1295, %v5315, %v5319
        %v5321 = vshrl.u32 %v4821, 16
        %v5323 = vrot.slane %v5321, 4
        %v5324 = vor.u32 %v5323, %v5305
        %v5325 = vrot.slane %v5324, 4
        %v5327 = vshll.u32 %v4823, 16
        %v5329 = vrot.slane %v5327, 5
        %v5330 = vsel %vm1295, %v5325, %v5329
        %v5331 = vshrl.u32 %v4822, 16
        %v5333 = vrot.slane %v5331, 4
        %v5334 = vor.u32 %v5333, %v5319
        %v5335 = vrot.slane %v5334, 4
        %v5337 = vshll.u32 %v4824, 16
        %v5339 = vrot.slane %v5337, 5
        %v5340 = vsel %vm1295, %v5335, %v5339
        %v5342 = vshrl.u32 %v4825, 16
        %v5344 = vrot.slane %v5342, 4
        %v5345 = vshll.u32 %v4825, 16
        %v5347 = vrot.slane %v5345, 5
        %v5348 = vor.u32 %v5344, %v5347
        %v5349 = vrot.slane %v5348, 4
        %v5351 = vshll.u32 %v4827, 16
        %v5353 = vrot.slane %v5351, 5
        %v5354 = vsel %vm1295, %v5349, %v5353
        %v5356 = vshrl.u32 %v4826, 16
        %v5358 = vrot.slane %v5356, 4
        %v5359 = vshll.u32 %v4826, 16
        %v5361 = vrot.slane %v5359, 5
        %v5362 = vor.u32 %v5358, %v5361
        %v5363 = vrot.slane %v5362, 4
        %v5365 = vshll.u32 %v4828, 16
        %v5367 = vrot.slane %v5365, 5
        %v5368 = vsel %vm1295, %v5363, %v5367
        %v5369 = vshrl.u32 %v4827, 16
        %v5371 = vrot.slane %v5369, 4
        %v5372 = vor.u32 %v5371, %v5353
        %v5373 = vrot.slane %v5372, 4
        %v5375 = vshll.u32 %v4829, 16
        %v5377 = vrot.slane %v5375, 5
        %v5378 = vsel %vm1295, %v5373, %v5377
        %v5379 = vshrl.u32 %v4828, 16
        %v5381 = vrot.slane %v5379, 4
        %v5382 = vor.u32 %v5381, %v5367
        %v5383 = vrot.slane %v5382, 4
        %v5385 = vshll.u32 %v4830, 16
        %v5387 = vrot.slane %v5385, 5
        %v5388 = vsel %vm1295, %v5383, %v5387
        %v5390 = vshrl.u32 %v4831, 16
        %v5392 = vrot.slane %v5390, 4
        %v5393 = vshll.u32 %v4831, 16
        %v5395 = vrot.slane %v5393, 5
        %v5396 = vor.u32 %v5392, %v5395
        %v5397 = vrot.slane %v5396, 4
        %v5399 = vshll.u32 %v4833, 16
        %v5401 = vrot.slane %v5399, 5
        %v5402 = vsel %vm1295, %v5397, %v5401
        %v5404 = vshrl.u32 %v4832, 16
        %v5406 = vrot.slane %v5404, 4
        %v5407 = vshll.u32 %v4832, 16
        %v5409 = vrot.slane %v5407, 5
        %v5410 = vor.u32 %v5406, %v5409
        %v5411 = vrot.slane %v5410, 4
        %v5413 = vshll.u32 %v4834, 16
        %v5415 = vrot.slane %v5413, 5
        %v5416 = vsel %vm1295, %v5411, %v5415
        %v5417 = vshrl.u32 %v4833, 16
        %v5419 = vrot.slane %v5417, 4
        %v5420 = vor.u32 %v5419, %v5401
        %v5421 = vrot.slane %v5420, 4
        %v5423 = vshll.u32 %v4835, 16
        %v5425 = vrot.slane %v5423, 5
        %v5426 = vsel %vm1295, %v5421, %v5425
        %v5427 = vshrl.u32 %v4834, 16
        %v5429 = vrot.slane %v5427, 4
        %v5430 = vor.u32 %v5429, %v5415
        %v5431 = vrot.slane %v5430, 4
        %v5433 = vshll.u32 %v4836, 16
        %v5435 = vrot.slane %v5433, 5
        %v5436 = vsel %vm1295, %v5431, %v5435
        %v5438 = vshrl.u32 %v4837, 16
        %v5440 = vrot.slane %v5438, 4
        %v5441 = vshll.u32 %v4837, 16
        %v5443 = vrot.slane %v5441, 5
        %v5444 = vor.u32 %v5440, %v5443
        %v5445 = vrot.slane %v5444, 4
        %v5447 = vshll.u32 %v4839, 16
        %v5449 = vrot.slane %v5447, 5
        %v5450 = vsel %vm1295, %v5445, %v5449
        %v5452 = vshrl.u32 %v4838, 16
        %v5454 = vrot.slane %v5452, 4
        %v5455 = vshll.u32 %v4838, 16
        %v5457 = vrot.slane %v5455, 5
        %v5458 = vor.u32 %v5454, %v5457
        %v5459 = vrot.slane %v5458, 4
        %v5461 = vshll.u32 %v4840, 16
        %v5463 = vrot.slane %v5461, 5
        %v5464 = vsel %vm1295, %v5459, %v5463
        %v5465 = vshrl.u32 %v4839, 16
        %v5467 = vrot.slane %v5465, 4
        %v5468 = vor.u32 %v5467, %v5449
        %v5469 = vrot.slane %v5468, 4
        %v5471 = vshll.u32 %v4841, 16
        %v5473 = vrot.slane %v5471, 5
        %v5474 = vsel %vm1295, %v5469, %v5473
        %v5475 = vshrl.u32 %v4840, 16
        %v5477 = vrot.slane %v5475, 4
        %v5478 = vor.u32 %v5477, %v5463
        %v5479 = vrot.slane %v5478, 4
        %v5481 = vshll.u32 %v4842, 16
        %v5483 = vrot.slane %v5481, 5
        %v5484 = vsel %vm1295, %v5479, %v5483
        %v5486 = vshrl.u32 %v4843, 16
        %v5488 = vrot.slane %v5486, 4
        %v5489 = vshll.u32 %v4843, 16
        %v5491 = vrot.slane %v5489, 5
        %v5492 = vor.u32 %v5488, %v5491
        %v5493 = vrot.slane %v5492, 4
        %v5495 = vshll.u32 %v4845, 16
        %v5497 = vrot.slane %v5495, 5
        %v5498 = vsel %vm1295, %v5493, %v5497
        %v5500 = vshrl.u32 %v4844, 16
        %v5502 = vrot.slane %v5500, 4
        %v5503 = vshll.u32 %v4844, 16
        %v5505 = vrot.slane %v5503, 5
        %v5506 = vor.u32 %v5502, %v5505
        %v5507 = vrot.slane %v5506, 4
        %v5509 = vshll.u32 %v4846, 16
        %v5511 = vrot.slane %v5509, 5
        %v5512 = vsel %vm1295, %v5507, %v5511
        %v5513 = vshrl.u32 %v4845, 16
        %v5515 = vrot.slane %v5513, 4
        %v5516 = vor.u32 %v5515, %v5497
        %v5517 = vrot.slane %v5516, 4
        %v5519 = vshll.u32 %v4847, 16
        %v5521 = vrot.slane %v5519, 5
        %v5522 = vsel %vm1295, %v5517, %v5521
        %v5523 = vshrl.u32 %v4846, 16
        %v5525 = vrot.slane %v5523, 4
        %v5526 = vor.u32 %v5525, %v5511
        %v5527 = vrot.slane %v5526, 4
        %v5529 = vshll.u32 %v4848, 16
        %v5531 = vrot.slane %v5529, 5
        %v5532 = vsel %vm1295, %v5527, %v5531
        %v5534 = vshrl.u32 %v4849, 16
        %v5536 = vrot.slane %v5534, 4
        %v5537 = vshll.u32 %v4849, 16
        %v5539 = vrot.slane %v5537, 5
        %v5540 = vor.u32 %v5536, %v5539
        %v5541 = vrot.slane %v5540, 4
        %v5543 = vshll.u32 %v4851, 16
        %v5545 = vrot.slane %v5543, 5
        %v5546 = vsel %vm1295, %v5541, %v5545
        %v5548 = vshrl.u32 %v4850, 16
        %v5550 = vrot.slane %v5548, 4
        %v5551 = vshll.u32 %v4850, 16
        %v5553 = vrot.slane %v5551, 5
        %v5554 = vor.u32 %v5550, %v5553
        %v5555 = vrot.slane %v5554, 4
        %v5557 = vshll.u32 %v4852, 16
        %v5559 = vrot.slane %v5557, 5
        %v5560 = vsel %vm1295, %v5555, %v5559
        %v5561 = vshrl.u32 %v4851, 16
        %v5563 = vrot.slane %v5561, 4
        %v5564 = vor.u32 %v5563, %v5545
        %v5565 = vrot.slane %v5564, 4
        %v5567 = vshll.u32 %v4853, 16
        %v5569 = vrot.slane %v5567, 5
        %v5570 = vsel %vm1295, %v5565, %v5569
        %v5571 = vshrl.u32 %v4852, 16
        %v5573 = vrot.slane %v5571, 4
        %v5574 = vor.u32 %v5573, %v5559
        %v5575 = vrot.slane %v5574, 4
        %v5577 = vshll.u32 %v4854, 16
        %v5579 = vrot.slane %v5577, 5
        %v5580 = vsel %vm1295, %v5575, %v5579
        %v5582 = vshrl.u32 %v4855, 16
        %v5584 = vrot.slane %v5582, 4
        %v5585 = vshll.u32 %v4855, 16
        %v5587 = vrot.slane %v5585, 5
        %v5588 = vor.u32 %v5584, %v5587
        %v5589 = vrot.slane %v5588, 4
        %v5591 = vshll.u32 %v4857, 16
        %v5593 = vrot.slane %v5591, 5
        %v5594 = vsel %vm1295, %v5589, %v5593
        %v5596 = vshrl.u32 %v4856, 16
        %v5598 = vrot.slane %v5596, 4
        %v5599 = vshll.u32 %v4856, 16
        %v5601 = vrot.slane %v5599, 5
        %v5602 = vor.u32 %v5598, %v5601
        %v5603 = vrot.slane %v5602, 4
        %v5605 = vshll.u32 %v4858, 16
        %v5607 = vrot.slane %v5605, 5
        %v5608 = vsel %vm1295, %v5603, %v5607
        %v5609 = vshrl.u32 %v4857, 16
        %v5611 = vrot.slane %v5609, 4
        %v5612 = vor.u32 %v5611, %v5593
        %v5613 = vrot.slane %v5612, 4
        %v5615 = vshll.u32 %v4859, 16
        %v5617 = vrot.slane %v5615, 5
        %v5618 = vsel %vm1295, %v5613, %v5617
        %v5619 = vshrl.u32 %v4858, 16
        %v5621 = vrot.slane %v5619, 4
        %v5622 = vor.u32 %v5621, %v5607
        %v5623 = vrot.slane %v5622, 4
        %v5625 = vshll.u32 %v4860, 16
        %v5627 = vrot.slane %v5625, 5
        %v5628 = vsel %vm1295, %v5623, %v5627
        %s5629 = scalar_lea.vmem %s248, 640
        %v5630 = vld [vmem:[%s5629] sm:$0xf]
        %v5631 = vld [vmem:[%s5629 + $0x4] sm:$0xf]
        %v5632 = vld [vmem:[%s5629 + $0x8] sm:$0xf]
        %v5633 = vld [vmem:[%s5629 + $0xc] sm:$0xf]
        %v5634 = vld [vmem:[%s5629 + $0x10] sm:$0xf]
        %v5635 = vld [vmem:[%s5629 + $0x14] sm:$0xf]
        %v5636 = vld [vmem:[%s5629 + $0x18] sm:$0xf]
        %v5637 = vld [vmem:[%s5629 + $0x1c] sm:$0xf]
        %v5638 = vld [vmem:[%s5629 + $0x20] sm:$0xf]
        %v5639 = vld [vmem:[%s5629 + $0x24] sm:$0xf]
        %v5640 = vld [vmem:[%s5629 + $0x28] sm:$0xf]
        %v5641 = vld [vmem:[%s5629 + $0x2c] sm:$0xf]
        %v5642 = vld [vmem:[%s5629 + $0x30] sm:$0xf]
        %v5643 = vld [vmem:[%s5629 + $0x34] sm:$0xf]
        %v5644 = vld [vmem:[%s5629 + $0x38] sm:$0xf]
        %v5645 = vld [vmem:[%s5629 + $0x3c] sm:$0xf]
        %v5646 = vld [vmem:[%s5629 + $0x40] sm:$0xf]
        %v5647 = vld [vmem:[%s5629 + $0x44] sm:$0xf]
        %v5648 = vld [vmem:[%s5629 + $0x48] sm:$0xf]
        %v5649 = vld [vmem:[%s5629 + $0x4c] sm:$0xf]
        %v5650 = vld [vmem:[%s5629 + $0x50] sm:$0xf]
        %v5651 = vld [vmem:[%s5629 + $0x54] sm:$0xf]
        %v5652 = vld [vmem:[%s5629 + $0x58] sm:$0xf]
        %v5653 = vld [vmem:[%s5629 + $0x5c] sm:$0xf]
        %v5654 = vld [vmem:[%s5629 + $0x60] sm:$0xf]
        %v5655 = vld [vmem:[%s5629 + $0x64] sm:$0xf]
        %v5656 = vld [vmem:[%s5629 + $0x68] sm:$0xf]
        %v5657 = vld [vmem:[%s5629 + $0x6c] sm:$0xf]
        %v5658 = vld [vmem:[%s5629 + $0x70] sm:$0xf]
        %v5659 = vld [vmem:[%s5629 + $0x74] sm:$0xf]
        %v5660 = vld [vmem:[%s5629 + $0x78] sm:$0xf]
        %v5661 = vld [vmem:[%s5629 + $0x7c] sm:$0xf]
        %v5662 = vld [vmem:[%s5629 + $0x80] sm:$0xf]
        %v5663 = vld [vmem:[%s5629 + $0x84] sm:$0xf]
        %v5664 = vld [vmem:[%s5629 + $0x88] sm:$0xf]
        %v5665 = vld [vmem:[%s5629 + $0x8c] sm:$0xf]
        %v5666 = vld [vmem:[%s5629 + $0x90] sm:$0xf]
        %v5667 = vld [vmem:[%s5629 + $0x94] sm:$0xf]
        %v5668 = vld [vmem:[%s5629 + $0x98] sm:$0xf]
        %v5669 = vld [vmem:[%s5629 + $0x9c] sm:$0xf]
        %v5670 = vunpack.c.l.b16 %v4874
        %v5671 = vunpack.c.h.b16 %v4874
        %v5672 = vunpack.c.l.b16 %v4888
        %v5673 = vunpack.c.l.b16 %v4898
        %v5674 = vunpack.c.h.b16 %v4898
        %v5675 = vunpack.c.l.b16 %v4908
        %v5676 = vunpack.c.l.b16 %v4922
        %v5677 = vunpack.c.h.b16 %v4922
        %v5678 = vunpack.c.l.b16 %v4936
        %v5679 = vunpack.c.l.b16 %v4946
        %v5680 = vunpack.c.h.b16 %v4946
        %v5681 = vunpack.c.l.b16 %v4956
        %v5682 = vunpack.c.l.b16 %v4970
        %v5683 = vunpack.c.h.b16 %v4970
        %v5684 = vunpack.c.l.b16 %v4984
        %v5685 = vunpack.c.l.b16 %v4994
        %v5686 = vunpack.c.h.b16 %v4994
        %v5687 = vunpack.c.l.b16 %v5004
        %v5688 = vunpack.c.l.b16 %v5018
        %v5689 = vunpack.c.h.b16 %v5018
        %v5690 = vunpack.c.l.b16 %v5032
        %v5691 = vunpack.c.l.b16 %v5042
        %v5692 = vunpack.c.h.b16 %v5042
        %v5693 = vunpack.c.l.b16 %v5052
        %v5694 = vunpack.c.l.b16 %v5066
        %v5695 = vunpack.c.h.b16 %v5066
        %v5696 = vunpack.c.l.b16 %v5080
        %v5697 = vunpack.c.l.b16 %v5090
        %v5698 = vunpack.c.h.b16 %v5090
        %v5699 = vunpack.c.l.b16 %v5100
        %v5700 = vunpack.c.l.b16 %v5114
        %v5701 = vunpack.c.h.b16 %v5114
        %v5702 = vunpack.c.l.b16 %v5128
        %v5703 = vunpack.c.l.b16 %v5138
        %v5704 = vunpack.c.h.b16 %v5138
        %v5705 = vunpack.c.l.b16 %v5148
        %v5706 = vunpack.c.l.b16 %v5162
        %v5707 = vunpack.c.h.b16 %v5162
        %v5708 = vunpack.c.l.b16 %v5176
        %v5709 = vunpack.c.l.b16 %v5186
        %v5710 = vunpack.c.h.b16 %v5186
        %v5711 = vunpack.c.l.b16 %v5196
        %v5712 = vunpack.c.l.b16 %v5210
        %v5713 = vunpack.c.h.b16 %v5210
        %v5714 = vunpack.c.l.b16 %v5224
        %v5715 = vunpack.c.l.b16 %v5234
        %v5716 = vunpack.c.h.b16 %v5234
        %v5717 = vunpack.c.l.b16 %v5244
        %v5718 = vunpack.c.l.b16 %v5258
        %v5719 = vunpack.c.h.b16 %v5258
        %v5720 = vunpack.c.l.b16 %v5272
        %v5721 = vunpack.c.l.b16 %v5282
        %v5722 = vunpack.c.h.b16 %v5282
        %v5723 = vunpack.c.l.b16 %v5292
        %v5724 = vunpack.c.l.b16 %v5306
        %v5725 = vunpack.c.h.b16 %v5306
        %v5726 = vunpack.c.l.b16 %v5320
        %v5727 = vunpack.c.l.b16 %v5330
        %v5728 = vunpack.c.h.b16 %v5330
        %v5729 = vunpack.c.l.b16 %v5340
        %v5730 = vunpack.c.l.b16 %v5354
        %v5731 = vunpack.c.h.b16 %v5354
        %v5732 = vunpack.c.l.b16 %v5368
        %v5733 = vunpack.c.l.b16 %v5378
        %v5734 = vunpack.c.h.b16 %v5378
        %v5735 = vunpack.c.l.b16 %v5388
        %v5736 = vunpack.c.l.b16 %v5402
        %v5737 = vunpack.c.h.b16 %v5402
        %v5738 = vunpack.c.l.b16 %v5416
        %v5739 = vunpack.c.l.b16 %v5426
        %v5740 = vunpack.c.h.b16 %v5426
        %v5741 = vunpack.c.l.b16 %v5436
        %v5742 = vunpack.c.l.b16 %v5450
        %v5743 = vunpack.c.h.b16 %v5450
        %v5744 = vunpack.c.l.b16 %v5464
        %v5745 = vunpack.c.l.b16 %v5474
        %v5746 = vunpack.c.h.b16 %v5474
        %v5747 = vunpack.c.l.b16 %v5484
        %v5748 = vunpack.c.l.b16 %v5498
        %v5749 = vunpack.c.h.b16 %v5498
        %v5750 = vunpack.c.l.b16 %v5512
        %v5751 = vunpack.c.l.b16 %v5522
        %v5752 = vunpack.c.h.b16 %v5522
        %v5753 = vunpack.c.l.b16 %v5532
        %v5754 = vunpack.c.l.b16 %v5546
        %v5755 = vunpack.c.h.b16 %v5546
        %v5756 = vunpack.c.l.b16 %v5560
        %v5757 = vunpack.c.l.b16 %v5570
        %v5758 = vunpack.c.h.b16 %v5570
        %v5759 = vunpack.c.l.b16 %v5580
        %v5760 = vunpack.c.l.b16 %v5594
        %v5761 = vunpack.c.h.b16 %v5594
        %v5762 = vunpack.c.l.b16 %v5608
        %v5763 = vunpack.c.l.b16 %v5618
        %v5764 = vunpack.c.h.b16 %v5618
        %v5765 = vunpack.c.l.b16 %v5628
        %v5766 = vpack.c.b16 %v5673, %v5670
        %v5767 = vpack.c.b16 %v5674, %v5671
        %v5768 = vpack.c.b16 %v5675, %v5672
        %v5769 = vpack.c.b16 %v5679, %v5676
        %v5770 = vpack.c.b16 %v5680, %v5677
        %v5771 = vpack.c.b16 %v5681, %v5678
        %v5772 = vpack.c.b16 %v5685, %v5682
        %v5773 = vpack.c.b16 %v5686, %v5683
        %v5774 = vpack.c.b16 %v5687, %v5684
        %v5775 = vpack.c.b16 %v5691, %v5688
        %v5776 = vpack.c.b16 %v5692, %v5689
        %v5777 = vpack.c.b16 %v5693, %v5690
        %v5778 = vpack.c.b16 %v5697, %v5694
        %v5779 = vpack.c.b16 %v5698, %v5695
        %v5780 = vpack.c.b16 %v5699, %v5696
        %v5781 = vpack.c.b16 %v5703, %v5700
        %v5782 = vpack.c.b16 %v5704, %v5701
        %v5783 = vpack.c.b16 %v5705, %v5702
        %v5784 = vpack.c.b16 %v5709, %v5706
        %v5785 = vpack.c.b16 %v5710, %v5707
        %v5786 = vpack.c.b16 %v5711, %v5708
        %v5787 = vpack.c.b16 %v5715, %v5712
        %v5788 = vpack.c.b16 %v5716, %v5713
        %v5789 = vpack.c.b16 %v5717, %v5714
        %v5790 = vpack.c.b16 %v5721, %v5718
        %v5791 = vpack.c.b16 %v5722, %v5719
        %v5792 = vpack.c.b16 %v5723, %v5720
        %v5793 = vpack.c.b16 %v5727, %v5724
        %v5794 = vpack.c.b16 %v5728, %v5725
        %v5795 = vpack.c.b16 %v5729, %v5726
        %v5796 = vpack.c.b16 %v5733, %v5730
        %v5797 = vpack.c.b16 %v5734, %v5731
        %v5798 = vpack.c.b16 %v5735, %v5732
        %v5799 = vpack.c.b16 %v5739, %v5736
        %v5800 = vpack.c.b16 %v5740, %v5737
        %v5801 = vpack.c.b16 %v5741, %v5738
        %v5802 = vpack.c.b16 %v5745, %v5742
        %v5803 = vpack.c.b16 %v5746, %v5743
        %v5804 = vpack.c.b16 %v5747, %v5744
        %v5805 = vpack.c.b16 %v5751, %v5748
        %v5806 = vpack.c.b16 %v5752, %v5749
        %v5807 = vpack.c.b16 %v5753, %v5750
        %v5808 = vpack.c.b16 %v5757, %v5754
        %v5809 = vpack.c.b16 %v5758, %v5755
        %v5810 = vpack.c.b16 %v5759, %v5756
        %v5811 = vpack.c.b16 %v5763, %v5760
        %v5812 = vpack.c.b16 %v5764, %v5761
        %v5813 = vpack.c.b16 %v5765, %v5762
        %v5886 = vunpack.c.l.b16 %v5630
        %v5887 = vunpack.c.l.b16 %v5631
        %v5888 = vunpack.c.l.b16 %v5632
        %v5889 = vunpack.c.l.b16 %v5633
        %v5890 = vunpack.c.l.b16 %v5634
        %v5891 = vunpack.c.l.b16 %v5635
        %v5892 = vunpack.c.l.b16 %v5636
        %v5893 = vunpack.c.l.b16 %v5637
        %v5894 = vunpack.c.l.b16 %v5638
        %v5895 = vunpack.c.l.b16 %v5639
        %v5896 = vunpack.c.l.b16 %v5640
        %v5897 = vunpack.c.l.b16 %v5641
        %v5898 = vunpack.c.l.b16 %v5642
        %v5899 = vunpack.c.l.b16 %v5643
        %v5900 = vunpack.c.l.b16 %v5644
        %v5901 = vunpack.c.l.b16 %v5645
        %v5902 = vunpack.c.l.b16 %v5646
        %v5903 = vunpack.c.l.b16 %v5647
        %v5904 = vunpack.c.l.b16 %v5648
        %v5905 = vunpack.c.l.b16 %v5649
        %v5906 = vunpack.c.l.b16 %v5650
        %v5907 = vunpack.c.l.b16 %v5651
        %v5908 = vunpack.c.l.b16 %v5652
        %v5909 = vunpack.c.l.b16 %v5653
        %v5910 = vunpack.c.l.b16 %v5654
        %v5911 = vunpack.c.l.b16 %v5655
        %v5912 = vunpack.c.l.b16 %v5656
        %v5913 = vunpack.c.l.b16 %v5657
        %v5914 = vunpack.c.l.b16 %v5658
        %v5915 = vunpack.c.l.b16 %v5659
        %v5916 = vunpack.c.l.b16 %v5660
        %v5917 = vunpack.c.l.b16 %v5661
        %v5918 = vunpack.c.l.b16 %v5662
        %v5919 = vunpack.c.l.b16 %v5663
        %v5920 = vunpack.c.l.b16 %v5664
        %v5921 = vunpack.c.l.b16 %v5665
        %v5922 = vunpack.c.l.b16 %v5666
        %v5923 = vunpack.c.l.b16 %v5667
        %v5924 = vunpack.c.l.b16 %v5668
        %v5925 = vunpack.c.l.b16 %v5669
        %v5926 = vpack.c.b16 %v5887, %v5886
        %v5927 = vpack.c.b16 %v5889, %v5888
        %v5928 = vpack.c.b16 %v5891, %v5890
        %v5929 = vpack.c.b16 %v5893, %v5892
        %v5930 = vpack.c.b16 %v5895, %v5894
        %v5931 = vpack.c.b16 %v5897, %v5896
        %v5932 = vpack.c.b16 %v5899, %v5898
        %v5933 = vpack.c.b16 %v5901, %v5900
        %v5934 = vpack.c.b16 %v5903, %v5902
        %v5935 = vpack.c.b16 %v5905, %v5904
        %v5936 = vpack.c.b16 %v5907, %v5906
        %v5937 = vpack.c.b16 %v5909, %v5908
        %v5938 = vpack.c.b16 %v5911, %v5910
        %v5939 = vpack.c.b16 %v5913, %v5912
        %v5940 = vpack.c.b16 %v5915, %v5914
        %v5941 = vpack.c.b16 %v5917, %v5916
        %v5942 = vpack.c.b16 %v5919, %v5918
        %v5943 = vpack.c.b16 %v5921, %v5920
        %v5944 = vpack.c.b16 %v5923, %v5922
        %v5945 = vpack.c.b16 %v5925, %v5924
        %v5967 = vsel %vm794, %v5768, 0
        %v5970 = vsel %vm794, %v5771, 0
        %v5973 = vsel %vm794, %v5774, 0
        %v5976 = vsel %vm794, %v5777, 0
        %v5979 = vsel %vm794, %v5780, 0
        %v5982 = vsel %vm794, %v5783, 0
        %v5985 = vsel %vm794, %v5786, 0
        %v5988 = vsel %vm794, %v5789, 0
        %v5991 = vsel %vm794, %v5792, 0
        %v5994 = vsel %vm794, %v5795, 0
        %v5997 = vsel %vm794, %v5798, 0
        %v6000 = vsel %vm794, %v5801, 0
        %v6003 = vsel %vm794, %v5804, 0
        %v6006 = vsel %vm794, %v5807, 0
        %v6009 = vsel %vm794, %v5810, 0
        %v6012 = vsel %vm794, %v5813, 0
        %6014 = vmatprep.subr.bf16.mxu0 0
        %6015 = vmatpush1.bf16.msra.mxu0 %v5926
        %6016 = vmatprep.subr.bf16.mxu0 0
        %6017 = vmatpush1.bf16.msra.mxu0 %v5927
        %6018 = vmatprep.subr.bf16.mxu0 0
        %6019 = vmatpush1.bf16.msra.mxu0 %v5928
        %6020 = vmatprep.subr.bf16.mxu0 0
        %6021 = vmatpush1.bf16.msra.mxu0 %v5929
        %6022 = vmatprep.subr.bf16.mxu0 0
        %6023 = vmatpush1.bf16.msra.mxu0 %v5930
        %6024 = vmatprep.subr.bf16.mxu0 0
        %6025 = vmatpush1.bf16.msra.mxu0 %v5931
        %6026 = vmatprep.subr.bf16.mxu0 0
        %6027 = vmatpush1.bf16.msra.mxu0 %v5932
        %6028 = vmatprep.subr.bf16.mxu0 0
        %6029 = vmatpush1.bf16.msra.mxu0 %v5933
        %6030 = vmatprep.subr.bf16.mxu0 0
        %6031 = vmatpush1.bf16.msra.mxu0 %v5934
        %6032 = vmatprep.subr.bf16.mxu0 0
        %6033 = vmatpush1.bf16.msra.mxu0 %v5935
        %6034 = vmatprep.subr.bf16.mxu0 0
        %6035 = vmatpush1.bf16.msra.mxu0 %v5936
        %6036 = vmatprep.subr.bf16.mxu0 0
        %6037 = vmatpush1.bf16.msra.mxu0 %v5937
        %6038 = vmatprep.subr.bf16.mxu0 0
        %6039 = vmatpush1.bf16.msra.mxu0 %v5938
        %6040 = vmatprep.subr.bf16.mxu0 0
        %6041 = vmatpush1.bf16.msra.mxu0 %v5939
        %6042 = vmatprep.subr.bf16.mxu0 0
        %6043 = vmatpush1.bf16.msra.mxu0 %v5940
        %6044 = vmatprep.subr.bf16.mxu0 0
        %6045 = vmatpush1.bf16.msra.mxu0 %v5941
        %6046 = vmatprep.mubr.bf16.mxu0 %v5767
        %6047 = vmatmul.mubr.bf16.gmra.mrb[0].mxu0 %v5766
        %v6048 = vpop.f32.mrb[0].mxu0
        %v6049 = vadd.f32 0.0, %v6048
        %v6050 = vpop.f32.mrb[0].mxu0
        %v6051 = vpop.f32.mrb[0].mxu0
        %v6052 = vadd.f32 0.0, %v6051
        %v6053 = vpop.f32.mrb[0].mxu0
        %6054 = vmatprep.mubr.bf16.mxu0 %v5770
        %6055 = vmatmul.mubr.bf16.gmra.mrb[0].mxu0 %v5769
        %v6056 = vpop.f32.mrb[0].mxu0
        %v6057 = vadd.f32 0.0, %v6056
        %v6058 = vpop.f32.mrb[0].mxu0
        %v6059 = vpop.f32.mrb[0].mxu0
        %v6060 = vadd.f32 0.0, %v6059
        %v6061 = vpop.f32.mrb[0].mxu0
        %6062 = vmatprep.mubr.bf16.mxu0 %v5773
        %6063 = vmatmul.mubr.bf16.gmra.mrb[0].mxu0 %v5772
        %v6064 = vpop.f32.mrb[0].mxu0
        %v6065 = vadd.f32 0.0, %v6064
        %v6066 = vpop.f32.mrb[0].mxu0
        %v6067 = vpop.f32.mrb[0].mxu0
        %v6068 = vadd.f32 0.0, %v6067
        %v6069 = vpop.f32.mrb[0].mxu0
        %6070 = vmatprep.mubr.bf16.mxu0 %v5776
        %6071 = vmatmul.mubr.bf16.gmra.mrb[0].mxu0 %v5775
        %v6072 = vpop.f32.mrb[0].mxu0
        %v6073 = vadd.f32 0.0, %v6072
        %v6074 = vpop.f32.mrb[0].mxu0
        %v6075 = vpop.f32.mrb[0].mxu0
        %v6076 = vadd.f32 0.0, %v6075
        %v6077 = vpop.f32.mrb[0].mxu0
        %6078 = vmatprep.mubr.bf16.mxu0 %v5779
        %6079 = vmatmul.mubr.bf16.gmra.mrb[0].mxu0 %v5778
        %v6080 = vpop.f32.mrb[0].mxu0
        %v6081 = vadd.f32 0.0, %v6080
        %v6082 = vpop.f32.mrb[0].mxu0
        %v6083 = vpop.f32.mrb[0].mxu0
        %v6084 = vadd.f32 0.0, %v6083
        %v6085 = vpop.f32.mrb[0].mxu0
        %6086 = vmatprep.mubr.bf16.mxu0 %v5782
        %6087 = vmatmul.mubr.bf16.gmra.mrb[0].mxu0 %v5781
        %v6088 = vpop.f32.mrb[0].mxu0
        %v6089 = vadd.f32 0.0, %v6088
        %v6090 = vpop.f32.mrb[0].mxu0
        %v6091 = vpop.f32.mrb[0].mxu0
        %v6092 = vadd.f32 0.0, %v6091
        %v6093 = vpop.f32.mrb[0].mxu0
        %6094 = vmatprep.mubr.bf16.mxu0 %v5785
        %6095 = vmatmul.mubr.bf16.gmra.mrb[0].mxu0 %v5784
        %v6096 = vpop.f32.mrb[0].mxu0
        %v6097 = vadd.f32 0.0, %v6096
        %v6098 = vpop.f32.mrb[0].mxu0
        %v6099 = vpop.f32.mrb[0].mxu0
        %v6100 = vadd.f32 0.0, %v6099
        %v6101 = vpop.f32.mrb[0].mxu0
        %6102 = vmatprep.mubr.bf16.mxu0 %v5788
        %6103 = vmatmul.mubr.bf16.gmra.mrb[0].mxu0 %v5787
        %v6104 = vpop.f32.mrb[0].mxu0
        %v6105 = vadd.f32 0.0, %v6104
        %v6106 = vpop.f32.mrb[0].mxu0
        %v6107 = vpop.f32.mrb[0].mxu0
        %v6108 = vadd.f32 0.0, %v6107
        %v6109 = vpop.f32.mrb[0].mxu0
        %6110 = vmatprep.mubr.bf16.mxu0 %v5791
        %6111 = vmatmul.mubr.bf16.gmra.mrb[0].mxu0 %v5790
        %v6112 = vpop.f32.mrb[0].mxu0
        %v6113 = vadd.f32 0.0, %v6112
        %v6114 = vpop.f32.mrb[0].mxu0
        %v6115 = vpop.f32.mrb[0].mxu0
        %v6116 = vadd.f32 0.0, %v6115
        %v6117 = vpop.f32.mrb[0].mxu0
        %6118 = vmatprep.mubr.bf16.mxu0 %v5794
        %6119 = vmatmul.mubr.bf16.gmra.mrb[0].mxu0 %v5793
        %v6120 = vpop.f32.mrb[0].mxu0
        %v6121 = vadd.f32 0.0, %v6120
        %v6122 = vpop.f32.mrb[0].mxu0
        %v6123 = vpop.f32.mrb[0].mxu0
        %v6124 = vadd.f32 0.0, %v6123
        %v6125 = vpop.f32.mrb[0].mxu0
        %6126 = vmatprep.mubr.bf16.mxu0 %v5797
        %6127 = vmatmul.mubr.bf16.gmra.mrb[0].mxu0 %v5796
        %v6128 = vpop.f32.mrb[0].mxu0
        %v6129 = vadd.f32 0.0, %v6128
        %v6130 = vpop.f32.mrb[0].mxu0
        %v6131 = vpop.f32.mrb[0].mxu0
        %v6132 = vadd.f32 0.0, %v6131
        %v6133 = vpop.f32.mrb[0].mxu0
        %6134 = vmatprep.mubr.bf16.mxu0 %v5800
        %6135 = vmatmul.mubr.bf16.gmra.mrb[0].mxu0 %v5799
        %v6136 = vpop.f32.mrb[0].mxu0
        %v6137 = vadd.f32 0.0, %v6136
        %v6138 = vpop.f32.mrb[0].mxu0
        %v6139 = vpop.f32.mrb[0].mxu0
        %v6140 = vadd.f32 0.0, %v6139
        %v6141 = vpop.f32.mrb[0].mxu0
        %6142 = vmatprep.mubr.bf16.mxu0 %v5803
        %6143 = vmatmul.mubr.bf16.gmra.mrb[0].mxu0 %v5802
        %v6144 = vpop.f32.mrb[0].mxu0
        %v6145 = vadd.f32 0.0, %v6144
        %v6146 = vpop.f32.mrb[0].mxu0
        %v6147 = vpop.f32.mrb[0].mxu0
        %v6148 = vadd.f32 0.0, %v6147
        %v6149 = vpop.f32.mrb[0].mxu0
        %6150 = vmatprep.mubr.bf16.mxu0 %v5806
        %6151 = vmatmul.mubr.bf16.gmra.mrb[0].mxu0 %v5805
        %v6152 = vpop.f32.mrb[0].mxu0
        %v6153 = vadd.f32 0.0, %v6152
        %v6154 = vpop.f32.mrb[0].mxu0
        %v6155 = vpop.f32.mrb[0].mxu0
        %v6156 = vadd.f32 0.0, %v6155
        %v6157 = vpop.f32.mrb[0].mxu0
        %6158 = vmatprep.mubr.bf16.mxu0 %v5809
        %6159 = vmatmul.mubr.bf16.gmra.mrb[0].mxu0 %v5808
        %v6160 = vpop.f32.mrb[0].mxu0
        %v6161 = vadd.f32 0.0, %v6160
        %v6162 = vpop.f32.mrb[0].mxu0
        %v6163 = vpop.f32.mrb[0].mxu0
        %v6164 = vadd.f32 0.0, %v6163
        %v6165 = vpop.f32.mrb[0].mxu0
        %6166 = vmatprep.mubr.bf16.mxu0 %v5812
        %6167 = vmatmul.mubr.bf16.gmra.mrb[0].mxu0 %v5811
        %v6168 = vpop.f32.mrb[0].mxu0
        %v6169 = vadd.f32 0.0, %v6168
        %v6170 = vpop.f32.mrb[0].mxu0
        %v6171 = vpop.f32.mrb[0].mxu0
        %v6172 = vadd.f32 0.0, %v6171
        %v6173 = vpop.f32.mrb[0].mxu0
        %6174 = vdwg.mxu0
        %6175 = vmatprep.subr.bf16.mxu0 0
        %6176 = vmatpush1.bf16.msra.mxu0 %v5942
        %6177 = vmatprep.subr.bf16.mxu0 0
        %6178 = vmatpush1.bf16.msra.mxu0 %v5943
        %6179 = vmatprep.subr.bf16.mxu0 0
        %6180 = vmatpush1.bf16.msra.mxu0 %v5944
        %6181 = vmatprep.subr.bf16.mxu0 0
        %6182 = vmatpush1.bf16.msra.mxu0 %v5945
        %6183 = vmatprep.subr.bf16.mxu0 0
        %6184 = vmatpush1.bf16.msra.mxu0 0
        %6185 = vmatprep.subr.bf16.mxu0 0
        %6186 = vmatpush1.bf16.msra.mxu0 0
        %6187 = vmatprep.subr.bf16.mxu0 0
        %6188 = vmatpush1.bf16.msra.mxu0 0
        %6189 = vmatprep.subr.bf16.mxu0 0
        %6190 = vmatpush1.bf16.msra.mxu0 0
        %6191 = vmatprep.subr.bf16.mxu0 0
        %6192 = vmatpush1.bf16.msra.mxu0 0
        %6193 = vmatprep.subr.bf16.mxu0 0
        %6194 = vmatpush1.bf16.msra.mxu0 0
        %6195 = vmatprep.subr.bf16.mxu0 0
        %6196 = vmatpush1.bf16.msra.mxu0 0
        %6197 = vmatprep.subr.bf16.mxu0 0
        %6198 = vmatpush1.bf16.msra.mxu0 0
        %6199 = vmatprep.subr.bf16.mxu0 0
        %6200 = vmatpush1.bf16.msra.mxu0 0
        %6201 = vmatprep.subr.bf16.mxu0 0
        %6202 = vmatpush1.bf16.msra.mxu0 0
        %6203 = vmatprep.subr.bf16.mxu0 0
        %6204 = vmatpush1.bf16.msra.mxu0 0
        %6205 = vmatprep.subr.bf16.mxu0 0
        %6206 = vmatpush1.bf16.msra.mxu0 0
        %6207 = vmatprep.mubr.bf16.mxu0 0
        %6208 = vmatmul.mubr.bf16.gmra.mrb[0].mxu0 %v5967
        %v6209 = vpop.f32.mrb[0].mxu0
        %v6210 = vadd.f32 %v6049, %v6209
        %v6211 = vpop.f32.mrb[0].mxu0
        %v6212 = vpop.f32.mrb[0].mxu0
        %v6213 = vadd.f32 %v6052, %v6212
        %v6214 = vpop.f32.mrb[0].mxu0
        %6215 = vmatprep.mubr.bf16.mxu0 0
        %6216 = vmatmul.mubr.bf16.gmra.mrb[0].mxu0 %v5970
        %v6217 = vpop.f32.mrb[0].mxu0
        %v6218 = vadd.f32 %v6057, %v6217
        %v6219 = vpop.f32.mrb[0].mxu0
        %v6220 = vpop.f32.mrb[0].mxu0
        %v6221 = vadd.f32 %v6060, %v6220
        %v6222 = vpop.f32.mrb[0].mxu0
        %6223 = vmatprep.mubr.bf16.mxu0 0
        %6224 = vmatmul.mubr.bf16.gmra.mrb[0].mxu0 %v5973
        %v6225 = vpop.f32.mrb[0].mxu0
        %v6226 = vadd.f32 %v6065, %v6225
        %v6227 = vpop.f32.mrb[0].mxu0
        %v6228 = vpop.f32.mrb[0].mxu0
        %v6229 = vadd.f32 %v6068, %v6228
        %v6230 = vpop.f32.mrb[0].mxu0
        %6231 = vmatprep.mubr.bf16.mxu0 0
        %6232 = vmatmul.mubr.bf16.gmra.mrb[0].mxu0 %v5976
        %v6233 = vpop.f32.mrb[0].mxu0
        %v6234 = vadd.f32 %v6073, %v6233
        %v6235 = vpop.f32.mrb[0].mxu0
        %v6236 = vpop.f32.mrb[0].mxu0
        %v6237 = vadd.f32 %v6076, %v6236
        %v6238 = vpop.f32.mrb[0].mxu0
        %6239 = vmatprep.mubr.bf16.mxu0 0
        %6240 = vmatmul.mubr.bf16.gmra.mrb[0].mxu0 %v5979
        %v6241 = vpop.f32.mrb[0].mxu0
        %v6242 = vadd.f32 %v6081, %v6241
        %v6243 = vpop.f32.mrb[0].mxu0
        %v6244 = vpop.f32.mrb[0].mxu0
        %v6245 = vadd.f32 %v6084, %v6244
        %v6246 = vpop.f32.mrb[0].mxu0
        %6247 = vmatprep.mubr.bf16.mxu0 0
        %6248 = vmatmul.mubr.bf16.gmra.mrb[0].mxu0 %v5982
        %v6249 = vpop.f32.mrb[0].mxu0
        %v6250 = vadd.f32 %v6089, %v6249
        %v6251 = vpop.f32.mrb[0].mxu0
        %v6252 = vpop.f32.mrb[0].mxu0
        %v6253 = vadd.f32 %v6092, %v6252
        %v6254 = vpop.f32.mrb[0].mxu0
        %6255 = vmatprep.mubr.bf16.mxu0 0
        %6256 = vmatmul.mubr.bf16.gmra.mrb[0].mxu0 %v5985
        %v6257 = vpop.f32.mrb[0].mxu0
        %v6258 = vadd.f32 %v6097, %v6257
        %v6259 = vpop.f32.mrb[0].mxu0
        %v6260 = vpop.f32.mrb[0].mxu0
        %v6261 = vadd.f32 %v6100, %v6260
        %v6262 = vpop.f32.mrb[0].mxu0
        %6263 = vmatprep.mubr.bf16.mxu0 0
        %6264 = vmatmul.mubr.bf16.gmra.mrb[0].mxu0 %v5988
        %v6265 = vpop.f32.mrb[0].mxu0
        %v6266 = vadd.f32 %v6105, %v6265
        %v6267 = vpop.f32.mrb[0].mxu0
        %v6268 = vpop.f32.mrb[0].mxu0
        %v6269 = vadd.f32 %v6108, %v6268
        %v6270 = vpop.f32.mrb[0].mxu0
        %6271 = vmatprep.mubr.bf16.mxu0 0
        %6272 = vmatmul.mubr.bf16.gmra.mrb[0].mxu0 %v5991
        %v6273 = vpop.f32.mrb[0].mxu0
        %v6274 = vadd.f32 %v6113, %v6273
        %v6275 = vpop.f32.mrb[0].mxu0
        %v6276 = vpop.f32.mrb[0].mxu0
        %v6277 = vadd.f32 %v6116, %v6276
        %v6278 = vpop.f32.mrb[0].mxu0
        %6279 = vmatprep.mubr.bf16.mxu0 0
        %6280 = vmatmul.mubr.bf16.gmra.mrb[0].mxu0 %v5994
        %v6281 = vpop.f32.mrb[0].mxu0
        %v6282 = vadd.f32 %v6121, %v6281
        %v6283 = vpop.f32.mrb[0].mxu0
        %v6284 = vpop.f32.mrb[0].mxu0
        %v6285 = vadd.f32 %v6124, %v6284
        %v6286 = vpop.f32.mrb[0].mxu0
        %6287 = vmatprep.mubr.bf16.mxu0 0
        %6288 = vmatmul.mubr.bf16.gmra.mrb[0].mxu0 %v5997
        %v6289 = vpop.f32.mrb[0].mxu0
        %v6290 = vadd.f32 %v6129, %v6289
        %v6291 = vpop.f32.mrb[0].mxu0
        %v6292 = vpop.f32.mrb[0].mxu0
        %v6293 = vadd.f32 %v6132, %v6292
        %v6294 = vpop.f32.mrb[0].mxu0
        %6295 = vmatprep.mubr.bf16.mxu0 0
        %6296 = vmatmul.mubr.bf16.gmra.mrb[0].mxu0 %v6000
        %v6297 = vpop.f32.mrb[0].mxu0
        %v6298 = vadd.f32 %v6137, %v6297
        %v6299 = vpop.f32.mrb[0].mxu0
        %v6300 = vpop.f32.mrb[0].mxu0
        %v6301 = vadd.f32 %v6140, %v6300
        %v6302 = vpop.f32.mrb[0].mxu0
        %6303 = vmatprep.mubr.bf16.mxu0 0
        %6304 = vmatmul.mubr.bf16.gmra.mrb[0].mxu0 %v6003
        %v6305 = vpop.f32.mrb[0].mxu0
        %v6306 = vadd.f32 %v6145, %v6305
        %v6307 = vpop.f32.mrb[0].mxu0
        %v6308 = vpop.f32.mrb[0].mxu0
        %v6309 = vadd.f32 %v6148, %v6308
        %v6310 = vpop.f32.mrb[0].mxu0
        %6311 = vmatprep.mubr.bf16.mxu0 0
        %6312 = vmatmul.mubr.bf16.gmra.mrb[0].mxu0 %v6006
        %v6313 = vpop.f32.mrb[0].mxu0
        %v6314 = vadd.f32 %v6153, %v6313
        %v6315 = vpop.f32.mrb[0].mxu0
        %v6316 = vpop.f32.mrb[0].mxu0
        %v6317 = vadd.f32 %v6156, %v6316
        %v6318 = vpop.f32.mrb[0].mxu0
        %6319 = vmatprep.mubr.bf16.mxu0 0
        %6320 = vmatmul.mubr.bf16.gmra.mrb[0].mxu0 %v6009
        %v6321 = vpop.f32.mrb[0].mxu0
        %v6322 = vadd.f32 %v6161, %v6321
        %v6323 = vpop.f32.mrb[0].mxu0
        %v6324 = vpop.f32.mrb[0].mxu0
        %v6325 = vadd.f32 %v6164, %v6324
        %v6326 = vpop.f32.mrb[0].mxu0
        %6327 = vmatprep.mubr.bf16.mxu0 0
        %6328 = vmatmul.mubr.bf16.gmra.mrb[0].mxu0 %v6012
        %v6329 = vpop.f32.mrb[0].mxu0
        %v6330 = vadd.f32 %v6169, %v6329
        %v6331 = vpop.f32.mrb[0].mxu0
        %v6332 = vpop.f32.mrb[0].mxu0
        %v6333 = vadd.f32 %v6172, %v6332
        %v6334 = vpop.f32.mrb[0].mxu0
        %6335 = vdwg.mxu0
        %v6336 = vadd.f32 %v4733, %v6210
        %v6337 = vadd.f32 %v4734, %v6213
        %v6338 = vadd.f32 %v4735, %v6218
        %v6339 = vadd.f32 %v4736, %v6221
        %v6340 = vadd.f32 %v4737, %v6226
        %v6341 = vadd.f32 %v4738, %v6229
        %v6342 = vadd.f32 %v4739, %v6234
        %v6343 = vadd.f32 %v4740, %v6237
        %v6344 = vadd.f32 %v4741, %v6242
        %v6345 = vadd.f32 %v4742, %v6245
        %v6346 = vadd.f32 %v4743, %v6250
        %v6347 = vadd.f32 %v4744, %v6253
        %v6348 = vadd.f32 %v4745, %v6258
        %v6349 = vadd.f32 %v4746, %v6261
        %v6350 = vadd.f32 %v4747, %v6266
        %v6351 = vadd.f32 %v4748, %v6269
        %v6352 = vadd.f32 %v4749, %v6274
        %v6353 = vadd.f32 %v4750, %v6277
        %v6354 = vadd.f32 %v4751, %v6282
        %v6355 = vadd.f32 %v4752, %v6285
        %v6356 = vadd.f32 %v4753, %v6290
        %v6357 = vadd.f32 %v4754, %v6293
        %v6358 = vadd.f32 %v4755, %v6298
        %v6359 = vadd.f32 %v4756, %v6301
        %v6360 = vadd.f32 %v4757, %v6306
        %v6361 = vadd.f32 %v4758, %v6309
        %v6362 = vadd.f32 %v4759, %v6314
        %v6363 = vadd.f32 %v4760, %v6317
        %v6364 = vadd.f32 %v4761, %v6322
        %v6365 = vadd.f32 %v4762, %v6325
        %v6366 = vadd.f32 %v4763, %v6330
        %v6367 = vadd.f32 %v4764, %v6333
        %v6368 = vld [vmem:[%s3897] sm:$0xee]
        %v6369 = vld [vmem:[%s3897 + $0x8] sm:$0xe]
        %v6370 = vld [vmem:[%s3897 + $0x24] sm:$0xee]
        %v6371 = vld [vmem:[%s3897 + $0x2c] sm:$0xe]
        %v6372 = vld [vmem:[%s3897 + $0x48] sm:$0xee]
        %v6373 = vld [vmem:[%s3897 + $0x50] sm:$0xe]
        %v6374 = vld [vmem:[%s3897 + $0x6c] sm:$0xee]
        %v6375 = vld [vmem:[%s3897 + $0x74] sm:$0xe]
        %v6376 = vld [vmem:[%s3897 + $0x90] sm:$0xee]
        %v6377 = vld [vmem:[%s3897 + $0x98] sm:$0xe]
        %v6378 = vld [vmem:[%s3897 + $0xb4] sm:$0xee]
        %v6379 = vld [vmem:[%s3897 + $0xbc] sm:$0xe]
        %v6380 = vld [vmem:[%s3897 + $0xd8] sm:$0xee]
        %v6381 = vld [vmem:[%s3897 + $0xe0] sm:$0xe]
        %v6382 = vld [vmem:[%s3897 + $0xfc] sm:$0xee]
        %v6383 = vld [vmem:[%s3897 + $0x104] sm:$0xe]
        %v6384 = vld [vmem:[%s3897 + $0x120] sm:$0xee]
        %v6385 = vld [vmem:[%s3897 + $0x128] sm:$0xe]
        %v6386 = vld [vmem:[%s3897 + $0x144] sm:$0xee]
        %v6387 = vld [vmem:[%s3897 + $0x14c] sm:$0xe]
        %v6388 = vld [vmem:[%s3897 + $0x168] sm:$0xee]
        %v6389 = vld [vmem:[%s3897 + $0x170] sm:$0xe]
        %v6390 = vld [vmem:[%s3897 + $0x18c] sm:$0xee]
        %v6391 = vld [vmem:[%s3897 + $0x194] sm:$0xe]
        %v6392 = vld [vmem:[%s3897 + $0x1b0] sm:$0xee]
        %v6393 = vld [vmem:[%s3897 + $0x1b8] sm:$0xe]
        %v6394 = vld [vmem:[%s3897 + $0x1d4] sm:$0xee]
        %v6395 = vld [vmem:[%s3897 + $0x1dc] sm:$0xe]
        %v6396 = vld [vmem:[%s3897 + $0x1f8] sm:$0xee]
        %v6397 = vld [vmem:[%s3897 + $0x200] sm:$0xe]
        %v6398 = vld [vmem:[%s3897 + $0x21c] sm:$0xee]
        %v6399 = vld [vmem:[%s3897 + $0x224] sm:$0xe]
        %v6496 = vrot.slane %v6368, 5
        %v6497 = vrot.slane %v6496, 4
        %v6498 = vrot.slane %v4767, 5
        %v6499 = vsel %vm2933, %v6497, %v6498
        %v6500 = vrot.slane %v6369, 5
        %v6501 = vrot.slane %v6500, 4
        %v6502 = vrot.slane %v4768, 5
        %v6503 = vsel %vm2933, %v6501, %v6502
        %v6504 = vrot.slane %v6498, 4
        %v6505 = vrot.slane %v4769, 5
        %v6506 = vsel %vm2933, %v6504, %v6505
        %v6507 = vrot.slane %v6502, 4
        %v6508 = vrot.slane %v4770, 5
        %v6509 = vsel %vm2933, %v6507, %v6508
        %v6510 = vrot.slane %v6370, 5
        %v6511 = vrot.slane %v6510, 4
        %v6512 = vrot.slane %v4773, 5
        %v6513 = vsel %vm2933, %v6511, %v6512
        %v6514 = vrot.slane %v6371, 5
        %v6515 = vrot.slane %v6514, 4
        %v6516 = vrot.slane %v4774, 5
        %v6517 = vsel %vm2933, %v6515, %v6516
        %v6518 = vrot.slane %v6512, 4
        %v6519 = vrot.slane %v4775, 5
        %v6520 = vsel %vm2933, %v6518, %v6519
        %v6521 = vrot.slane %v6516, 4
        %v6522 = vrot.slane %v4776, 5
        %v6523 = vsel %vm2933, %v6521, %v6522
        %v6524 = vrot.slane %v6372, 5
        %v6525 = vrot.slane %v6524, 4
        %v6526 = vrot.slane %v4779, 5
        %v6527 = vsel %vm2933, %v6525, %v6526
        %v6528 = vrot.slane %v6373, 5
        %v6529 = vrot.slane %v6528, 4
        %v6530 = vrot.slane %v4780, 5
        %v6531 = vsel %vm2933, %v6529, %v6530
        %v6532 = vrot.slane %v6526, 4
        %v6533 = vrot.slane %v4781, 5
        %v6534 = vsel %vm2933, %v6532, %v6533
        %v6535 = vrot.slane %v6530, 4
        %v6536 = vrot.slane %v4782, 5
        %v6537 = vsel %vm2933, %v6535, %v6536
        %v6538 = vrot.slane %v6374, 5
        %v6539 = vrot.slane %v6538, 4
        %v6540 = vrot.slane %v4785, 5
        %v6541 = vsel %vm2933, %v6539, %v6540
        %v6542 = vrot.slane %v6375, 5
        %v6543 = vrot.slane %v6542, 4
        %v6544 = vrot.slane %v4786, 5
        %v6545 = vsel %vm2933, %v6543, %v6544
        %v6546 = vrot.slane %v6540, 4
        %v6547 = vrot.slane %v4787, 5
        %v6548 = vsel %vm2933, %v6546, %v6547
        %v6549 = vrot.slane %v6544, 4
        %v6550 = vrot.slane %v4788, 5
        %v6551 = vsel %vm2933, %v6549, %v6550
        %v6552 = vrot.slane %v6376, 5
        %v6553 = vrot.slane %v6552, 4
        %v6554 = vrot.slane %v4791, 5
        %v6555 = vsel %vm2933, %v6553, %v6554
        %v6556 = vrot.slane %v6377, 5
        %v6557 = vrot.slane %v6556, 4
        %v6558 = vrot.slane %v4792, 5
        %v6559 = vsel %vm2933, %v6557, %v6558
        %v6560 = vrot.slane %v6554, 4
        %v6561 = vrot.slane %v4793, 5
        %v6562 = vsel %vm2933, %v6560, %v6561
        %v6563 = vrot.slane %v6558, 4
        %v6564 = vrot.slane %v4794, 5
        %v6565 = vsel %vm2933, %v6563, %v6564
        %v6566 = vrot.slane %v6378, 5
        %v6567 = vrot.slane %v6566, 4
        %v6568 = vrot.slane %v4797, 5
        %v6569 = vsel %vm2933, %v6567, %v6568
        %v6570 = vrot.slane %v6379, 5
        %v6571 = vrot.slane %v6570, 4
        %v6572 = vrot.slane %v4798, 5
        %v6573 = vsel %vm2933, %v6571, %v6572
        %v6574 = vrot.slane %v6568, 4
        %v6575 = vrot.slane %v4799, 5
        %v6576 = vsel %vm2933, %v6574, %v6575
        %v6577 = vrot.slane %v6572, 4
        %v6578 = vrot.slane %v4800, 5
        %v6579 = vsel %vm2933, %v6577, %v6578
        %v6580 = vrot.slane %v6380, 5
        %v6581 = vrot.slane %v6580, 4
        %v6582 = vrot.slane %v4803, 5
        %v6583 = vsel %vm2933, %v6581, %v6582
        %v6584 = vrot.slane %v6381, 5
        %v6585 = vrot.slane %v6584, 4
        %v6586 = vrot.slane %v4804, 5
        %v6587 = vsel %vm2933, %v6585, %v6586
        %v6588 = vrot.slane %v6582, 4
        %v6589 = vrot.slane %v4805, 5
        %v6590 = vsel %vm2933, %v6588, %v6589
        %v6591 = vrot.slane %v6586, 4
        %v6592 = vrot.slane %v4806, 5
        %v6593 = vsel %vm2933, %v6591, %v6592
        %v6594 = vrot.slane %v6382, 5
        %v6595 = vrot.slane %v6594, 4
        %v6596 = vrot.slane %v4809, 5
        %v6597 = vsel %vm2933, %v6595, %v6596
        %v6598 = vrot.slane %v6383, 5
        %v6599 = vrot.slane %v6598, 4
        %v6600 = vrot.slane %v4810, 5
        %v6601 = vsel %vm2933, %v6599, %v6600
        %v6602 = vrot.slane %v6596, 4
        %v6603 = vrot.slane %v4811, 5
        %v6604 = vsel %vm2933, %v6602, %v6603
        %v6605 = vrot.slane %v6600, 4
        %v6606 = vrot.slane %v4812, 5
        %v6607 = vsel %vm2933, %v6605, %v6606
        %v6608 = vrot.slane %v6384, 5
        %v6609 = vrot.slane %v6608, 4
        %v6610 = vrot.slane %v4815, 5
        %v6611 = vsel %vm2933, %v6609, %v6610
        %v6612 = vrot.slane %v6385, 5
        %v6613 = vrot.slane %v6612, 4
        %v6614 = vrot.slane %v4816, 5
        %v6615 = vsel %vm2933, %v6613, %v6614
        %v6616 = vrot.slane %v6610, 4
        %v6617 = vrot.slane %v4817, 5
        %v6618 = vsel %vm2933, %v6616, %v6617
        %v6619 = vrot.slane %v6614, 4
        %v6620 = vrot.slane %v4818, 5
        %v6621 = vsel %vm2933, %v6619, %v6620
        %v6622 = vrot.slane %v6386, 5
        %v6623 = vrot.slane %v6622, 4
        %v6624 = vrot.slane %v4821, 5
        %v6625 = vsel %vm2933, %v6623, %v6624
        %v6626 = vrot.slane %v6387, 5
        %v6627 = vrot.slane %v6626, 4
        %v6628 = vrot.slane %v4822, 5
        %v6629 = vsel %vm2933, %v6627, %v6628
        %v6630 = vrot.slane %v6624, 4
        %v6631 = vrot.slane %v4823, 5
        %v6632 = vsel %vm2933, %v6630, %v6631
        %v6633 = vrot.slane %v6628, 4
        %v6634 = vrot.slane %v4824, 5
        %v6635 = vsel %vm2933, %v6633, %v6634
        %v6636 = vrot.slane %v6388, 5
        %v6637 = vrot.slane %v6636, 4
        %v6638 = vrot.slane %v4827, 5
        %v6639 = vsel %vm2933, %v6637, %v6638
        %v6640 = vrot.slane %v6389, 5
        %v6641 = vrot.slane %v6640, 4
        %v6642 = vrot.slane %v4828, 5
        %v6643 = vsel %vm2933, %v6641, %v6642
        %v6644 = vrot.slane %v6638, 4
        %v6645 = vrot.slane %v4829, 5
        %v6646 = vsel %vm2933, %v6644, %v6645
        %v6647 = vrot.slane %v6642, 4
        %v6648 = vrot.slane %v4830, 5
        %v6649 = vsel %vm2933, %v6647, %v6648
        %v6650 = vrot.slane %v6390, 5
        %v6651 = vrot.slane %v6650, 4
        %v6652 = vrot.slane %v4833, 5
        %v6653 = vsel %vm2933, %v6651, %v6652
        %v6654 = vrot.slane %v6391, 5
        %v6655 = vrot.slane %v6654, 4
        %v6656 = vrot.slane %v4834, 5
        %v6657 = vsel %vm2933, %v6655, %v6656
        %v6658 = vrot.slane %v6652, 4
        %v6659 = vrot.slane %v4835, 5
        %v6660 = vsel %vm2933, %v6658, %v6659
        %v6661 = vrot.slane %v6656, 4
        %v6662 = vrot.slane %v4836, 5
        %v6663 = vsel %vm2933, %v6661, %v6662
        %v6664 = vrot.slane %v6392, 5
        %v6665 = vrot.slane %v6664, 4
        %v6666 = vrot.slane %v4839, 5
        %v6667 = vsel %vm2933, %v6665, %v6666
        %v6668 = vrot.slane %v6393, 5
        %v6669 = vrot.slane %v6668, 4
        %v6670 = vrot.slane %v4840, 5
        %v6671 = vsel %vm2933, %v6669, %v6670
        %v6672 = vrot.slane %v6666, 4
        %v6673 = vrot.slane %v4841, 5
        %v6674 = vsel %vm2933, %v6672, %v6673
        %v6675 = vrot.slane %v6670, 4
        %v6676 = vrot.slane %v4842, 5
        %v6677 = vsel %vm2933, %v6675, %v6676
        %v6678 = vrot.slane %v6394, 5
        %v6679 = vrot.slane %v6678, 4
        %v6680 = vrot.slane %v4845, 5
        %v6681 = vsel %vm2933, %v6679, %v6680
        %v6682 = vrot.slane %v6395, 5
        %v6683 = vrot.slane %v6682, 4
        %v6684 = vrot.slane %v4846, 5
        %v6685 = vsel %vm2933, %v6683, %v6684
        %v6686 = vrot.slane %v6680, 4
        %v6687 = vrot.slane %v4847, 5
        %v6688 = vsel %vm2933, %v6686, %v6687
        %v6689 = vrot.slane %v6684, 4
        %v6690 = vrot.slane %v4848, 5
        %v6691 = vsel %vm2933, %v6689, %v6690
        %v6692 = vrot.slane %v6396, 5
        %v6693 = vrot.slane %v6692, 4
        %v6694 = vrot.slane %v4851, 5
        %v6695 = vsel %vm2933, %v6693, %v6694
        %v6696 = vrot.slane %v6397, 5
        %v6697 = vrot.slane %v6696, 4
        %v6698 = vrot.slane %v4852, 5
        %v6699 = vsel %vm2933, %v6697, %v6698
        %v6700 = vrot.slane %v6694, 4
        %v6701 = vrot.slane %v4853, 5
        %v6702 = vsel %vm2933, %v6700, %v6701
        %v6703 = vrot.slane %v6698, 4
        %v6704 = vrot.slane %v4854, 5
        %v6705 = vsel %vm2933, %v6703, %v6704
        %v6706 = vrot.slane %v6398, 5
        %v6707 = vrot.slane %v6706, 4
        %v6708 = vrot.slane %v4857, 5
        %v6709 = vsel %vm2933, %v6707, %v6708
        %v6710 = vrot.slane %v6399, 5
        %v6711 = vrot.slane %v6710, 4
        %v6712 = vrot.slane %v4858, 5
        %v6713 = vsel %vm2933, %v6711, %v6712
        %v6714 = vrot.slane %v6708, 4
        %v6715 = vrot.slane %v4859, 5
        %v6716 = vsel %vm2933, %v6714, %v6715
        %v6717 = vrot.slane %v6712, 4
        %v6718 = vrot.slane %v4860, 5
        %v6719 = vsel %vm2933, %v6717, %v6718
        %s6720 = scalar_lea.vmem %s248, 800
        %v6721 = vld [vmem:[%s6720] sm:$0xf]
        %v6722 = vld [vmem:[%s6720 + $0x4] sm:$0xf]
        %v6723 = vld [vmem:[%s6720 + $0x8] sm:$0xf]
        %v6724 = vld [vmem:[%s6720 + $0xc] sm:$0xf]
        %v6725 = vld [vmem:[%s6720 + $0x10] sm:$0xf]
        %v6726 = vld [vmem:[%s6720 + $0x14] sm:$0xf]
        %v6727 = vld [vmem:[%s6720 + $0x18] sm:$0xf]
        %v6728 = vld [vmem:[%s6720 + $0x1c] sm:$0xf]
        %v6729 = vld [vmem:[%s6720 + $0x20] sm:$0xf]
        %v6730 = vld [vmem:[%s6720 + $0x24] sm:$0xf]
        %v6731 = vld [vmem:[%s6720 + $0x28] sm:$0xf]
        %v6732 = vld [vmem:[%s6720 + $0x2c] sm:$0xf]
        %v6733 = vld [vmem:[%s6720 + $0x30] sm:$0xf]
        %v6734 = vld [vmem:[%s6720 + $0x34] sm:$0xf]
        %v6735 = vld [vmem:[%s6720 + $0x38] sm:$0xf]
        %v6736 = vld [vmem:[%s6720 + $0x3c] sm:$0xf]
        %v6737 = vld [vmem:[%s6720 + $0x40] sm:$0xf]
        %v6738 = vld [vmem:[%s6720 + $0x44] sm:$0xf]
        %v6739 = vld [vmem:[%s6720 + $0x48] sm:$0xf]
        %v6740 = vld [vmem:[%s6720 + $0x4c] sm:$0xf]
        %v6741 = vld [vmem:[%s6720 + $0x50] sm:$0xf]
        %v6742 = vld [vmem:[%s6720 + $0x54] sm:$0xf]
        %v6743 = vld [vmem:[%s6720 + $0x58] sm:$0xf]
        %v6744 = vld [vmem:[%s6720 + $0x5c] sm:$0xf]
        %v6745 = vld [vmem:[%s6720 + $0x60] sm:$0xf]
        %v6746 = vld [vmem:[%s6720 + $0x64] sm:$0xf]
        %v6747 = vld [vmem:[%s6720 + $0x68] sm:$0xf]
        %v6748 = vld [vmem:[%s6720 + $0x6c] sm:$0xf]
        %v6749 = vld [vmem:[%s6720 + $0x70] sm:$0xf]
        %v6750 = vld [vmem:[%s6720 + $0x74] sm:$0xf]
        %v6751 = vld [vmem:[%s6720 + $0x78] sm:$0xf]
        %v6752 = vld [vmem:[%s6720 + $0x7c] sm:$0xf]
        %v6753 = vld [vmem:[%s6720 + $0x80] sm:$0xf]
        %v6754 = vld [vmem:[%s6720 + $0x84] sm:$0xf]
        %v6755 = vld [vmem:[%s6720 + $0x88] sm:$0xf]
        %v6756 = vld [vmem:[%s6720 + $0x8c] sm:$0xf]
        %v6757 = vld [vmem:[%s6720 + $0x90] sm:$0xf]
        %v6758 = vld [vmem:[%s6720 + $0x94] sm:$0xf]
        %v6759 = vld [vmem:[%s6720 + $0x98] sm:$0xf]
        %v6760 = vld [vmem:[%s6720 + $0x9c] sm:$0xf]
        %v6761 = vunpack.c.l.b16 %v6499
        %v6762 = vunpack.c.h.b16 %v6499
        %v6763 = vunpack.c.l.b16 %v6503
        %v6764 = vunpack.c.l.b16 %v6506
        %v6765 = vunpack.c.h.b16 %v6506
        %v6766 = vunpack.c.l.b16 %v6509
        %v6767 = vunpack.c.l.b16 %v6513
        %v6768 = vunpack.c.h.b16 %v6513
        %v6769 = vunpack.c.l.b16 %v6517
        %v6770 = vunpack.c.l.b16 %v6520
        %v6771 = vunpack.c.h.b16 %v6520
        %v6772 = vunpack.c.l.b16 %v6523
        %v6773 = vunpack.c.l.b16 %v6527
        %v6774 = vunpack.c.h.b16 %v6527
        %v6775 = vunpack.c.l.b16 %v6531
        %v6776 = vunpack.c.l.b16 %v6534
        %v6777 = vunpack.c.h.b16 %v6534
        %v6778 = vunpack.c.l.b16 %v6537
        %v6779 = vunpack.c.l.b16 %v6541
        %v6780 = vunpack.c.h.b16 %v6541
        %v6781 = vunpack.c.l.b16 %v6545
        %v6782 = vunpack.c.l.b16 %v6548
        %v6783 = vunpack.c.h.b16 %v6548
        %v6784 = vunpack.c.l.b16 %v6551
        %v6785 = vunpack.c.l.b16 %v6555
        %v6786 = vunpack.c.h.b16 %v6555
        %v6787 = vunpack.c.l.b16 %v6559
        %v6788 = vunpack.c.l.b16 %v6562
        %v6789 = vunpack.c.h.b16 %v6562
        %v6790 = vunpack.c.l.b16 %v6565
        %v6791 = vunpack.c.l.b16 %v6569
        %v6792 = vunpack.c.h.b16 %v6569
        %v6793 = vunpack.c.l.b16 %v6573
        %v6794 = vunpack.c.l.b16 %v6576
        %v6795 = vunpack.c.h.b16 %v6576
        %v6796 = vunpack.c.l.b16 %v6579
        %v6797 = vunpack.c.l.b16 %v6583
        %v6798 = vunpack.c.h.b16 %v6583
        %v6799 = vunpack.c.l.b16 %v6587
        %v6800 = vunpack.c.l.b16 %v6590
        %v6801 = vunpack.c.h.b16 %v6590
        %v6802 = vunpack.c.l.b16 %v6593
        %v6803 = vunpack.c.l.b16 %v6597
        %v6804 = vunpack.c.h.b16 %v6597
        %v6805 = vunpack.c.l.b16 %v6601
        %v6806 = vunpack.c.l.b16 %v6604
        %v6807 = vunpack.c.h.b16 %v6604
        %v6808 = vunpack.c.l.b16 %v6607
        %v6809 = vunpack.c.l.b16 %v6611
        %v6810 = vunpack.c.h.b16 %v6611
        %v6811 = vunpack.c.l.b16 %v6615
        %v6812 = vunpack.c.l.b16 %v6618
        %v6813 = vunpack.c.h.b16 %v6618
        %v6814 = vunpack.c.l.b16 %v6621
        %v6815 = vunpack.c.l.b16 %v6625
        %v6816 = vunpack.c.h.b16 %v6625
        %v6817 = vunpack.c.l.b16 %v6629
        %v6818 = vunpack.c.l.b16 %v6632
        %v6819 = vunpack.c.h.b16 %v6632
        %v6820 = vunpack.c.l.b16 %v6635
        %v6821 = vunpack.c.l.b16 %v6639
        %v6822 = vunpack.c.h.b16 %v6639
        %v6823 = vunpack.c.l.b16 %v6643
        %v6824 = vunpack.c.l.b16 %v6646
        %v6825 = vunpack.c.h.b16 %v6646
        %v6826 = vunpack.c.l.b16 %v6649
        %v6827 = vunpack.c.l.b16 %v6653
        %v6828 = vunpack.c.h.b16 %v6653
        %v6829 = vunpack.c.l.b16 %v6657
        %v6830 = vunpack.c.l.b16 %v6660
        %v6831 = vunpack.c.h.b16 %v6660
        %v6832 = vunpack.c.l.b16 %v6663
        %v6833 = vunpack.c.l.b16 %v6667
        %v6834 = vunpack.c.h.b16 %v6667
        %v6835 = vunpack.c.l.b16 %v6671
        %v6836 = vunpack.c.l.b16 %v6674
        %v6837 = vunpack.c.h.b16 %v6674
        %v6838 = vunpack.c.l.b16 %v6677
        %v6839 = vunpack.c.l.b16 %v6681
        %v6840 = vunpack.c.h.b16 %v6681
        %v6841 = vunpack.c.l.b16 %v6685
        %v6842 = vunpack.c.l.b16 %v6688
        %v6843 = vunpack.c.h.b16 %v6688
        %v6844 = vunpack.c.l.b16 %v6691
        %v6845 = vunpack.c.l.b16 %v6695
        %v6846 = vunpack.c.h.b16 %v6695
        %v6847 = vunpack.c.l.b16 %v6699
        %v6848 = vunpack.c.l.b16 %v6702
        %v6849 = vunpack.c.h.b16 %v6702
        %v6850 = vunpack.c.l.b16 %v6705
        %v6851 = vunpack.c.l.b16 %v6709
        %v6852 = vunpack.c.h.b16 %v6709
        %v6853 = vunpack.c.l.b16 %v6713
        %v6854 = vunpack.c.l.b16 %v6716
        %v6855 = vunpack.c.h.b16 %v6716
        %v6856 = vunpack.c.l.b16 %v6719
        %v6857 = vpack.c.b16 %v6764, %v6761
        %v6858 = vpack.c.b16 %v6765, %v6762
        %v6859 = vpack.c.b16 %v6766, %v6763
        %v6860 = vpack.c.b16 %v6770, %v6767
        %v6861 = vpack.c.b16 %v6771, %v6768
        %v6862 = vpack.c.b16 %v6772, %v6769
        %v6863 = vpack.c.b16 %v6776, %v6773
        %v6864 = vpack.c.b16 %v6777, %v6774
        %v6865 = vpack.c.b16 %v6778, %v6775
        %v6866 = vpack.c.b16 %v6782, %v6779
        %v6867 = vpack.c.b16 %v6783, %v6780
        %v6868 = vpack.c.b16 %v6784, %v6781
        %v6869 = vpack.c.b16 %v6788, %v6785
        %v6870 = vpack.c.b16 %v6789, %v6786
        %v6871 = vpack.c.b16 %v6790, %v6787
        %v6872 = vpack.c.b16 %v6794, %v6791
        %v6873 = vpack.c.b16 %v6795, %v6792
        %v6874 = vpack.c.b16 %v6796, %v6793
        %v6875 = vpack.c.b16 %v6800, %v6797
        %v6876 = vpack.c.b16 %v6801, %v6798
        %v6877 = vpack.c.b16 %v6802, %v6799
        %v6878 = vpack.c.b16 %v6806, %v6803
        %v6879 = vpack.c.b16 %v6807, %v6804
        %v6880 = vpack.c.b16 %v6808, %v6805
        %v6881 = vpack.c.b16 %v6812, %v6809
        %v6882 = vpack.c.b16 %v6813, %v6810
        %v6883 = vpack.c.b16 %v6814, %v6811
        %v6884 = vpack.c.b16 %v6818, %v6815
        %v6885 = vpack.c.b16 %v6819, %v6816
        %v6886 = vpack.c.b16 %v6820, %v6817
        %v6887 = vpack.c.b16 %v6824, %v6821
        %v6888 = vpack.c.b16 %v6825, %v6822
        %v6889 = vpack.c.b16 %v6826, %v6823
        %v6890 = vpack.c.b16 %v6830, %v6827
        %v6891 = vpack.c.b16 %v6831, %v6828
        %v6892 = vpack.c.b16 %v6832, %v6829
        %v6893 = vpack.c.b16 %v6836, %v6833
        %v6894 = vpack.c.b16 %v6837, %v6834
        %v6895 = vpack.c.b16 %v6838, %v6835
        %v6896 = vpack.c.b16 %v6842, %v6839
        %v6897 = vpack.c.b16 %v6843, %v6840
        %v6898 = vpack.c.b16 %v6844, %v6841
        %v6899 = vpack.c.b16 %v6848, %v6845
        %v6900 = vpack.c.b16 %v6849, %v6846
        %v6901 = vpack.c.b16 %v6850, %v6847
        %v6902 = vpack.c.b16 %v6854, %v6851
        %v6903 = vpack.c.b16 %v6855, %v6852
        %v6904 = vpack.c.b16 %v6856, %v6853
        %v6977 = vunpack.c.l.b16 %v6721
        %v6978 = vunpack.c.l.b16 %v6722
        %v6979 = vunpack.c.l.b16 %v6723
        %v6980 = vunpack.c.l.b16 %v6724
        %v6981 = vunpack.c.l.b16 %v6725
        %v6982 = vunpack.c.l.b16 %v6726
        %v6983 = vunpack.c.l.b16 %v6727
        %v6984 = vunpack.c.l.b16 %v6728
        %v6985 = vunpack.c.l.b16 %v6729
        %v6986 = vunpack.c.l.b16 %v6730
        %v6987 = vunpack.c.l.b16 %v6731
        %v6988 = vunpack.c.l.b16 %v6732
        %v6989 = vunpack.c.l.b16 %v6733
        %v6990 = vunpack.c.l.b16 %v6734
        %v6991 = vunpack.c.l.b16 %v6735
        %v6992 = vunpack.c.l.b16 %v6736
        %v6993 = vunpack.c.l.b16 %v6737
        %v6994 = vunpack.c.l.b16 %v6738
        %v6995 = vunpack.c.l.b16 %v6739
        %v6996 = vunpack.c.l.b16 %v6740
        %v6997 = vunpack.c.l.b16 %v6741
        %v6998 = vunpack.c.l.b16 %v6742
        %v6999 = vunpack.c.l.b16 %v6743
        %v7000 = vunpack.c.l.b16 %v6744
        %v7001 = vunpack.c.l.b16 %v6745
        %v7002 = vunpack.c.l.b16 %v6746
        %v7003 = vunpack.c.l.b16 %v6747
        %v7004 = vunpack.c.l.b16 %v6748
        %v7005 = vunpack.c.l.b16 %v6749
        %v7006 = vunpack.c.l.b16 %v6750
        %v7007 = vunpack.c.l.b16 %v6751
        %v7008 = vunpack.c.l.b16 %v6752
        %v7009 = vunpack.c.l.b16 %v6753
        %v7010 = vunpack.c.l.b16 %v6754
        %v7011 = vunpack.c.l.b16 %v6755
        %v7012 = vunpack.c.l.b16 %v6756
        %v7013 = vunpack.c.l.b16 %v6757
        %v7014 = vunpack.c.l.b16 %v6758
        %v7015 = vunpack.c.l.b16 %v6759
        %v7016 = vunpack.c.l.b16 %v6760
        %v7017 = vpack.c.b16 %v6978, %v6977
        %v7018 = vpack.c.b16 %v6980, %v6979
        %v7019 = vpack.c.b16 %v6982, %v6981
        %v7020 = vpack.c.b16 %v6984, %v6983
        %v7021 = vpack.c.b16 %v6986, %v6985
        %v7022 = vpack.c.b16 %v6988, %v6987
        %v7023 = vpack.c.b16 %v6990, %v6989
        %v7024 = vpack.c.b16 %v6992, %v6991
        %v7025 = vpack.c.b16 %v6994, %v6993
        %v7026 = vpack.c.b16 %v6996, %v6995
        %v7027 = vpack.c.b16 %v6998, %v6997
        %v7028 = vpack.c.b16 %v7000, %v6999
        %v7029 = vpack.c.b16 %v7002, %v7001
        %v7030 = vpack.c.b16 %v7004, %v7003
        %v7031 = vpack.c.b16 %v7006, %v7005
        %v7032 = vpack.c.b16 %v7008, %v7007
        %v7033 = vpack.c.b16 %v7010, %v7009
        %v7034 = vpack.c.b16 %v7012, %v7011
        %v7035 = vpack.c.b16 %v7014, %v7013
        %v7036 = vpack.c.b16 %v7016, %v7015
        %v7058 = vsel %vm794, %v6859, 0
        %v7061 = vsel %vm794, %v6862, 0
        %v7064 = vsel %vm794, %v6865, 0
        %v7067 = vsel %vm794, %v6868, 0
        %v7070 = vsel %vm794, %v6871, 0
        %v7073 = vsel %vm794, %v6874, 0
        %v7076 = vsel %vm794, %v6877, 0
        %v7079 = vsel %vm794, %v6880, 0
        %v7082 = vsel %vm794, %v6883, 0
        %v7085 = vsel %vm794, %v6886, 0
        %v7088 = vsel %vm794, %v6889, 0
        %v7091 = vsel %vm794, %v6892, 0
        %v7094 = vsel %vm794, %v6895, 0
        %v7097 = vsel %vm794, %v6898, 0
        %v7100 = vsel %vm794, %v6901, 0
        %v7103 = vsel %vm794, %v6904, 0
        %7105 = vmatprep.subr.bf16.mxu0 0
        %7106 = vmatpush1.bf16.msra.mxu0 %v7017
        %7107 = vmatprep.subr.bf16.mxu0 0
        %7108 = vmatpush1.bf16.msra.mxu0 %v7018
        %7109 = vmatprep.subr.bf16.mxu0 0
        %7110 = vmatpush1.bf16.msra.mxu0 %v7019
        %7111 = vmatprep.subr.bf16.mxu0 0
        %7112 = vmatpush1.bf16.msra.mxu0 %v7020
        %7113 = vmatprep.subr.bf16.mxu0 0
        %7114 = vmatpush1.bf16.msra.mxu0 %v7021
        %7115 = vmatprep.subr.bf16.mxu0 0
        %7116 = vmatpush1.bf16.msra.mxu0 %v7022
        %7117 = vmatprep.subr.bf16.mxu0 0
        %7118 = vmatpush1.bf16.msra.mxu0 %v7023
        %7119 = vmatprep.subr.bf16.mxu0 0
        %7120 = vmatpush1.bf16.msra.mxu0 %v7024
        %7121 = vmatprep.subr.bf16.mxu0 0
        %7122 = vmatpush1.bf16.msra.mxu0 %v7025
        %7123 = vmatprep.subr.bf16.mxu0 0
        %7124 = vmatpush1.bf16.msra.mxu0 %v7026
        %7125 = vmatprep.subr.bf16.mxu0 0
        %7126 = vmatpush1.bf16.msra.mxu0 %v7027
        %7127 = vmatprep.subr.bf16.mxu0 0
        %7128 = vmatpush1.bf16.msra.mxu0 %v7028
        %7129 = vmatprep.subr.bf16.mxu0 0
        %7130 = vmatpush1.bf16.msra.mxu0 %v7029
        %7131 = vmatprep.subr.bf16.mxu0 0
        %7132 = vmatpush1.bf16.msra.mxu0 %v7030
        %7133 = vmatprep.subr.bf16.mxu0 0
        %7134 = vmatpush1.bf16.msra.mxu0 %v7031
        %7135 = vmatprep.subr.bf16.mxu0 0
        %7136 = vmatpush1.bf16.msra.mxu0 %v7032
        %7137 = vmatprep.mubr.bf16.mxu0 %v6858
        %7138 = vmatmul.mubr.bf16.gmra.mrb[0].mxu0 %v6857
        %v7139 = vpop.f32.mrb[0].mxu0
        %v7140 = vadd.f32 0.0, %v7139
        %v7141 = vpop.f32.mrb[0].mxu0
        %v7142 = vpop.f32.mrb[0].mxu0
        %v7143 = vadd.f32 0.0, %v7142
        %v7144 = vpop.f32.mrb[0].mxu0
        %7145 = vmatprep.mubr.bf16.mxu0 %v6861
        %7146 = vmatmul.mubr.bf16.gmra.mrb[0].mxu0 %v6860
        %v7147 = vpop.f32.mrb[0].mxu0
        %v7148 = vadd.f32 0.0, %v7147
        %v7149 = vpop.f32.mrb[0].mxu0
        %v7150 = vpop.f32.mrb[0].mxu0
        %v7151 = vadd.f32 0.0, %v7150
        %v7152 = vpop.f32.mrb[0].mxu0
        %7153 = vmatprep.mubr.bf16.mxu0 %v6864
        %7154 = vmatmul.mubr.bf16.gmra.mrb[0].mxu0 %v6863
        %v7155 = vpop.f32.mrb[0].mxu0
        %v7156 = vadd.f32 0.0, %v7155
        %v7157 = vpop.f32.mrb[0].mxu0
        %v7158 = vpop.f32.mrb[0].mxu0
        %v7159 = vadd.f32 0.0, %v7158
        %v7160 = vpop.f32.mrb[0].mxu0
        %7161 = vmatprep.mubr.bf16.mxu0 %v6867
        %7162 = vmatmul.mubr.bf16.gmra.mrb[0].mxu0 %v6866
        %v7163 = vpop.f32.mrb[0].mxu0
        %v7164 = vadd.f32 0.0, %v7163
        %v7165 = vpop.f32.mrb[0].mxu0
        %v7166 = vpop.f32.mrb[0].mxu0
        %v7167 = vadd.f32 0.0, %v7166
        %v7168 = vpop.f32.mrb[0].mxu0
        %7169 = vmatprep.mubr.bf16.mxu0 %v6870
        %7170 = vmatmul.mubr.bf16.gmra.mrb[0].mxu0 %v6869
        %v7171 = vpop.f32.mrb[0].mxu0
        %v7172 = vadd.f32 0.0, %v7171
        %v7173 = vpop.f32.mrb[0].mxu0
        %v7174 = vpop.f32.mrb[0].mxu0
        %v7175 = vadd.f32 0.0, %v7174
        %v7176 = vpop.f32.mrb[0].mxu0
        %7177 = vmatprep.mubr.bf16.mxu0 %v6873
        %7178 = vmatmul.mubr.bf16.gmra.mrb[0].mxu0 %v6872
        %v7179 = vpop.f32.mrb[0].mxu0
        %v7180 = vadd.f32 0.0, %v7179
        %v7181 = vpop.f32.mrb[0].mxu0
        %v7182 = vpop.f32.mrb[0].mxu0
        %v7183 = vadd.f32 0.0, %v7182
        %v7184 = vpop.f32.mrb[0].mxu0
        %7185 = vmatprep.mubr.bf16.mxu0 %v6876
        %7186 = vmatmul.mubr.bf16.gmra.mrb[0].mxu0 %v6875
        %v7187 = vpop.f32.mrb[0].mxu0
        %v7188 = vadd.f32 0.0, %v7187
        %v7189 = vpop.f32.mrb[0].mxu0
        %v7190 = vpop.f32.mrb[0].mxu0
        %v7191 = vadd.f32 0.0, %v7190
        %v7192 = vpop.f32.mrb[0].mxu0
        %7193 = vmatprep.mubr.bf16.mxu0 %v6879
        %7194 = vmatmul.mubr.bf16.gmra.mrb[0].mxu0 %v6878
        %v7195 = vpop.f32.mrb[0].mxu0
        %v7196 = vadd.f32 0.0, %v7195
        %v7197 = vpop.f32.mrb[0].mxu0
        %v7198 = vpop.f32.mrb[0].mxu0
        %v7199 = vadd.f32 0.0, %v7198
        %v7200 = vpop.f32.mrb[0].mxu0
        %7201 = vmatprep.mubr.bf16.mxu0 %v6882
        %7202 = vmatmul.mubr.bf16.gmra.mrb[0].mxu0 %v6881
        %v7203 = vpop.f32.mrb[0].mxu0
        %v7204 = vadd.f32 0.0, %v7203
        %v7205 = vpop.f32.mrb[0].mxu0
        %v7206 = vpop.f32.mrb[0].mxu0
        %v7207 = vadd.f32 0.0, %v7206
        %v7208 = vpop.f32.mrb[0].mxu0
        %7209 = vmatprep.mubr.bf16.mxu0 %v6885
        %7210 = vmatmul.mubr.bf16.gmra.mrb[0].mxu0 %v6884
        %v7211 = vpop.f32.mrb[0].mxu0
        %v7212 = vadd.f32 0.0, %v7211
        %v7213 = vpop.f32.mrb[0].mxu0
        %v7214 = vpop.f32.mrb[0].mxu0
        %v7215 = vadd.f32 0.0, %v7214
        %v7216 = vpop.f32.mrb[0].mxu0
        %7217 = vmatprep.mubr.bf16.mxu0 %v6888
        %7218 = vmatmul.mubr.bf16.gmra.mrb[0].mxu0 %v6887
        %v7219 = vpop.f32.mrb[0].mxu0
        %v7220 = vadd.f32 0.0, %v7219
        %v7221 = vpop.f32.mrb[0].mxu0
        %v7222 = vpop.f32.mrb[0].mxu0
        %v7223 = vadd.f32 0.0, %v7222
        %v7224 = vpop.f32.mrb[0].mxu0
        %7225 = vmatprep.mubr.bf16.mxu0 %v6891
        %7226 = vmatmul.mubr.bf16.gmra.mrb[0].mxu0 %v6890
        %v7227 = vpop.f32.mrb[0].mxu0
        %v7228 = vadd.f32 0.0, %v7227
        %v7229 = vpop.f32.mrb[0].mxu0
        %v7230 = vpop.f32.mrb[0].mxu0
        %v7231 = vadd.f32 0.0, %v7230
        %v7232 = vpop.f32.mrb[0].mxu0
        %7233 = vmatprep.mubr.bf16.mxu0 %v6894
        %7234 = vmatmul.mubr.bf16.gmra.mrb[0].mxu0 %v6893
        %v7235 = vpop.f32.mrb[0].mxu0
        %v7236 = vadd.f32 0.0, %v7235
        %v7237 = vpop.f32.mrb[0].mxu0
        %v7238 = vpop.f32.mrb[0].mxu0
        %v7239 = vadd.f32 0.0, %v7238
        %v7240 = vpop.f32.mrb[0].mxu0
        %7241 = vmatprep.mubr.bf16.mxu0 %v6897
        %7242 = vmatmul.mubr.bf16.gmra.mrb[0].mxu0 %v6896
        %v7243 = vpop.f32.mrb[0].mxu0
        %v7244 = vadd.f32 0.0, %v7243
        %v7245 = vpop.f32.mrb[0].mxu0
        %v7246 = vpop.f32.mrb[0].mxu0
        %v7247 = vadd.f32 0.0, %v7246
        %v7248 = vpop.f32.mrb[0].mxu0
        %7249 = vmatprep.mubr.bf16.mxu0 %v6900
        %7250 = vmatmul.mubr.bf16.gmra.mrb[0].mxu0 %v6899
        %v7251 = vpop.f32.mrb[0].mxu0
        %v7252 = vadd.f32 0.0, %v7251
        %v7253 = vpop.f32.mrb[0].mxu0
        %v7254 = vpop.f32.mrb[0].mxu0
        %v7255 = vadd.f32 0.0, %v7254
        %v7256 = vpop.f32.mrb[0].mxu0
        %7257 = vmatprep.mubr.bf16.mxu0 %v6903
        %7258 = vmatmul.mubr.bf16.gmra.mrb[0].mxu0 %v6902
        %v7259 = vpop.f32.mrb[0].mxu0
        %v7260 = vadd.f32 0.0, %v7259
        %v7261 = vpop.f32.mrb[0].mxu0
        %v7262 = vpop.f32.mrb[0].mxu0
        %v7263 = vadd.f32 0.0, %v7262
        %v7264 = vpop.f32.mrb[0].mxu0
        %7265 = vdwg.mxu0
        %7266 = vmatprep.subr.bf16.mxu0 0
        %7267 = vmatpush1.bf16.msra.mxu0 %v7033
        %7268 = vmatprep.subr.bf16.mxu0 0
        %7269 = vmatpush1.bf16.msra.mxu0 %v7034
        %7270 = vmatprep.subr.bf16.mxu0 0
        %7271 = vmatpush1.bf16.msra.mxu0 %v7035
        %7272 = vmatprep.subr.bf16.mxu0 0
        %7273 = vmatpush1.bf16.msra.mxu0 %v7036
        %7274 = vmatprep.subr.bf16.mxu0 0
        %7275 = vmatpush1.bf16.msra.mxu0 0
        %7276 = vmatprep.subr.bf16.mxu0 0
        %7277 = vmatpush1.bf16.msra.mxu0 0
        %7278 = vmatprep.subr.bf16.mxu0 0
        %7279 = vmatpush1.bf16.msra.mxu0 0
        %7280 = vmatprep.subr.bf16.mxu0 0
        %7281 = vmatpush1.bf16.msra.mxu0 0
        %7282 = vmatprep.subr.bf16.mxu0 0
        %7283 = vmatpush1.bf16.msra.mxu0 0
        %7284 = vmatprep.subr.bf16.mxu0 0
        %7285 = vmatpush1.bf16.msra.mxu0 0
        %7286 = vmatprep.subr.bf16.mxu0 0
        %7287 = vmatpush1.bf16.msra.mxu0 0
        %7288 = vmatprep.subr.bf16.mxu0 0
        %7289 = vmatpush1.bf16.msra.mxu0 0
        %7290 = vmatprep.subr.bf16.mxu0 0
        %7291 = vmatpush1.bf16.msra.mxu0 0
        %7292 = vmatprep.subr.bf16.mxu0 0
        %7293 = vmatpush1.bf16.msra.mxu0 0
        %7294 = vmatprep.subr.bf16.mxu0 0
        %7295 = vmatpush1.bf16.msra.mxu0 0
        %7296 = vmatprep.subr.bf16.mxu0 0
        %7297 = vmatpush1.bf16.msra.mxu0 0
        %7298 = vmatprep.mubr.bf16.mxu0 0
        %7299 = vmatmul.mubr.bf16.gmra.mrb[0].mxu0 %v7058
        %v7300 = vpop.f32.mrb[0].mxu0
        %v7301 = vadd.f32 %v7140, %v7300
        %v7302 = vpop.f32.mrb[0].mxu0
        %v7303 = vpop.f32.mrb[0].mxu0
        %v7304 = vadd.f32 %v7143, %v7303
        %v7305 = vpop.f32.mrb[0].mxu0
        %7306 = vmatprep.mubr.bf16.mxu0 0
        %7307 = vmatmul.mubr.bf16.gmra.mrb[0].mxu0 %v7061
        %v7308 = vpop.f32.mrb[0].mxu0
        %v7309 = vadd.f32 %v7148, %v7308
        %v7310 = vpop.f32.mrb[0].mxu0
        %v7311 = vpop.f32.mrb[0].mxu0
        %v7312 = vadd.f32 %v7151, %v7311
        %v7313 = vpop.f32.mrb[0].mxu0
        %7314 = vmatprep.mubr.bf16.mxu0 0
        %7315 = vmatmul.mubr.bf16.gmra.mrb[0].mxu0 %v7064
        %v7316 = vpop.f32.mrb[0].mxu0
        %v7317 = vadd.f32 %v7156, %v7316
        %v7318 = vpop.f32.mrb[0].mxu0
        %v7319 = vpop.f32.mrb[0].mxu0
        %v7320 = vadd.f32 %v7159, %v7319
        %v7321 = vpop.f32.mrb[0].mxu0
        %7322 = vmatprep.mubr.bf16.mxu0 0
        %7323 = vmatmul.mubr.bf16.gmra.mrb[0].mxu0 %v7067
        %v7324 = vpop.f32.mrb[0].mxu0
        %v7325 = vadd.f32 %v7164, %v7324
        %v7326 = vpop.f32.mrb[0].mxu0
        %v7327 = vpop.f32.mrb[0].mxu0
        %v7328 = vadd.f32 %v7167, %v7327
        %v7329 = vpop.f32.mrb[0].mxu0
        %7330 = vmatprep.mubr.bf16.mxu0 0
        %7331 = vmatmul.mubr.bf16.gmra.mrb[0].mxu0 %v7070
        %v7332 = vpop.f32.mrb[0].mxu0
        %v7333 = vadd.f32 %v7172, %v7332
        %v7334 = vpop.f32.mrb[0].mxu0
        %v7335 = vpop.f32.mrb[0].mxu0
        %v7336 = vadd.f32 %v7175, %v7335
        %v7337 = vpop.f32.mrb[0].mxu0
        %7338 = vmatprep.mubr.bf16.mxu0 0
        %7339 = vmatmul.mubr.bf16.gmra.mrb[0].mxu0 %v7073
        %v7340 = vpop.f32.mrb[0].mxu0
        %v7341 = vadd.f32 %v7180, %v7340
        %v7342 = vpop.f32.mrb[0].mxu0
        %v7343 = vpop.f32.mrb[0].mxu0
        %v7344 = vadd.f32 %v7183, %v7343
        %v7345 = vpop.f32.mrb[0].mxu0
        %7346 = vmatprep.mubr.bf16.mxu0 0
        %7347 = vmatmul.mubr.bf16.gmra.mrb[0].mxu0 %v7076
        %v7348 = vpop.f32.mrb[0].mxu0
        %v7349 = vadd.f32 %v7188, %v7348
        %v7350 = vpop.f32.mrb[0].mxu0
        %v7351 = vpop.f32.mrb[0].mxu0
        %v7352 = vadd.f32 %v7191, %v7351
        %v7353 = vpop.f32.mrb[0].mxu0
        %7354 = vmatprep.mubr.bf16.mxu0 0
        %7355 = vmatmul.mubr.bf16.gmra.mrb[0].mxu0 %v7079
        %v7356 = vpop.f32.mrb[0].mxu0
        %v7357 = vadd.f32 %v7196, %v7356
        %v7358 = vpop.f32.mrb[0].mxu0
        %v7359 = vpop.f32.mrb[0].mxu0
        %v7360 = vadd.f32 %v7199, %v7359
        %v7361 = vpop.f32.mrb[0].mxu0
        %7362 = vmatprep.mubr.bf16.mxu0 0
        %7363 = vmatmul.mubr.bf16.gmra.mrb[0].mxu0 %v7082
        %v7364 = vpop.f32.mrb[0].mxu0
        %v7365 = vadd.f32 %v7204, %v7364
        %v7366 = vpop.f32.mrb[0].mxu0
        %v7367 = vpop.f32.mrb[0].mxu0
        %v7368 = vadd.f32 %v7207, %v7367
        %v7369 = vpop.f32.mrb[0].mxu0
        %7370 = vmatprep.mubr.bf16.mxu0 0
        %7371 = vmatmul.mubr.bf16.gmra.mrb[0].mxu0 %v7085
        %v7372 = vpop.f32.mrb[0].mxu0
        %v7373 = vadd.f32 %v7212, %v7372
        %v7374 = vpop.f32.mrb[0].mxu0
        %v7375 = vpop.f32.mrb[0].mxu0
        %v7376 = vadd.f32 %v7215, %v7375
        %v7377 = vpop.f32.mrb[0].mxu0
        %7378 = vmatprep.mubr.bf16.mxu0 0
        %7379 = vmatmul.mubr.bf16.gmra.mrb[0].mxu0 %v7088
        %v7380 = vpop.f32.mrb[0].mxu0
        %v7381 = vadd.f32 %v7220, %v7380
        %v7382 = vpop.f32.mrb[0].mxu0
        %v7383 = vpop.f32.mrb[0].mxu0
        %v7384 = vadd.f32 %v7223, %v7383
        %v7385 = vpop.f32.mrb[0].mxu0
        %7386 = vmatprep.mubr.bf16.mxu0 0
        %7387 = vmatmul.mubr.bf16.gmra.mrb[0].mxu0 %v7091
        %v7388 = vpop.f32.mrb[0].mxu0
        %v7389 = vadd.f32 %v7228, %v7388
        %v7390 = vpop.f32.mrb[0].mxu0
        %v7391 = vpop.f32.mrb[0].mxu0
        %v7392 = vadd.f32 %v7231, %v7391
        %v7393 = vpop.f32.mrb[0].mxu0
        %7394 = vmatprep.mubr.bf16.mxu0 0
        %7395 = vmatmul.mubr.bf16.gmra.mrb[0].mxu0 %v7094
        %v7396 = vpop.f32.mrb[0].mxu0
        %v7397 = vadd.f32 %v7236, %v7396
        %v7398 = vpop.f32.mrb[0].mxu0
        %v7399 = vpop.f32.mrb[0].mxu0
        %v7400 = vadd.f32 %v7239, %v7399
        %v7401 = vpop.f32.mrb[0].mxu0
        %7402 = vmatprep.mubr.bf16.mxu0 0
        %7403 = vmatmul.mubr.bf16.gmra.mrb[0].mxu0 %v7097
        %v7404 = vpop.f32.mrb[0].mxu0
        %v7405 = vadd.f32 %v7244, %v7404
        %v7406 = vpop.f32.mrb[0].mxu0
        %v7407 = vpop.f32.mrb[0].mxu0
        %v7408 = vadd.f32 %v7247, %v7407
        %v7409 = vpop.f32.mrb[0].mxu0
        %7410 = vmatprep.mubr.bf16.mxu0 0
        %7411 = vmatmul.mubr.bf16.gmra.mrb[0].mxu0 %v7100
        %v7412 = vpop.f32.mrb[0].mxu0
        %v7413 = vadd.f32 %v7252, %v7412
        %v7414 = vpop.f32.mrb[0].mxu0
        %v7415 = vpop.f32.mrb[0].mxu0
        %v7416 = vadd.f32 %v7255, %v7415
        %v7417 = vpop.f32.mrb[0].mxu0
        %7418 = vmatprep.mubr.bf16.mxu0 0
        %7419 = vmatmul.mubr.bf16.gmra.mrb[0].mxu0 %v7103
        %v7420 = vpop.f32.mrb[0].mxu0
        %v7421 = vadd.f32 %v7260, %v7420
        %v7422 = vpop.f32.mrb[0].mxu0
        %v7423 = vpop.f32.mrb[0].mxu0
        %v7424 = vadd.f32 %v7263, %v7423
        %v7425 = vpop.f32.mrb[0].mxu0
        %7426 = vdwg.mxu0
        %v7427 = vadd.f32 %v6336, %v7301
        %v7428 = vadd.f32 %v6337, %v7304
        %v7429 = vadd.f32 %v6338, %v7309
        %v7430 = vadd.f32 %v6339, %v7312
        %v7431 = vadd.f32 %v6340, %v7317
        %v7432 = vadd.f32 %v6341, %v7320
        %v7433 = vadd.f32 %v6342, %v7325
        %v7434 = vadd.f32 %v6343, %v7328
        %v7435 = vadd.f32 %v6344, %v7333
        %v7436 = vadd.f32 %v6345, %v7336
        %v7437 = vadd.f32 %v6346, %v7341
        %v7438 = vadd.f32 %v6347, %v7344
        %v7439 = vadd.f32 %v6348, %v7349
        %v7440 = vadd.f32 %v6349, %v7352
        %v7441 = vadd.f32 %v6350, %v7357
        %v7442 = vadd.f32 %v6351, %v7360
        %v7443 = vadd.f32 %v6352, %v7365
        %v7444 = vadd.f32 %v6353, %v7368
        %v7445 = vadd.f32 %v6354, %v7373
        %v7446 = vadd.f32 %v6355, %v7376
        %v7447 = vadd.f32 %v6356, %v7381
        %v7448 = vadd.f32 %v6357, %v7384
        %v7449 = vadd.f32 %v6358, %v7389
        %v7450 = vadd.f32 %v6359, %v7392
        %v7451 = vadd.f32 %v6360, %v7397
        %v7452 = vadd.f32 %v6361, %v7400
        %v7453 = vadd.f32 %v6362, %v7405
        %v7454 = vadd.f32 %v6363, %v7408
        %v7455 = vadd.f32 %v6364, %v7413
        %v7456 = vadd.f32 %v6365, %v7416
        %v7457 = vadd.f32 %v6366, %v7421
        %v7458 = vadd.f32 %v6367, %v7424
        %s7459 = scalar_lea.vmem %s239, 72
        %v7460 = vld [vmem:[%s7459] sm:$0xff]
        %v7461 = vld [vmem:[%s7459 + $0x8] sm:$0xf]
        %v7462 = vld [vmem:[%s7459 + $0xc] sm:$0xff]
        %v7463 = vld [vmem:[%s7459 + $0x14] sm:$0xf]
        %v7464 = vld [vmem:[%s7459 + $0x24] sm:$0xff]
        %v7465 = vld [vmem:[%s7459 + $0x2c] sm:$0xf]
        %v7466 = vld [vmem:[%s7459 + $0x30] sm:$0xff]
        %v7467 = vld [vmem:[%s7459 + $0x38] sm:$0xf]
        %v7468 = vld [vmem:[%s7459 + $0x48] sm:$0xff]
        %v7469 = vld [vmem:[%s7459 + $0x50] sm:$0xf]
        %v7470 = vld [vmem:[%s7459 + $0x54] sm:$0xff]
        %v7471 = vld [vmem:[%s7459 + $0x5c] sm:$0xf]
        %v7472 = vld [vmem:[%s7459 + $0x6c] sm:$0xff]
        %v7473 = vld [vmem:[%s7459 + $0x74] sm:$0xf]
        %v7474 = vld [vmem:[%s7459 + $0x78] sm:$0xff]
        %v7475 = vld [vmem:[%s7459 + $0x80] sm:$0xf]
        %v7476 = vld [vmem:[%s7459 + $0x90] sm:$0xff]
        %v7477 = vld [vmem:[%s7459 + $0x98] sm:$0xf]
        %v7478 = vld [vmem:[%s7459 + $0x9c] sm:$0xff]
        %v7479 = vld [vmem:[%s7459 + $0xa4] sm:$0xf]
        %v7480 = vld [vmem:[%s7459 + $0xb4] sm:$0xff]
        %v7481 = vld [vmem:[%s7459 + $0xbc] sm:$0xf]
        %v7482 = vld [vmem:[%s7459 + $0xc0] sm:$0xff]
        %v7483 = vld [vmem:[%s7459 + $0xc8] sm:$0xf]
        %v7484 = vld [vmem:[%s7459 + $0xd8] sm:$0xff]
        %v7485 = vld [vmem:[%s7459 + $0xe0] sm:$0xf]
        %v7486 = vld [vmem:[%s7459 + $0xe4] sm:$0xff]
        %v7487 = vld [vmem:[%s7459 + $0xec] sm:$0xf]
        %v7488 = vld [vmem:[%s7459 + $0xfc] sm:$0xff]
        %v7489 = vld [vmem:[%s7459 + $0x104] sm:$0xf]
        %v7490 = vld [vmem:[%s7459 + $0x108] sm:$0xff]
        %v7491 = vld [vmem:[%s7459 + $0x110] sm:$0xf]
        %v7492 = vld [vmem:[%s7459 + $0x120] sm:$0xff]
        %v7493 = vld [vmem:[%s7459 + $0x128] sm:$0xf]
        %v7494 = vld [vmem:[%s7459 + $0x12c] sm:$0xff]
        %v7495 = vld [vmem:[%s7459 + $0x134] sm:$0xf]
        %v7496 = vld [vmem:[%s7459 + $0x144] sm:$0xff]
        %v7497 = vld [vmem:[%s7459 + $0x14c] sm:$0xf]
        %v7498 = vld [vmem:[%s7459 + $0x150] sm:$0xff]
        %v7499 = vld [vmem:[%s7459 + $0x158] sm:$0xf]
        %v7500 = vld [vmem:[%s7459 + $0x168] sm:$0xff]
        %v7501 = vld [vmem:[%s7459 + $0x170] sm:$0xf]
        %v7502 = vld [vmem:[%s7459 + $0x174] sm:$0xff]
        %v7503 = vld [vmem:[%s7459 + $0x17c] sm:$0xf]
        %v7504 = vld [vmem:[%s7459 + $0x18c] sm:$0xff]
        %v7505 = vld [vmem:[%s7459 + $0x194] sm:$0xf]
        %v7506 = vld [vmem:[%s7459 + $0x198] sm:$0xff]
        %v7507 = vld [vmem:[%s7459 + $0x1a0] sm:$0xf]
        %v7508 = vld [vmem:[%s7459 + $0x1b0] sm:$0xff]
        %v7509 = vld [vmem:[%s7459 + $0x1b8] sm:$0xf]
        %v7510 = vld [vmem:[%s7459 + $0x1bc] sm:$0xff]
        %v7511 = vld [vmem:[%s7459 + $0x1c4] sm:$0xf]
        %v7512 = vld [vmem:[%s7459 + $0x1d4] sm:$0xff]
        %v7513 = vld [vmem:[%s7459 + $0x1dc] sm:$0xf]
        %v7514 = vld [vmem:[%s7459 + $0x1e0] sm:$0xff]
        %v7515 = vld [vmem:[%s7459 + $0x1e8] sm:$0xf]
        %v7516 = vld [vmem:[%s7459 + $0x1f8] sm:$0xff]
        %v7517 = vld [vmem:[%s7459 + $0x200] sm:$0xf]
        %v7518 = vld [vmem:[%s7459 + $0x204] sm:$0xff]
        %v7519 = vld [vmem:[%s7459 + $0x20c] sm:$0xf]
        %v7520 = vld [vmem:[%s7459 + $0x21c] sm:$0xff]
        %v7521 = vld [vmem:[%s7459 + $0x224] sm:$0xf]
        %v7522 = vld [vmem:[%s7459 + $0x228] sm:$0xff]
        %v7523 = vld [vmem:[%s7459 + $0x230] sm:$0xf]
        %s7524 = scalar_lea.vmem %s248, 960
        %v7525 = vld [vmem:[%s7524] sm:$0xf]
        %v7526 = vld [vmem:[%s7524 + $0x4] sm:$0xf]
        %v7527 = vld [vmem:[%s7524 + $0x8] sm:$0xf]
        %v7528 = vld [vmem:[%s7524 + $0xc] sm:$0xf]
        %v7529 = vld [vmem:[%s7524 + $0x10] sm:$0xf]
        %v7530 = vld [vmem:[%s7524 + $0x14] sm:$0xf]
        %v7531 = vld [vmem:[%s7524 + $0x18] sm:$0xf]
        %v7532 = vld [vmem:[%s7524 + $0x1c] sm:$0xf]
        %v7533 = vld [vmem:[%s7524 + $0x20] sm:$0xf]
        %v7534 = vld [vmem:[%s7524 + $0x24] sm:$0xf]
        %v7535 = vld [vmem:[%s7524 + $0x28] sm:$0xf]
        %v7536 = vld [vmem:[%s7524 + $0x2c] sm:$0xf]
        %v7537 = vld [vmem:[%s7524 + $0x30] sm:$0xf]
        %v7538 = vld [vmem:[%s7524 + $0x34] sm:$0xf]
        %v7539 = vld [vmem:[%s7524 + $0x38] sm:$0xf]
        %v7540 = vld [vmem:[%s7524 + $0x3c] sm:$0xf]
        %v7541 = vld [vmem:[%s7524 + $0x40] sm:$0xf]
        %v7542 = vld [vmem:[%s7524 + $0x44] sm:$0xf]
        %v7543 = vld [vmem:[%s7524 + $0x48] sm:$0xf]
        %v7544 = vld [vmem:[%s7524 + $0x4c] sm:$0xf]
        %v7545 = vld [vmem:[%s7524 + $0x50] sm:$0xf]
        %v7546 = vld [vmem:[%s7524 + $0x54] sm:$0xf]
        %v7547 = vld [vmem:[%s7524 + $0x58] sm:$0xf]
        %v7548 = vld [vmem:[%s7524 + $0x5c] sm:$0xf]
        %v7549 = vld [vmem:[%s7524 + $0x60] sm:$0xf]
        %v7550 = vld [vmem:[%s7524 + $0x64] sm:$0xf]
        %v7551 = vld [vmem:[%s7524 + $0x68] sm:$0xf]
        %v7552 = vld [vmem:[%s7524 + $0x6c] sm:$0xf]
        %v7553 = vld [vmem:[%s7524 + $0x70] sm:$0xf]
        %v7554 = vld [vmem:[%s7524 + $0x74] sm:$0xf]
        %v7555 = vld [vmem:[%s7524 + $0x78] sm:$0xf]
        %v7556 = vld [vmem:[%s7524 + $0x7c] sm:$0xf]
        %v7557 = vld [vmem:[%s7524 + $0x80] sm:$0xf]
        %v7558 = vld [vmem:[%s7524 + $0x84] sm:$0xf]
        %v7559 = vld [vmem:[%s7524 + $0x88] sm:$0xf]
        %v7560 = vld [vmem:[%s7524 + $0x8c] sm:$0xf]
        %v7561 = vld [vmem:[%s7524 + $0x90] sm:$0xf]
        %v7562 = vld [vmem:[%s7524 + $0x94] sm:$0xf]
        %v7563 = vld [vmem:[%s7524 + $0x98] sm:$0xf]
        %v7564 = vld [vmem:[%s7524 + $0x9c] sm:$0xf]
        %v7629 = vunpack.c.l.b16 %v7460
        %v7630 = vunpack.c.h.b16 %v7460
        %v7631 = vunpack.c.l.b16 %v7461
        %v7632 = vunpack.c.l.b16 %v7462
        %v7633 = vunpack.c.h.b16 %v7462
        %v7634 = vunpack.c.l.b16 %v7463
        %v7635 = vunpack.c.l.b16 %v7464
        %v7636 = vunpack.c.h.b16 %v7464
        %v7637 = vunpack.c.l.b16 %v7465
        %v7638 = vunpack.c.l.b16 %v7466
        %v7639 = vunpack.c.h.b16 %v7466
        %v7640 = vunpack.c.l.b16 %v7467
        %v7641 = vunpack.c.l.b16 %v7468
        %v7642 = vunpack.c.h.b16 %v7468
        %v7643 = vunpack.c.l.b16 %v7469
        %v7644 = vunpack.c.l.b16 %v7470
        %v7645 = vunpack.c.h.b16 %v7470
        %v7646 = vunpack.c.l.b16 %v7471
        %v7647 = vunpack.c.l.b16 %v7472
        %v7648 = vunpack.c.h.b16 %v7472
        %v7649 = vunpack.c.l.b16 %v7473
        %v7650 = vunpack.c.l.b16 %v7474
        %v7651 = vunpack.c.h.b16 %v7474
        %v7652 = vunpack.c.l.b16 %v7475
        %v7653 = vunpack.c.l.b16 %v7476
        %v7654 = vunpack.c.h.b16 %v7476
        %v7655 = vunpack.c.l.b16 %v7477
        %v7656 = vunpack.c.l.b16 %v7478
        %v7657 = vunpack.c.h.b16 %v7478
        %v7658 = vunpack.c.l.b16 %v7479
        %v7659 = vunpack.c.l.b16 %v7480
        %v7660 = vunpack.c.h.b16 %v7480
        %v7661 = vunpack.c.l.b16 %v7481
        %v7662 = vunpack.c.l.b16 %v7482
        %v7663 = vunpack.c.h.b16 %v7482
        %v7664 = vunpack.c.l.b16 %v7483
        %v7665 = vunpack.c.l.b16 %v7484
        %v7666 = vunpack.c.h.b16 %v7484
        %v7667 = vunpack.c.l.b16 %v7485
        %v7668 = vunpack.c.l.b16 %v7486
        %v7669 = vunpack.c.h.b16 %v7486
        %v7670 = vunpack.c.l.b16 %v7487
        %v7671 = vunpack.c.l.b16 %v7488
        %v7672 = vunpack.c.h.b16 %v7488
        %v7673 = vunpack.c.l.b16 %v7489
        %v7674 = vunpack.c.l.b16 %v7490
        %v7675 = vunpack.c.h.b16 %v7490
        %v7676 = vunpack.c.l.b16 %v7491
        %v7677 = vunpack.c.l.b16 %v7492
        %v7678 = vunpack.c.h.b16 %v7492
        %v7679 = vunpack.c.l.b16 %v7493
        %v7680 = vunpack.c.l.b16 %v7494
        %v7681 = vunpack.c.h.b16 %v7494
        %v7682 = vunpack.c.l.b16 %v7495
        %v7683 = vunpack.c.l.b16 %v7496
        %v7684 = vunpack.c.h.b16 %v7496
        %v7685 = vunpack.c.l.b16 %v7497
        %v7686 = vunpack.c.l.b16 %v7498
        %v7687 = vunpack.c.h.b16 %v7498
        %v7688 = vunpack.c.l.b16 %v7499
        %v7689 = vunpack.c.l.b16 %v7500
        %v7690 = vunpack.c.h.b16 %v7500
        %v7691 = vunpack.c.l.b16 %v7501
        %v7692 = vunpack.c.l.b16 %v7502
        %v7693 = vunpack.c.h.b16 %v7502
        %v7694 = vunpack.c.l.b16 %v7503
        %v7695 = vunpack.c.l.b16 %v7504
        %v7696 = vunpack.c.h.b16 %v7504
        %v7697 = vunpack.c.l.b16 %v7505
        %v7698 = vunpack.c.l.b16 %v7506
        %v7699 = vunpack.c.h.b16 %v7506
        %v7700 = vunpack.c.l.b16 %v7507
        %v7701 = vunpack.c.l.b16 %v7508
        %v7702 = vunpack.c.h.b16 %v7508
        %v7703 = vunpack.c.l.b16 %v7509
        %v7704 = vunpack.c.l.b16 %v7510
        %v7705 = vunpack.c.h.b16 %v7510
        %v7706 = vunpack.c.l.b16 %v7511
        %v7707 = vunpack.c.l.b16 %v7512
        %v7708 = vunpack.c.h.b16 %v7512
        %v7709 = vunpack.c.l.b16 %v7513
        %v7710 = vunpack.c.l.b16 %v7514
        %v7711 = vunpack.c.h.b16 %v7514
        %v7712 = vunpack.c.l.b16 %v7515
        %v7713 = vunpack.c.l.b16 %v7516
        %v7714 = vunpack.c.h.b16 %v7516
        %v7715 = vunpack.c.l.b16 %v7517
        %v7716 = vunpack.c.l.b16 %v7518
        %v7717 = vunpack.c.h.b16 %v7518
        %v7718 = vunpack.c.l.b16 %v7519
        %v7719 = vunpack.c.l.b16 %v7520
        %v7720 = vunpack.c.h.b16 %v7520
        %v7721 = vunpack.c.l.b16 %v7521
        %v7722 = vunpack.c.l.b16 %v7522
        %v7723 = vunpack.c.h.b16 %v7522
        %v7724 = vunpack.c.l.b16 %v7523
        %v7725 = vpack.c.b16 %v7632, %v7629
        %v7726 = vpack.c.b16 %v7633, %v7630
        %v7727 = vpack.c.b16 %v7634, %v7631
        %v7728 = vpack.c.b16 %v7638, %v7635
        %v7729 = vpack.c.b16 %v7639, %v7636
        %v7730 = vpack.c.b16 %v7640, %v7637
        %v7731 = vpack.c.b16 %v7644, %v7641
        %v7732 = vpack.c.b16 %v7645, %v7642
        %v7733 = vpack.c.b16 %v7646, %v7643
        %v7734 = vpack.c.b16 %v7650, %v7647
        %v7735 = vpack.c.b16 %v7651, %v7648
        %v7736 = vpack.c.b16 %v7652, %v7649
        %v7737 = vpack.c.b16 %v7656, %v7653
        %v7738 = vpack.c.b16 %v7657, %v7654
        %v7739 = vpack.c.b16 %v7658, %v7655
        %v7740 = vpack.c.b16 %v7662, %v7659
        %v7741 = vpack.c.b16 %v7663, %v7660
        %v7742 = vpack.c.b16 %v7664, %v7661
        %v7743 = vpack.c.b16 %v7668, %v7665
        %v7744 = vpack.c.b16 %v7669, %v7666
        %v7745 = vpack.c.b16 %v7670, %v7667
        %v7746 = vpack.c.b16 %v7674, %v7671
        %v7747 = vpack.c.b16 %v7675, %v7672
        %v7748 = vpack.c.b16 %v7676, %v7673
        %v7749 = vpack.c.b16 %v7680, %v7677
        %v7750 = vpack.c.b16 %v7681, %v7678
        %v7751 = vpack.c.b16 %v7682, %v7679
        %v7752 = vpack.c.b16 %v7686, %v7683
        %v7753 = vpack.c.b16 %v7687, %v7684
        %v7754 = vpack.c.b16 %v7688, %v7685
        %v7755 = vpack.c.b16 %v7692, %v7689
        %v7756 = vpack.c.b16 %v7693, %v7690
        %v7757 = vpack.c.b16 %v7694, %v7691
        %v7758 = vpack.c.b16 %v7698, %v7695
        %v7759 = vpack.c.b16 %v7699, %v7696
        %v7760 = vpack.c.b16 %v7700, %v7697
        %v7761 = vpack.c.b16 %v7704, %v7701
        %v7762 = vpack.c.b16 %v7705, %v7702
        %v7763 = vpack.c.b16 %v7706, %v7703
        %v7764 = vpack.c.b16 %v7710, %v7707
        %v7765 = vpack.c.b16 %v7711, %v7708
        %v7766 = vpack.c.b16 %v7712, %v7709
        %v7767 = vpack.c.b16 %v7716, %v7713
        %v7768 = vpack.c.b16 %v7717, %v7714
        %v7769 = vpack.c.b16 %v7718, %v7715
        %v7770 = vpack.c.b16 %v7722, %v7719
        %v7771 = vpack.c.b16 %v7723, %v7720
        %v7772 = vpack.c.b16 %v7724, %v7721
        %v7845 = vunpack.c.l.b16 %v7525
        %v7846 = vunpack.c.l.b16 %v7526
        %v7847 = vunpack.c.l.b16 %v7527
        %v7848 = vunpack.c.l.b16 %v7528
        %v7849 = vunpack.c.l.b16 %v7529
        %v7850 = vunpack.c.l.b16 %v7530
        %v7851 = vunpack.c.l.b16 %v7531
        %v7852 = vunpack.c.l.b16 %v7532
        %v7853 = vunpack.c.l.b16 %v7533
        %v7854 = vunpack.c.l.b16 %v7534
        %v7855 = vunpack.c.l.b16 %v7535
        %v7856 = vunpack.c.l.b16 %v7536
        %v7857 = vunpack.c.l.b16 %v7537
        %v7858 = vunpack.c.l.b16 %v7538
        %v7859 = vunpack.c.l.b16 %v7539
        %v7860 = vunpack.c.l.b16 %v7540
        %v7861 = vunpack.c.l.b16 %v7541
        %v7862 = vunpack.c.l.b16 %v7542
        %v7863 = vunpack.c.l.b16 %v7543
        %v7864 = vunpack.c.l.b16 %v7544
        %v7865 = vunpack.c.l.b16 %v7545
        %v7866 = vunpack.c.l.b16 %v7546
        %v7867 = vunpack.c.l.b16 %v7547
        %v7868 = vunpack.c.l.b16 %v7548
        %v7869 = vunpack.c.l.b16 %v7549
        %v7870 = vunpack.c.l.b16 %v7550
        %v7871 = vunpack.c.l.b16 %v7551
        %v7872 = vunpack.c.l.b16 %v7552
        %v7873 = vunpack.c.l.b16 %v7553
        %v7874 = vunpack.c.l.b16 %v7554
        %v7875 = vunpack.c.l.b16 %v7555
        %v7876 = vunpack.c.l.b16 %v7556
        %v7877 = vunpack.c.l.b16 %v7557
        %v7878 = vunpack.c.l.b16 %v7558
        %v7879 = vunpack.c.l.b16 %v7559
        %v7880 = vunpack.c.l.b16 %v7560
        %v7881 = vunpack.c.l.b16 %v7561
        %v7882 = vunpack.c.l.b16 %v7562
        %v7883 = vunpack.c.l.b16 %v7563
        %v7884 = vunpack.c.l.b16 %v7564
        %v7885 = vpack.c.b16 %v7846, %v7845
        %v7886 = vpack.c.b16 %v7848, %v7847
        %v7887 = vpack.c.b16 %v7850, %v7849
        %v7888 = vpack.c.b16 %v7852, %v7851
        %v7889 = vpack.c.b16 %v7854, %v7853
        %v7890 = vpack.c.b16 %v7856, %v7855
        %v7891 = vpack.c.b16 %v7858, %v7857
        %v7892 = vpack.c.b16 %v7860, %v7859
        %v7893 = vpack.c.b16 %v7862, %v7861
        %v7894 = vpack.c.b16 %v7864, %v7863
        %v7895 = vpack.c.b16 %v7866, %v7865
        %v7896 = vpack.c.b16 %v7868, %v7867
        %v7897 = vpack.c.b16 %v7870, %v7869
        %v7898 = vpack.c.b16 %v7872, %v7871
        %v7899 = vpack.c.b16 %v7874, %v7873
        %v7900 = vpack.c.b16 %v7876, %v7875
        %v7901 = vpack.c.b16 %v7878, %v7877
        %v7902 = vpack.c.b16 %v7880, %v7879
        %v7903 = vpack.c.b16 %v7882, %v7881
        %v7904 = vpack.c.b16 %v7884, %v7883
        %v7926 = vsel %vm794, %v7727, 0
        %v7929 = vsel %vm794, %v7730, 0
        %v7932 = vsel %vm794, %v7733, 0
        %v7935 = vsel %vm794, %v7736, 0
        %v7938 = vsel %vm794, %v7739, 0
        %v7941 = vsel %vm794, %v7742, 0
        %v7944 = vsel %vm794, %v7745, 0
        %v7947 = vsel %vm794, %v7748, 0
        %v7950 = vsel %vm794, %v7751, 0
        %v7953 = vsel %vm794, %v7754, 0
        %v7956 = vsel %vm794, %v7757, 0
        %v7959 = vsel %vm794, %v7760, 0
        %v7962 = vsel %vm794, %v7763, 0
        %v7965 = vsel %vm794, %v7766, 0
        %v7968 = vsel %vm794, %v7769, 0
        %v7971 = vsel %vm794, %v7772, 0
        %7973 = vmatprep.subr.bf16.mxu0 0
        %7974 = vmatpush1.bf16.msra.mxu0 %v7885
        %7975 = vmatprep.subr.bf16.mxu0 0
        %7976 = vmatpush1.bf16.msra.mxu0 %v7886
        %7977 = vmatprep.subr.bf16.mxu0 0
        %7978 = vmatpush1.bf16.msra.mxu0 %v7887
        %7979 = vmatprep.subr.bf16.mxu0 0
        %7980 = vmatpush1.bf16.msra.mxu0 %v7888
        %7981 = vmatprep.subr.bf16.mxu0 0
        %7982 = vmatpush1.bf16.msra.mxu0 %v7889
        %7983 = vmatprep.subr.bf16.mxu0 0
        %7984 = vmatpush1.bf16.msra.mxu0 %v7890
        %7985 = vmatprep.subr.bf16.mxu0 0
        %7986 = vmatpush1.bf16.msra.mxu0 %v7891
        %7987 = vmatprep.subr.bf16.mxu0 0
        %7988 = vmatpush1.bf16.msra.mxu0 %v7892
        %7989 = vmatprep.subr.bf16.mxu0 0
        %7990 = vmatpush1.bf16.msra.mxu0 %v7893
        %7991 = vmatprep.subr.bf16.mxu0 0
        %7992 = vmatpush1.bf16.msra.mxu0 %v7894
        %7993 = vmatprep.subr.bf16.mxu0 0
        %7994 = vmatpush1.bf16.msra.mxu0 %v7895
        %7995 = vmatprep.subr.bf16.mxu0 0
        %7996 = vmatpush1.bf16.msra.mxu0 %v7896
        %7997 = vmatprep.subr.bf16.mxu0 0
        %7998 = vmatpush1.bf16.msra.mxu0 %v7897
        %7999 = vmatprep.subr.bf16.mxu0 0
        %8000 = vmatpush1.bf16.msra.mxu0 %v7898
        %8001 = vmatprep.subr.bf16.mxu0 0
        %8002 = vmatpush1.bf16.msra.mxu0 %v7899
        %8003 = vmatprep.subr.bf16.mxu0 0
        %8004 = vmatpush1.bf16.msra.mxu0 %v7900
        %8005 = vmatprep.mubr.bf16.mxu0 %v7726
        %8006 = vmatmul.mubr.bf16.gmra.mrb[0].mxu0 %v7725
        %v8007 = vpop.f32.mrb[0].mxu0
        %v8008 = vadd.f32 0.0, %v8007
        %v8009 = vpop.f32.mrb[0].mxu0
        %v8010 = vpop.f32.mrb[0].mxu0
        %v8011 = vadd.f32 0.0, %v8010
        %v8012 = vpop.f32.mrb[0].mxu0
        %8013 = vmatprep.mubr.bf16.mxu0 %v7729
        %8014 = vmatmul.mubr.bf16.gmra.mrb[0].mxu0 %v7728
        %v8015 = vpop.f32.mrb[0].mxu0
        %v8016 = vadd.f32 0.0, %v8015
        %v8017 = vpop.f32.mrb[0].mxu0
        %v8018 = vpop.f32.mrb[0].mxu0
        %v8019 = vadd.f32 0.0, %v8018
        %v8020 = vpop.f32.mrb[0].mxu0
        %8021 = vmatprep.mubr.bf16.mxu0 %v7732
        %8022 = vmatmul.mubr.bf16.gmra.mrb[0].mxu0 %v7731
        %v8023 = vpop.f32.mrb[0].mxu0
        %v8024 = vadd.f32 0.0, %v8023
        %v8025 = vpop.f32.mrb[0].mxu0
        %v8026 = vpop.f32.mrb[0].mxu0
        %v8027 = vadd.f32 0.0, %v8026
        %v8028 = vpop.f32.mrb[0].mxu0
        %8029 = vmatprep.mubr.bf16.mxu0 %v7735
        %8030 = vmatmul.mubr.bf16.gmra.mrb[0].mxu0 %v7734
        %v8031 = vpop.f32.mrb[0].mxu0
        %v8032 = vadd.f32 0.0, %v8031
        %v8033 = vpop.f32.mrb[0].mxu0
        %v8034 = vpop.f32.mrb[0].mxu0
        %v8035 = vadd.f32 0.0, %v8034
        %v8036 = vpop.f32.mrb[0].mxu0
        %8037 = vmatprep.mubr.bf16.mxu0 %v7738
        %8038 = vmatmul.mubr.bf16.gmra.mrb[0].mxu0 %v7737
        %v8039 = vpop.f32.mrb[0].mxu0
        %v8040 = vadd.f32 0.0, %v8039
        %v8041 = vpop.f32.mrb[0].mxu0
        %v8042 = vpop.f32.mrb[0].mxu0
        %v8043 = vadd.f32 0.0, %v8042
        %v8044 = vpop.f32.mrb[0].mxu0
        %8045 = vmatprep.mubr.bf16.mxu0 %v7741
        %8046 = vmatmul.mubr.bf16.gmra.mrb[0].mxu0 %v7740
        %v8047 = vpop.f32.mrb[0].mxu0
        %v8048 = vadd.f32 0.0, %v8047
        %v8049 = vpop.f32.mrb[0].mxu0
        %v8050 = vpop.f32.mrb[0].mxu0
        %v8051 = vadd.f32 0.0, %v8050
        %v8052 = vpop.f32.mrb[0].mxu0
        %8053 = vmatprep.mubr.bf16.mxu0 %v7744
        %8054 = vmatmul.mubr.bf16.gmra.mrb[0].mxu0 %v7743
        %v8055 = vpop.f32.mrb[0].mxu0
        %v8056 = vadd.f32 0.0, %v8055
        %v8057 = vpop.f32.mrb[0].mxu0
        %v8058 = vpop.f32.mrb[0].mxu0
        %v8059 = vadd.f32 0.0, %v8058
        %v8060 = vpop.f32.mrb[0].mxu0
        %8061 = vmatprep.mubr.bf16.mxu0 %v7747
        %8062 = vmatmul.mubr.bf16.gmra.mrb[0].mxu0 %v7746
        %v8063 = vpop.f32.mrb[0].mxu0
        %v8064 = vadd.f32 0.0, %v8063
        %v8065 = vpop.f32.mrb[0].mxu0
        %v8066 = vpop.f32.mrb[0].mxu0
        %v8067 = vadd.f32 0.0, %v8066
        %v8068 = vpop.f32.mrb[0].mxu0
        %8069 = vmatprep.mubr.bf16.mxu0 %v7750
        %8070 = vmatmul.mubr.bf16.gmra.mrb[0].mxu0 %v7749
        %v8071 = vpop.f32.mrb[0].mxu0
        %v8072 = vadd.f32 0.0, %v8071
        %v8073 = vpop.f32.mrb[0].mxu0
        %v8074 = vpop.f32.mrb[0].mxu0
        %v8075 = vadd.f32 0.0, %v8074
        %v8076 = vpop.f32.mrb[0].mxu0
        %8077 = vmatprep.mubr.bf16.mxu0 %v7753
        %8078 = vmatmul.mubr.bf16.gmra.mrb[0].mxu0 %v7752
        %v8079 = vpop.f32.mrb[0].mxu0
        %v8080 = vadd.f32 0.0, %v8079
        %v8081 = vpop.f32.mrb[0].mxu0
        %v8082 = vpop.f32.mrb[0].mxu0
        %v8083 = vadd.f32 0.0, %v8082
        %v8084 = vpop.f32.mrb[0].mxu0
        %8085 = vmatprep.mubr.bf16.mxu0 %v7756
        %8086 = vmatmul.mubr.bf16.gmra.mrb[0].mxu0 %v7755
        %v8087 = vpop.f32.mrb[0].mxu0
        %v8088 = vadd.f32 0.0, %v8087
        %v8089 = vpop.f32.mrb[0].mxu0
        %v8090 = vpop.f32.mrb[0].mxu0
        %v8091 = vadd.f32 0.0, %v8090
        %v8092 = vpop.f32.mrb[0].mxu0
        %8093 = vmatprep.mubr.bf16.mxu0 %v7759
        %8094 = vmatmul.mubr.bf16.gmra.mrb[0].mxu0 %v7758
        %v8095 = vpop.f32.mrb[0].mxu0
        %v8096 = vadd.f32 0.0, %v8095
        %v8097 = vpop.f32.mrb[0].mxu0
        %v8098 = vpop.f32.mrb[0].mxu0
        %v8099 = vadd.f32 0.0, %v8098
        %v8100 = vpop.f32.mrb[0].mxu0
        %8101 = vmatprep.mubr.bf16.mxu0 %v7762
        %8102 = vmatmul.mubr.bf16.gmra.mrb[0].mxu0 %v7761
        %v8103 = vpop.f32.mrb[0].mxu0
        %v8104 = vadd.f32 0.0, %v8103
        %v8105 = vpop.f32.mrb[0].mxu0
        %v8106 = vpop.f32.mrb[0].mxu0
        %v8107 = vadd.f32 0.0, %v8106
        %v8108 = vpop.f32.mrb[0].mxu0
        %8109 = vmatprep.mubr.bf16.mxu0 %v7765
        %8110 = vmatmul.mubr.bf16.gmra.mrb[0].mxu0 %v7764
        %v8111 = vpop.f32.mrb[0].mxu0
        %v8112 = vadd.f32 0.0, %v8111
        %v8113 = vpop.f32.mrb[0].mxu0
        %v8114 = vpop.f32.mrb[0].mxu0
        %v8115 = vadd.f32 0.0, %v8114
        %v8116 = vpop.f32.mrb[0].mxu0
        %8117 = vmatprep.mubr.bf16.mxu0 %v7768
        %8118 = vmatmul.mubr.bf16.gmra.mrb[0].mxu0 %v7767
        %v8119 = vpop.f32.mrb[0].mxu0
        %v8120 = vadd.f32 0.0, %v8119
        %v8121 = vpop.f32.mrb[0].mxu0
        %v8122 = vpop.f32.mrb[0].mxu0
        %v8123 = vadd.f32 0.0, %v8122
        %v8124 = vpop.f32.mrb[0].mxu0
        %8125 = vmatprep.mubr.bf16.mxu0 %v7771
        %8126 = vmatmul.mubr.bf16.gmra.mrb[0].mxu0 %v7770
        %v8127 = vpop.f32.mrb[0].mxu0
        %v8128 = vadd.f32 0.0, %v8127
        %v8129 = vpop.f32.mrb[0].mxu0
        %v8130 = vpop.f32.mrb[0].mxu0
        %v8131 = vadd.f32 0.0, %v8130
        %v8132 = vpop.f32.mrb[0].mxu0
        %8133 = vdwg.mxu0
        %8134 = vmatprep.subr.bf16.mxu0 0
        %8135 = vmatpush1.bf16.msra.mxu0 %v7901
        %8136 = vmatprep.subr.bf16.mxu0 0
        %8137 = vmatpush1.bf16.msra.mxu0 %v7902
        %8138 = vmatprep.subr.bf16.mxu0 0
        %8139 = vmatpush1.bf16.msra.mxu0 %v7903
        %8140 = vmatprep.subr.bf16.mxu0 0
        %8141 = vmatpush1.bf16.msra.mxu0 %v7904
        %8142 = vmatprep.subr.bf16.mxu0 0
        %8143 = vmatpush1.bf16.msra.mxu0 0
        %8144 = vmatprep.subr.bf16.mxu0 0
        %8145 = vmatpush1.bf16.msra.mxu0 0
        %8146 = vmatprep.subr.bf16.mxu0 0
        %8147 = vmatpush1.bf16.msra.mxu0 0
        %8148 = vmatprep.subr.bf16.mxu0 0
        %8149 = vmatpush1.bf16.msra.mxu0 0
        %8150 = vmatprep.subr.bf16.mxu0 0
        %8151 = vmatpush1.bf16.msra.mxu0 0
        %8152 = vmatprep.subr.bf16.mxu0 0
        %8153 = vmatpush1.bf16.msra.mxu0 0
        %8154 = vmatprep.subr.bf16.mxu0 0
        %8155 = vmatpush1.bf16.msra.mxu0 0
        %8156 = vmatprep.subr.bf16.mxu0 0
        %8157 = vmatpush1.bf16.msra.mxu0 0
        %8158 = vmatprep.subr.bf16.mxu0 0
        %8159 = vmatpush1.bf16.msra.mxu0 0
        %8160 = vmatprep.subr.bf16.mxu0 0
        %8161 = vmatpush1.bf16.msra.mxu0 0
        %8162 = vmatprep.subr.bf16.mxu0 0
        %8163 = vmatpush1.bf16.msra.mxu0 0
        %8164 = vmatprep.subr.bf16.mxu0 0
        %8165 = vmatpush1.bf16.msra.mxu0 0
        %8166 = vmatprep.mubr.bf16.mxu0 0
        %8167 = vmatmul.mubr.bf16.gmra.mrb[0].mxu0 %v7926
        %v8168 = vpop.f32.mrb[0].mxu0
        %v8169 = vadd.f32 %v8008, %v8168
        %v8170 = vpop.f32.mrb[0].mxu0
        %v8171 = vpop.f32.mrb[0].mxu0
        %v8172 = vadd.f32 %v8011, %v8171
        %v8173 = vpop.f32.mrb[0].mxu0
        %8174 = vmatprep.mubr.bf16.mxu0 0
        %8175 = vmatmul.mubr.bf16.gmra.mrb[0].mxu0 %v7929
        %v8176 = vpop.f32.mrb[0].mxu0
        %v8177 = vadd.f32 %v8016, %v8176
        %v8178 = vpop.f32.mrb[0].mxu0
        %v8179 = vpop.f32.mrb[0].mxu0
        %v8180 = vadd.f32 %v8019, %v8179
        %v8181 = vpop.f32.mrb[0].mxu0
        %8182 = vmatprep.mubr.bf16.mxu0 0
        %8183 = vmatmul.mubr.bf16.gmra.mrb[0].mxu0 %v7932
        %v8184 = vpop.f32.mrb[0].mxu0
        %v8185 = vadd.f32 %v8024, %v8184
        %v8186 = vpop.f32.mrb[0].mxu0
        %v8187 = vpop.f32.mrb[0].mxu0
        %v8188 = vadd.f32 %v8027, %v8187
        %v8189 = vpop.f32.mrb[0].mxu0
        %8190 = vmatprep.mubr.bf16.mxu0 0
        %8191 = vmatmul.mubr.bf16.gmra.mrb[0].mxu0 %v7935
        %v8192 = vpop.f32.mrb[0].mxu0
        %v8193 = vadd.f32 %v8032, %v8192
        %v8194 = vpop.f32.mrb[0].mxu0
        %v8195 = vpop.f32.mrb[0].mxu0
        %v8196 = vadd.f32 %v8035, %v8195
        %v8197 = vpop.f32.mrb[0].mxu0
        %8198 = vmatprep.mubr.bf16.mxu0 0
        %8199 = vmatmul.mubr.bf16.gmra.mrb[0].mxu0 %v7938
        %v8200 = vpop.f32.mrb[0].mxu0
        %v8201 = vadd.f32 %v8040, %v8200
        %v8202 = vpop.f32.mrb[0].mxu0
        %v8203 = vpop.f32.mrb[0].mxu0
        %v8204 = vadd.f32 %v8043, %v8203
        %v8205 = vpop.f32.mrb[0].mxu0
        %8206 = vmatprep.mubr.bf16.mxu0 0
        %8207 = vmatmul.mubr.bf16.gmra.mrb[0].mxu0 %v7941
        %v8208 = vpop.f32.mrb[0].mxu0
        %v8209 = vadd.f32 %v8048, %v8208
        %v8210 = vpop.f32.mrb[0].mxu0
        %v8211 = vpop.f32.mrb[0].mxu0
        %v8212 = vadd.f32 %v8051, %v8211
        %v8213 = vpop.f32.mrb[0].mxu0
        %8214 = vmatprep.mubr.bf16.mxu0 0
        %8215 = vmatmul.mubr.bf16.gmra.mrb[0].mxu0 %v7944
        %v8216 = vpop.f32.mrb[0].mxu0
        %v8217 = vadd.f32 %v8056, %v8216
        %v8218 = vpop.f32.mrb[0].mxu0
        %v8219 = vpop.f32.mrb[0].mxu0
        %v8220 = vadd.f32 %v8059, %v8219
        %v8221 = vpop.f32.mrb[0].mxu0
        %8222 = vmatprep.mubr.bf16.mxu0 0
        %8223 = vmatmul.mubr.bf16.gmra.mrb[0].mxu0 %v7947
        %v8224 = vpop.f32.mrb[0].mxu0
        %v8225 = vadd.f32 %v8064, %v8224
        %v8226 = vpop.f32.mrb[0].mxu0
        %v8227 = vpop.f32.mrb[0].mxu0
        %v8228 = vadd.f32 %v8067, %v8227
        %v8229 = vpop.f32.mrb[0].mxu0
        %8230 = vmatprep.mubr.bf16.mxu0 0
        %8231 = vmatmul.mubr.bf16.gmra.mrb[0].mxu0 %v7950
        %v8232 = vpop.f32.mrb[0].mxu0
        %v8233 = vadd.f32 %v8072, %v8232
        %v8234 = vpop.f32.mrb[0].mxu0
        %v8235 = vpop.f32.mrb[0].mxu0
        %v8236 = vadd.f32 %v8075, %v8235
        %v8237 = vpop.f32.mrb[0].mxu0
        %8238 = vmatprep.mubr.bf16.mxu0 0
        %8239 = vmatmul.mubr.bf16.gmra.mrb[0].mxu0 %v7953
        %v8240 = vpop.f32.mrb[0].mxu0
        %v8241 = vadd.f32 %v8080, %v8240
        %v8242 = vpop.f32.mrb[0].mxu0
        %v8243 = vpop.f32.mrb[0].mxu0
        %v8244 = vadd.f32 %v8083, %v8243
        %v8245 = vpop.f32.mrb[0].mxu0
        %8246 = vmatprep.mubr.bf16.mxu0 0
        %8247 = vmatmul.mubr.bf16.gmra.mrb[0].mxu0 %v7956
        %v8248 = vpop.f32.mrb[0].mxu0
        %v8249 = vadd.f32 %v8088, %v8248
        %v8250 = vpop.f32.mrb[0].mxu0
        %v8251 = vpop.f32.mrb[0].mxu0
        %v8252 = vadd.f32 %v8091, %v8251
        %v8253 = vpop.f32.mrb[0].mxu0
        %8254 = vmatprep.mubr.bf16.mxu0 0
        %8255 = vmatmul.mubr.bf16.gmra.mrb[0].mxu0 %v7959
        %v8256 = vpop.f32.mrb[0].mxu0
        %v8257 = vadd.f32 %v8096, %v8256
        %v8258 = vpop.f32.mrb[0].mxu0
        %v8259 = vpop.f32.mrb[0].mxu0
        %v8260 = vadd.f32 %v8099, %v8259
        %v8261 = vpop.f32.mrb[0].mxu0
        %8262 = vmatprep.mubr.bf16.mxu0 0
        %8263 = vmatmul.mubr.bf16.gmra.mrb[0].mxu0 %v7962
        %v8264 = vpop.f32.mrb[0].mxu0
        %v8265 = vadd.f32 %v8104, %v8264
        %v8266 = vpop.f32.mrb[0].mxu0
        %v8267 = vpop.f32.mrb[0].mxu0
        %v8268 = vadd.f32 %v8107, %v8267
        %v8269 = vpop.f32.mrb[0].mxu0
        %8270 = vmatprep.mubr.bf16.mxu0 0
        %8271 = vmatmul.mubr.bf16.gmra.mrb[0].mxu0 %v7965
        %v8272 = vpop.f32.mrb[0].mxu0
        %v8273 = vadd.f32 %v8112, %v8272
        %v8274 = vpop.f32.mrb[0].mxu0
        %v8275 = vpop.f32.mrb[0].mxu0
        %v8276 = vadd.f32 %v8115, %v8275
        %v8277 = vpop.f32.mrb[0].mxu0
        %8278 = vmatprep.mubr.bf16.mxu0 0
        %8279 = vmatmul.mubr.bf16.gmra.mrb[0].mxu0 %v7968
        %v8280 = vpop.f32.mrb[0].mxu0
        %v8281 = vadd.f32 %v8120, %v8280
        %v8282 = vpop.f32.mrb[0].mxu0
        %v8283 = vpop.f32.mrb[0].mxu0
        %v8284 = vadd.f32 %v8123, %v8283
        %v8285 = vpop.f32.mrb[0].mxu0
        %8286 = vmatprep.mubr.bf16.mxu0 0
        %8287 = vmatmul.mubr.bf16.gmra.mrb[0].mxu0 %v7971
        %v8288 = vpop.f32.mrb[0].mxu0
        %v8289 = vadd.f32 %v8128, %v8288
        %v8290 = vpop.f32.mrb[0].mxu0
        %v8291 = vpop.f32.mrb[0].mxu0
        %v8292 = vadd.f32 %v8131, %v8291
        %v8293 = vpop.f32.mrb[0].mxu0
        %8294 = vdwg.mxu0
        %v8295 = vadd.f32 %v7427, %v8169
        %v8296 = vadd.f32 %v7428, %v8172
        %v8297 = vadd.f32 %v7429, %v8177
        %v8298 = vadd.f32 %v7430, %v8180
        %v8299 = vadd.f32 %v7431, %v8185
        %v8300 = vadd.f32 %v7432, %v8188
        %v8301 = vadd.f32 %v7433, %v8193
        %v8302 = vadd.f32 %v7434, %v8196
        %v8303 = vadd.f32 %v7435, %v8201
        %v8304 = vadd.f32 %v7436, %v8204
        %v8305 = vadd.f32 %v7437, %v8209
        %v8306 = vadd.f32 %v7438, %v8212
        %v8307 = vadd.f32 %v7439, %v8217
        %v8308 = vadd.f32 %v7440, %v8220
        %v8309 = vadd.f32 %v7441, %v8225
        %v8310 = vadd.f32 %v7442, %v8228
        %v8311 = vadd.f32 %v7443, %v8233
        %v8312 = vadd.f32 %v7444, %v8236
        %v8313 = vadd.f32 %v7445, %v8241
        %v8314 = vadd.f32 %v7446, %v8244
        %v8315 = vadd.f32 %v7447, %v8249
        %v8316 = vadd.f32 %v7448, %v8252
        %v8317 = vadd.f32 %v7449, %v8257
        %v8318 = vadd.f32 %v7450, %v8260
        %v8319 = vadd.f32 %v7451, %v8265
        %v8320 = vadd.f32 %v7452, %v8268
        %v8321 = vadd.f32 %v7453, %v8273
        %v8322 = vadd.f32 %v7454, %v8276
        %v8323 = vadd.f32 %v7455, %v8281
        %v8324 = vadd.f32 %v7456, %v8284
        %v8325 = vadd.f32 %v7457, %v8289
        %v8326 = vadd.f32 %v7458, %v8292
        %v8327 = vld [vmem:[%s7459] sm:$0xff]
        %v8328 = vld [vmem:[%s7459 + $0x8] sm:$0xf]
        %v8329 = vld [vmem:[%s7459 + $0xc] sm:$0xff]
        %v8330 = vld [vmem:[%s7459 + $0x14] sm:$0xf]
        %v8331 = vld [vmem:[%s7459 + $0x18] sm:$0x11]
        %v8332 = vld [vmem:[%s7459 + $0x20] sm:$0x1]
        %v8333 = vld [vmem:[%s7459 + $0x24] sm:$0xff]
        %v8334 = vld [vmem:[%s7459 + $0x2c] sm:$0xf]
        %v8335 = vld [vmem:[%s7459 + $0x30] sm:$0xff]
        %v8336 = vld [vmem:[%s7459 + $0x38] sm:$0xf]
        %v8337 = vld [vmem:[%s7459 + $0x3c] sm:$0x11]
        %v8338 = vld [vmem:[%s7459 + $0x44] sm:$0x1]
        %v8339 = vld [vmem:[%s7459 + $0x48] sm:$0xff]
        %v8340 = vld [vmem:[%s7459 + $0x50] sm:$0xf]
        %v8341 = vld [vmem:[%s7459 + $0x54] sm:$0xff]
        %v8342 = vld [vmem:[%s7459 + $0x5c] sm:$0xf]
        %v8343 = vld [vmem:[%s7459 + $0x60] sm:$0x11]
        %v8344 = vld [vmem:[%s7459 + $0x68] sm:$0x1]
        %v8345 = vld [vmem:[%s7459 + $0x6c] sm:$0xff]
        %v8346 = vld [vmem:[%s7459 + $0x74] sm:$0xf]
        %v8347 = vld [vmem:[%s7459 + $0x78] sm:$0xff]
        %v8348 = vld [vmem:[%s7459 + $0x80] sm:$0xf]
        %v8349 = vld [vmem:[%s7459 + $0x84] sm:$0x11]
        %v8350 = vld [vmem:[%s7459 + $0x8c] sm:$0x1]
        %v8351 = vld [vmem:[%s7459 + $0x90] sm:$0xff]
        %v8352 = vld [vmem:[%s7459 + $0x98] sm:$0xf]
        %v8353 = vld [vmem:[%s7459 + $0x9c] sm:$0xff]
        %v8354 = vld [vmem:[%s7459 + $0xa4] sm:$0xf]
        %v8355 = vld [vmem:[%s7459 + $0xa8] sm:$0x11]
        %v8356 = vld [vmem:[%s7459 + $0xb0] sm:$0x1]
        %v8357 = vld [vmem:[%s7459 + $0xb4] sm:$0xff]
        %v8358 = vld [vmem:[%s7459 + $0xbc] sm:$0xf]
        %v8359 = vld [vmem:[%s7459 + $0xc0] sm:$0xff]
        %v8360 = vld [vmem:[%s7459 + $0xc8] sm:$0xf]
        %v8361 = vld [vmem:[%s7459 + $0xcc] sm:$0x11]
        %v8362 = vld [vmem:[%s7459 + $0xd4] sm:$0x1]
        %v8363 = vld [vmem:[%s7459 + $0xd8] sm:$0xff]
        %v8364 = vld [vmem:[%s7459 + $0xe0] sm:$0xf]
        %v8365 = vld [vmem:[%s7459 + $0xe4] sm:$0xff]
        %v8366 = vld [vmem:[%s7459 + $0xec] sm:$0xf]
        %v8367 = vld [vmem:[%s7459 + $0xf0] sm:$0x11]
        %v8368 = vld [vmem:[%s7459 + $0xf8] sm:$0x1]
        %v8369 = vld [vmem:[%s7459 + $0xfc] sm:$0xff]
        %v8370 = vld [vmem:[%s7459 + $0x104] sm:$0xf]
        %v8371 = vld [vmem:[%s7459 + $0x108] sm:$0xff]
        %v8372 = vld [vmem:[%s7459 + $0x110] sm:$0xf]
        %v8373 = vld [vmem:[%s7459 + $0x114] sm:$0x11]
        %v8374 = vld [vmem:[%s7459 + $0x11c] sm:$0x1]
        %v8375 = vld [vmem:[%s7459 + $0x120] sm:$0xff]
        %v8376 = vld [vmem:[%s7459 + $0x128] sm:$0xf]
        %v8377 = vld [vmem:[%s7459 + $0x12c] sm:$0xff]
        %v8378 = vld [vmem:[%s7459 + $0x134] sm:$0xf]
        %v8379 = vld [vmem:[%s7459 + $0x138] sm:$0x11]
        %v8380 = vld [vmem:[%s7459 + $0x140] sm:$0x1]
        %v8381 = vld [vmem:[%s7459 + $0x144] sm:$0xff]
        %v8382 = vld [vmem:[%s7459 + $0x14c] sm:$0xf]
        %v8383 = vld [vmem:[%s7459 + $0x150] sm:$0xff]
        %v8384 = vld [vmem:[%s7459 + $0x158] sm:$0xf]
        %v8385 = vld [vmem:[%s7459 + $0x15c] sm:$0x11]
        %v8386 = vld [vmem:[%s7459 + $0x164] sm:$0x1]
        %v8387 = vld [vmem:[%s7459 + $0x168] sm:$0xff]
        %v8388 = vld [vmem:[%s7459 + $0x170] sm:$0xf]
        %v8389 = vld [vmem:[%s7459 + $0x174] sm:$0xff]
        %v8390 = vld [vmem:[%s7459 + $0x17c] sm:$0xf]
        %v8391 = vld [vmem:[%s7459 + $0x180] sm:$0x11]
        %v8392 = vld [vmem:[%s7459 + $0x188] sm:$0x1]
        %v8393 = vld [vmem:[%s7459 + $0x18c] sm:$0xff]
        %v8394 = vld [vmem:[%s7459 + $0x194] sm:$0xf]
        %v8395 = vld [vmem:[%s7459 + $0x198] sm:$0xff]
        %v8396 = vld [vmem:[%s7459 + $0x1a0] sm:$0xf]
        %v8397 = vld [vmem:[%s7459 + $0x1a4] sm:$0x11]
        %v8398 = vld [vmem:[%s7459 + $0x1ac] sm:$0x1]
        %v8399 = vld [vmem:[%s7459 + $0x1b0] sm:$0xff]
        %v8400 = vld [vmem:[%s7459 + $0x1b8] sm:$0xf]
        %v8401 = vld [vmem:[%s7459 + $0x1bc] sm:$0xff]
        %v8402 = vld [vmem:[%s7459 + $0x1c4] sm:$0xf]
        %v8403 = vld [vmem:[%s7459 + $0x1c8] sm:$0x11]
        %v8404 = vld [vmem:[%s7459 + $0x1d0] sm:$0x1]
        %v8405 = vld [vmem:[%s7459 + $0x1d4] sm:$0xff]
        %v8406 = vld [vmem:[%s7459 + $0x1dc] sm:$0xf]
        %v8407 = vld [vmem:[%s7459 + $0x1e0] sm:$0xff]
        %v8408 = vld [vmem:[%s7459 + $0x1e8] sm:$0xf]
        %v8409 = vld [vmem:[%s7459 + $0x1ec] sm:$0x11]
        %v8410 = vld [vmem:[%s7459 + $0x1f4] sm:$0x1]
        %v8411 = vld [vmem:[%s7459 + $0x1f8] sm:$0xff]
        %v8412 = vld [vmem:[%s7459 + $0x200] sm:$0xf]
        %v8413 = vld [vmem:[%s7459 + $0x204] sm:$0xff]
        %v8414 = vld [vmem:[%s7459 + $0x20c] sm:$0xf]
        %v8415 = vld [vmem:[%s7459 + $0x210] sm:$0x11]
        %v8416 = vld [vmem:[%s7459 + $0x218] sm:$0x1]
        %v8417 = vld [vmem:[%s7459 + $0x21c] sm:$0xff]
        %v8418 = vld [vmem:[%s7459 + $0x224] sm:$0xf]
        %v8419 = vld [vmem:[%s7459 + $0x228] sm:$0xff]
        %v8420 = vld [vmem:[%s7459 + $0x230] sm:$0xf]
        %v8421 = vld [vmem:[%s7459 + $0x234] sm:$0x11]
        %v8422 = vld [vmem:[%s7459 + $0x23c] sm:$0x1]
        %v8424 = vshrl.u32 %v8327, 16
        %v8426 = vrot.slane %v8424, 4
        %v8427 = vshll.u32 %v8327, 16
        %v8429 = vrot.slane %v8427, 5
        %v8430 = vor.u32 %v8426, %v8429
        %v8431 = vrot.slane %v8430, 4
        %v8433 = vshll.u32 %v8329, 16
        %v8435 = vrot.slane %v8433, 5
        %v8436 = vsel %vm1295, %v8431, %v8435
        %v8438 = vshrl.u32 %v8328, 16
        %v8440 = vrot.slane %v8438, 4
        %v8441 = vshll.u32 %v8328, 16
        %v8443 = vrot.slane %v8441, 5
        %v8444 = vor.u32 %v8440, %v8443
        %v8445 = vrot.slane %v8444, 4
        %v8447 = vshll.u32 %v8330, 16
        %v8449 = vrot.slane %v8447, 5
        %v8450 = vsel %vm1295, %v8445, %v8449
        %v8451 = vshrl.u32 %v8329, 16
        %v8453 = vrot.slane %v8451, 4
        %v8454 = vor.u32 %v8453, %v8435
        %v8455 = vrot.slane %v8454, 4
        %v8457 = vshll.u32 %v8331, 16
        %v8459 = vrot.slane %v8457, 5
        %v8460 = vsel %vm1295, %v8455, %v8459
        %v8461 = vshrl.u32 %v8330, 16
        %v8463 = vrot.slane %v8461, 4
        %v8464 = vor.u32 %v8463, %v8449
        %v8465 = vrot.slane %v8464, 4
        %v8467 = vshll.u32 %v8332, 16
        %v8469 = vrot.slane %v8467, 5
        %v8470 = vsel %vm1295, %v8465, %v8469
        %v8472 = vshrl.u32 %v8333, 16
        %v8474 = vrot.slane %v8472, 4
        %v8475 = vshll.u32 %v8333, 16
        %v8477 = vrot.slane %v8475, 5
        %v8478 = vor.u32 %v8474, %v8477
        %v8479 = vrot.slane %v8478, 4
        %v8481 = vshll.u32 %v8335, 16
        %v8483 = vrot.slane %v8481, 5
        %v8484 = vsel %vm1295, %v8479, %v8483
        %v8486 = vshrl.u32 %v8334, 16
        %v8488 = vrot.slane %v8486, 4
        %v8489 = vshll.u32 %v8334, 16
        %v8491 = vrot.slane %v8489, 5
        %v8492 = vor.u32 %v8488, %v8491
        %v8493 = vrot.slane %v8492, 4
        %v8495 = vshll.u32 %v8336, 16
        %v8497 = vrot.slane %v8495, 5
        %v8498 = vsel %vm1295, %v8493, %v8497
        %v8499 = vshrl.u32 %v8335, 16
        %v8501 = vrot.slane %v8499, 4
        %v8502 = vor.u32 %v8501, %v8483
        %v8503 = vrot.slane %v8502, 4
        %v8505 = vshll.u32 %v8337, 16
        %v8507 = vrot.slane %v8505, 5
        %v8508 = vsel %vm1295, %v8503, %v8507
        %v8509 = vshrl.u32 %v8336, 16
        %v8511 = vrot.slane %v8509, 4
        %v8512 = vor.u32 %v8511, %v8497
        %v8513 = vrot.slane %v8512, 4
        %v8515 = vshll.u32 %v8338, 16
        %v8517 = vrot.slane %v8515, 5
        %v8518 = vsel %vm1295, %v8513, %v8517
        %v8520 = vshrl.u32 %v8339, 16
        %v8522 = vrot.slane %v8520, 4
        %v8523 = vshll.u32 %v8339, 16
        %v8525 = vrot.slane %v8523, 5
        %v8526 = vor.u32 %v8522, %v8525
        %v8527 = vrot.slane %v8526, 4
        %v8529 = vshll.u32 %v8341, 16
        %v8531 = vrot.slane %v8529, 5
        %v8532 = vsel %vm1295, %v8527, %v8531
        %v8534 = vshrl.u32 %v8340, 16
        %v8536 = vrot.slane %v8534, 4
        %v8537 = vshll.u32 %v8340, 16
        %v8539 = vrot.slane %v8537, 5
        %v8540 = vor.u32 %v8536, %v8539
        %v8541 = vrot.slane %v8540, 4
        %v8543 = vshll.u32 %v8342, 16
        %v8545 = vrot.slane %v8543, 5
        %v8546 = vsel %vm1295, %v8541, %v8545
        %v8547 = vshrl.u32 %v8341, 16
        %v8549 = vrot.slane %v8547, 4
        %v8550 = vor.u32 %v8549, %v8531
        %v8551 = vrot.slane %v8550, 4
        %v8553 = vshll.u32 %v8343, 16
        %v8555 = vrot.slane %v8553, 5
        %v8556 = vsel %vm1295, %v8551, %v8555
        %v8557 = vshrl.u32 %v8342, 16
        %v8559 = vrot.slane %v8557, 4
        %v8560 = vor.u32 %v8559, %v8545
        %v8561 = vrot.slane %v8560, 4
        %v8563 = vshll.u32 %v8344, 16
        %v8565 = vrot.slane %v8563, 5
        %v8566 = vsel %vm1295, %v8561, %v8565
        %v8568 = vshrl.u32 %v8345, 16
        %v8570 = vrot.slane %v8568, 4
        %v8571 = vshll.u32 %v8345, 16
        %v8573 = vrot.slane %v8571, 5
        %v8574 = vor.u32 %v8570, %v8573
        %v8575 = vrot.slane %v8574, 4
        %v8577 = vshll.u32 %v8347, 16
        %v8579 = vrot.slane %v8577, 5
        %v8580 = vsel %vm1295, %v8575, %v8579
        %v8582 = vshrl.u32 %v8346, 16
        %v8584 = vrot.slane %v8582, 4
        %v8585 = vshll.u32 %v8346, 16
        %v8587 = vrot.slane %v8585, 5
        %v8588 = vor.u32 %v8584, %v8587
        %v8589 = vrot.slane %v8588, 4
        %v8591 = vshll.u32 %v8348, 16
        %v8593 = vrot.slane %v8591, 5
        %v8594 = vsel %vm1295, %v8589, %v8593
        %v8595 = vshrl.u32 %v8347, 16
        %v8597 = vrot.slane %v8595, 4
        %v8598 = vor.u32 %v8597, %v8579
        %v8599 = vrot.slane %v8598, 4
        %v8601 = vshll.u32 %v8349, 16
        %v8603 = vrot.slane %v8601, 5
        %v8604 = vsel %vm1295, %v8599, %v8603
        %v8605 = vshrl.u32 %v8348, 16
        %v8607 = vrot.slane %v8605, 4
        %v8608 = vor.u32 %v8607, %v8593
        %v8609 = vrot.slane %v8608, 4
        %v8611 = vshll.u32 %v8350, 16
        %v8613 = vrot.slane %v8611, 5
        %v8614 = vsel %vm1295, %v8609, %v8613
        %v8616 = vshrl.u32 %v8351, 16
        %v8618 = vrot.slane %v8616, 4
        %v8619 = vshll.u32 %v8351, 16
        %v8621 = vrot.slane %v8619, 5
        %v8622 = vor.u32 %v8618, %v8621
        %v8623 = vrot.slane %v8622, 4
        %v8625 = vshll.u32 %v8353, 16
        %v8627 = vrot.slane %v8625, 5
        %v8628 = vsel %vm1295, %v8623, %v8627
        %v8630 = vshrl.u32 %v8352, 16
        %v8632 = vrot.slane %v8630, 4
        %v8633 = vshll.u32 %v8352, 16
        %v8635 = vrot.slane %v8633, 5
        %v8636 = vor.u32 %v8632, %v8635
        %v8637 = vrot.slane %v8636, 4
        %v8639 = vshll.u32 %v8354, 16
        %v8641 = vrot.slane %v8639, 5
        %v8642 = vsel %vm1295, %v8637, %v8641
        %v8643 = vshrl.u32 %v8353, 16
        %v8645 = vrot.slane %v8643, 4
        %v8646 = vor.u32 %v8645, %v8627
        %v8647 = vrot.slane %v8646, 4
        %v8649 = vshll.u32 %v8355, 16
        %v8651 = vrot.slane %v8649, 5
        %v8652 = vsel %vm1295, %v8647, %v8651
        %v8653 = vshrl.u32 %v8354, 16
        %v8655 = vrot.slane %v8653, 4
        %v8656 = vor.u32 %v8655, %v8641
        %v8657 = vrot.slane %v8656, 4
        %v8659 = vshll.u32 %v8356, 16
        %v8661 = vrot.slane %v8659, 5
        %v8662 = vsel %vm1295, %v8657, %v8661
        %v8664 = vshrl.u32 %v8357, 16
        %v8666 = vrot.slane %v8664, 4
        %v8667 = vshll.u32 %v8357, 16
        %v8669 = vrot.slane %v8667, 5
        %v8670 = vor.u32 %v8666, %v8669
        %v8671 = vrot.slane %v8670, 4
        %v8673 = vshll.u32 %v8359, 16
        %v8675 = vrot.slane %v8673, 5
        %v8676 = vsel %vm1295, %v8671, %v8675
        %v8678 = vshrl.u32 %v8358, 16
        %v8680 = vrot.slane %v8678, 4
        %v8681 = vshll.u32 %v8358, 16
        %v8683 = vrot.slane %v8681, 5
        %v8684 = vor.u32 %v8680, %v8683
        %v8685 = vrot.slane %v8684, 4
        %v8687 = vshll.u32 %v8360, 16
        %v8689 = vrot.slane %v8687, 5
        %v8690 = vsel %vm1295, %v8685, %v8689
        %v8691 = vshrl.u32 %v8359, 16
        %v8693 = vrot.slane %v8691, 4
        %v8694 = vor.u32 %v8693, %v8675
        %v8695 = vrot.slane %v8694, 4
        %v8697 = vshll.u32 %v8361, 16
        %v8699 = vrot.slane %v8697, 5
        %v8700 = vsel %vm1295, %v8695, %v8699
        %v8701 = vshrl.u32 %v8360, 16
        %v8703 = vrot.slane %v8701, 4
        %v8704 = vor.u32 %v8703, %v8689
        %v8705 = vrot.slane %v8704, 4
        %v8707 = vshll.u32 %v8362, 16
        %v8709 = vrot.slane %v8707, 5
        %v8710 = vsel %vm1295, %v8705, %v8709
        %v8712 = vshrl.u32 %v8363, 16
        %v8714 = vrot.slane %v8712, 4
        %v8715 = vshll.u32 %v8363, 16
        %v8717 = vrot.slane %v8715, 5
        %v8718 = vor.u32 %v8714, %v8717
        %v8719 = vrot.slane %v8718, 4
        %v8721 = vshll.u32 %v8365, 16
        %v8723 = vrot.slane %v8721, 5
        %v8724 = vsel %vm1295, %v8719, %v8723
        %v8726 = vshrl.u32 %v8364, 16
        %v8728 = vrot.slane %v8726, 4
        %v8729 = vshll.u32 %v8364, 16
        %v8731 = vrot.slane %v8729, 5
        %v8732 = vor.u32 %v8728, %v8731
        %v8733 = vrot.slane %v8732, 4
        %v8735 = vshll.u32 %v8366, 16
        %v8737 = vrot.slane %v8735, 5
        %v8738 = vsel %vm1295, %v8733, %v8737
        %v8739 = vshrl.u32 %v8365, 16
        %v8741 = vrot.slane %v8739, 4
        %v8742 = vor.u32 %v8741, %v8723
        %v8743 = vrot.slane %v8742, 4
        %v8745 = vshll.u32 %v8367, 16
        %v8747 = vrot.slane %v8745, 5
        %v8748 = vsel %vm1295, %v8743, %v8747
        %v8749 = vshrl.u32 %v8366, 16
        %v8751 = vrot.slane %v8749, 4
        %v8752 = vor.u32 %v8751, %v8737
        %v8753 = vrot.slane %v8752, 4
        %v8755 = vshll.u32 %v8368, 16
        %v8757 = vrot.slane %v8755, 5
        %v8758 = vsel %vm1295, %v8753, %v8757
        %v8760 = vshrl.u32 %v8369, 16
        %v8762 = vrot.slane %v8760, 4
        %v8763 = vshll.u32 %v8369, 16
        %v8765 = vrot.slane %v8763, 5
        %v8766 = vor.u32 %v8762, %v8765
        %v8767 = vrot.slane %v8766, 4
        %v8769 = vshll.u32 %v8371, 16
        %v8771 = vrot.slane %v8769, 5
        %v8772 = vsel %vm1295, %v8767, %v8771
        %v8774 = vshrl.u32 %v8370, 16
        %v8776 = vrot.slane %v8774, 4
        %v8777 = vshll.u32 %v8370, 16
        %v8779 = vrot.slane %v8777, 5
        %v8780 = vor.u32 %v8776, %v8779
        %v8781 = vrot.slane %v8780, 4
        %v8783 = vshll.u32 %v8372, 16
        %v8785 = vrot.slane %v8783, 5
        %v8786 = vsel %vm1295, %v8781, %v8785
        %v8787 = vshrl.u32 %v8371, 16
        %v8789 = vrot.slane %v8787, 4
        %v8790 = vor.u32 %v8789, %v8771
        %v8791 = vrot.slane %v8790, 4
        %v8793 = vshll.u32 %v8373, 16
        %v8795 = vrot.slane %v8793, 5
        %v8796 = vsel %vm1295, %v8791, %v8795
        %v8797 = vshrl.u32 %v8372, 16
        %v8799 = vrot.slane %v8797, 4
        %v8800 = vor.u32 %v8799, %v8785
        %v8801 = vrot.slane %v8800, 4
        %v8803 = vshll.u32 %v8374, 16
        %v8805 = vrot.slane %v8803, 5
        %v8806 = vsel %vm1295, %v8801, %v8805
        %v8808 = vshrl.u32 %v8375, 16
        %v8810 = vrot.slane %v8808, 4
        %v8811 = vshll.u32 %v8375, 16
        %v8813 = vrot.slane %v8811, 5
        %v8814 = vor.u32 %v8810, %v8813
        %v8815 = vrot.slane %v8814, 4
        %v8817 = vshll.u32 %v8377, 16
        %v8819 = vrot.slane %v8817, 5
        %v8820 = vsel %vm1295, %v8815, %v8819
        %v8822 = vshrl.u32 %v8376, 16
        %v8824 = vrot.slane %v8822, 4
        %v8825 = vshll.u32 %v8376, 16
        %v8827 = vrot.slane %v8825, 5
        %v8828 = vor.u32 %v8824, %v8827
        %v8829 = vrot.slane %v8828, 4
        %v8831 = vshll.u32 %v8378, 16
        %v8833 = vrot.slane %v8831, 5
        %v8834 = vsel %vm1295, %v8829, %v8833
        %v8835 = vshrl.u32 %v8377, 16
        %v8837 = vrot.slane %v8835, 4
        %v8838 = vor.u32 %v8837, %v8819
        %v8839 = vrot.slane %v8838, 4
        %v8841 = vshll.u32 %v8379, 16
        %v8843 = vrot.slane %v8841, 5
        %v8844 = vsel %vm1295, %v8839, %v8843
        %v8845 = vshrl.u32 %v8378, 16
        %v8847 = vrot.slane %v8845, 4
        %v8848 = vor.u32 %v8847, %v8833
        %v8849 = vrot.slane %v8848, 4
        %v8851 = vshll.u32 %v8380, 16
        %v8853 = vrot.slane %v8851, 5
        %v8854 = vsel %vm1295, %v8849, %v8853
        %v8856 = vshrl.u32 %v8381, 16
        %v8858 = vrot.slane %v8856, 4
        %v8859 = vshll.u32 %v8381, 16
        %v8861 = vrot.slane %v8859, 5
        %v8862 = vor.u32 %v8858, %v8861
        %v8863 = vrot.slane %v8862, 4
        %v8865 = vshll.u32 %v8383, 16
        %v8867 = vrot.slane %v8865, 5
        %v8868 = vsel %vm1295, %v8863, %v8867
        %v8870 = vshrl.u32 %v8382, 16
        %v8872 = vrot.slane %v8870, 4
        %v8873 = vshll.u32 %v8382, 16
        %v8875 = vrot.slane %v8873, 5
        %v8876 = vor.u32 %v8872, %v8875
        %v8877 = vrot.slane %v8876, 4
        %v8879 = vshll.u32 %v8384, 16
        %v8881 = vrot.slane %v8879, 5
        %v8882 = vsel %vm1295, %v8877, %v8881
        %v8883 = vshrl.u32 %v8383, 16
        %v8885 = vrot.slane %v8883, 4
        %v8886 = vor.u32 %v8885, %v8867
        %v8887 = vrot.slane %v8886, 4
        %v8889 = vshll.u32 %v8385, 16
        %v8891 = vrot.slane %v8889, 5
        %v8892 = vsel %vm1295, %v8887, %v8891
        %v8893 = vshrl.u32 %v8384, 16
        %v8895 = vrot.slane %v8893, 4
        %v8896 = vor.u32 %v8895, %v8881
        %v8897 = vrot.slane %v8896, 4
        %v8899 = vshll.u32 %v8386, 16
        %v8901 = vrot.slane %v8899, 5
        %v8902 = vsel %vm1295, %v8897, %v8901
        %v8904 = vshrl.u32 %v8387, 16
        %v8906 = vrot.slane %v8904, 4
        %v8907 = vshll.u32 %v8387, 16
        %v8909 = vrot.slane %v8907, 5
        %v8910 = vor.u32 %v8906, %v8909
        %v8911 = vrot.slane %v8910, 4
        %v8913 = vshll.u32 %v8389, 16
        %v8915 = vrot.slane %v8913, 5
        %v8916 = vsel %vm1295, %v8911, %v8915
        %v8918 = vshrl.u32 %v8388, 16
        %v8920 = vrot.slane %v8918, 4
        %v8921 = vshll.u32 %v8388, 16
        %v8923 = vrot.slane %v8921, 5
        %v8924 = vor.u32 %v8920, %v8923
        %v8925 = vrot.slane %v8924, 4
        %v8927 = vshll.u32 %v8390, 16
        %v8929 = vrot.slane %v8927, 5
        %v8930 = vsel %vm1295, %v8925, %v8929
        %v8931 = vshrl.u32 %v8389, 16
        %v8933 = vrot.slane %v8931, 4
        %v8934 = vor.u32 %v8933, %v8915
        %v8935 = vrot.slane %v8934, 4
        %v8937 = vshll.u32 %v8391, 16
        %v8939 = vrot.slane %v8937, 5
        %v8940 = vsel %vm1295, %v8935, %v8939
        %v8941 = vshrl.u32 %v8390, 16
        %v8943 = vrot.slane %v8941, 4
        %v8944 = vor.u32 %v8943, %v8929
        %v8945 = vrot.slane %v8944, 4
        %v8947 = vshll.u32 %v8392, 16
        %v8949 = vrot.slane %v8947, 5
        %v8950 = vsel %vm1295, %v8945, %v8949
        %v8952 = vshrl.u32 %v8393, 16
        %v8954 = vrot.slane %v8952, 4
        %v8955 = vshll.u32 %v8393, 16
        %v8957 = vrot.slane %v8955, 5
        %v8958 = vor.u32 %v8954, %v8957
        %v8959 = vrot.slane %v8958, 4
        %v8961 = vshll.u32 %v8395, 16
        %v8963 = vrot.slane %v8961, 5
        %v8964 = vsel %vm1295, %v8959, %v8963
        %v8966 = vshrl.u32 %v8394, 16
        %v8968 = vrot.slane %v8966, 4
        %v8969 = vshll.u32 %v8394, 16
        %v8971 = vrot.slane %v8969, 5
        %v8972 = vor.u32 %v8968, %v8971
        %v8973 = vrot.slane %v8972, 4
        %v8975 = vshll.u32 %v8396, 16
        %v8977 = vrot.slane %v8975, 5
        %v8978 = vsel %vm1295, %v8973, %v8977
        %v8979 = vshrl.u32 %v8395, 16
        %v8981 = vrot.slane %v8979, 4
        %v8982 = vor.u32 %v8981, %v8963
        %v8983 = vrot.slane %v8982, 4
        %v8985 = vshll.u32 %v8397, 16
        %v8987 = vrot.slane %v8985, 5
        %v8988 = vsel %vm1295, %v8983, %v8987
        %v8989 = vshrl.u32 %v8396, 16
        %v8991 = vrot.slane %v8989, 4
        %v8992 = vor.u32 %v8991, %v8977
        %v8993 = vrot.slane %v8992, 4
        %v8995 = vshll.u32 %v8398, 16
        %v8997 = vrot.slane %v8995, 5
        %v8998 = vsel %vm1295, %v8993, %v8997
        %v9000 = vshrl.u32 %v8399, 16
        %v9002 = vrot.slane %v9000, 4
        %v9003 = vshll.u32 %v8399, 16
        %v9005 = vrot.slane %v9003, 5
        %v9006 = vor.u32 %v9002, %v9005
        %v9007 = vrot.slane %v9006, 4
        %v9009 = vshll.u32 %v8401, 16
        %v9011 = vrot.slane %v9009, 5
        %v9012 = vsel %vm1295, %v9007, %v9011
        %v9014 = vshrl.u32 %v8400, 16
        %v9016 = vrot.slane %v9014, 4
        %v9017 = vshll.u32 %v8400, 16
        %v9019 = vrot.slane %v9017, 5
        %v9020 = vor.u32 %v9016, %v9019
        %v9021 = vrot.slane %v9020, 4
        %v9023 = vshll.u32 %v8402, 16
        %v9025 = vrot.slane %v9023, 5
        %v9026 = vsel %vm1295, %v9021, %v9025
        %v9027 = vshrl.u32 %v8401, 16
        %v9029 = vrot.slane %v9027, 4
        %v9030 = vor.u32 %v9029, %v9011
        %v9031 = vrot.slane %v9030, 4
        %v9033 = vshll.u32 %v8403, 16
        %v9035 = vrot.slane %v9033, 5
        %v9036 = vsel %vm1295, %v9031, %v9035
        %v9037 = vshrl.u32 %v8402, 16
        %v9039 = vrot.slane %v9037, 4
        %v9040 = vor.u32 %v9039, %v9025
        %v9041 = vrot.slane %v9040, 4
        %v9043 = vshll.u32 %v8404, 16
        %v9045 = vrot.slane %v9043, 5
        %v9046 = vsel %vm1295, %v9041, %v9045
        %v9048 = vshrl.u32 %v8405, 16
        %v9050 = vrot.slane %v9048, 4
        %v9051 = vshll.u32 %v8405, 16
        %v9053 = vrot.slane %v9051, 5
        %v9054 = vor.u32 %v9050, %v9053
        %v9055 = vrot.slane %v9054, 4
        %v9057 = vshll.u32 %v8407, 16
        %v9059 = vrot.slane %v9057, 5
        %v9060 = vsel %vm1295, %v9055, %v9059
        %v9062 = vshrl.u32 %v8406, 16
        %v9064 = vrot.slane %v9062, 4
        %v9065 = vshll.u32 %v8406, 16
        %v9067 = vrot.slane %v9065, 5
        %v9068 = vor.u32 %v9064, %v9067
        %v9069 = vrot.slane %v9068, 4
        %v9071 = vshll.u32 %v8408, 16
        %v9073 = vrot.slane %v9071, 5
        %v9074 = vsel %vm1295, %v9069, %v9073
        %v9075 = vshrl.u32 %v8407, 16
        %v9077 = vrot.slane %v9075, 4
        %v9078 = vor.u32 %v9077, %v9059
        %v9079 = vrot.slane %v9078, 4
        %v9081 = vshll.u32 %v8409, 16
        %v9083 = vrot.slane %v9081, 5
        %v9084 = vsel %vm1295, %v9079, %v9083
        %v9085 = vshrl.u32 %v8408, 16
        %v9087 = vrot.slane %v9085, 4
        %v9088 = vor.u32 %v9087, %v9073
        %v9089 = vrot.slane %v9088, 4
        %v9091 = vshll.u32 %v8410, 16
        %v9093 = vrot.slane %v9091, 5
        %v9094 = vsel %vm1295, %v9089, %v9093
        %v9096 = vshrl.u32 %v8411, 16
        %v9098 = vrot.slane %v9096, 4
        %v9099 = vshll.u32 %v8411, 16
        %v9101 = vrot.slane %v9099, 5
        %v9102 = vor.u32 %v9098, %v9101
        %v9103 = vrot.slane %v9102, 4
        %v9105 = vshll.u32 %v8413, 16
        %v9107 = vrot.slane %v9105, 5
        %v9108 = vsel %vm1295, %v9103, %v9107
        %v9110 = vshrl.u32 %v8412, 16
        %v9112 = vrot.slane %v9110, 4
        %v9113 = vshll.u32 %v8412, 16
        %v9115 = vrot.slane %v9113, 5
        %v9116 = vor.u32 %v9112, %v9115
        %v9117 = vrot.slane %v9116, 4
        %v9119 = vshll.u32 %v8414, 16
        %v9121 = vrot.slane %v9119, 5
        %v9122 = vsel %vm1295, %v9117, %v9121
        %v9123 = vshrl.u32 %v8413, 16
        %v9125 = vrot.slane %v9123, 4
        %v9126 = vor.u32 %v9125, %v9107
        %v9127 = vrot.slane %v9126, 4
        %v9129 = vshll.u32 %v8415, 16
        %v9131 = vrot.slane %v9129, 5
        %v9132 = vsel %vm1295, %v9127, %v9131
        %v9133 = vshrl.u32 %v8414, 16
        %v9135 = vrot.slane %v9133, 4
        %v9136 = vor.u32 %v9135, %v9121
        %v9137 = vrot.slane %v9136, 4
        %v9139 = vshll.u32 %v8416, 16
        %v9141 = vrot.slane %v9139, 5
        %v9142 = vsel %vm1295, %v9137, %v9141
        %v9144 = vshrl.u32 %v8417, 16
        %v9146 = vrot.slane %v9144, 4
        %v9147 = vshll.u32 %v8417, 16
        %v9149 = vrot.slane %v9147, 5
        %v9150 = vor.u32 %v9146, %v9149
        %v9151 = vrot.slane %v9150, 4
        %v9153 = vshll.u32 %v8419, 16
        %v9155 = vrot.slane %v9153, 5
        %v9156 = vsel %vm1295, %v9151, %v9155
        %v9158 = vshrl.u32 %v8418, 16
        %v9160 = vrot.slane %v9158, 4
        %v9161 = vshll.u32 %v8418, 16
        %v9163 = vrot.slane %v9161, 5
        %v9164 = vor.u32 %v9160, %v9163
        %v9165 = vrot.slane %v9164, 4
        %v9167 = vshll.u32 %v8420, 16
        %v9169 = vrot.slane %v9167, 5
        %v9170 = vsel %vm1295, %v9165, %v9169
        %v9171 = vshrl.u32 %v8419, 16
        %v9173 = vrot.slane %v9171, 4
        %v9174 = vor.u32 %v9173, %v9155
        %v9175 = vrot.slane %v9174, 4
        %v9177 = vshll.u32 %v8421, 16
        %v9179 = vrot.slane %v9177, 5
        %v9180 = vsel %vm1295, %v9175, %v9179
        %v9181 = vshrl.u32 %v8420, 16
        %v9183 = vrot.slane %v9181, 4
        %v9184 = vor.u32 %v9183, %v9169
        %v9185 = vrot.slane %v9184, 4
        %v9187 = vshll.u32 %v8422, 16
        %v9189 = vrot.slane %v9187, 5
        %v9190 = vsel %vm1295, %v9185, %v9189
        %s9191 = scalar_lea.vmem %s248, 1120
        %v9192 = vld [vmem:[%s9191] sm:$0xf]
        %v9193 = vld [vmem:[%s9191 + $0x4] sm:$0xf]
        %v9194 = vld [vmem:[%s9191 + $0x8] sm:$0xf]
        %v9195 = vld [vmem:[%s9191 + $0xc] sm:$0xf]
        %v9196 = vld [vmem:[%s9191 + $0x10] sm:$0xf]
        %v9197 = vld [vmem:[%s9191 + $0x14] sm:$0xf]
        %v9198 = vld [vmem:[%s9191 + $0x18] sm:$0xf]
        %v9199 = vld [vmem:[%s9191 + $0x1c] sm:$0xf]
        %v9200 = vld [vmem:[%s9191 + $0x20] sm:$0xf]
        %v9201 = vld [vmem:[%s9191 + $0x24] sm:$0xf]
        %v9202 = vld [vmem:[%s9191 + $0x28] sm:$0xf]
        %v9203 = vld [vmem:[%s9191 + $0x2c] sm:$0xf]
        %v9204 = vld [vmem:[%s9191 + $0x30] sm:$0xf]
        %v9205 = vld [vmem:[%s9191 + $0x34] sm:$0xf]
        %v9206 = vld [vmem:[%s9191 + $0x38] sm:$0xf]
        %v9207 = vld [vmem:[%s9191 + $0x3c] sm:$0xf]
        %v9208 = vld [vmem:[%s9191 + $0x40] sm:$0xf]
        %v9209 = vld [vmem:[%s9191 + $0x44] sm:$0xf]
        %v9210 = vld [vmem:[%s9191 + $0x48] sm:$0xf]
        %v9211 = vld [vmem:[%s9191 + $0x4c] sm:$0xf]
        %v9212 = vld [vmem:[%s9191 + $0x50] sm:$0xf]
        %v9213 = vld [vmem:[%s9191 + $0x54] sm:$0xf]
        %v9214 = vld [vmem:[%s9191 + $0x58] sm:$0xf]
        %v9215 = vld [vmem:[%s9191 + $0x5c] sm:$0xf]
        %v9216 = vld [vmem:[%s9191 + $0x60] sm:$0xf]
        %v9217 = vld [vmem:[%s9191 + $0x64] sm:$0xf]
        %v9218 = vld [vmem:[%s9191 + $0x68] sm:$0xf]
        %v9219 = vld [vmem:[%s9191 + $0x6c] sm:$0xf]
        %v9220 = vld [vmem:[%s9191 + $0x70] sm:$0xf]
        %v9221 = vld [vmem:[%s9191 + $0x74] sm:$0xf]
        %v9222 = vld [vmem:[%s9191 + $0x78] sm:$0xf]
        %v9223 = vld [vmem:[%s9191 + $0x7c] sm:$0xf]
        %v9224 = vld [vmem:[%s9191 + $0x80] sm:$0xf]
        %v9225 = vld [vmem:[%s9191 + $0x84] sm:$0xf]
        %v9226 = vld [vmem:[%s9191 + $0x88] sm:$0xf]
        %v9227 = vld [vmem:[%s9191 + $0x8c] sm:$0xf]
        %v9228 = vld [vmem:[%s9191 + $0x90] sm:$0xf]
        %v9229 = vld [vmem:[%s9191 + $0x94] sm:$0xf]
        %v9230 = vld [vmem:[%s9191 + $0x98] sm:$0xf]
        %v9231 = vld [vmem:[%s9191 + $0x9c] sm:$0xf]
        %v9232 = vunpack.c.l.b16 %v8436
        %v9233 = vunpack.c.h.b16 %v8436
        %v9234 = vunpack.c.l.b16 %v8450
        %v9235 = vunpack.c.l.b16 %v8460
        %v9236 = vunpack.c.h.b16 %v8460
        %v9237 = vunpack.c.l.b16 %v8470
        %v9238 = vunpack.c.l.b16 %v8484
        %v9239 = vunpack.c.h.b16 %v8484
        %v9240 = vunpack.c.l.b16 %v8498
        %v9241 = vunpack.c.l.b16 %v8508
        %v9242 = vunpack.c.h.b16 %v8508
        %v9243 = vunpack.c.l.b16 %v8518
        %v9244 = vunpack.c.l.b16 %v8532
        %v9245 = vunpack.c.h.b16 %v8532
        %v9246 = vunpack.c.l.b16 %v8546
        %v9247 = vunpack.c.l.b16 %v8556
        %v9248 = vunpack.c.h.b16 %v8556
        %v9249 = vunpack.c.l.b16 %v8566
        %v9250 = vunpack.c.l.b16 %v8580
        %v9251 = vunpack.c.h.b16 %v8580
        %v9252 = vunpack.c.l.b16 %v8594
        %v9253 = vunpack.c.l.b16 %v8604
        %v9254 = vunpack.c.h.b16 %v8604
        %v9255 = vunpack.c.l.b16 %v8614
        %v9256 = vunpack.c.l.b16 %v8628
        %v9257 = vunpack.c.h.b16 %v8628
        %v9258 = vunpack.c.l.b16 %v8642
        %v9259 = vunpack.c.l.b16 %v8652
        %v9260 = vunpack.c.h.b16 %v8652
        %v9261 = vunpack.c.l.b16 %v8662
        %v9262 = vunpack.c.l.b16 %v8676
        %v9263 = vunpack.c.h.b16 %v8676
        %v9264 = vunpack.c.l.b16 %v8690
        %v9265 = vunpack.c.l.b16 %v8700
        %v9266 = vunpack.c.h.b16 %v8700
        %v9267 = vunpack.c.l.b16 %v8710
        %v9268 = vunpack.c.l.b16 %v8724
        %v9269 = vunpack.c.h.b16 %v8724
        %v9270 = vunpack.c.l.b16 %v8738
        %v9271 = vunpack.c.l.b16 %v8748
        %v9272 = vunpack.c.h.b16 %v8748
        %v9273 = vunpack.c.l.b16 %v8758
        %v9274 = vunpack.c.l.b16 %v8772
        %v9275 = vunpack.c.h.b16 %v8772
        %v9276 = vunpack.c.l.b16 %v8786
        %v9277 = vunpack.c.l.b16 %v8796
        %v9278 = vunpack.c.h.b16 %v8796
        %v9279 = vunpack.c.l.b16 %v8806
        %v9280 = vunpack.c.l.b16 %v8820
        %v9281 = vunpack.c.h.b16 %v8820
        %v9282 = vunpack.c.l.b16 %v8834
        %v9283 = vunpack.c.l.b16 %v8844
        %v9284 = vunpack.c.h.b16 %v8844
        %v9285 = vunpack.c.l.b16 %v8854
        %v9286 = vunpack.c.l.b16 %v8868
        %v9287 = vunpack.c.h.b16 %v8868
        %v9288 = vunpack.c.l.b16 %v8882
        %v9289 = vunpack.c.l.b16 %v8892
        %v9290 = vunpack.c.h.b16 %v8892
        %v9291 = vunpack.c.l.b16 %v8902
        %v9292 = vunpack.c.l.b16 %v8916
        %v9293 = vunpack.c.h.b16 %v8916
        %v9294 = vunpack.c.l.b16 %v8930
        %v9295 = vunpack.c.l.b16 %v8940
        %v9296 = vunpack.c.h.b16 %v8940
        %v9297 = vunpack.c.l.b16 %v8950
        %v9298 = vunpack.c.l.b16 %v8964
        %v9299 = vunpack.c.h.b16 %v8964
        %v9300 = vunpack.c.l.b16 %v8978
        %v9301 = vunpack.c.l.b16 %v8988
        %v9302 = vunpack.c.h.b16 %v8988
        %v9303 = vunpack.c.l.b16 %v8998
        %v9304 = vunpack.c.l.b16 %v9012
        %v9305 = vunpack.c.h.b16 %v9012
        %v9306 = vunpack.c.l.b16 %v9026
        %v9307 = vunpack.c.l.b16 %v9036
        %v9308 = vunpack.c.h.b16 %v9036
        %v9309 = vunpack.c.l.b16 %v9046
        %v9310 = vunpack.c.l.b16 %v9060
        %v9311 = vunpack.c.h.b16 %v9060
        %v9312 = vunpack.c.l.b16 %v9074
        %v9313 = vunpack.c.l.b16 %v9084
        %v9314 = vunpack.c.h.b16 %v9084
        %v9315 = vunpack.c.l.b16 %v9094
        %v9316 = vunpack.c.l.b16 %v9108
        %v9317 = vunpack.c.h.b16 %v9108
        %v9318 = vunpack.c.l.b16 %v9122
        %v9319 = vunpack.c.l.b16 %v9132
        %v9320 = vunpack.c.h.b16 %v9132
        %v9321 = vunpack.c.l.b16 %v9142
        %v9322 = vunpack.c.l.b16 %v9156
        %v9323 = vunpack.c.h.b16 %v9156
        %v9324 = vunpack.c.l.b16 %v9170
        %v9325 = vunpack.c.l.b16 %v9180
        %v9326 = vunpack.c.h.b16 %v9180
        %v9327 = vunpack.c.l.b16 %v9190
        %v9328 = vpack.c.b16 %v9235, %v9232
        %v9329 = vpack.c.b16 %v9236, %v9233
        %v9330 = vpack.c.b16 %v9237, %v9234
        %v9331 = vpack.c.b16 %v9241, %v9238
        %v9332 = vpack.c.b16 %v9242, %v9239
        %v9333 = vpack.c.b16 %v9243, %v9240
        %v9334 = vpack.c.b16 %v9247, %v9244
        %v9335 = vpack.c.b16 %v9248, %v9245
        %v9336 = vpack.c.b16 %v9249, %v9246
        %v9337 = vpack.c.b16 %v9253, %v9250
        %v9338 = vpack.c.b16 %v9254, %v9251
        %v9339 = vpack.c.b16 %v9255, %v9252
        %v9340 = vpack.c.b16 %v9259, %v9256
        %v9341 = vpack.c.b16 %v9260, %v9257
        %v9342 = vpack.c.b16 %v9261, %v9258
        %v9343 = vpack.c.b16 %v9265, %v9262
        %v9344 = vpack.c.b16 %v9266, %v9263
        %v9345 = vpack.c.b16 %v9267, %v9264
        %v9346 = vpack.c.b16 %v9271, %v9268
        %v9347 = vpack.c.b16 %v9272, %v9269
        %v9348 = vpack.c.b16 %v9273, %v9270
        %v9349 = vpack.c.b16 %v9277, %v9274
        %v9350 = vpack.c.b16 %v9278, %v9275
        %v9351 = vpack.c.b16 %v9279, %v9276
        %v9352 = vpack.c.b16 %v9283, %v9280
        %v9353 = vpack.c.b16 %v9284, %v9281
        %v9354 = vpack.c.b16 %v9285, %v9282
        %v9355 = vpack.c.b16 %v9289, %v9286
        %v9356 = vpack.c.b16 %v9290, %v9287
        %v9357 = vpack.c.b16 %v9291, %v9288
        %v9358 = vpack.c.b16 %v9295, %v9292
        %v9359 = vpack.c.b16 %v9296, %v9293
        %v9360 = vpack.c.b16 %v9297, %v9294
        %v9361 = vpack.c.b16 %v9301, %v9298
        %v9362 = vpack.c.b16 %v9302, %v9299
        %v9363 = vpack.c.b16 %v9303, %v9300
        %v9364 = vpack.c.b16 %v9307, %v9304
        %v9365 = vpack.c.b16 %v9308, %v9305
        %v9366 = vpack.c.b16 %v9309, %v9306
        %v9367 = vpack.c.b16 %v9313, %v9310
        %v9368 = vpack.c.b16 %v9314, %v9311
        %v9369 = vpack.c.b16 %v9315, %v9312
        %v9370 = vpack.c.b16 %v9319, %v9316
        %v9371 = vpack.c.b16 %v9320, %v9317
        %v9372 = vpack.c.b16 %v9321, %v9318
        %v9373 = vpack.c.b16 %v9325, %v9322
        %v9374 = vpack.c.b16 %v9326, %v9323
        %v9375 = vpack.c.b16 %v9327, %v9324
        %v9448 = vunpack.c.l.b16 %v9192
        %v9449 = vunpack.c.l.b16 %v9193
        %v9450 = vunpack.c.l.b16 %v9194
        %v9451 = vunpack.c.l.b16 %v9195
        %v9452 = vunpack.c.l.b16 %v9196
        %v9453 = vunpack.c.l.b16 %v9197
        %v9454 = vunpack.c.l.b16 %v9198
        %v9455 = vunpack.c.l.b16 %v9199
        %v9456 = vunpack.c.l.b16 %v9200
        %v9457 = vunpack.c.l.b16 %v9201
        %v9458 = vunpack.c.l.b16 %v9202
        %v9459 = vunpack.c.l.b16 %v9203
        %v9460 = vunpack.c.l.b16 %v9204
        %v9461 = vunpack.c.l.b16 %v9205
        %v9462 = vunpack.c.l.b16 %v9206
        %v9463 = vunpack.c.l.b16 %v9207
        %v9464 = vunpack.c.l.b16 %v9208
        %v9465 = vunpack.c.l.b16 %v9209
        %v9466 = vunpack.c.l.b16 %v9210
        %v9467 = vunpack.c.l.b16 %v9211
        %v9468 = vunpack.c.l.b16 %v9212
        %v9469 = vunpack.c.l.b16 %v9213
        %v9470 = vunpack.c.l.b16 %v9214
        %v9471 = vunpack.c.l.b16 %v9215
        %v9472 = vunpack.c.l.b16 %v9216
        %v9473 = vunpack.c.l.b16 %v9217
        %v9474 = vunpack.c.l.b16 %v9218
        %v9475 = vunpack.c.l.b16 %v9219
        %v9476 = vunpack.c.l.b16 %v9220
        %v9477 = vunpack.c.l.b16 %v9221
        %v9478 = vunpack.c.l.b16 %v9222
        %v9479 = vunpack.c.l.b16 %v9223
        %v9480 = vunpack.c.l.b16 %v9224
        %v9481 = vunpack.c.l.b16 %v9225
        %v9482 = vunpack.c.l.b16 %v9226
        %v9483 = vunpack.c.l.b16 %v9227
        %v9484 = vunpack.c.l.b16 %v9228
        %v9485 = vunpack.c.l.b16 %v9229
        %v9486 = vunpack.c.l.b16 %v9230
        %v9487 = vunpack.c.l.b16 %v9231
        %v9488 = vpack.c.b16 %v9449, %v9448
        %v9489 = vpack.c.b16 %v9451, %v9450
        %v9490 = vpack.c.b16 %v9453, %v9452
        %v9491 = vpack.c.b16 %v9455, %v9454
        %v9492 = vpack.c.b16 %v9457, %v9456
        %v9493 = vpack.c.b16 %v9459, %v9458
        %v9494 = vpack.c.b16 %v9461, %v9460
        %v9495 = vpack.c.b16 %v9463, %v9462
        %v9496 = vpack.c.b16 %v9465, %v9464
        %v9497 = vpack.c.b16 %v9467, %v9466
        %v9498 = vpack.c.b16 %v9469, %v9468
        %v9499 = vpack.c.b16 %v9471, %v9470
        %v9500 = vpack.c.b16 %v9473, %v9472
        %v9501 = vpack.c.b16 %v9475, %v9474
        %v9502 = vpack.c.b16 %v9477, %v9476
        %v9503 = vpack.c.b16 %v9479, %v9478
        %v9504 = vpack.c.b16 %v9481, %v9480
        %v9505 = vpack.c.b16 %v9483, %v9482
        %v9506 = vpack.c.b16 %v9485, %v9484
        %v9507 = vpack.c.b16 %v9487, %v9486
        %v9529 = vsel %vm794, %v9330, 0
        %v9532 = vsel %vm794, %v9333, 0
        %v9535 = vsel %vm794, %v9336, 0
        %v9538 = vsel %vm794, %v9339, 0
        %v9541 = vsel %vm794, %v9342, 0
        %v9544 = vsel %vm794, %v9345, 0
        %v9547 = vsel %vm794, %v9348, 0
        %v9550 = vsel %vm794, %v9351, 0
        %v9553 = vsel %vm794, %v9354, 0
        %v9556 = vsel %vm794, %v9357, 0
        %v9559 = vsel %vm794, %v9360, 0
        %v9562 = vsel %vm794, %v9363, 0
        %v9565 = vsel %vm794, %v9366, 0
        %v9568 = vsel %vm794, %v9369, 0
        %v9571 = vsel %vm794, %v9372, 0
        %v9574 = vsel %vm794, %v9375, 0
        %9576 = vmatprep.subr.bf16.mxu0 0
        %9577 = vmatpush1.bf16.msra.mxu0 %v9488
        %9578 = vmatprep.subr.bf16.mxu0 0
        %9579 = vmatpush1.bf16.msra.mxu0 %v9489
        %9580 = vmatprep.subr.bf16.mxu0 0
        %9581 = vmatpush1.bf16.msra.mxu0 %v9490
        %9582 = vmatprep.subr.bf16.mxu0 0
        %9583 = vmatpush1.bf16.msra.mxu0 %v9491
        %9584 = vmatprep.subr.bf16.mxu0 0
        %9585 = vmatpush1.bf16.msra.mxu0 %v9492
        %9586 = vmatprep.subr.bf16.mxu0 0
        %9587 = vmatpush1.bf16.msra.mxu0 %v9493
        %9588 = vmatprep.subr.bf16.mxu0 0
        %9589 = vmatpush1.bf16.msra.mxu0 %v9494
        %9590 = vmatprep.subr.bf16.mxu0 0
        %9591 = vmatpush1.bf16.msra.mxu0 %v9495
        %9592 = vmatprep.subr.bf16.mxu0 0
        %9593 = vmatpush1.bf16.msra.mxu0 %v9496
        %9594 = vmatprep.subr.bf16.mxu0 0
        %9595 = vmatpush1.bf16.msra.mxu0 %v9497
        %9596 = vmatprep.subr.bf16.mxu0 0
        %9597 = vmatpush1.bf16.msra.mxu0 %v9498
        %9598 = vmatprep.subr.bf16.mxu0 0
        %9599 = vmatpush1.bf16.msra.mxu0 %v9499
        %9600 = vmatprep.subr.bf16.mxu0 0
        %9601 = vmatpush1.bf16.msra.mxu0 %v9500
        %9602 = vmatprep.subr.bf16.mxu0 0
        %9603 = vmatpush1.bf16.msra.mxu0 %v9501
        %9604 = vmatprep.subr.bf16.mxu0 0
        %9605 = vmatpush1.bf16.msra.mxu0 %v9502
        %9606 = vmatprep.subr.bf16.mxu0 0
        %9607 = vmatpush1.bf16.msra.mxu0 %v9503
        %9608 = vmatprep.mubr.bf16.mxu0 %v9329
        %9609 = vmatmul.mubr.bf16.gmra.mrb[0].mxu0 %v9328
        %v9610 = vpop.f32.mrb[0].mxu0
        %v9611 = vadd.f32 0.0, %v9610
        %v9612 = vpop.f32.mrb[0].mxu0
        %v9613 = vpop.f32.mrb[0].mxu0
        %v9614 = vadd.f32 0.0, %v9613
        %v9615 = vpop.f32.mrb[0].mxu0
        %9616 = vmatprep.mubr.bf16.mxu0 %v9332
        %9617 = vmatmul.mubr.bf16.gmra.mrb[0].mxu0 %v9331
        %v9618 = vpop.f32.mrb[0].mxu0
        %v9619 = vadd.f32 0.0, %v9618
        %v9620 = vpop.f32.mrb[0].mxu0
        %v9621 = vpop.f32.mrb[0].mxu0
        %v9622 = vadd.f32 0.0, %v9621
        %v9623 = vpop.f32.mrb[0].mxu0
        %9624 = vmatprep.mubr.bf16.mxu0 %v9335
        %9625 = vmatmul.mubr.bf16.gmra.mrb[0].mxu0 %v9334
        %v9626 = vpop.f32.mrb[0].mxu0
        %v9627 = vadd.f32 0.0, %v9626
        %v9628 = vpop.f32.mrb[0].mxu0
        %v9629 = vpop.f32.mrb[0].mxu0
        %v9630 = vadd.f32 0.0, %v9629
        %v9631 = vpop.f32.mrb[0].mxu0
        %9632 = vmatprep.mubr.bf16.mxu0 %v9338
        %9633 = vmatmul.mubr.bf16.gmra.mrb[0].mxu0 %v9337
        %v9634 = vpop.f32.mrb[0].mxu0
        %v9635 = vadd.f32 0.0, %v9634
        %v9636 = vpop.f32.mrb[0].mxu0
        %v9637 = vpop.f32.mrb[0].mxu0
        %v9638 = vadd.f32 0.0, %v9637
        %v9639 = vpop.f32.mrb[0].mxu0
        %9640 = vmatprep.mubr.bf16.mxu0 %v9341
        %9641 = vmatmul.mubr.bf16.gmra.mrb[0].mxu0 %v9340
        %v9642 = vpop.f32.mrb[0].mxu0
        %v9643 = vadd.f32 0.0, %v9642
        %v9644 = vpop.f32.mrb[0].mxu0
        %v9645 = vpop.f32.mrb[0].mxu0
        %v9646 = vadd.f32 0.0, %v9645
        %v9647 = vpop.f32.mrb[0].mxu0
        %9648 = vmatprep.mubr.bf16.mxu0 %v9344
        %9649 = vmatmul.mubr.bf16.gmra.mrb[0].mxu0 %v9343
        %v9650 = vpop.f32.mrb[0].mxu0
        %v9651 = vadd.f32 0.0, %v9650
        %v9652 = vpop.f32.mrb[0].mxu0
        %v9653 = vpop.f32.mrb[0].mxu0
        %v9654 = vadd.f32 0.0, %v9653
        %v9655 = vpop.f32.mrb[0].mxu0
        %9656 = vmatprep.mubr.bf16.mxu0 %v9347
        %9657 = vmatmul.mubr.bf16.gmra.mrb[0].mxu0 %v9346
        %v9658 = vpop.f32.mrb[0].mxu0
        %v9659 = vadd.f32 0.0, %v9658
        %v9660 = vpop.f32.mrb[0].mxu0
        %v9661 = vpop.f32.mrb[0].mxu0
        %v9662 = vadd.f32 0.0, %v9661
        %v9663 = vpop.f32.mrb[0].mxu0
        %9664 = vmatprep.mubr.bf16.mxu0 %v9350
        %9665 = vmatmul.mubr.bf16.gmra.mrb[0].mxu0 %v9349
        %v9666 = vpop.f32.mrb[0].mxu0
        %v9667 = vadd.f32 0.0, %v9666
        %v9668 = vpop.f32.mrb[0].mxu0
        %v9669 = vpop.f32.mrb[0].mxu0
        %v9670 = vadd.f32 0.0, %v9669
        %v9671 = vpop.f32.mrb[0].mxu0
        %9672 = vmatprep.mubr.bf16.mxu0 %v9353
        %9673 = vmatmul.mubr.bf16.gmra.mrb[0].mxu0 %v9352
        %v9674 = vpop.f32.mrb[0].mxu0
        %v9675 = vadd.f32 0.0, %v9674
        %v9676 = vpop.f32.mrb[0].mxu0
        %v9677 = vpop.f32.mrb[0].mxu0
        %v9678 = vadd.f32 0.0, %v9677
        %v9679 = vpop.f32.mrb[0].mxu0
        %9680 = vmatprep.mubr.bf16.mxu0 %v9356
        %9681 = vmatmul.mubr.bf16.gmra.mrb[0].mxu0 %v9355
        %v9682 = vpop.f32.mrb[0].mxu0
        %v9683 = vadd.f32 0.0, %v9682
        %v9684 = vpop.f32.mrb[0].mxu0
        %v9685 = vpop.f32.mrb[0].mxu0
        %v9686 = vadd.f32 0.0, %v9685
        %v9687 = vpop.f32.mrb[0].mxu0
        %9688 = vmatprep.mubr.bf16.mxu0 %v9359
        %9689 = vmatmul.mubr.bf16.gmra.mrb[0].mxu0 %v9358
        %v9690 = vpop.f32.mrb[0].mxu0
        %v9691 = vadd.f32 0.0, %v9690
        %v9692 = vpop.f32.mrb[0].mxu0
        %v9693 = vpop.f32.mrb[0].mxu0
        %v9694 = vadd.f32 0.0, %v9693
        %v9695 = vpop.f32.mrb[0].mxu0
        %9696 = vmatprep.mubr.bf16.mxu0 %v9362
        %9697 = vmatmul.mubr.bf16.gmra.mrb[0].mxu0 %v9361
        %v9698 = vpop.f32.mrb[0].mxu0
        %v9699 = vadd.f32 0.0, %v9698
        %v9700 = vpop.f32.mrb[0].mxu0
        %v9701 = vpop.f32.mrb[0].mxu0
        %v9702 = vadd.f32 0.0, %v9701
        %v9703 = vpop.f32.mrb[0].mxu0
        %9704 = vmatprep.mubr.bf16.mxu0 %v9365
        %9705 = vmatmul.mubr.bf16.gmra.mrb[0].mxu0 %v9364
        %v9706 = vpop.f32.mrb[0].mxu0
        %v9707 = vadd.f32 0.0, %v9706
        %v9708 = vpop.f32.mrb[0].mxu0
        %v9709 = vpop.f32.mrb[0].mxu0
        %v9710 = vadd.f32 0.0, %v9709
        %v9711 = vpop.f32.mrb[0].mxu0
        %9712 = vmatprep.mubr.bf16.mxu0 %v9368
        %9713 = vmatmul.mubr.bf16.gmra.mrb[0].mxu0 %v9367
        %v9714 = vpop.f32.mrb[0].mxu0
        %v9715 = vadd.f32 0.0, %v9714
        %v9716 = vpop.f32.mrb[0].mxu0
        %v9717 = vpop.f32.mrb[0].mxu0
        %v9718 = vadd.f32 0.0, %v9717
        %v9719 = vpop.f32.mrb[0].mxu0
        %9720 = vmatprep.mubr.bf16.mxu0 %v9371
        %9721 = vmatmul.mubr.bf16.gmra.mrb[0].mxu0 %v9370
        %v9722 = vpop.f32.mrb[0].mxu0
        %v9723 = vadd.f32 0.0, %v9722
        %v9724 = vpop.f32.mrb[0].mxu0
        %v9725 = vpop.f32.mrb[0].mxu0
        %v9726 = vadd.f32 0.0, %v9725
        %v9727 = vpop.f32.mrb[0].mxu0
        %9728 = vmatprep.mubr.bf16.mxu0 %v9374
        %9729 = vmatmul.mubr.bf16.gmra.mrb[0].mxu0 %v9373
        %v9730 = vpop.f32.mrb[0].mxu0
        %v9731 = vadd.f32 0.0, %v9730
        %v9732 = vpop.f32.mrb[0].mxu0
        %v9733 = vpop.f32.mrb[0].mxu0
        %v9734 = vadd.f32 0.0, %v9733
        %v9735 = vpop.f32.mrb[0].mxu0
        %9736 = vdwg.mxu0
        %9737 = vmatprep.subr.bf16.mxu0 0
        %9738 = vmatpush1.bf16.msra.mxu0 %v9504
        %9739 = vmatprep.subr.bf16.mxu0 0
        %9740 = vmatpush1.bf16.msra.mxu0 %v9505
        %9741 = vmatprep.subr.bf16.mxu0 0
        %9742 = vmatpush1.bf16.msra.mxu0 %v9506
        %9743 = vmatprep.subr.bf16.mxu0 0
        %9744 = vmatpush1.bf16.msra.mxu0 %v9507
        %9745 = vmatprep.subr.bf16.mxu0 0
        %9746 = vmatpush1.bf16.msra.mxu0 0
        %9747 = vmatprep.subr.bf16.mxu0 0
        %9748 = vmatpush1.bf16.msra.mxu0 0
        %9749 = vmatprep.subr.bf16.mxu0 0
        %9750 = vmatpush1.bf16.msra.mxu0 0
        %9751 = vmatprep.subr.bf16.mxu0 0
        %9752 = vmatpush1.bf16.msra.mxu0 0
        %9753 = vmatprep.subr.bf16.mxu0 0
        %9754 = vmatpush1.bf16.msra.mxu0 0
        %9755 = vmatprep.subr.bf16.mxu0 0
        %9756 = vmatpush1.bf16.msra.mxu0 0
        %9757 = vmatprep.subr.bf16.mxu0 0
        %9758 = vmatpush1.bf16.msra.mxu0 0
        %9759 = vmatprep.subr.bf16.mxu0 0
        %9760 = vmatpush1.bf16.msra.mxu0 0
        %9761 = vmatprep.subr.bf16.mxu0 0
        %9762 = vmatpush1.bf16.msra.mxu0 0
        %9763 = vmatprep.subr.bf16.mxu0 0
        %9764 = vmatpush1.bf16.msra.mxu0 0
        %9765 = vmatprep.subr.bf16.mxu0 0
        %9766 = vmatpush1.bf16.msra.mxu0 0
        %9767 = vmatprep.subr.bf16.mxu0 0
        %9768 = vmatpush1.bf16.msra.mxu0 0
        %9769 = vmatprep.mubr.bf16.mxu0 0
        %9770 = vmatmul.mubr.bf16.gmra.mrb[0].mxu0 %v9529
        %v9771 = vpop.f32.mrb[0].mxu0
        %v9772 = vadd.f32 %v9611, %v9771
        %v9773 = vpop.f32.mrb[0].mxu0
        %v9774 = vpop.f32.mrb[0].mxu0
        %v9775 = vadd.f32 %v9614, %v9774
        %v9776 = vpop.f32.mrb[0].mxu0
        %9777 = vmatprep.mubr.bf16.mxu0 0
        %9778 = vmatmul.mubr.bf16.gmra.mrb[0].mxu0 %v9532
        %v9779 = vpop.f32.mrb[0].mxu0
        %v9780 = vadd.f32 %v9619, %v9779
        %v9781 = vpop.f32.mrb[0].mxu0
        %v9782 = vpop.f32.mrb[0].mxu0
        %v9783 = vadd.f32 %v9622, %v9782
        %v9784 = vpop.f32.mrb[0].mxu0
        %9785 = vmatprep.mubr.bf16.mxu0 0
        %9786 = vmatmul.mubr.bf16.gmra.mrb[0].mxu0 %v9535
        %v9787 = vpop.f32.mrb[0].mxu0
        %v9788 = vadd.f32 %v9627, %v9787
        %v9789 = vpop.f32.mrb[0].mxu0
        %v9790 = vpop.f32.mrb[0].mxu0
        %v9791 = vadd.f32 %v9630, %v9790
        %v9792 = vpop.f32.mrb[0].mxu0
        %9793 = vmatprep.mubr.bf16.mxu0 0
        %9794 = vmatmul.mubr.bf16.gmra.mrb[0].mxu0 %v9538
        %v9795 = vpop.f32.mrb[0].mxu0
        %v9796 = vadd.f32 %v9635, %v9795
        %v9797 = vpop.f32.mrb[0].mxu0
        %v9798 = vpop.f32.mrb[0].mxu0
        %v9799 = vadd.f32 %v9638, %v9798
        %v9800 = vpop.f32.mrb[0].mxu0
        %9801 = vmatprep.mubr.bf16.mxu0 0
        %9802 = vmatmul.mubr.bf16.gmra.mrb[0].mxu0 %v9541
        %v9803 = vpop.f32.mrb[0].mxu0
        %v9804 = vadd.f32 %v9643, %v9803
        %v9805 = vpop.f32.mrb[0].mxu0
        %v9806 = vpop.f32.mrb[0].mxu0
        %v9807 = vadd.f32 %v9646, %v9806
        %v9808 = vpop.f32.mrb[0].mxu0
        %9809 = vmatprep.mubr.bf16.mxu0 0
        %9810 = vmatmul.mubr.bf16.gmra.mrb[0].mxu0 %v9544
        %v9811 = vpop.f32.mrb[0].mxu0
        %v9812 = vadd.f32 %v9651, %v9811
        %v9813 = vpop.f32.mrb[0].mxu0
        %v9814 = vpop.f32.mrb[0].mxu0
        %v9815 = vadd.f32 %v9654, %v9814
        %v9816 = vpop.f32.mrb[0].mxu0
        %9817 = vmatprep.mubr.bf16.mxu0 0
        %9818 = vmatmul.mubr.bf16.gmra.mrb[0].mxu0 %v9547
        %v9819 = vpop.f32.mrb[0].mxu0
        %v9820 = vadd.f32 %v9659, %v9819
        %v9821 = vpop.f32.mrb[0].mxu0
        %v9822 = vpop.f32.mrb[0].mxu0
        %v9823 = vadd.f32 %v9662, %v9822
        %v9824 = vpop.f32.mrb[0].mxu0
        %9825 = vmatprep.mubr.bf16.mxu0 0
        %9826 = vmatmul.mubr.bf16.gmra.mrb[0].mxu0 %v9550
        %v9827 = vpop.f32.mrb[0].mxu0
        %v9828 = vadd.f32 %v9667, %v9827
        %v9829 = vpop.f32.mrb[0].mxu0
        %v9830 = vpop.f32.mrb[0].mxu0
        %v9831 = vadd.f32 %v9670, %v9830
        %v9832 = vpop.f32.mrb[0].mxu0
        %9833 = vmatprep.mubr.bf16.mxu0 0
        %9834 = vmatmul.mubr.bf16.gmra.mrb[0].mxu0 %v9553
        %v9835 = vpop.f32.mrb[0].mxu0
        %v9836 = vadd.f32 %v9675, %v9835
        %v9837 = vpop.f32.mrb[0].mxu0
        %v9838 = vpop.f32.mrb[0].mxu0
        %v9839 = vadd.f32 %v9678, %v9838
        %v9840 = vpop.f32.mrb[0].mxu0
        %9841 = vmatprep.mubr.bf16.mxu0 0
        %9842 = vmatmul.mubr.bf16.gmra.mrb[0].mxu0 %v9556
        %v9843 = vpop.f32.mrb[0].mxu0
        %v9844 = vadd.f32 %v9683, %v9843
        %v9845 = vpop.f32.mrb[0].mxu0
        %v9846 = vpop.f32.mrb[0].mxu0
        %v9847 = vadd.f32 %v9686, %v9846
        %v9848 = vpop.f32.mrb[0].mxu0
        %9849 = vmatprep.mubr.bf16.mxu0 0
        %9850 = vmatmul.mubr.bf16.gmra.mrb[0].mxu0 %v9559
        %v9851 = vpop.f32.mrb[0].mxu0
        %v9852 = vadd.f32 %v9691, %v9851
        %v9853 = vpop.f32.mrb[0].mxu0
        %v9854 = vpop.f32.mrb[0].mxu0
        %v9855 = vadd.f32 %v9694, %v9854
        %v9856 = vpop.f32.mrb[0].mxu0
        %9857 = vmatprep.mubr.bf16.mxu0 0
        %9858 = vmatmul.mubr.bf16.gmra.mrb[0].mxu0 %v9562
        %v9859 = vpop.f32.mrb[0].mxu0
        %v9860 = vadd.f32 %v9699, %v9859
        %v9861 = vpop.f32.mrb[0].mxu0
        %v9862 = vpop.f32.mrb[0].mxu0
        %v9863 = vadd.f32 %v9702, %v9862
        %v9864 = vpop.f32.mrb[0].mxu0
        %9865 = vmatprep.mubr.bf16.mxu0 0
        %9866 = vmatmul.mubr.bf16.gmra.mrb[0].mxu0 %v9565
        %v9867 = vpop.f32.mrb[0].mxu0
        %v9868 = vadd.f32 %v9707, %v9867
        %v9869 = vpop.f32.mrb[0].mxu0
        %v9870 = vpop.f32.mrb[0].mxu0
        %v9871 = vadd.f32 %v9710, %v9870
        %v9872 = vpop.f32.mrb[0].mxu0
        %9873 = vmatprep.mubr.bf16.mxu0 0
        %9874 = vmatmul.mubr.bf16.gmra.mrb[0].mxu0 %v9568
        %v9875 = vpop.f32.mrb[0].mxu0
        %v9876 = vadd.f32 %v9715, %v9875
        %v9877 = vpop.f32.mrb[0].mxu0
        %v9878 = vpop.f32.mrb[0].mxu0
        %v9879 = vadd.f32 %v9718, %v9878
        %v9880 = vpop.f32.mrb[0].mxu0
        %9881 = vmatprep.mubr.bf16.mxu0 0
        %9882 = vmatmul.mubr.bf16.gmra.mrb[0].mxu0 %v9571
        %v9883 = vpop.f32.mrb[0].mxu0
        %v9884 = vadd.f32 %v9723, %v9883
        %v9885 = vpop.f32.mrb[0].mxu0
        %v9886 = vpop.f32.mrb[0].mxu0
        %v9887 = vadd.f32 %v9726, %v9886
        %v9888 = vpop.f32.mrb[0].mxu0
        %9889 = vmatprep.mubr.bf16.mxu0 0
        %9890 = vmatmul.mubr.bf16.gmra.mrb[0].mxu0 %v9574
        %v9891 = vpop.f32.mrb[0].mxu0
        %v9892 = vadd.f32 %v9731, %v9891
        %v9893 = vpop.f32.mrb[0].mxu0
        %v9894 = vpop.f32.mrb[0].mxu0
        %v9895 = vadd.f32 %v9734, %v9894
        %v9896 = vpop.f32.mrb[0].mxu0
        %9897 = vdwg.mxu0
        %v9898 = vadd.f32 %v8295, %v9772
        %v9899 = vadd.f32 %v8296, %v9775
        %v9900 = vadd.f32 %v8297, %v9780
        %v9901 = vadd.f32 %v8298, %v9783
        %v9902 = vadd.f32 %v8299, %v9788
        %v9903 = vadd.f32 %v8300, %v9791
        %v9904 = vadd.f32 %v8301, %v9796
        %v9905 = vadd.f32 %v8302, %v9799
        %v9906 = vadd.f32 %v8303, %v9804
        %v9907 = vadd.f32 %v8304, %v9807
        %v9908 = vadd.f32 %v8305, %v9812
        %v9909 = vadd.f32 %v8306, %v9815
        %v9910 = vadd.f32 %v8307, %v9820
        %v9911 = vadd.f32 %v8308, %v9823
        %v9912 = vadd.f32 %v8309, %v9828
        %v9913 = vadd.f32 %v8310, %v9831
        %v9914 = vadd.f32 %v8311, %v9836
        %v9915 = vadd.f32 %v8312, %v9839
        %v9916 = vadd.f32 %v8313, %v9844
        %v9917 = vadd.f32 %v8314, %v9847
        %v9918 = vadd.f32 %v8315, %v9852
        %v9919 = vadd.f32 %v8316, %v9855
        %v9920 = vadd.f32 %v8317, %v9860
        %v9921 = vadd.f32 %v8318, %v9863
        %v9922 = vadd.f32 %v8319, %v9868
        %v9923 = vadd.f32 %v8320, %v9871
        %v9924 = vadd.f32 %v8321, %v9876
        %v9925 = vadd.f32 %v8322, %v9879
        %v9926 = vadd.f32 %v8323, %v9884
        %v9927 = vadd.f32 %v8324, %v9887
        %v9928 = vadd.f32 %v8325, %v9892
        %v9929 = vadd.f32 %v8326, %v9895
        %v9930 = vld [vmem:[%s7459] sm:$0xee]
        %v9931 = vld [vmem:[%s7459 + $0x8] sm:$0xe]
        %v9932 = vld [vmem:[%s7459 + $0x24] sm:$0xee]
        %v9933 = vld [vmem:[%s7459 + $0x2c] sm:$0xe]
        %v9934 = vld [vmem:[%s7459 + $0x48] sm:$0xee]
        %v9935 = vld [vmem:[%s7459 + $0x50] sm:$0xe]
        %v9936 = vld [vmem:[%s7459 + $0x6c] sm:$0xee]
        %v9937 = vld [vmem:[%s7459 + $0x74] sm:$0xe]
        %v9938 = vld [vmem:[%s7459 + $0x90] sm:$0xee]
        %v9939 = vld [vmem:[%s7459 + $0x98] sm:$0xe]
        %v9940 = vld [vmem:[%s7459 + $0xb4] sm:$0xee]
        %v9941 = vld [vmem:[%s7459 + $0xbc] sm:$0xe]
        %v9942 = vld [vmem:[%s7459 + $0xd8] sm:$0xee]
        %v9943 = vld [vmem:[%s7459 + $0xe0] sm:$0xe]
        %v9944 = vld [vmem:[%s7459 + $0xfc] sm:$0xee]
        %v9945 = vld [vmem:[%s7459 + $0x104] sm:$0xe]
        %v9946 = vld [vmem:[%s7459 + $0x120] sm:$0xee]
        %v9947 = vld [vmem:[%s7459 + $0x128] sm:$0xe]
        %v9948 = vld [vmem:[%s7459 + $0x144] sm:$0xee]
        %v9949 = vld [vmem:[%s7459 + $0x14c] sm:$0xe]
        %v9950 = vld [vmem:[%s7459 + $0x168] sm:$0xee]
        %v9951 = vld [vmem:[%s7459 + $0x170] sm:$0xe]
        %v9952 = vld [vmem:[%s7459 + $0x18c] sm:$0xee]
        %v9953 = vld [vmem:[%s7459 + $0x194] sm:$0xe]
        %v9954 = vld [vmem:[%s7459 + $0x1b0] sm:$0xee]
        %v9955 = vld [vmem:[%s7459 + $0x1b8] sm:$0xe]
        %v9956 = vld [vmem:[%s7459 + $0x1d4] sm:$0xee]
        %v9957 = vld [vmem:[%s7459 + $0x1dc] sm:$0xe]
        %v9958 = vld [vmem:[%s7459 + $0x1f8] sm:$0xee]
        %v9959 = vld [vmem:[%s7459 + $0x200] sm:$0xe]
        %v9960 = vld [vmem:[%s7459 + $0x21c] sm:$0xee]
        %v9961 = vld [vmem:[%s7459 + $0x224] sm:$0xe]
        %v10058 = vrot.slane %v9930, 5
        %v10059 = vrot.slane %v10058, 4
        %v10060 = vrot.slane %v8329, 5
        %v10061 = vsel %vm2933, %v10059, %v10060
        %v10062 = vrot.slane %v9931, 5
        %v10063 = vrot.slane %v10062, 4
        %v10064 = vrot.slane %v8330, 5
        %v10065 = vsel %vm2933, %v10063, %v10064
        %v10066 = vrot.slane %v10060, 4
        %v10067 = vrot.slane %v8331, 5
        %v10068 = vsel %vm2933, %v10066, %v10067
        %v10069 = vrot.slane %v10064, 4
        %v10070 = vrot.slane %v8332, 5
        %v10071 = vsel %vm2933, %v10069, %v10070
        %v10072 = vrot.slane %v9932, 5
        %v10073 = vrot.slane %v10072, 4
        %v10074 = vrot.slane %v8335, 5
        %v10075 = vsel %vm2933, %v10073, %v10074
        %v10076 = vrot.slane %v9933, 5
        %v10077 = vrot.slane %v10076, 4
        %v10078 = vrot.slane %v8336, 5
        %v10079 = vsel %vm2933, %v10077, %v10078
        %v10080 = vrot.slane %v10074, 4
        %v10081 = vrot.slane %v8337, 5
        %v10082 = vsel %vm2933, %v10080, %v10081
        %v10083 = vrot.slane %v10078, 4
        %v10084 = vrot.slane %v8338, 5
        %v10085 = vsel %vm2933, %v10083, %v10084
        %v10086 = vrot.slane %v9934, 5
        %v10087 = vrot.slane %v10086, 4
        %v10088 = vrot.slane %v8341, 5
        %v10089 = vsel %vm2933, %v10087, %v10088
        %v10090 = vrot.slane %v9935, 5
        %v10091 = vrot.slane %v10090, 4
        %v10092 = vrot.slane %v8342, 5
        %v10093 = vsel %vm2933, %v10091, %v10092
        %v10094 = vrot.slane %v10088, 4
        %v10095 = vrot.slane %v8343, 5
        %v10096 = vsel %vm2933, %v10094, %v10095
        %v10097 = vrot.slane %v10092, 4
        %v10098 = vrot.slane %v8344, 5
        %v10099 = vsel %vm2933, %v10097, %v10098
        %v10100 = vrot.slane %v9936, 5
        %v10101 = vrot.slane %v10100, 4
        %v10102 = vrot.slane %v8347, 5
        %v10103 = vsel %vm2933, %v10101, %v10102
        %v10104 = vrot.slane %v9937, 5
        %v10105 = vrot.slane %v10104, 4
        %v10106 = vrot.slane %v8348, 5
        %v10107 = vsel %vm2933, %v10105, %v10106
        %v10108 = vrot.slane %v10102, 4
        %v10109 = vrot.slane %v8349, 5
        %v10110 = vsel %vm2933, %v10108, %v10109
        %v10111 = vrot.slane %v10106, 4
        %v10112 = vrot.slane %v8350, 5
        %v10113 = vsel %vm2933, %v10111, %v10112
        %v10114 = vrot.slane %v9938, 5
        %v10115 = vrot.slane %v10114, 4
        %v10116 = vrot.slane %v8353, 5
        %v10117 = vsel %vm2933, %v10115, %v10116
        %v10118 = vrot.slane %v9939, 5
        %v10119 = vrot.slane %v10118, 4
        %v10120 = vrot.slane %v8354, 5
        %v10121 = vsel %vm2933, %v10119, %v10120
        %v10122 = vrot.slane %v10116, 4
        %v10123 = vrot.slane %v8355, 5
        %v10124 = vsel %vm2933, %v10122, %v10123
        %v10125 = vrot.slane %v10120, 4
        %v10126 = vrot.slane %v8356, 5
        %v10127 = vsel %vm2933, %v10125, %v10126
        %v10128 = vrot.slane %v9940, 5
        %v10129 = vrot.slane %v10128, 4
        %v10130 = vrot.slane %v8359, 5
        %v10131 = vsel %vm2933, %v10129, %v10130
        %v10132 = vrot.slane %v9941, 5
        %v10133 = vrot.slane %v10132, 4
        %v10134 = vrot.slane %v8360, 5
        %v10135 = vsel %vm2933, %v10133, %v10134
        %v10136 = vrot.slane %v10130, 4
        %v10137 = vrot.slane %v8361, 5
        %v10138 = vsel %vm2933, %v10136, %v10137
        %v10139 = vrot.slane %v10134, 4
        %v10140 = vrot.slane %v8362, 5
        %v10141 = vsel %vm2933, %v10139, %v10140
        %v10142 = vrot.slane %v9942, 5
        %v10143 = vrot.slane %v10142, 4
        %v10144 = vrot.slane %v8365, 5
        %v10145 = vsel %vm2933, %v10143, %v10144
        %v10146 = vrot.slane %v9943, 5
        %v10147 = vrot.slane %v10146, 4
        %v10148 = vrot.slane %v8366, 5
        %v10149 = vsel %vm2933, %v10147, %v10148
        %v10150 = vrot.slane %v10144, 4
        %v10151 = vrot.slane %v8367, 5
        %v10152 = vsel %vm2933, %v10150, %v10151
        %v10153 = vrot.slane %v10148, 4
        %v10154 = vrot.slane %v8368, 5
        %v10155 = vsel %vm2933, %v10153, %v10154
        %v10156 = vrot.slane %v9944, 5
        %v10157 = vrot.slane %v10156, 4
        %v10158 = vrot.slane %v8371, 5
        %v10159 = vsel %vm2933, %v10157, %v10158
        %v10160 = vrot.slane %v9945, 5
        %v10161 = vrot.slane %v10160, 4
        %v10162 = vrot.slane %v8372, 5
        %v10163 = vsel %vm2933, %v10161, %v10162
        %v10164 = vrot.slane %v10158, 4
        %v10165 = vrot.slane %v8373, 5
        %v10166 = vsel %vm2933, %v10164, %v10165
        %v10167 = vrot.slane %v10162, 4
        %v10168 = vrot.slane %v8374, 5
        %v10169 = vsel %vm2933, %v10167, %v10168
        %v10170 = vrot.slane %v9946, 5
        %v10171 = vrot.slane %v10170, 4
        %v10172 = vrot.slane %v8377, 5
        %v10173 = vsel %vm2933, %v10171, %v10172
        %v10174 = vrot.slane %v9947, 5
        %v10175 = vrot.slane %v10174, 4
        %v10176 = vrot.slane %v8378, 5
        %v10177 = vsel %vm2933, %v10175, %v10176
        %v10178 = vrot.slane %v10172, 4
        %v10179 = vrot.slane %v8379, 5
        %v10180 = vsel %vm2933, %v10178, %v10179
        %v10181 = vrot.slane %v10176, 4
        %v10182 = vrot.slane %v8380, 5
        %v10183 = vsel %vm2933, %v10181, %v10182
        %v10184 = vrot.slane %v9948, 5
        %v10185 = vrot.slane %v10184, 4
        %v10186 = vrot.slane %v8383, 5
        %v10187 = vsel %vm2933, %v10185, %v10186
        %v10188 = vrot.slane %v9949, 5
        %v10189 = vrot.slane %v10188, 4
        %v10190 = vrot.slane %v8384, 5
        %v10191 = vsel %vm2933, %v10189, %v10190
        %v10192 = vrot.slane %v10186, 4
        %v10193 = vrot.slane %v8385, 5
        %v10194 = vsel %vm2933, %v10192, %v10193
        %v10195 = vrot.slane %v10190, 4
        %v10196 = vrot.slane %v8386, 5
        %v10197 = vsel %vm2933, %v10195, %v10196
        %v10198 = vrot.slane %v9950, 5
        %v10199 = vrot.slane %v10198, 4
        %v10200 = vrot.slane %v8389, 5
        %v10201 = vsel %vm2933, %v10199, %v10200
        %v10202 = vrot.slane %v9951, 5
        %v10203 = vrot.slane %v10202, 4
        %v10204 = vrot.slane %v8390, 5
        %v10205 = vsel %vm2933, %v10203, %v10204
        %v10206 = vrot.slane %v10200, 4
        %v10207 = vrot.slane %v8391, 5
        %v10208 = vsel %vm2933, %v10206, %v10207
        %v10209 = vrot.slane %v10204, 4
        %v10210 = vrot.slane %v8392, 5
        %v10211 = vsel %vm2933, %v10209, %v10210
        %v10212 = vrot.slane %v9952, 5
        %v10213 = vrot.slane %v10212, 4
        %v10214 = vrot.slane %v8395, 5
        %v10215 = vsel %vm2933, %v10213, %v10214
        %v10216 = vrot.slane %v9953, 5
        %v10217 = vrot.slane %v10216, 4
        %v10218 = vrot.slane %v8396, 5
        %v10219 = vsel %vm2933, %v10217, %v10218
        %v10220 = vrot.slane %v10214, 4
        %v10221 = vrot.slane %v8397, 5
        %v10222 = vsel %vm2933, %v10220, %v10221
        %v10223 = vrot.slane %v10218, 4
        %v10224 = vrot.slane %v8398, 5
        %v10225 = vsel %vm2933, %v10223, %v10224
        %v10226 = vrot.slane %v9954, 5
        %v10227 = vrot.slane %v10226, 4
        %v10228 = vrot.slane %v8401, 5
        %v10229 = vsel %vm2933, %v10227, %v10228
        %v10230 = vrot.slane %v9955, 5
        %v10231 = vrot.slane %v10230, 4
        %v10232 = vrot.slane %v8402, 5
        %v10233 = vsel %vm2933, %v10231, %v10232
        %v10234 = vrot.slane %v10228, 4
        %v10235 = vrot.slane %v8403, 5
        %v10236 = vsel %vm2933, %v10234, %v10235
        %v10237 = vrot.slane %v10232, 4
        %v10238 = vrot.slane %v8404, 5
        %v10239 = vsel %vm2933, %v10237, %v10238
        %v10240 = vrot.slane %v9956, 5
        %v10241 = vrot.slane %v10240, 4
        %v10242 = vrot.slane %v8407, 5
        %v10243 = vsel %vm2933, %v10241, %v10242
        %v10244 = vrot.slane %v9957, 5
        %v10245 = vrot.slane %v10244, 4
        %v10246 = vrot.slane %v8408, 5
        %v10247 = vsel %vm2933, %v10245, %v10246
        %v10248 = vrot.slane %v10242, 4
        %v10249 = vrot.slane %v8409, 5
        %v10250 = vsel %vm2933, %v10248, %v10249
        %v10251 = vrot.slane %v10246, 4
        %v10252 = vrot.slane %v8410, 5
        %v10253 = vsel %vm2933, %v10251, %v10252
        %v10254 = vrot.slane %v9958, 5
        %v10255 = vrot.slane %v10254, 4
        %v10256 = vrot.slane %v8413, 5
        %v10257 = vsel %vm2933, %v10255, %v10256
        %v10258 = vrot.slane %v9959, 5
        %v10259 = vrot.slane %v10258, 4
        %v10260 = vrot.slane %v8414, 5
        %v10261 = vsel %vm2933, %v10259, %v10260
        %v10262 = vrot.slane %v10256, 4
        %v10263 = vrot.slane %v8415, 5
        %v10264 = vsel %vm2933, %v10262, %v10263
        %v10265 = vrot.slane %v10260, 4
        %v10266 = vrot.slane %v8416, 5
        %v10267 = vsel %vm2933, %v10265, %v10266
        %v10268 = vrot.slane %v9960, 5
        %v10269 = vrot.slane %v10268, 4
        %v10270 = vrot.slane %v8419, 5
        %v10271 = vsel %vm2933, %v10269, %v10270
        %v10272 = vrot.slane %v9961, 5
        %v10273 = vrot.slane %v10272, 4
        %v10274 = vrot.slane %v8420, 5
        %v10275 = vsel %vm2933, %v10273, %v10274
        %v10276 = vrot.slane %v10270, 4
        %v10277 = vrot.slane %v8421, 5
        %v10278 = vsel %vm2933, %v10276, %v10277
        %v10279 = vrot.slane %v10274, 4
        %v10280 = vrot.slane %v8422, 5
        %v10281 = vsel %vm2933, %v10279, %v10280
        %s10282 = scalar_lea.vmem %s248, 1280
        %v10283 = vld [vmem:[%s10282] sm:$0xf]
        %v10284 = vld [vmem:[%s10282 + $0x4] sm:$0xf]
        %v10285 = vld [vmem:[%s10282 + $0x8] sm:$0xf]
        %v10286 = vld [vmem:[%s10282 + $0xc] sm:$0xf]
        %v10287 = vld [vmem:[%s10282 + $0x10] sm:$0xf]
        %v10288 = vld [vmem:[%s10282 + $0x14] sm:$0xf]
        %v10289 = vld [vmem:[%s10282 + $0x18] sm:$0xf]
        %v10290 = vld [vmem:[%s10282 + $0x1c] sm:$0xf]
        %v10291 = vld [vmem:[%s10282 + $0x20] sm:$0xf]
        %v10292 = vld [vmem:[%s10282 + $0x24] sm:$0xf]
        %v10293 = vld [vmem:[%s10282 + $0x28] sm:$0xf]
        %v10294 = vld [vmem:[%s10282 + $0x2c] sm:$0xf]
        %v10295 = vld [vmem:[%s10282 + $0x30] sm:$0xf]
        %v10296 = vld [vmem:[%s10282 + $0x34] sm:$0xf]
        %v10297 = vld [vmem:[%s10282 + $0x38] sm:$0xf]
        %v10298 = vld [vmem:[%s10282 + $0x3c] sm:$0xf]
        %v10299 = vld [vmem:[%s10282 + $0x40] sm:$0xf]
        %v10300 = vld [vmem:[%s10282 + $0x44] sm:$0xf]
        %v10301 = vld [vmem:[%s10282 + $0x48] sm:$0xf]
        %v10302 = vld [vmem:[%s10282 + $0x4c] sm:$0xf]
        %v10303 = vld [vmem:[%s10282 + $0x50] sm:$0xf]
        %v10304 = vld [vmem:[%s10282 + $0x54] sm:$0xf]
        %v10305 = vld [vmem:[%s10282 + $0x58] sm:$0xf]
        %v10306 = vld [vmem:[%s10282 + $0x5c] sm:$0xf]
        %v10307 = vld [vmem:[%s10282 + $0x60] sm:$0xf]
        %v10308 = vld [vmem:[%s10282 + $0x64] sm:$0xf]
        %v10309 = vld [vmem:[%s10282 + $0x68] sm:$0xf]
        %v10310 = vld [vmem:[%s10282 + $0x6c] sm:$0xf]
        %v10311 = vld [vmem:[%s10282 + $0x70] sm:$0xf]
        %v10312 = vld [vmem:[%s10282 + $0x74] sm:$0xf]
        %v10313 = vld [vmem:[%s10282 + $0x78] sm:$0xf]
        %v10314 = vld [vmem:[%s10282 + $0x7c] sm:$0xf]
        %v10315 = vld [vmem:[%s10282 + $0x80] sm:$0xf]
        %v10316 = vld [vmem:[%s10282 + $0x84] sm:$0xf]
        %v10317 = vld [vmem:[%s10282 + $0x88] sm:$0xf]
        %v10318 = vld [vmem:[%s10282 + $0x8c] sm:$0xf]
        %v10319 = vld [vmem:[%s10282 + $0x90] sm:$0xf]
        %v10320 = vld [vmem:[%s10282 + $0x94] sm:$0xf]
        %v10321 = vld [vmem:[%s10282 + $0x98] sm:$0xf]
        %v10322 = vld [vmem:[%s10282 + $0x9c] sm:$0xf]
        %v10323 = vunpack.c.l.b16 %v10061
        %v10324 = vunpack.c.h.b16 %v10061
        %v10325 = vunpack.c.l.b16 %v10065
        %v10326 = vunpack.c.l.b16 %v10068
        %v10327 = vunpack.c.h.b16 %v10068
        %v10328 = vunpack.c.l.b16 %v10071
        %v10329 = vunpack.c.l.b16 %v10075
        %v10330 = vunpack.c.h.b16 %v10075
        %v10331 = vunpack.c.l.b16 %v10079
        %v10332 = vunpack.c.l.b16 %v10082
        %v10333 = vunpack.c.h.b16 %v10082
        %v10334 = vunpack.c.l.b16 %v10085
        %v10335 = vunpack.c.l.b16 %v10089
        %v10336 = vunpack.c.h.b16 %v10089
        %v10337 = vunpack.c.l.b16 %v10093
        %v10338 = vunpack.c.l.b16 %v10096
        %v10339 = vunpack.c.h.b16 %v10096
        %v10340 = vunpack.c.l.b16 %v10099
        %v10341 = vunpack.c.l.b16 %v10103
        %v10342 = vunpack.c.h.b16 %v10103
        %v10343 = vunpack.c.l.b16 %v10107
        %v10344 = vunpack.c.l.b16 %v10110
        %v10345 = vunpack.c.h.b16 %v10110
        %v10346 = vunpack.c.l.b16 %v10113
        %v10347 = vunpack.c.l.b16 %v10117
        %v10348 = vunpack.c.h.b16 %v10117
        %v10349 = vunpack.c.l.b16 %v10121
        %v10350 = vunpack.c.l.b16 %v10124
        %v10351 = vunpack.c.h.b16 %v10124
        %v10352 = vunpack.c.l.b16 %v10127
        %v10353 = vunpack.c.l.b16 %v10131
        %v10354 = vunpack.c.h.b16 %v10131
        %v10355 = vunpack.c.l.b16 %v10135
        %v10356 = vunpack.c.l.b16 %v10138
        %v10357 = vunpack.c.h.b16 %v10138
        %v10358 = vunpack.c.l.b16 %v10141
        %v10359 = vunpack.c.l.b16 %v10145
        %v10360 = vunpack.c.h.b16 %v10145
        %v10361 = vunpack.c.l.b16 %v10149
        %v10362 = vunpack.c.l.b16 %v10152
        %v10363 = vunpack.c.h.b16 %v10152
        %v10364 = vunpack.c.l.b16 %v10155
        %v10365 = vunpack.c.l.b16 %v10159
        %v10366 = vunpack.c.h.b16 %v10159
        %v10367 = vunpack.c.l.b16 %v10163
        %v10368 = vunpack.c.l.b16 %v10166
        %v10369 = vunpack.c.h.b16 %v10166
        %v10370 = vunpack.c.l.b16 %v10169
        %v10371 = vunpack.c.l.b16 %v10173
        %v10372 = vunpack.c.h.b16 %v10173
        %v10373 = vunpack.c.l.b16 %v10177
        %v10374 = vunpack.c.l.b16 %v10180
        %v10375 = vunpack.c.h.b16 %v10180
        %v10376 = vunpack.c.l.b16 %v10183
        %v10377 = vunpack.c.l.b16 %v10187
        %v10378 = vunpack.c.h.b16 %v10187
        %v10379 = vunpack.c.l.b16 %v10191
        %v10380 = vunpack.c.l.b16 %v10194
        %v10381 = vunpack.c.h.b16 %v10194
        %v10382 = vunpack.c.l.b16 %v10197
        %v10383 = vunpack.c.l.b16 %v10201
        %v10384 = vunpack.c.h.b16 %v10201
        %v10385 = vunpack.c.l.b16 %v10205
        %v10386 = vunpack.c.l.b16 %v10208
        %v10387 = vunpack.c.h.b16 %v10208
        %v10388 = vunpack.c.l.b16 %v10211
        %v10389 = vunpack.c.l.b16 %v10215
        %v10390 = vunpack.c.h.b16 %v10215
        %v10391 = vunpack.c.l.b16 %v10219
        %v10392 = vunpack.c.l.b16 %v10222
        %v10393 = vunpack.c.h.b16 %v10222
        %v10394 = vunpack.c.l.b16 %v10225
        %v10395 = vunpack.c.l.b16 %v10229
        %v10396 = vunpack.c.h.b16 %v10229
        %v10397 = vunpack.c.l.b16 %v10233
        %v10398 = vunpack.c.l.b16 %v10236
        %v10399 = vunpack.c.h.b16 %v10236
        %v10400 = vunpack.c.l.b16 %v10239
        %v10401 = vunpack.c.l.b16 %v10243
        %v10402 = vunpack.c.h.b16 %v10243
        %v10403 = vunpack.c.l.b16 %v10247
        %v10404 = vunpack.c.l.b16 %v10250
        %v10405 = vunpack.c.h.b16 %v10250
        %v10406 = vunpack.c.l.b16 %v10253
        %v10407 = vunpack.c.l.b16 %v10257
        %v10408 = vunpack.c.h.b16 %v10257
        %v10409 = vunpack.c.l.b16 %v10261
        %v10410 = vunpack.c.l.b16 %v10264
        %v10411 = vunpack.c.h.b16 %v10264
        %v10412 = vunpack.c.l.b16 %v10267
        %v10413 = vunpack.c.l.b16 %v10271
        %v10414 = vunpack.c.h.b16 %v10271
        %v10415 = vunpack.c.l.b16 %v10275
        %v10416 = vunpack.c.l.b16 %v10278
        %v10417 = vunpack.c.h.b16 %v10278
        %v10418 = vunpack.c.l.b16 %v10281
        %v10419 = vpack.c.b16 %v10326, %v10323
        %v10420 = vpack.c.b16 %v10327, %v10324
        %v10421 = vpack.c.b16 %v10328, %v10325
        %v10422 = vpack.c.b16 %v10332, %v10329
        %v10423 = vpack.c.b16 %v10333, %v10330
        %v10424 = vpack.c.b16 %v10334, %v10331
        %v10425 = vpack.c.b16 %v10338, %v10335
        %v10426 = vpack.c.b16 %v10339, %v10336
        %v10427 = vpack.c.b16 %v10340, %v10337
        %v10428 = vpack.c.b16 %v10344, %v10341
        %v10429 = vpack.c.b16 %v10345, %v10342
        %v10430 = vpack.c.b16 %v10346, %v10343
        %v10431 = vpack.c.b16 %v10350, %v10347
        %v10432 = vpack.c.b16 %v10351, %v10348
        %v10433 = vpack.c.b16 %v10352, %v10349
        %v10434 = vpack.c.b16 %v10356, %v10353
        %v10435 = vpack.c.b16 %v10357, %v10354
        %v10436 = vpack.c.b16 %v10358, %v10355
        %v10437 = vpack.c.b16 %v10362, %v10359
        %v10438 = vpack.c.b16 %v10363, %v10360
        %v10439 = vpack.c.b16 %v10364, %v10361
        %v10440 = vpack.c.b16 %v10368, %v10365
        %v10441 = vpack.c.b16 %v10369, %v10366
        %v10442 = vpack.c.b16 %v10370, %v10367
        %v10443 = vpack.c.b16 %v10374, %v10371
        %v10444 = vpack.c.b16 %v10375, %v10372
        %v10445 = vpack.c.b16 %v10376, %v10373
        %v10446 = vpack.c.b16 %v10380, %v10377
        %v10447 = vpack.c.b16 %v10381, %v10378
        %v10448 = vpack.c.b16 %v10382, %v10379
        %v10449 = vpack.c.b16 %v10386, %v10383
        %v10450 = vpack.c.b16 %v10387, %v10384
        %v10451 = vpack.c.b16 %v10388, %v10385
        %v10452 = vpack.c.b16 %v10392, %v10389
        %v10453 = vpack.c.b16 %v10393, %v10390
        %v10454 = vpack.c.b16 %v10394, %v10391
        %v10455 = vpack.c.b16 %v10398, %v10395
        %v10456 = vpack.c.b16 %v10399, %v10396
        %v10457 = vpack.c.b16 %v10400, %v10397
        %v10458 = vpack.c.b16 %v10404, %v10401
        %v10459 = vpack.c.b16 %v10405, %v10402
        %v10460 = vpack.c.b16 %v10406, %v10403
        %v10461 = vpack.c.b16 %v10410, %v10407
        %v10462 = vpack.c.b16 %v10411, %v10408
        %v10463 = vpack.c.b16 %v10412, %v10409
        %v10464 = vpack.c.b16 %v10416, %v10413
        %v10465 = vpack.c.b16 %v10417, %v10414
        %v10466 = vpack.c.b16 %v10418, %v10415
        %v10539 = vunpack.c.l.b16 %v10283
        %v10540 = vunpack.c.l.b16 %v10284
        %v10541 = vunpack.c.l.b16 %v10285
        %v10542 = vunpack.c.l.b16 %v10286
        %v10543 = vunpack.c.l.b16 %v10287
        %v10544 = vunpack.c.l.b16 %v10288
        %v10545 = vunpack.c.l.b16 %v10289
        %v10546 = vunpack.c.l.b16 %v10290
        %v10547 = vunpack.c.l.b16 %v10291
        %v10548 = vunpack.c.l.b16 %v10292
        %v10549 = vunpack.c.l.b16 %v10293
        %v10550 = vunpack.c.l.b16 %v10294
        %v10551 = vunpack.c.l.b16 %v10295
        %v10552 = vunpack.c.l.b16 %v10296
        %v10553 = vunpack.c.l.b16 %v10297
        %v10554 = vunpack.c.l.b16 %v10298
        %v10555 = vunpack.c.l.b16 %v10299
        %v10556 = vunpack.c.l.b16 %v10300
        %v10557 = vunpack.c.l.b16 %v10301
        %v10558 = vunpack.c.l.b16 %v10302
        %v10559 = vunpack.c.l.b16 %v10303
        %v10560 = vunpack.c.l.b16 %v10304
        %v10561 = vunpack.c.l.b16 %v10305
        %v10562 = vunpack.c.l.b16 %v10306
        %v10563 = vunpack.c.l.b16 %v10307
        %v10564 = vunpack.c.l.b16 %v10308
        %v10565 = vunpack.c.l.b16 %v10309
        %v10566 = vunpack.c.l.b16 %v10310
        %v10567 = vunpack.c.l.b16 %v10311
        %v10568 = vunpack.c.l.b16 %v10312
        %v10569 = vunpack.c.l.b16 %v10313
        %v10570 = vunpack.c.l.b16 %v10314
        %v10571 = vunpack.c.l.b16 %v10315
        %v10572 = vunpack.c.l.b16 %v10316
        %v10573 = vunpack.c.l.b16 %v10317
        %v10574 = vunpack.c.l.b16 %v10318
        %v10575 = vunpack.c.l.b16 %v10319
        %v10576 = vunpack.c.l.b16 %v10320
        %v10577 = vunpack.c.l.b16 %v10321
        %v10578 = vunpack.c.l.b16 %v10322
        %v10579 = vpack.c.b16 %v10540, %v10539
        %v10580 = vpack.c.b16 %v10542, %v10541
        %v10581 = vpack.c.b16 %v10544, %v10543
        %v10582 = vpack.c.b16 %v10546, %v10545
        %v10583 = vpack.c.b16 %v10548, %v10547
        %v10584 = vpack.c.b16 %v10550, %v10549
        %v10585 = vpack.c.b16 %v10552, %v10551
        %v10586 = vpack.c.b16 %v10554, %v10553
        %v10587 = vpack.c.b16 %v10556, %v10555
        %v10588 = vpack.c.b16 %v10558, %v10557
        %v10589 = vpack.c.b16 %v10560, %v10559
        %v10590 = vpack.c.b16 %v10562, %v10561
        %v10591 = vpack.c.b16 %v10564, %v10563
        %v10592 = vpack.c.b16 %v10566, %v10565
        %v10593 = vpack.c.b16 %v10568, %v10567
        %v10594 = vpack.c.b16 %v10570, %v10569
        %v10595 = vpack.c.b16 %v10572, %v10571
        %v10596 = vpack.c.b16 %v10574, %v10573
        %v10597 = vpack.c.b16 %v10576, %v10575
        %v10598 = vpack.c.b16 %v10578, %v10577
        %v10620 = vsel %vm794, %v10421, 0
        %v10623 = vsel %vm794, %v10424, 0
        %v10626 = vsel %vm794, %v10427, 0
        %v10629 = vsel %vm794, %v10430, 0
        %v10632 = vsel %vm794, %v10433, 0
        %v10635 = vsel %vm794, %v10436, 0
        %v10638 = vsel %vm794, %v10439, 0
        %v10641 = vsel %vm794, %v10442, 0
        %v10644 = vsel %vm794, %v10445, 0
        %v10647 = vsel %vm794, %v10448, 0
        %v10650 = vsel %vm794, %v10451, 0
        %v10653 = vsel %vm794, %v10454, 0
        %v10656 = vsel %vm794, %v10457, 0
        %v10659 = vsel %vm794, %v10460, 0
        %v10662 = vsel %vm794, %v10463, 0
        %v10665 = vsel %vm794, %v10466, 0
        %10667 = vmatprep.subr.bf16.mxu0 0
        %10668 = vmatpush1.bf16.msra.mxu0 %v10579
        %10669 = vmatprep.subr.bf16.mxu0 0
        %10670 = vmatpush1.bf16.msra.mxu0 %v10580
        %10671 = vmatprep.subr.bf16.mxu0 0
        %10672 = vmatpush1.bf16.msra.mxu0 %v10581
        %10673 = vmatprep.subr.bf16.mxu0 0
        %10674 = vmatpush1.bf16.msra.mxu0 %v10582
        %10675 = vmatprep.subr.bf16.mxu0 0
        %10676 = vmatpush1.bf16.msra.mxu0 %v10583
        %10677 = vmatprep.subr.bf16.mxu0 0
        %10678 = vmatpush1.bf16.msra.mxu0 %v10584
        %10679 = vmatprep.subr.bf16.mxu0 0
        %10680 = vmatpush1.bf16.msra.mxu0 %v10585
        %10681 = vmatprep.subr.bf16.mxu0 0
        %10682 = vmatpush1.bf16.msra.mxu0 %v10586
        %10683 = vmatprep.subr.bf16.mxu0 0
        %10684 = vmatpush1.bf16.msra.mxu0 %v10587
        %10685 = vmatprep.subr.bf16.mxu0 0
        %10686 = vmatpush1.bf16.msra.mxu0 %v10588
        %10687 = vmatprep.subr.bf16.mxu0 0
        %10688 = vmatpush1.bf16.msra.mxu0 %v10589
        %10689 = vmatprep.subr.bf16.mxu0 0
        %10690 = vmatpush1.bf16.msra.mxu0 %v10590
        %10691 = vmatprep.subr.bf16.mxu0 0
        %10692 = vmatpush1.bf16.msra.mxu0 %v10591
        %10693 = vmatprep.subr.bf16.mxu0 0
        %10694 = vmatpush1.bf16.msra.mxu0 %v10592
        %10695 = vmatprep.subr.bf16.mxu0 0
        %10696 = vmatpush1.bf16.msra.mxu0 %v10593
        %10697 = vmatprep.subr.bf16.mxu0 0
        %10698 = vmatpush1.bf16.msra.mxu0 %v10594
        %10699 = vmatprep.mubr.bf16.mxu0 %v10420
        %10700 = vmatmul.mubr.bf16.gmra.mrb[0].mxu0 %v10419
        %v10701 = vpop.f32.mrb[0].mxu0
        %v10702 = vadd.f32 0.0, %v10701
        %v10703 = vpop.f32.mrb[0].mxu0
        %v10704 = vpop.f32.mrb[0].mxu0
        %v10705 = vadd.f32 0.0, %v10704
        %v10706 = vpop.f32.mrb[0].mxu0
        %10707 = vmatprep.mubr.bf16.mxu0 %v10423
        %10708 = vmatmul.mubr.bf16.gmra.mrb[0].mxu0 %v10422
        %v10709 = vpop.f32.mrb[0].mxu0
        %v10710 = vadd.f32 0.0, %v10709
        %v10711 = vpop.f32.mrb[0].mxu0
        %v10712 = vpop.f32.mrb[0].mxu0
        %v10713 = vadd.f32 0.0, %v10712
        %v10714 = vpop.f32.mrb[0].mxu0
        %10715 = vmatprep.mubr.bf16.mxu0 %v10426
        %10716 = vmatmul.mubr.bf16.gmra.mrb[0].mxu0 %v10425
        %v10717 = vpop.f32.mrb[0].mxu0
        %v10718 = vadd.f32 0.0, %v10717
        %v10719 = vpop.f32.mrb[0].mxu0
        %v10720 = vpop.f32.mrb[0].mxu0
        %v10721 = vadd.f32 0.0, %v10720
        %v10722 = vpop.f32.mrb[0].mxu0
        %10723 = vmatprep.mubr.bf16.mxu0 %v10429
        %10724 = vmatmul.mubr.bf16.gmra.mrb[0].mxu0 %v10428
        %v10725 = vpop.f32.mrb[0].mxu0
        %v10726 = vadd.f32 0.0, %v10725
        %v10727 = vpop.f32.mrb[0].mxu0
        %v10728 = vpop.f32.mrb[0].mxu0
        %v10729 = vadd.f32 0.0, %v10728
        %v10730 = vpop.f32.mrb[0].mxu0
        %10731 = vmatprep.mubr.bf16.mxu0 %v10432
        %10732 = vmatmul.mubr.bf16.gmra.mrb[0].mxu0 %v10431
        %v10733 = vpop.f32.mrb[0].mxu0
        %v10734 = vadd.f32 0.0, %v10733
        %v10735 = vpop.f32.mrb[0].mxu0
        %v10736 = vpop.f32.mrb[0].mxu0
        %v10737 = vadd.f32 0.0, %v10736
        %v10738 = vpop.f32.mrb[0].mxu0
        %10739 = vmatprep.mubr.bf16.mxu0 %v10435
        %10740 = vmatmul.mubr.bf16.gmra.mrb[0].mxu0 %v10434
        %v10741 = vpop.f32.mrb[0].mxu0
        %v10742 = vadd.f32 0.0, %v10741
        %v10743 = vpop.f32.mrb[0].mxu0
        %v10744 = vpop.f32.mrb[0].mxu0
        %v10745 = vadd.f32 0.0, %v10744
        %v10746 = vpop.f32.mrb[0].mxu0
        %10747 = vmatprep.mubr.bf16.mxu0 %v10438
        %10748 = vmatmul.mubr.bf16.gmra.mrb[0].mxu0 %v10437
        %v10749 = vpop.f32.mrb[0].mxu0
        %v10750 = vadd.f32 0.0, %v10749
        %v10751 = vpop.f32.mrb[0].mxu0
        %v10752 = vpop.f32.mrb[0].mxu0
        %v10753 = vadd.f32 0.0, %v10752
        %v10754 = vpop.f32.mrb[0].mxu0
        %10755 = vmatprep.mubr.bf16.mxu0 %v10441
        %10756 = vmatmul.mubr.bf16.gmra.mrb[0].mxu0 %v10440
        %v10757 = vpop.f32.mrb[0].mxu0
        %v10758 = vadd.f32 0.0, %v10757
        %v10759 = vpop.f32.mrb[0].mxu0
        %v10760 = vpop.f32.mrb[0].mxu0
        %v10761 = vadd.f32 0.0, %v10760
        %v10762 = vpop.f32.mrb[0].mxu0
        %10763 = vmatprep.mubr.bf16.mxu0 %v10444
        %10764 = vmatmul.mubr.bf16.gmra.mrb[0].mxu0 %v10443
        %v10765 = vpop.f32.mrb[0].mxu0
        %v10766 = vadd.f32 0.0, %v10765
        %v10767 = vpop.f32.mrb[0].mxu0
        %v10768 = vpop.f32.mrb[0].mxu0
        %v10769 = vadd.f32 0.0, %v10768
        %v10770 = vpop.f32.mrb[0].mxu0
        %10771 = vmatprep.mubr.bf16.mxu0 %v10447
        %10772 = vmatmul.mubr.bf16.gmra.mrb[0].mxu0 %v10446
        %v10773 = vpop.f32.mrb[0].mxu0
        %v10774 = vadd.f32 0.0, %v10773
        %v10775 = vpop.f32.mrb[0].mxu0
        %v10776 = vpop.f32.mrb[0].mxu0
        %v10777 = vadd.f32 0.0, %v10776
        %v10778 = vpop.f32.mrb[0].mxu0
        %10779 = vmatprep.mubr.bf16.mxu0 %v10450
        %10780 = vmatmul.mubr.bf16.gmra.mrb[0].mxu0 %v10449
        %v10781 = vpop.f32.mrb[0].mxu0
        %v10782 = vadd.f32 0.0, %v10781
        %v10783 = vpop.f32.mrb[0].mxu0
        %v10784 = vpop.f32.mrb[0].mxu0
        %v10785 = vadd.f32 0.0, %v10784
        %v10786 = vpop.f32.mrb[0].mxu0
        %10787 = vmatprep.mubr.bf16.mxu0 %v10453
        %10788 = vmatmul.mubr.bf16.gmra.mrb[0].mxu0 %v10452
        %v10789 = vpop.f32.mrb[0].mxu0
        %v10790 = vadd.f32 0.0, %v10789
        %v10791 = vpop.f32.mrb[0].mxu0
        %v10792 = vpop.f32.mrb[0].mxu0
        %v10793 = vadd.f32 0.0, %v10792
        %v10794 = vpop.f32.mrb[0].mxu0
        %10795 = vmatprep.mubr.bf16.mxu0 %v10456
        %10796 = vmatmul.mubr.bf16.gmra.mrb[0].mxu0 %v10455
        %v10797 = vpop.f32.mrb[0].mxu0
        %v10798 = vadd.f32 0.0, %v10797
        %v10799 = vpop.f32.mrb[0].mxu0
        %v10800 = vpop.f32.mrb[0].mxu0
        %v10801 = vadd.f32 0.0, %v10800
        %v10802 = vpop.f32.mrb[0].mxu0
        %10803 = vmatprep.mubr.bf16.mxu0 %v10459
        %10804 = vmatmul.mubr.bf16.gmra.mrb[0].mxu0 %v10458
        %v10805 = vpop.f32.mrb[0].mxu0
        %v10806 = vadd.f32 0.0, %v10805
        %v10807 = vpop.f32.mrb[0].mxu0
        %v10808 = vpop.f32.mrb[0].mxu0
        %v10809 = vadd.f32 0.0, %v10808
        %v10810 = vpop.f32.mrb[0].mxu0
        %10811 = vmatprep.mubr.bf16.mxu0 %v10462
        %10812 = vmatmul.mubr.bf16.gmra.mrb[0].mxu0 %v10461
        %v10813 = vpop.f32.mrb[0].mxu0
        %v10814 = vadd.f32 0.0, %v10813
        %v10815 = vpop.f32.mrb[0].mxu0
        %v10816 = vpop.f32.mrb[0].mxu0
        %v10817 = vadd.f32 0.0, %v10816
        %v10818 = vpop.f32.mrb[0].mxu0
        %10819 = vmatprep.mubr.bf16.mxu0 %v10465
        %10820 = vmatmul.mubr.bf16.gmra.mrb[0].mxu0 %v10464
        %v10821 = vpop.f32.mrb[0].mxu0
        %v10822 = vadd.f32 0.0, %v10821
        %v10823 = vpop.f32.mrb[0].mxu0
        %v10824 = vpop.f32.mrb[0].mxu0
        %v10825 = vadd.f32 0.0, %v10824
        %v10826 = vpop.f32.mrb[0].mxu0
        %10827 = vdwg.mxu0
        %10828 = vmatprep.subr.bf16.mxu0 0
        %10829 = vmatpush1.bf16.msra.mxu0 %v10595
        %10830 = vmatprep.subr.bf16.mxu0 0
        %10831 = vmatpush1.bf16.msra.mxu0 %v10596
        %10832 = vmatprep.subr.bf16.mxu0 0
        %10833 = vmatpush1.bf16.msra.mxu0 %v10597
        %10834 = vmatprep.subr.bf16.mxu0 0
        %10835 = vmatpush1.bf16.msra.mxu0 %v10598
        %10836 = vmatprep.subr.bf16.mxu0 0
        %10837 = vmatpush1.bf16.msra.mxu0 0
        %10838 = vmatprep.subr.bf16.mxu0 0
        %10839 = vmatpush1.bf16.msra.mxu0 0
        %10840 = vmatprep.subr.bf16.mxu0 0
        %10841 = vmatpush1.bf16.msra.mxu0 0
        %10842 = vmatprep.subr.bf16.mxu0 0
        %10843 = vmatpush1.bf16.msra.mxu0 0
        %10844 = vmatprep.subr.bf16.mxu0 0
        %10845 = vmatpush1.bf16.msra.mxu0 0
        %10846 = vmatprep.subr.bf16.mxu0 0
        %10847 = vmatpush1.bf16.msra.mxu0 0
        %10848 = vmatprep.subr.bf16.mxu0 0
        %10849 = vmatpush1.bf16.msra.mxu0 0
        %10850 = vmatprep.subr.bf16.mxu0 0
        %10851 = vmatpush1.bf16.msra.mxu0 0
        %10852 = vmatprep.subr.bf16.mxu0 0
        %10853 = vmatpush1.bf16.msra.mxu0 0
        %10854 = vmatprep.subr.bf16.mxu0 0
        %10855 = vmatpush1.bf16.msra.mxu0 0
        %10856 = vmatprep.subr.bf16.mxu0 0
        %10857 = vmatpush1.bf16.msra.mxu0 0
        %10858 = vmatprep.subr.bf16.mxu0 0
        %10859 = vmatpush1.bf16.msra.mxu0 0
        %10860 = vmatprep.mubr.bf16.mxu0 0
        %10861 = vmatmul.mubr.bf16.gmra.mrb[0].mxu0 %v10620
        %v10862 = vpop.f32.mrb[0].mxu0
        %v10863 = vadd.f32 %v10702, %v10862
        %v10864 = vpop.f32.mrb[0].mxu0
        %v10865 = vpop.f32.mrb[0].mxu0
        %v10866 = vadd.f32 %v10705, %v10865
        %v10867 = vpop.f32.mrb[0].mxu0
        %10868 = vmatprep.mubr.bf16.mxu0 0
        %10869 = vmatmul.mubr.bf16.gmra.mrb[0].mxu0 %v10623
        %v10870 = vpop.f32.mrb[0].mxu0
        %v10871 = vadd.f32 %v10710, %v10870
        %v10872 = vpop.f32.mrb[0].mxu0
        %v10873 = vpop.f32.mrb[0].mxu0
        %v10874 = vadd.f32 %v10713, %v10873
        %v10875 = vpop.f32.mrb[0].mxu0
        %10876 = vmatprep.mubr.bf16.mxu0 0
        %10877 = vmatmul.mubr.bf16.gmra.mrb[0].mxu0 %v10626
        %v10878 = vpop.f32.mrb[0].mxu0
        %v10879 = vadd.f32 %v10718, %v10878
        %v10880 = vpop.f32.mrb[0].mxu0
        %v10881 = vpop.f32.mrb[0].mxu0
        %v10882 = vadd.f32 %v10721, %v10881
        %v10883 = vpop.f32.mrb[0].mxu0
        %10884 = vmatprep.mubr.bf16.mxu0 0
        %10885 = vmatmul.mubr.bf16.gmra.mrb[0].mxu0 %v10629
        %v10886 = vpop.f32.mrb[0].mxu0
        %v10887 = vadd.f32 %v10726, %v10886
        %v10888 = vpop.f32.mrb[0].mxu0
        %v10889 = vpop.f32.mrb[0].mxu0
        %v10890 = vadd.f32 %v10729, %v10889
        %v10891 = vpop.f32.mrb[0].mxu0
        %10892 = vmatprep.mubr.bf16.mxu0 0
        %10893 = vmatmul.mubr.bf16.gmra.mrb[0].mxu0 %v10632
        %v10894 = vpop.f32.mrb[0].mxu0
        %v10895 = vadd.f32 %v10734, %v10894
        %v10896 = vpop.f32.mrb[0].mxu0
        %v10897 = vpop.f32.mrb[0].mxu0
        %v10898 = vadd.f32 %v10737, %v10897
        %v10899 = vpop.f32.mrb[0].mxu0
        %10900 = vmatprep.mubr.bf16.mxu0 0
        %10901 = vmatmul.mubr.bf16.gmra.mrb[0].mxu0 %v10635
        %v10902 = vpop.f32.mrb[0].mxu0
        %v10903 = vadd.f32 %v10742, %v10902
        %v10904 = vpop.f32.mrb[0].mxu0
        %v10905 = vpop.f32.mrb[0].mxu0
        %v10906 = vadd.f32 %v10745, %v10905
        %v10907 = vpop.f32.mrb[0].mxu0
        %10908 = vmatprep.mubr.bf16.mxu0 0
        %10909 = vmatmul.mubr.bf16.gmra.mrb[0].mxu0 %v10638
        %v10910 = vpop.f32.mrb[0].mxu0
        %v10911 = vadd.f32 %v10750, %v10910
        %v10912 = vpop.f32.mrb[0].mxu0
        %v10913 = vpop.f32.mrb[0].mxu0
        %v10914 = vadd.f32 %v10753, %v10913
        %v10915 = vpop.f32.mrb[0].mxu0
        %10916 = vmatprep.mubr.bf16.mxu0 0
        %10917 = vmatmul.mubr.bf16.gmra.mrb[0].mxu0 %v10641
        %v10918 = vpop.f32.mrb[0].mxu0
        %v10919 = vadd.f32 %v10758, %v10918
        %v10920 = vpop.f32.mrb[0].mxu0
        %v10921 = vpop.f32.mrb[0].mxu0
        %v10922 = vadd.f32 %v10761, %v10921
        %v10923 = vpop.f32.mrb[0].mxu0
        %10924 = vmatprep.mubr.bf16.mxu0 0
        %10925 = vmatmul.mubr.bf16.gmra.mrb[0].mxu0 %v10644
        %v10926 = vpop.f32.mrb[0].mxu0
        %v10927 = vadd.f32 %v10766, %v10926
        %v10928 = vpop.f32.mrb[0].mxu0
        %v10929 = vpop.f32.mrb[0].mxu0
        %v10930 = vadd.f32 %v10769, %v10929
        %v10931 = vpop.f32.mrb[0].mxu0
        %10932 = vmatprep.mubr.bf16.mxu0 0
        %10933 = vmatmul.mubr.bf16.gmra.mrb[0].mxu0 %v10647
        %v10934 = vpop.f32.mrb[0].mxu0
        %v10935 = vadd.f32 %v10774, %v10934
        %v10936 = vpop.f32.mrb[0].mxu0
        %v10937 = vpop.f32.mrb[0].mxu0
        %v10938 = vadd.f32 %v10777, %v10937
        %v10939 = vpop.f32.mrb[0].mxu0
        %10940 = vmatprep.mubr.bf16.mxu0 0
        %10941 = vmatmul.mubr.bf16.gmra.mrb[0].mxu0 %v10650
        %v10942 = vpop.f32.mrb[0].mxu0
        %v10943 = vadd.f32 %v10782, %v10942
        %v10944 = vpop.f32.mrb[0].mxu0
        %v10945 = vpop.f32.mrb[0].mxu0
        %v10946 = vadd.f32 %v10785, %v10945
        %v10947 = vpop.f32.mrb[0].mxu0
        %10948 = vmatprep.mubr.bf16.mxu0 0
        %10949 = vmatmul.mubr.bf16.gmra.mrb[0].mxu0 %v10653
        %v10950 = vpop.f32.mrb[0].mxu0
        %v10951 = vadd.f32 %v10790, %v10950
        %v10952 = vpop.f32.mrb[0].mxu0
        %v10953 = vpop.f32.mrb[0].mxu0
        %v10954 = vadd.f32 %v10793, %v10953
        %v10955 = vpop.f32.mrb[0].mxu0
        %10956 = vmatprep.mubr.bf16.mxu0 0
        %10957 = vmatmul.mubr.bf16.gmra.mrb[0].mxu0 %v10656
        %v10958 = vpop.f32.mrb[0].mxu0
        %v10959 = vadd.f32 %v10798, %v10958
        %v10960 = vpop.f32.mrb[0].mxu0
        %v10961 = vpop.f32.mrb[0].mxu0
        %v10962 = vadd.f32 %v10801, %v10961
        %v10963 = vpop.f32.mrb[0].mxu0
        %10964 = vmatprep.mubr.bf16.mxu0 0
        %10965 = vmatmul.mubr.bf16.gmra.mrb[0].mxu0 %v10659
        %v10966 = vpop.f32.mrb[0].mxu0
        %v10967 = vadd.f32 %v10806, %v10966
        %v10968 = vpop.f32.mrb[0].mxu0
        %v10969 = vpop.f32.mrb[0].mxu0
        %v10970 = vadd.f32 %v10809, %v10969
        %v10971 = vpop.f32.mrb[0].mxu0
        %10972 = vmatprep.mubr.bf16.mxu0 0
        %10973 = vmatmul.mubr.bf16.gmra.mrb[0].mxu0 %v10662
        %v10974 = vpop.f32.mrb[0].mxu0
        %v10975 = vadd.f32 %v10814, %v10974
        %v10976 = vpop.f32.mrb[0].mxu0
        %v10977 = vpop.f32.mrb[0].mxu0
        %v10978 = vadd.f32 %v10817, %v10977
        %v10979 = vpop.f32.mrb[0].mxu0
        %10980 = vmatprep.mubr.bf16.mxu0 0
        %10981 = vmatmul.mubr.bf16.gmra.mrb[0].mxu0 %v10665
        %v10982 = vpop.f32.mrb[0].mxu0
        %v10983 = vadd.f32 %v10822, %v10982
        %v10984 = vpop.f32.mrb[0].mxu0
        %v10985 = vpop.f32.mrb[0].mxu0
        %v10986 = vadd.f32 %v10825, %v10985
        %v10987 = vpop.f32.mrb[0].mxu0
        %10988 = vdwg.mxu0
        %v10989 = vadd.f32 %v9898, %v10863
        %v10990 = vadd.f32 %v9899, %v10866
        %v10991 = vadd.f32 %v9900, %v10871
        %v10992 = vadd.f32 %v9901, %v10874
        %v10993 = vadd.f32 %v9902, %v10879
        %v10994 = vadd.f32 %v9903, %v10882
        %v10995 = vadd.f32 %v9904, %v10887
        %v10996 = vadd.f32 %v9905, %v10890
        %v10997 = vadd.f32 %v9906, %v10895
        %v10998 = vadd.f32 %v9907, %v10898
        %v10999 = vadd.f32 %v9908, %v10903
        %v11000 = vadd.f32 %v9909, %v10906
        %v11001 = vadd.f32 %v9910, %v10911
        %v11002 = vadd.f32 %v9911, %v10914
        %v11003 = vadd.f32 %v9912, %v10919
        %v11004 = vadd.f32 %v9913, %v10922
        %v11005 = vadd.f32 %v9914, %v10927
        %v11006 = vadd.f32 %v9915, %v10930
        %v11007 = vadd.f32 %v9916, %v10935
        %v11008 = vadd.f32 %v9917, %v10938
        %v11009 = vadd.f32 %v9918, %v10943
        %v11010 = vadd.f32 %v9919, %v10946
        %v11011 = vadd.f32 %v9920, %v10951
        %v11012 = vadd.f32 %v9921, %v10954
        %v11013 = vadd.f32 %v9922, %v10959
        %v11014 = vadd.f32 %v9923, %v10962
        %v11015 = vadd.f32 %v9924, %v10967
        %v11016 = vadd.f32 %v9925, %v10970
        %v11017 = vadd.f32 %v9926, %v10975
        %v11018 = vadd.f32 %v9927, %v10978
        %v11019 = vadd.f32 %v9928, %v10983
        %v11020 = vadd.f32 %v9929, %v10986
        %11021 = vst.msk [vmem:[#allocation2] sm:$0xff] %vm794, %v10989
        %11022 = vst.msk [vmem:[#allocation2 + $0x8] sm:$0xff] %vm794, %v10990
        %11023 = vst.msk [vmem:[#allocation2 + $0x10] sm:$0xff] %vm794, %v10991
        %11024 = vst.msk [vmem:[#allocation2 + $0x18] sm:$0xff] %vm794, %v10992
        %11025 = vst.msk [vmem:[#allocation2 + $0x20] sm:$0xff] %vm794, %v10993
        %11026 = vst.msk [vmem:[#allocation2 + $0x28] sm:$0xff] %vm794, %v10994
        %11027 = vst.msk [vmem:[#allocation2 + $0x30] sm:$0xff] %vm794, %v10995
        %11028 = vst.msk [vmem:[#allocation2 + $0x38] sm:$0xff] %vm794, %v10996
        %11029 = vst.msk [vmem:[#allocation2 + $0x40] sm:$0xff] %vm794, %v10997
        %11030 = vst.msk [vmem:[#allocation2 + $0x48] sm:$0xff] %vm794, %v10998
        %11031 = vst.msk [vmem:[#allocation2 + $0x50] sm:$0xff] %vm794, %v10999
        %11032 = vst.msk [vmem:[#allocation2 + $0x58] sm:$0xff] %vm794, %v11000
        %11033 = vst.msk [vmem:[#allocation2 + $0x60] sm:$0xff] %vm794, %v11001
        %11034 = vst.msk [vmem:[#allocation2 + $0x68] sm:$0xff] %vm794, %v11002
        %11035 = vst.msk [vmem:[#allocation2 + $0x70] sm:$0xff] %vm794, %v11003
        %11036 = vst.msk [vmem:[#allocation2 + $0x78] sm:$0xff] %vm794, %v11004
        %11037 = vst.msk [vmem:[#allocation2 + $0x80] sm:$0xff] %vm794, %v11005
        %11038 = vst.msk [vmem:[#allocation2 + $0x88] sm:$0xff] %vm794, %v11006
        %11039 = vst.msk [vmem:[#allocation2 + $0x90] sm:$0xff] %vm794, %v11007
        %11040 = vst.msk [vmem:[#allocation2 + $0x98] sm:$0xff] %vm794, %v11008
        %11041 = vst.msk [vmem:[#allocation2 + $0xa0] sm:$0xff] %vm794, %v11009
        %11042 = vst.msk [vmem:[#allocation2 + $0xa8] sm:$0xff] %vm794, %v11010
        %11043 = vst.msk [vmem:[#allocation2 + $0xb0] sm:$0xff] %vm794, %v11011
        %11044 = vst.msk [vmem:[#allocation2 + $0xb8] sm:$0xff] %vm794, %v11012
        %11045 = vst.msk [vmem:[#allocation2 + $0xc0] sm:$0xff] %vm794, %v11013
        %11046 = vst.msk [vmem:[#allocation2 + $0xc8] sm:$0xff] %vm794, %v11014
        %11047 = vst.msk [vmem:[#allocation2 + $0xd0] sm:$0xff] %vm794, %v11015
        %11048 = vst.msk [vmem:[#allocation2 + $0xd8] sm:$0xff] %vm794, %v11016
        %11049 = vst.msk [vmem:[#allocation2 + $0xe0] sm:$0xff] %vm794, %v11017
        %11050 = vst.msk [vmem:[#allocation2 + $0xe8] sm:$0xff] %vm794, %v11018
        %11051 = vst.msk [vmem:[#allocation2 + $0xf0] sm:$0xff] %vm794, %v11019
        %11052 = vst.msk [vmem:[#allocation2 + $0xf8] sm:$0xff] %vm794, %v11020
        // Predicated region
        $region37: #{tpu_custom_call.1} parent=31 // pred_check
          %p11053 = pneg %p254
        $region38: #{tpu_custom_call.1} parent=31 // pred_check_branch
          %11055 = sbr.rel (%p11053) target = $region40
        $region39: #{tpu_custom_call.1} parent=31 // pred_region
          %v11056 = vld [vmem:[#allocation2] sm:$0xff]
          %v11057 = vld [vmem:[#allocation2 + $0x8] sm:$0xff]
          %v11058 = vld [vmem:[#allocation2 + $0x10] sm:$0xff]
          %v11059 = vld [vmem:[#allocation2 + $0x18] sm:$0xff]
          %v11060 = vld [vmem:[#allocation2 + $0x20] sm:$0xff]
          %v11061 = vld [vmem:[#allocation2 + $0x28] sm:$0xff]
          %v11062 = vld [vmem:[#allocation2 + $0x30] sm:$0xff]
          %v11063 = vld [vmem:[#allocation2 + $0x38] sm:$0xff]
          %v11064 = vld [vmem:[#allocation2 + $0x40] sm:$0xff]
          %v11065 = vld [vmem:[#allocation2 + $0x48] sm:$0xff]
          %v11066 = vld [vmem:[#allocation2 + $0x50] sm:$0xff]
          %v11067 = vld [vmem:[#allocation2 + $0x58] sm:$0xff]
          %v11068 = vld [vmem:[#allocation2 + $0x60] sm:$0xff]
          %v11069 = vld [vmem:[#allocation2 + $0x68] sm:$0xff]
          %v11070 = vld [vmem:[#allocation2 + $0x70] sm:$0xff]
          %v11071 = vld [vmem:[#allocation2 + $0x78] sm:$0xff]
          %v11072 = vld [vmem:[#allocation2 + $0x80] sm:$0xff]
          %v11073 = vld [vmem:[#allocation2 + $0x88] sm:$0xff]
          %v11074 = vld [vmem:[#allocation2 + $0x90] sm:$0xff]
          %v11075 = vld [vmem:[#allocation2 + $0x98] sm:$0xff]
          %v11076 = vld [vmem:[#allocation2 + $0xa0] sm:$0xff]
          %v11077 = vld [vmem:[#allocation2 + $0xa8] sm:$0xff]
          %v11078 = vld [vmem:[#allocation2 + $0xb0] sm:$0xff]
          %v11079 = vld [vmem:[#allocation2 + $0xb8] sm:$0xff]
          %v11080 = vld [vmem:[#allocation2 + $0xc0] sm:$0xff]
          %v11081 = vld [vmem:[#allocation2 + $0xc8] sm:$0xff]
          %v11082 = vld [vmem:[#allocation2 + $0xd0] sm:$0xff]
          %v11083 = vld [vmem:[#allocation2 + $0xd8] sm:$0xff]
          %v11084 = vld [vmem:[#allocation2 + $0xe0] sm:$0xff]
          %v11085 = vld [vmem:[#allocation2 + $0xe8] sm:$0xff]
          %v11086 = vld [vmem:[#allocation2 + $0xf0] sm:$0xff]
          %v11087 = vld [vmem:[#allocation2 + $0xf8] sm:$0xff]
          %11088 = vst.msk [vmem:[%s230] sm:$0xff] %vm794, %v11056
          %11089 = vst.msk [vmem:[%s230 + $0x8] sm:$0xff] %vm794, %v11057
          %11090 = vst.msk [vmem:[%s230 + $0x10] sm:$0xff] %vm794, %v11058
          %11091 = vst.msk [vmem:[%s230 + $0x18] sm:$0xff] %vm794, %v11059
          %11092 = vst.msk [vmem:[%s230 + $0x20] sm:$0xff] %vm794, %v11060
          %11093 = vst.msk [vmem:[%s230 + $0x28] sm:$0xff] %vm794, %v11061
          %11094 = vst.msk [vmem:[%s230 + $0x30] sm:$0xff] %vm794, %v11062
          %11095 = vst.msk [vmem:[%s230 + $0x38] sm:$0xff] %vm794, %v11063
          %11096 = vst.msk [vmem:[%s230 + $0x40] sm:$0xff] %vm794, %v11064
          %11097 = vst.msk [vmem:[%s230 + $0x48] sm:$0xff] %vm794, %v11065
          %11098 = vst.msk [vmem:[%s230 + $0x50] sm:$0xff] %vm794, %v11066
          %11099 = vst.msk [vmem:[%s230 + $0x58] sm:$0xff] %vm794, %v11067
          %11100 = vst.msk [vmem:[%s230 + $0x60] sm:$0xff] %vm794, %v11068
          %11101 = vst.msk [vmem:[%s230 + $0x68] sm:$0xff] %vm794, %v11069
          %11102 = vst.msk [vmem:[%s230 + $0x70] sm:$0xff] %vm794, %v11070
          %11103 = vst.msk [vmem:[%s230 + $0x78] sm:$0xff] %vm794, %v11071
          %11104 = vst.msk [vmem:[%s230 + $0x80] sm:$0xff] %vm794, %v11072
          %11105 = vst.msk [vmem:[%s230 + $0x88] sm:$0xff] %vm794, %v11073
          %11106 = vst.msk [vmem:[%s230 + $0x90] sm:$0xff] %vm794, %v11074
          %11107 = vst.msk [vmem:[%s230 + $0x98] sm:$0xff] %vm794, %v11075
          %11108 = vst.msk [vmem:[%s230 + $0xa0] sm:$0xff] %vm794, %v11076
          %11109 = vst.msk [vmem:[%s230 + $0xa8] sm:$0xff] %vm794, %v11077
          %11110 = vst.msk [vmem:[%s230 + $0xb0] sm:$0xff] %vm794, %v11078
          %11111 = vst.msk [vmem:[%s230 + $0xb8] sm:$0xff] %vm794, %v11079
          %11112 = vst.msk [vmem:[%s230 + $0xc0] sm:$0xff] %vm794, %v11080
          %11113 = vst.msk [vmem:[%s230 + $0xc8] sm:$0xff] %vm794, %v11081
          %11114 = vst.msk [vmem:[%s230 + $0xd0] sm:$0xff] %vm794, %v11082
          %11115 = vst.msk [vmem:[%s230 + $0xd8] sm:$0xff] %vm794, %v11083
          %11116 = vst.msk [vmem:[%s230 + $0xe0] sm:$0xff] %vm794, %v11084
          %11117 = vst.msk [vmem:[%s230 + $0xe8] sm:$0xff] %vm794, %v11085
          %11118 = vst.msk [vmem:[%s230 + $0xf0] sm:$0xff] %vm794, %v11086
          %11119 = vst.msk [vmem:[%s230 + $0xf8] sm:$0xff] %vm794, %v11087
        $region40: #{tpu_custom_call.1} parent=31 // pred_fallthru
          _
        %s11120 = sand.u32 %s128, 1
        %s11121 = scalar_lea.sflag [#allocation4], %s11120
        %s11122 = sand.u32 %s128, 1
        %s11123 = smul.addr %s11122, 256
        %s11124 = scalar_lea.vmem [#allocation3], %s11123
        // Predicated region
        $region41: #{tpu_custom_call.1} parent=31 // pred_check
          %p11125 = pneg %p138
        $region42: #{tpu_custom_call.1} parent=31 // pred_check_branch
          %11127 = sbr.rel (%p11125) target = $region44
        $region43: #{tpu_custom_call.1} parent=31 // pred_region
          %s11129 = ssub.s32 4096, 4096
          %11130 = vsyncadd %s11121, %s11129
          %s11131 = smul.addr %s22, 32
          %s11132 = sadd.s32 %s23, %s11131
          %s11133 = smul.addr %s11132, 128
          %s11134 = scalar_lea.hbm %s3, %s11133
          %s11135 = sshll.u32 %s11124, 4
          %s11136 = int_to_ptr.vmem [resolvable:$true] %s11135
          %11141 = dma.vmem_to_hbm [thread:$0]  %s11136, 4096, %s11134, %s11121, 128, 128, 8
        $region44: #{tpu_custom_call.1} parent=31 // pred_fallthru
          _
      $region32: #{tpu_custom_call.1} parent=5 // pred_fallthru
        _
      %p11142 = scmp.le.s32.totalorder 2, %s12
      // Predicated region
      $region45: #{tpu_custom_call.1} parent=5 // pred_check
        %p11143 = pneg %p11142
      $region46: #{tpu_custom_call.1} parent=5 // pred_check_branch
        %11145 = sbr.rel (%p11143) target = $region48
      $region47: #{tpu_custom_call.1} parent=5 // pred_region
        %s11146 = ssub.s32 %s12, 2
        // Predicated region
        $region49: #{tpu_custom_call.1} parent=47 // pred_check
          %p11147 = pneg %p144
        $region50: #{tpu_custom_call.1} parent=47 // pred_check_branch
          %11149 = sbr.rel (%p11147) target = $region52
        $region51: #{tpu_custom_call.1} parent=47 // pred_region
          %s11150 = sand.u32 %s129, 1
          %s11151 = scalar_lea.sflag [#allocation4], %s11150
          %s11152 = sand.u32 %s129, 1
          %s11153 = smul.addr %s11152, 256
          %s11154 = scalar_lea.vmem [#allocation3], %s11153
          %11155 = dma.done %s11151, 4096
        $region52: #{tpu_custom_call.1} parent=47 // pred_fallthru
          _
      $region48: #{tpu_custom_call.1} parent=5 // pred_fallthru
        _
    $region6: #{tpu_custom_call.1} parent=1 // loop_footer
      %s16 = sadd.s32 1, %s12
    $region7: #{tpu_custom_call.1} parent=1 // loop_footer_branch
      %11 = sbr.rel target = $region3
    $region8: #{tpu_custom_call.1} parent=1 // loop_exit
      _
    %11156 = vsyncpa [#allocation4], 1
    %s11157 = scalar_lea.sflag [#allocation4], 1
    %11158 = vsyncpa %s11157, 1

</llo_original>
